<compile_context>
chip_gen: v7x
topology: tpu7x:2x2x1
jax: 0.10.0
libtpu: 0.0.40
codegen_flags: <defaults>
</compile_context>

<pallas_src>
import functools

import numpy as np
import jax
import jax.numpy as jnp
from jax import lax
from jax.experimental import pallas as pl
from jax.experimental.pallas import tpu as pltpu


RATIO = 0.8          # TopKPooling ratio (implemented exactly as floor((4n+4)/5))
LANE_PAD = 128       # lane-dense width of slabs and the final output
NEG_BIG = -1e30      # "minus infinity" for masked max / padded logits


def _round_up(n, m):
    return ((n + m - 1) // m) * m


def _mxu(a, b):
    """MXU matmul: bf16 inputs, f32 accumulation.  astype is a no-op for
    operands that are already bf16 (pre-cast weights / x / adjacency)."""
    return jnp.dot(a.astype(jnp.bfloat16), b.astype(jnp.bfloat16),
                   preferred_element_type=jnp.float32)


# ------------------------------- fused kernel -------------------------------

def _make_kernel(num_graphs, max_num_nodes, sub_pad, w_layout, aux_layout):
    B, N = num_graphs, max_num_nodes
    NF = B * N

    def kernel(x_ref, adj_ref, mask_ref, w_ref, aux_ref, o_ref):
        def wpiece(name):                       # static, sublane-aligned slices
            s, r, c = w_layout[name]
            return w_ref[s:s + r, :c]

        def apiece(name):
            s, r, c = aux_layout[name]
            return aux_ref[s:s + r, :c]

        x = x_ref[...]        # (NF, Cin) bf16 flat node features
        a = adj_ref[...]      # (NF, NF) bf16 block-diag adjacency, a[i,j]=#edges j->i
        m = mask_ref[...]     # (NF, 1)  f32 valid-node mask

        # ---- constants hoisted once, reused by all three pooling stages ----
        sg = apiece("same_graph")                              # (NF,NF) f32 {0,1}
        sg_b = sg > 0.0
        i_idx = lax.broadcasted_iota(jnp.int32, (NF, NF), 0)
        j_idx = lax.broadcasted_iota(jnp.int32, (NF, NF), 1)
        tie_break = j_idx < i_idx                              # smaller index wins ties

        def graph_conv_relu(h, adj, w_stack, b):
            # GraphConv(aggr='add'): out_i = W_rel.(sum_{j->i} h_j) + W_root.h_i + b
            # fused as ONE weight matmul: [agg | h] @ [[W_rel],[W_root]].
            hb = h.astype(jnp.bfloat16)
            agg = _mxu(adj, hb)                                         # (NF, Cin) f32
            ah = jnp.concatenate([agg.astype(jnp.bfloat16), hb], axis=-1)
            out = _mxu(ah, w_stack) + b                                 # (NF, Cout) f32
            # No mask multiply needed: padded/dropped rows only ever hold relu(b);
            # their adjacency rows+cols are zero so they never propagate, and the
            # pooling / readout masks exclude them downstream.
            return jnp.maximum(out, 0.0)

        def topk_pool(h, adj, m_col, pn):
            # TopKPooling(ratio=0.8): score = tanh(h.p/||p||); keep top ceil(0.8*n)
            # per graph.  Dense-masked equivalent of PyG's compaction + filter_adj.
            mrow = m_col[:, 0]                                          # (NF,)
            score = jnp.tanh(jnp.sum(h * pn, axis=-1))                  # (NF,)
            s = jnp.where(mrow > 0.0, score, -2.0)    # tanh in (-1,1) => never selected
            beats = sg_b & ((s[None, :] > s[:, None]) |
                            ((s[None, :] == s[:, None]) & tie_break))
            rank = jnp.sum(jnp.where(beats, 1.0, 0.0), axis=-1)         # (NF,)
            n_valid = jnp.sum(sg * mrow[None, :], axis=-1)              # (NF,) per-graph n
            # ceil(0.8*n) == floor((4n+4)/5); exact in f32 for these n.
            k = jnp.floor((4.0 * n_valid + 4.0) / 5.0)
            keep = jnp.where((rank < k) & (mrow > 0.0), 1.0, 0.0)       # (NF,)
            kc = keep[:, None]
            new_h = h * score[:, None] * kc                 # x[perm] * score[perm]
            new_a = adj * kc * keep[None, :]                # filter_adj
            return new_h, new_a, kc

        def readout(h, m_col):
            # torch.cat([global_max_pool, global_mean_pool], dim=1)
            c = h.shape[-1]
            hb = h.reshape(B, N, c)
            mb = m_col.reshape(B, N, 1)
            gmp = jnp.max(jnp.where(mb > 0.0, hb, NEG_BIG), axis=1)     # (B, c)
            cnt = jnp.maximum(jnp.sum(mb, axis=1), 1.0)                 # (B, 1)
            gap = jnp.sum(hb * mb, axis=1) / cnt                        # exact mean
            return jnp.concatenate([gmp, gap], axis=-1)                 # (B, 2c)

        # ----- block 1 -----
        h = graph_conv_relu(x, a, wpiece("conv1_w"), apiece("conv1_b"))
        h, a, m = topk_pool(h, a, m, apiece("pool1"))
        r = readout(h, m)
        # ----- block 2 -----
        h = graph_conv_relu(h, a, wpiece("conv2_w"), apiece("conv2_b"))
        h, a, m = topk_pool(h, a, m, apiece("pool2"))
        r = r + readout(h, m)
        # ----- block 3 -----
        h = graph_conv_relu(h, a, wpiece("conv3_w"), apiece("conv3_b"))
        h, a, m = topk_pool(h, a, m, apiece("pool3"))
        r = r + readout(h, m)

        # pad the batch (sublane) dim so the final store is an unmasked (8,128) vst
        r = jnp.concatenate(
            [r, jnp.zeros((sub_pad - B, r.shape[1]), jnp.float32)], axis=0)

        # ----- MLP head: lin1+ReLU -> (dropout) -> lin2+ReLU -> lin3 -> log_softmax -----
        z = jnp.maximum(_mxu(r, wpiece("lin1_w")) + apiece("lin1_b"), 0.0)
        # TODO(synk): dropout(p=0.5) is inference-mode identity here; training-mode
        # dropout would use pltpu.prng_seed / pltpu.prng_random_bits.
        z = jnp.maximum(_mxu(z, wpiece("lin2_w")) + apiece("lin2_b"), 0.0)
        logits = _mxu(z, wpiece("lin3_w")) + apiece("lin3_b")   # (8,128); pad bias=-1e30
        mx = jnp.max(logits, axis=-1, keepdims=True)
        lse = mx + jnp.log(jnp.sum(jnp.exp(logits - mx), axis=-1, keepdims=True))
        o_ref[...] = logits - lse                               # lane/sublane-dense store

    return kernel


# ------------------------------ parameter packing -----------------------------

def _pack_params(params, out_channels, num_graphs, max_num_nodes):
    """Pack all parameters into two lane-dense slabs:
       * w_slab  (bf16): all matmul weights (GraphConv weights stacked [W_rel; W_root])
       * aux_slab (f32): biases, normalized pooling vectors, padded lin3 bias,
                         and the static same-graph block mask."""
    w_rel1, w_root1, cb1 = params["conv1"]
    w_rel2, w_root2, cb2 = params["conv2"]
    w_rel3, w_root3, cb3 = params["conv3"]
    l1w, l1b = params["lin1"]
    l2w, l2b = params["lin2"]
    l3w, l3b = params["lin3"]

    # lin3 padded to a lane-dense 128-wide slab; padded bias = -1e30 so those
    # columns contribute exp(.)=0 to the log-softmax normalizer.
    h2 = l3w.shape[0]
    l3w_p = jnp.zeros((h2, LANE_PAD), jnp.float32).at[:, :out_channels].set(l3w)
    l3b_p = jnp.full((1, LANE_PAD), NEG_BIG, jnp.float32).at[:, :out_channels].set(l3b)

    weight_pieces = [
        ("conv1_w", jnp.concatenate([w_rel1, w_root1], axis=0)),
        ("conv2_w", jnp.concatenate([w_rel2, w_root2], axis=0)),
        ("conv3_w", jnp.concatenate([w_rel3, w_root3], axis=0)),
        ("lin1_w", l1w), ("lin2_w", l2w), ("lin3_w", l3w_p),
    ]

    def _normed(p):  # TopK score uses p / ||p||
        return p / jnp.sqrt(jnp.sum(p * p, axis=-1, keepdims=True))

    same_graph = jnp.asarray(
        np.kron(np.eye(num_graphs, dtype=np.float32),
                np.ones((max_num_nodes, max_num_nodes), np.float32)))

    aux_pieces = [
        ("conv1_b", cb1), ("conv2_b", cb2), ("conv3_b", cb3),
        ("pool1", _normed(params["pool1"])),
        ("pool2", _normed(params["pool2"])),
        ("pool3", _normed(params["pool3"])),
        ("lin1_b", l1b), ("lin2_b", l2b), ("lin3_b", l3b_p),
        ("same_graph", same_graph),
    ]

    def build(pieces, dtype, row_align):
        layout, blocks, off = {}, [], 0
        for name, mat in pieces:
            r, c = mat.shape
            rp = _round_up(r, row_align)          # keep every chunk tile-aligned
            layout[name] = (off, r, c)
            blk = jnp.zeros((rp, LANE_PAD), jnp.float32).at[:r, :c].set(
                mat.astype(jnp.float32))
            blocks.append(blk)
            off += rp
        return jnp.concatenate(blocks, axis=0).astype(dtype), layout

    w_slab, w_layout = build(weight_pieces, jnp.bfloat16, 16)   # bf16 tile = 16 sublanes
    aux_slab, aux_layout = build(aux_pieces, jnp.float32, 8)    # f32  tile = 8 sublanes
    return w_slab, w_layout, aux_slab, aux_layout


# -------------------------- sparse -> dense (glue) ---------------------------

def to_flat_dense(x, edge_index, batch, num_graphs, max_num_nodes):
    """Sparse -> flat block-diagonal dense via one-hot matmuls (no serialized
    XLA scatters).  Returns x_flat (B*N,Cin), adj (B*N,B*N) with
    adj[i,j] = #edges j->i, and mask (B*N,1).  Assumes `batch` is sorted."""
    num_nodes = x.shape[0]
    nf = num_graphs * max_num_nodes
    g_oh = jax.nn.one_hot(batch, num_graphs, dtype=jnp.float32)           # (nodes, B)
    counts = jnp.sum(g_oh, axis=0).astype(jnp.int32)                       # (B,)
    cum = jnp.concatenate([jnp.zeros((1,), jnp.int32), jnp.cumsum(counts)[:-1]])
    pos = jnp.arange(num_nodes, dtype=jnp.int32) - cum[batch]
    flat = batch * max_num_nodes + pos                                     # (nodes,)
    node_oh = jax.nn.one_hot(flat, nf, dtype=jnp.float32)                  # (nodes, NF)
    x_flat = node_oh.T @ x                                                 # (NF, Cin)
    mask = jnp.sum(node_oh, axis=0)[:, None]                               # (NF, 1)
    src, dst = edge_index[0], edge_index[1]
    adj = (jax.nn.one_hot(flat[dst], nf, dtype=jnp.float32).T
           @ jax.nn.one_hot(flat[src], nf, dtype=jnp.float32))             # (NF, NF)
    return x_flat, adj, mask


# ------------------------------ pallas wrapper -------------------------------

def topknet_forward(params, x, edge_index, batch, *,
                    num_graphs, max_num_nodes, out_channels):
    x_flat, adj, mask = to_flat_dense(x, edge_index, batch,
                                      num_graphs, max_num_nodes)
    w_slab, w_layout, aux_slab, aux_layout = _pack_params(
        params, out_channels, num_graphs, max_num_nodes)

    sub_pad = max(8, _round_up(num_graphs, 8))
    kernel = _make_kernel(num_graphs, max_num_nodes, sub_pad,
                          w_layout, aux_layout)

    out_padded = pl.pallas_call(
        kernel,
        out_shape=jax.ShapeDtypeStruct((sub_pad, LANE_PAD), jnp.float32),
        # no grid / no BlockSpecs: single-shot kernel, whole arrays in VMEM
        compiler_params=pltpu.CompilerParams(vmem_limit_bytes=16 * 1024 * 1024),
    )(x_flat.astype(jnp.bfloat16), adj.astype(jnp.bfloat16), mask,
      w_slab, aux_slab)
    return out_padded[:num_graphs, :out_channels]


# ----------------------------- parameter creation ----------------------------

def linear_params(key, fan_in, fan_out, bias=True):
    k1, k2 = jax.random.split(key)
    bound = 1.0 / np.sqrt(fan_in)
    w = jax.random.uniform(k1, (fan_in, fan_out), jnp.float32, -bound, bound)
    b = (jax.random.uniform(k2, (1, fan_out), jnp.float32, -bound, bound)
         if bias else jnp.zeros((1, fan_out), jnp.float32))
    return w, b


def graph_conv_params(key, cin, cout):
    k1, k2 = jax.random.split(key)
    w_rel, b_rel = linear_params(k1, cin, cout, bias=True)    # lin_rel (with bias)
    w_root, _ = linear_params(k2, cin, cout, bias=False)      # lin_root (no bias)
    return (w_rel, w_root, b_rel)


def topk_pool_params(key, c):
    bound = 1.0 / np.sqrt(c)
    return jax.random.uniform(key, (1, c), jnp.float32, -bound, bound)


def net_params(key, in_c, hid, out_c):
    keys = jax.random.split(key, 9)
    return {
        "conv1": graph_conv_params(keys[0], in_c, hid),
        "pool1": topk_pool_params(keys[1], hid),
        "conv2": graph_conv_params(keys[2], hid, hid),
        "pool2": topk_pool_params(keys[3], hid),
        "conv3": graph_conv_params(keys[4], hid, hid),
        "pool3": topk_pool_params(keys[5], hid),
        "lin1": linear_params(keys[6], 2 * hid, hid),
        "lin2": linear_params(keys[7], hid, hid // 2),
        "lin3": linear_params(keys[8], hid // 2, out_c),
    }


# ----------------------------------- main ------------------------------------

if __name__ == "__main__":
    key = jax.random.PRNGKey(0)
    in_channels, hidden_channels, out_channels = 4, 32, 6

    nodes_per_graph = [12, 10]
    num_graphs = len(nodes_per_graph)
    max_num_nodes = 16                       # dense padding (true sizes via mask)
    total_nodes = sum(nodes_per_graph)

    kx, kp = jax.random.split(key)
    x = jax.random.normal(kx, (total_nodes, in_channels), jnp.float32)
    batch = jnp.asarray(np.repeat(np.arange(num_graphs), nodes_per_graph), jnp.int32)

    # deterministic bidirectional ring edges per graph
    src_list, dst_list = [], []
    offset = 0
    for n in nodes_per_graph:
        for i in range(n):
            j = (i + 1) % n
            src_list += [offset + i, offset + j]
            dst_list += [offset + j, offset + i]
        offset += n
    edge_index = jnp.asarray(np.array([src_list, dst_list]), jnp.int32)

    params = net_params(kp, in_channels, hidden_channels, out_channels)

    fwd = jax.jit(functools.partial(topknet_forward,
                                    num_graphs=num_graphs,
                                    max_num_nodes=max_num_nodes,
                                    out_channels=out_channels))
    out = fwd(params, x, edge_index, batch)
    jax.block_until_ready(out)

    assert out.shape == (num_graphs, out_channels)
    assert bool(jnp.all(jnp.isfinite(out)))
    # log-softmax rows should sum to ~1 in prob space
    assert bool(jnp.allclose(jnp.sum(jnp.exp(out), axis=-1), 1.0, atol=1e-4))
    print("KERNEL_OK")
</pallas_src>

<mosaic_0001>
module attributes {stable_mosaic.version = 11 : i64} {
  func.func @kernel(%arg0: memref<32x4xbf16, #tpu.memory_space<vmem>>, %arg1: memref<32x32xbf16, #tpu.memory_space<vmem>>, %arg2: memref<32x1xf32, #tpu.memory_space<vmem>>, %arg3: memref<256x128xbf16, #tpu.memory_space<vmem>>, %arg4: memref<104x128xf32, #tpu.memory_space<vmem>>, %arg5: memref<8x128xf32, #tpu.memory_space<vmem>>) attributes {dimension_semantics = [], scalar_prefetch = 0 : i64, scratch_operands = 0 : i64, tpu.core_type = #tpu.core_type<tc>} {
    %c0 = arith.constant 0 : index
    %c0_0 = arith.constant 0 : index
    %0 = vector.load %arg0[%c0, %c0_0] : memref<32x4xbf16, #tpu.memory_space<vmem>>, vector<32x4xbf16>
    %c0_1 = arith.constant 0 : index
    %c0_2 = arith.constant 0 : index
    %1 = vector.load %arg1[%c0_1, %c0_2] : memref<32x32xbf16, #tpu.memory_space<vmem>>, vector<32x32xbf16>
    %c0_3 = arith.constant 0 : index
    %c0_4 = arith.constant 0 : index
    %2 = vector.load %arg2[%c0_3, %c0_4] : memref<32x1xf32, #tpu.memory_space<vmem>>, vector<32x1xf32>
    %c72 = arith.constant 72 : index
    %c0_5 = arith.constant 0 : index
    %3 = vector.load %arg4[%c72, %c0_5] : memref<104x128xf32, #tpu.memory_space<vmem>>, vector<32x32xf32>
    %cst = arith.constant 0.000000e+00 : f32
    %4 = vector.broadcast %cst : f32 to vector<32x32xf32>
    %5 = arith.cmpf ogt, %3, %4 : vector<32x32xf32>
    %6 = tpu.iota {dimensions = array<i32: 0>} : vector<32x32xi32>
    %7 = tpu.iota {dimensions = array<i32: 1>} : vector<32x32xi32>
    %8 = arith.cmpi slt, %7, %6 : vector<32x32xi32>
    %c0_6 = arith.constant 0 : index
    %c0_7 = arith.constant 0 : index
    %9 = vector.load %arg3[%c0_6, %c0_7] : memref<256x128xbf16, #tpu.memory_space<vmem>>, vector<8x32xbf16>
    %c0_8 = arith.constant 0 : index
    %c0_9 = arith.constant 0 : index
    %10 = vector.load %arg4[%c0_8, %c0_9] : memref<104x128xf32, #tpu.memory_space<vmem>>, vector<1x32xf32>
    %cst_10 = arith.constant dense<0.000000e+00> : vector<32x4xf32>
    %11 = tpu.matmul %1, %0, %cst_10 {dimension_numbers = #tpu.dot_dimension_numbers<[1], [0], [0], [1], [0, 0, 1, 1], [], []>} : vector<32x32xbf16>, vector<32x4xbf16>, vector<32x4xf32> -> vector<32x4xf32>
    %12 = arith.truncf %11 : vector<32x4xf32> to vector<32x4xbf16>
    %13 = tpu.concatenate %12, %0 in 1 : vector<32x4xbf16>, vector<32x4xbf16> -> vector<32x8xbf16>
    %cst_11 = arith.constant dense<0.000000e+00> : vector<32x32xf32>
    %14 = tpu.matmul %13, %9, %cst_11 {dimension_numbers = #tpu.dot_dimension_numbers<[1], [0], [0], [1], [0, 0, 1, 1], [], []>} : vector<32x8xbf16>, vector<8x32xbf16>, vector<32x32xf32> -> vector<32x32xf32>
    %15 = vector.broadcast %10 : vector<1x32xf32> to vector<32x32xf32>
    %16 = arith.addf %14, %15 : vector<32x32xf32>
    %cst_12 = arith.constant 0.000000e+00 : f32
    %17 = vector.broadcast %cst_12 : f32 to vector<32x32xf32>
    %18 = arith.maximumf %16, %17 : vector<32x32xf32>
    %c24 = arith.constant 24 : index
    %c0_13 = arith.constant 0 : index
    %19 = vector.load %arg4[%c24, %c0_13] : memref<104x128xf32, #tpu.memory_space<vmem>>, vector<1x32xf32>
    %20 = vector.shape_cast %2 : vector<32x1xf32> to vector<32xf32>
    %21 = vector.broadcast %19 : vector<1x32xf32> to vector<32x32xf32>
    %22 = arith.mulf %18, %21 : vector<32x32xf32>
    %cst_14 = arith.constant dense<0.000000e+00> : vector<32xf32>
    %23 = vector.multi_reduction <add>, %22, %cst_14 [1] : vector<32x32xf32> to vector<32xf32>
    %24 = math.tanh %23 : vector<32xf32>
    %cst_15 = arith.constant 0.000000e+00 : f32
    %25 = vector.broadcast %cst_15 : f32 to vector<32xf32>
    %26 = arith.cmpf ogt, %20, %25 : vector<32xf32>
    %cst_16 = arith.constant -2.000000e+00 : f32
    %27 = vector.broadcast %cst_16 : f32 to vector<32xf32>
    %28 = arith.select %26, %24, %27 : vector<32xi1>, vector<32xf32>
    %29 = vector.shape_cast %28 : vector<32xf32> to vector<1x32xf32>
    %30 = vector.shape_cast %28 : vector<32xf32> to vector<32x1xf32>
    %31 = vector.broadcast %29 : vector<1x32xf32> to vector<32x32xf32>
    %32 = vector.broadcast %30 : vector<32x1xf32> to vector<32x32xf32>
    %33 = arith.cmpf ogt, %31, %32 : vector<32x32xf32>
    %34 = vector.shape_cast %28 : vector<32xf32> to vector<1x32xf32>
    %35 = vector.shape_cast %28 : vector<32xf32> to vector<32x1xf32>
    %36 = vector.broadcast %34 : vector<1x32xf32> to vector<32x32xf32>
    %37 = vector.broadcast %35 : vector<32x1xf32> to vector<32x32xf32>
    %38 = arith.cmpf oeq, %36, %37 : vector<32x32xf32>
    %39 = arith.andi %38, %8 : vector<32x32xi1>
    %40 = arith.ori %33, %39 : vector<32x32xi1>
    %41 = arith.andi %5, %40 : vector<32x32xi1>
    %cst_17 = arith.constant 1.000000e+00 : f32
    %cst_18 = arith.constant 0.000000e+00 : f32
    %42 = vector.broadcast %cst_17 : f32 to vector<32x32xf32>
    %43 = vector.broadcast %cst_18 : f32 to vector<32x32xf32>
    %44 = arith.select %41, %42, %43 : vector<32x32xi1>, vector<32x32xf32>
    %cst_19 = arith.constant dense<0.000000e+00> : vector<32xf32>
    %45 = vector.multi_reduction <add>, %44, %cst_19 [1] : vector<32x32xf32> to vector<32xf32>
    %46 = vector.shape_cast %20 : vector<32xf32> to vector<1x32xf32>
    %47 = vector.broadcast %46 : vector<1x32xf32> to vector<32x32xf32>
    %48 = arith.mulf %3, %47 : vector<32x32xf32>
    %cst_20 = arith.constant dense<0.000000e+00> : vector<32xf32>
    %49 = vector.multi_reduction <add>, %48, %cst_20 [1] : vector<32x32xf32> to vector<32xf32>
    %cst_21 = arith.constant 4.000000e+00 : f32
    %50 = vector.broadcast %cst_21 : f32 to vector<32xf32>
    %51 = arith.mulf %50, %49 : vector<32xf32>
    %cst_22 = arith.constant 4.000000e+00 : f32
    %52 = vector.broadcast %cst_22 : f32 to vector<32xf32>
    %53 = arith.addf %51, %52 : vector<32xf32>
    %cst_23 = arith.constant 5.000000e+00 : f32
    %54 = vector.broadcast %cst_23 : f32 to vector<32xf32>
    %55 = arith.divf %53, %54 : vector<32xf32>
    %56 = math.floor %55 : vector<32xf32>
    %57 = arith.cmpf olt, %45, %56 : vector<32xf32>
    %cst_24 = arith.constant 0.000000e+00 : f32
    %58 = vector.broadcast %cst_24 : f32 to vector<32xf32>
    %59 = arith.cmpf ogt, %20, %58 : vector<32xf32>
    %60 = arith.andi %57, %59 : vector<32xi1>
    %cst_25 = arith.constant 1.000000e+00 : f32
    %cst_26 = arith.constant 0.000000e+00 : f32
    %61 = vector.broadcast %cst_25 : f32 to vector<32xf32>
    %62 = vector.broadcast %cst_26 : f32 to vector<32xf32>
    %63 = arith.select %60, %61, %62 : vector<32xi1>, vector<32xf32>
    %64 = vector.shape_cast %63 : vector<32xf32> to vector<32x1xf32>
    %65 = vector.shape_cast %24 : vector<32xf32> to vector<32x1xf32>
    %66 = vector.broadcast %65 : vector<32x1xf32> to vector<32x32xf32>
    %67 = arith.mulf %18, %66 : vector<32x32xf32>
    %68 = vector.broadcast %64 : vector<32x1xf32> to vector<32x32xf32>
    %69 = arith.mulf %67, %68 : vector<32x32xf32>
    %70 = arith.truncf %64 : vector<32x1xf32> to vector<32x1xbf16>
    %71 = vector.broadcast %70 : vector<32x1xbf16> to vector<32x32xbf16>
    %72 = arith.mulf %1, %71 : vector<32x32xbf16>
    %73 = vector.shape_cast %63 : vector<32xf32> to vector<1x32xf32>
    %74 = arith.truncf %73 : vector<1x32xf32> to vector<1x32xbf16>
    %75 = vector.broadcast %74 : vector<1x32xbf16> to vector<32x32xbf16>
    %76 = arith.mulf %72, %75 : vector<32x32xbf16>
    %77 = vector.shape_cast %69 : vector<32x32xf32> to vector<2x16x32xf32>
    %78 = vector.shape_cast %64 : vector<32x1xf32> to vector<2x16x1xf32>
    %cst_27 = arith.constant 0.000000e+00 : f32
    %79 = vector.broadcast %cst_27 : f32 to vector<2x16x1xf32>
    %80 = arith.cmpf ogt, %78, %79 : vector<2x16x1xf32>
    %cst_28 = arith.constant -1.000000e+30 : f32
    %81 = vector.shape_cast %80 : vector<2x16x1xi1> to vector<2x16x1xi1>
    %82 = vector.broadcast %81 : vector<2x16x1xi1> to vector<2x16x32xi1>
    %83 = vector.broadcast %cst_28 : f32 to vector<2x16x32xf32>
    %84 = arith.select %82, %77, %83 : vector<2x16x32xi1>, vector<2x16x32xf32>
    %cst_29 = arith.constant dense<0xFF800000> : vector<2x32xf32>
    %85 = vector.multi_reduction <maximumf>, %84, %cst_29 [1] : vector<2x16x32xf32> to vector<2x32xf32>
    %cst_30 = arith.constant dense<0.000000e+00> : vector<2x1xf32>
    %86 = vector.multi_reduction <add>, %78, %cst_30 [1] : vector<2x16x1xf32> to vector<2x1xf32>
    %cst_31 = arith.constant 1.000000e+00 : f32
    %87 = vector.broadcast %cst_31 : f32 to vector<2x1xf32>
    %88 = arith.maximumf %86, %87 : vector<2x1xf32>
    %89 = vector.broadcast %78 : vector<2x16x1xf32> to vector<2x16x32xf32>
    %90 = arith.mulf %77, %89 : vector<2x16x32xf32>
    %cst_32 = arith.constant dense<0.000000e+00> : vector<2x32xf32>
    %91 = vector.multi_reduction <add>, %90, %cst_32 [1] : vector<2x16x32xf32> to vector<2x32xf32>
    %92 = vector.broadcast %88 : vector<2x1xf32> to vector<2x32xf32>
    %93 = arith.divf %91, %92 : vector<2x32xf32>
    %94 = tpu.concatenate %85, %93 in 1 : vector<2x32xf32>, vector<2x32xf32> -> vector<2x64xf32>
    %c16 = arith.constant 16 : index
    %c0_33 = arith.constant 0 : index
    %95 = vector.load %arg3[%c16, %c0_33] : memref<256x128xbf16, #tpu.memory_space<vmem>>, vector<64x32xbf16>
    %c8 = arith.constant 8 : index
    %c0_34 = arith.constant 0 : index
    %96 = vector.load %arg4[%c8, %c0_34] : memref<104x128xf32, #tpu.memory_space<vmem>>, vector<1x32xf32>
    %97 = arith.truncf %69 : vector<32x32xf32> to vector<32x32xbf16>
    %cst_35 = arith.constant dense<0.000000e+00> : vector<32x32xf32>
    %98 = tpu.matmul %76, %97, %cst_35 {dimension_numbers = #tpu.dot_dimension_numbers<[1], [0], [0], [1], [0, 0, 1, 1], [], []>} : vector<32x32xbf16>, vector<32x32xbf16>, vector<32x32xf32> -> vector<32x32xf32>
    %99 = arith.truncf %98 : vector<32x32xf32> to vector<32x32xbf16>
    %100 = tpu.concatenate %99, %97 in 1 : vector<32x32xbf16>, vector<32x32xbf16> -> vector<32x64xbf16>
    %cst_36 = arith.constant dense<0.000000e+00> : vector<32x32xf32>
    %101 = tpu.matmul %100, %95, %cst_36 {dimension_numbers = #tpu.dot_dimension_numbers<[1], [0], [0], [1], [0, 0, 1, 1], [], []>} : vector<32x64xbf16>, vector<64x32xbf16>, vector<32x32xf32> -> vector<32x32xf32>
    %102 = vector.broadcast %96 : vector<1x32xf32> to vector<32x32xf32>
    %103 = arith.addf %101, %102 : vector<32x32xf32>
    %cst_37 = arith.constant 0.000000e+00 : f32
    %104 = vector.broadcast %cst_37 : f32 to vector<32x32xf32>
    %105 = arith.maximumf %103, %104 : vector<32x32xf32>
    %c32 = arith.constant 32 : index
    %c0_38 = arith.constant 0 : index
    %106 = vector.load %arg4[%c32, %c0_38] : memref<104x128xf32, #tpu.memory_space<vmem>>, vector<1x32xf32>
    %107 = vector.shape_cast %64 : vector<32x1xf32> to vector<32xf32>
    %108 = vector.broadcast %106 : vector<1x32xf32> to vector<32x32xf32>
    %109 = arith.mulf %105, %108 : vector<32x32xf32>
    %cst_39 = arith.constant dense<0.000000e+00> : vector<32xf32>
    %110 = vector.multi_reduction <add>, %109, %cst_39 [1] : vector<32x32xf32> to vector<32xf32>
    %111 = math.tanh %110 : vector<32xf32>
    %cst_40 = arith.constant 0.000000e+00 : f32
    %112 = vector.broadcast %cst_40 : f32 to vector<32xf32>
    %113 = arith.cmpf ogt, %107, %112 : vector<32xf32>
    %cst_41 = arith.constant -2.000000e+00 : f32
    %114 = vector.broadcast %cst_41 : f32 to vector<32xf32>
    %115 = arith.select %113, %111, %114 : vector<32xi1>, vector<32xf32>
    %116 = vector.shape_cast %115 : vector<32xf32> to vector<1x32xf32>
    %117 = vector.shape_cast %115 : vector<32xf32> to vector<32x1xf32>
    %118 = vector.broadcast %116 : vector<1x32xf32> to vector<32x32xf32>
    %119 = vector.broadcast %117 : vector<32x1xf32> to vector<32x32xf32>
    %120 = arith.cmpf ogt, %118, %119 : vector<32x32xf32>
    %121 = vector.shape_cast %115 : vector<32xf32> to vector<1x32xf32>
    %122 = vector.shape_cast %115 : vector<32xf32> to vector<32x1xf32>
    %123 = vector.broadcast %121 : vector<1x32xf32> to vector<32x32xf32>
    %124 = vector.broadcast %122 : vector<32x1xf32> to vector<32x32xf32>
    %125 = arith.cmpf oeq, %123, %124 : vector<32x32xf32>
    %126 = arith.andi %125, %8 : vector<32x32xi1>
    %127 = arith.ori %120, %126 : vector<32x32xi1>
    %128 = arith.andi %5, %127 : vector<32x32xi1>
    %cst_42 = arith.constant 1.000000e+00 : f32
    %cst_43 = arith.constant 0.000000e+00 : f32
    %129 = vector.broadcast %cst_42 : f32 to vector<32x32xf32>
    %130 = vector.broadcast %cst_43 : f32 to vector<32x32xf32>
    %131 = arith.select %128, %129, %130 : vector<32x32xi1>, vector<32x32xf32>
    %cst_44 = arith.constant dense<0.000000e+00> : vector<32xf32>
    %132 = vector.multi_reduction <add>, %131, %cst_44 [1] : vector<32x32xf32> to vector<32xf32>
    %133 = vector.shape_cast %107 : vector<32xf32> to vector<1x32xf32>
    %134 = vector.broadcast %133 : vector<1x32xf32> to vector<32x32xf32>
    %135 = arith.mulf %3, %134 : vector<32x32xf32>
    %cst_45 = arith.constant dense<0.000000e+00> : vector<32xf32>
    %136 = vector.multi_reduction <add>, %135, %cst_45 [1] : vector<32x32xf32> to vector<32xf32>
    %cst_46 = arith.constant 4.000000e+00 : f32
    %137 = vector.broadcast %cst_46 : f32 to vector<32xf32>
    %138 = arith.mulf %137, %136 : vector<32xf32>
    %cst_47 = arith.constant 4.000000e+00 : f32
    %139 = vector.broadcast %cst_47 : f32 to vector<32xf32>
    %140 = arith.addf %138, %139 : vector<32xf32>
    %cst_48 = arith.constant 5.000000e+00 : f32
    %141 = vector.broadcast %cst_48 : f32 to vector<32xf32>
    %142 = arith.divf %140, %141 : vector<32xf32>
    %143 = math.floor %142 : vector<32xf32>
    %144 = arith.cmpf olt, %132, %143 : vector<32xf32>
    %cst_49 = arith.constant 0.000000e+00 : f32
    %145 = vector.broadcast %cst_49 : f32 to vector<32xf32>
    %146 = arith.cmpf ogt, %107, %145 : vector<32xf32>
    %147 = arith.andi %144, %146 : vector<32xi1>
    %cst_50 = arith.constant 1.000000e+00 : f32
    %cst_51 = arith.constant 0.000000e+00 : f32
    %148 = vector.broadcast %cst_50 : f32 to vector<32xf32>
    %149 = vector.broadcast %cst_51 : f32 to vector<32xf32>
    %150 = arith.select %147, %148, %149 : vector<32xi1>, vector<32xf32>
    %151 = vector.shape_cast %150 : vector<32xf32> to vector<32x1xf32>
    %152 = vector.shape_cast %111 : vector<32xf32> to vector<32x1xf32>
    %153 = vector.broadcast %152 : vector<32x1xf32> to vector<32x32xf32>
    %154 = arith.mulf %105, %153 : vector<32x32xf32>
    %155 = vector.broadcast %151 : vector<32x1xf32> to vector<32x32xf32>
    %156 = arith.mulf %154, %155 : vector<32x32xf32>
    %157 = arith.truncf %151 : vector<32x1xf32> to vector<32x1xbf16>
    %158 = vector.broadcast %157 : vector<32x1xbf16> to vector<32x32xbf16>
    %159 = arith.mulf %76, %158 : vector<32x32xbf16>
    %160 = vector.shape_cast %150 : vector<32xf32> to vector<1x32xf32>
    %161 = arith.truncf %160 : vector<1x32xf32> to vector<1x32xbf16>
    %162 = vector.broadcast %161 : vector<1x32xbf16> to vector<32x32xbf16>
    %163 = arith.mulf %159, %162 : vector<32x32xbf16>
    %164 = vector.shape_cast %156 : vector<32x32xf32> to vector<2x16x32xf32>
    %165 = vector.shape_cast %151 : vector<32x1xf32> to vector<2x16x1xf32>
    %cst_52 = arith.constant 0.000000e+00 : f32
    %166 = vector.broadcast %cst_52 : f32 to vector<2x16x1xf32>
    %167 = arith.cmpf ogt, %165, %166 : vector<2x16x1xf32>
    %cst_53 = arith.constant -1.000000e+30 : f32
    %168 = vector.shape_cast %167 : vector<2x16x1xi1> to vector<2x16x1xi1>
    %169 = vector.broadcast %168 : vector<2x16x1xi1> to vector<2x16x32xi1>
    %170 = vector.broadcast %cst_53 : f32 to vector<2x16x32xf32>
    %171 = arith.select %169, %164, %170 : vector<2x16x32xi1>, vector<2x16x32xf32>
    %cst_54 = arith.constant dense<0xFF800000> : vector<2x32xf32>
    %172 = vector.multi_reduction <maximumf>, %171, %cst_54 [1] : vector<2x16x32xf32> to vector<2x32xf32>
    %cst_55 = arith.constant dense<0.000000e+00> : vector<2x1xf32>
    %173 = vector.multi_reduction <add>, %165, %cst_55 [1] : vector<2x16x1xf32> to vector<2x1xf32>
    %cst_56 = arith.constant 1.000000e+00 : f32
    %174 = vector.broadcast %cst_56 : f32 to vector<2x1xf32>
    %175 = arith.maximumf %173, %174 : vector<2x1xf32>
    %176 = vector.broadcast %165 : vector<2x16x1xf32> to vector<2x16x32xf32>
    %177 = arith.mulf %164, %176 : vector<2x16x32xf32>
    %cst_57 = arith.constant dense<0.000000e+00> : vector<2x32xf32>
    %178 = vector.multi_reduction <add>, %177, %cst_57 [1] : vector<2x16x32xf32> to vector<2x32xf32>
    %179 = vector.broadcast %175 : vector<2x1xf32> to vector<2x32xf32>
    %180 = arith.divf %178, %179 : vector<2x32xf32>
    %181 = tpu.concatenate %172, %180 in 1 : vector<2x32xf32>, vector<2x32xf32> -> vector<2x64xf32>
    %182 = arith.addf %94, %181 : vector<2x64xf32>
    %c80 = arith.constant 80 : index
    %c0_58 = arith.constant 0 : index
    %183 = vector.load %arg3[%c80, %c0_58] : memref<256x128xbf16, #tpu.memory_space<vmem>>, vector<64x32xbf16>
    %c16_59 = arith.constant 16 : index
    %c0_60 = arith.constant 0 : index
    %184 = vector.load %arg4[%c16_59, %c0_60] : memref<104x128xf32, #tpu.memory_space<vmem>>, vector<1x32xf32>
    %185 = arith.truncf %156 : vector<32x32xf32> to vector<32x32xbf16>
    %cst_61 = arith.constant dense<0.000000e+00> : vector<32x32xf32>
    %186 = tpu.matmul %163, %185, %cst_61 {dimension_numbers = #tpu.dot_dimension_numbers<[1], [0], [0], [1], [0, 0, 1, 1], [], []>} : vector<32x32xbf16>, vector<32x32xbf16>, vector<32x32xf32> -> vector<32x32xf32>
    %187 = arith.truncf %186 : vector<32x32xf32> to vector<32x32xbf16>
    %188 = tpu.concatenate %187, %185 in 1 : vector<32x32xbf16>, vector<32x32xbf16> -> vector<32x64xbf16>
    %cst_62 = arith.constant dense<0.000000e+00> : vector<32x32xf32>
    %189 = tpu.matmul %188, %183, %cst_62 {dimension_numbers = #tpu.dot_dimension_numbers<[1], [0], [0], [1], [0, 0, 1, 1], [], []>} : vector<32x64xbf16>, vector<64x32xbf16>, vector<32x32xf32> -> vector<32x32xf32>
    %190 = vector.broadcast %184 : vector<1x32xf32> to vector<32x32xf32>
    %191 = arith.addf %189, %190 : vector<32x32xf32>
    %cst_63 = arith.constant 0.000000e+00 : f32
    %192 = vector.broadcast %cst_63 : f32 to vector<32x32xf32>
    %193 = arith.maximumf %191, %192 : vector<32x32xf32>
    %c40 = arith.constant 40 : index
    %c0_64 = arith.constant 0 : index
    %194 = vector.load %arg4[%c40, %c0_64] : memref<104x128xf32, #tpu.memory_space<vmem>>, vector<1x32xf32>
    %195 = vector.shape_cast %151 : vector<32x1xf32> to vector<32xf32>
    %196 = vector.broadcast %194 : vector<1x32xf32> to vector<32x32xf32>
    %197 = arith.mulf %193, %196 : vector<32x32xf32>
    %cst_65 = arith.constant dense<0.000000e+00> : vector<32xf32>
    %198 = vector.multi_reduction <add>, %197, %cst_65 [1] : vector<32x32xf32> to vector<32xf32>
    %199 = math.tanh %198 : vector<32xf32>
    %cst_66 = arith.constant 0.000000e+00 : f32
    %200 = vector.broadcast %cst_66 : f32 to vector<32xf32>
    %201 = arith.cmpf ogt, %195, %200 : vector<32xf32>
    %cst_67 = arith.constant -2.000000e+00 : f32
    %202 = vector.broadcast %cst_67 : f32 to vector<32xf32>
    %203 = arith.select %201, %199, %202 : vector<32xi1>, vector<32xf32>
    %204 = vector.shape_cast %203 : vector<32xf32> to vector<1x32xf32>
    %205 = vector.shape_cast %203 : vector<32xf32> to vector<32x1xf32>
    %206 = vector.broadcast %204 : vector<1x32xf32> to vector<32x32xf32>
    %207 = vector.broadcast %205 : vector<32x1xf32> to vector<32x32xf32>
    %208 = arith.cmpf ogt, %206, %207 : vector<32x32xf32>
    %209 = vector.shape_cast %203 : vector<32xf32> to vector<1x32xf32>
    %210 = vector.shape_cast %203 : vector<32xf32> to vector<32x1xf32>
    %211 = vector.broadcast %209 : vector<1x32xf32> to vector<32x32xf32>
    %212 = vector.broadcast %210 : vector<32x1xf32> to vector<32x32xf32>
    %213 = arith.cmpf oeq, %211, %212 : vector<32x32xf32>
    %214 = arith.andi %213, %8 : vector<32x32xi1>
    %215 = arith.ori %208, %214 : vector<32x32xi1>
    %216 = arith.andi %5, %215 : vector<32x32xi1>
    %cst_68 = arith.constant 1.000000e+00 : f32
    %cst_69 = arith.constant 0.000000e+00 : f32
    %217 = vector.broadcast %cst_68 : f32 to vector<32x32xf32>
    %218 = vector.broadcast %cst_69 : f32 to vector<32x32xf32>
    %219 = arith.select %216, %217, %218 : vector<32x32xi1>, vector<32x32xf32>
    %cst_70 = arith.constant dense<0.000000e+00> : vector<32xf32>
    %220 = vector.multi_reduction <add>, %219, %cst_70 [1] : vector<32x32xf32> to vector<32xf32>
    %221 = vector.shape_cast %195 : vector<32xf32> to vector<1x32xf32>
    %222 = vector.broadcast %221 : vector<1x32xf32> to vector<32x32xf32>
    %223 = arith.mulf %3, %222 : vector<32x32xf32>
    %cst_71 = arith.constant dense<0.000000e+00> : vector<32xf32>
    %224 = vector.multi_reduction <add>, %223, %cst_71 [1] : vector<32x32xf32> to vector<32xf32>
    %cst_72 = arith.constant 4.000000e+00 : f32
    %225 = vector.broadcast %cst_72 : f32 to vector<32xf32>
    %226 = arith.mulf %225, %224 : vector<32xf32>
    %cst_73 = arith.constant 4.000000e+00 : f32
    %227 = vector.broadcast %cst_73 : f32 to vector<32xf32>
    %228 = arith.addf %226, %227 : vector<32xf32>
    %cst_74 = arith.constant 5.000000e+00 : f32
    %229 = vector.broadcast %cst_74 : f32 to vector<32xf32>
    %230 = arith.divf %228, %229 : vector<32xf32>
    %231 = math.floor %230 : vector<32xf32>
    %232 = arith.cmpf olt, %220, %231 : vector<32xf32>
    %cst_75 = arith.constant 0.000000e+00 : f32
    %233 = vector.broadcast %cst_75 : f32 to vector<32xf32>
    %234 = arith.cmpf ogt, %195, %233 : vector<32xf32>
    %235 = arith.andi %232, %234 : vector<32xi1>
    %cst_76 = arith.constant 1.000000e+00 : f32
    %cst_77 = arith.constant 0.000000e+00 : f32
    %236 = vector.broadcast %cst_76 : f32 to vector<32xf32>
    %237 = vector.broadcast %cst_77 : f32 to vector<32xf32>
    %238 = arith.select %235, %236, %237 : vector<32xi1>, vector<32xf32>
    %239 = vector.shape_cast %238 : vector<32xf32> to vector<32x1xf32>
    %240 = vector.shape_cast %199 : vector<32xf32> to vector<32x1xf32>
    %241 = vector.broadcast %240 : vector<32x1xf32> to vector<32x32xf32>
    %242 = arith.mulf %193, %241 : vector<32x32xf32>
    %243 = vector.broadcast %239 : vector<32x1xf32> to vector<32x32xf32>
    %244 = arith.mulf %242, %243 : vector<32x32xf32>
    %245 = vector.shape_cast %244 : vector<32x32xf32> to vector<2x16x32xf32>
    %246 = vector.shape_cast %239 : vector<32x1xf32> to vector<2x16x1xf32>
    %cst_78 = arith.constant 0.000000e+00 : f32
    %247 = vector.broadcast %cst_78 : f32 to vector<2x16x1xf32>
    %248 = arith.cmpf ogt, %246, %247 : vector<2x16x1xf32>
    %cst_79 = arith.constant -1.000000e+30 : f32
    %249 = vector.shape_cast %248 : vector<2x16x1xi1> to vector<2x16x1xi1>
    %250 = vector.broadcast %249 : vector<2x16x1xi1> to vector<2x16x32xi1>
    %251 = vector.broadcast %cst_79 : f32 to vector<2x16x32xf32>
    %252 = arith.select %250, %245, %251 : vector<2x16x32xi1>, vector<2x16x32xf32>
    %cst_80 = arith.constant dense<0xFF800000> : vector<2x32xf32>
    %253 = vector.multi_reduction <maximumf>, %252, %cst_80 [1] : vector<2x16x32xf32> to vector<2x32xf32>
    %cst_81 = arith.constant dense<0.000000e+00> : vector<2x1xf32>
    %254 = vector.multi_reduction <add>, %246, %cst_81 [1] : vector<2x16x1xf32> to vector<2x1xf32>
    %cst_82 = arith.constant 1.000000e+00 : f32
    %255 = vector.broadcast %cst_82 : f32 to vector<2x1xf32>
    %256 = arith.maximumf %254, %255 : vector<2x1xf32>
    %257 = vector.broadcast %246 : vector<2x16x1xf32> to vector<2x16x32xf32>
    %258 = arith.mulf %245, %257 : vector<2x16x32xf32>
    %cst_83 = arith.constant dense<0.000000e+00> : vector<2x32xf32>
    %259 = vector.multi_reduction <add>, %258, %cst_83 [1] : vector<2x16x32xf32> to vector<2x32xf32>
    %260 = vector.broadcast %256 : vector<2x1xf32> to vector<2x32xf32>
    %261 = arith.divf %259, %260 : vector<2x32xf32>
    %262 = tpu.concatenate %253, %261 in 1 : vector<2x32xf32>, vector<2x32xf32> -> vector<2x64xf32>
    %263 = arith.addf %182, %262 : vector<2x64xf32>
    %cst_84 = arith.constant 0.000000e+00 : f32
    %264 = vector.broadcast %cst_84 : f32 to vector<6x64xf32>
    %265 = tpu.concatenate %263, %264 in 0 : vector<2x64xf32>, vector<6x64xf32> -> vector<8x64xf32>
    %c144 = arith.constant 144 : index
    %c0_85 = arith.constant 0 : index
    %266 = vector.load %arg3[%c144, %c0_85] : memref<256x128xbf16, #tpu.memory_space<vmem>>, vector<64x32xbf16>
    %267 = arith.truncf %265 : vector<8x64xf32> to vector<8x64xbf16>
    %cst_86 = arith.constant dense<0.000000e+00> : vector<8x32xf32>
    %268 = tpu.matmul %267, %266, %cst_86 {dimension_numbers = #tpu.dot_dimension_numbers<[1], [0], [0], [1], [0, 0, 1, 1], [], []>} : vector<8x64xbf16>, vector<64x32xbf16>, vector<8x32xf32> -> vector<8x32xf32>
    %c48 = arith.constant 48 : index
    %c0_87 = arith.constant 0 : index
    %269 = vector.load %arg4[%c48, %c0_87] : memref<104x128xf32, #tpu.memory_space<vmem>>, vector<1x32xf32>
    %270 = vector.broadcast %269 : vector<1x32xf32> to vector<8x32xf32>
    %271 = arith.addf %268, %270 : vector<8x32xf32>
    %cst_88 = arith.constant 0.000000e+00 : f32
    %272 = vector.broadcast %cst_88 : f32 to vector<8x32xf32>
    %273 = arith.maximumf %271, %272 : vector<8x32xf32>
    %c208 = arith.constant 208 : index
    %c0_89 = arith.constant 0 : index
    %274 = vector.load %arg3[%c208, %c0_89] : memref<256x128xbf16, #tpu.memory_space<vmem>>, vector<32x16xbf16>
    %275 = arith.truncf %273 : vector<8x32xf32> to vector<8x32xbf16>
    %cst_90 = arith.constant dense<0.000000e+00> : vector<8x16xf32>
    %276 = tpu.matmul %275, %274, %cst_90 {dimension_numbers = #tpu.dot_dimension_numbers<[1], [0], [0], [1], [0, 0, 1, 1], [], []>} : vector<8x32xbf16>, vector<32x16xbf16>, vector<8x16xf32> -> vector<8x16xf32>
    %c56 = arith.constant 56 : index
    %c0_91 = arith.constant 0 : index
    %277 = vector.load %arg4[%c56, %c0_91] : memref<104x128xf32, #tpu.memory_space<vmem>>, vector<1x16xf32>
    %278 = vector.broadcast %277 : vector<1x16xf32> to vector<8x16xf32>
    %279 = arith.addf %276, %278 : vector<8x16xf32>
    %cst_92 = arith.constant 0.000000e+00 : f32
    %280 = vector.broadcast %cst_92 : f32 to vector<8x16xf32>
    %281 = arith.maximumf %279, %280 : vector<8x16xf32>
    %c240 = arith.constant 240 : index
    %c0_93 = arith.constant 0 : index
    %282 = vector.load %arg3[%c240, %c0_93] : memref<256x128xbf16, #tpu.memory_space<vmem>>, vector<16x128xbf16>
    %283 = arith.truncf %281 : vector<8x16xf32> to vector<8x16xbf16>
    %cst_94 = arith.constant dense<0.000000e+00> : vector<8x128xf32>
    %284 = tpu.matmul %283, %282, %cst_94 {dimension_numbers = #tpu.dot_dimension_numbers<[1], [0], [0], [1], [0, 0, 1, 1], [], []>} : vector<8x16xbf16>, vector<16x128xbf16>, vector<8x128xf32> -> vector<8x128xf32>
    %c64 = arith.constant 64 : index
    %c0_95 = arith.constant 0 : index
    %285 = vector.load %arg4[%c64, %c0_95] : memref<104x128xf32, #tpu.memory_space<vmem>>, vector<1x128xf32>
    %286 = vector.broadcast %285 : vector<1x128xf32> to vector<8x128xf32>
    %287 = arith.addf %284, %286 : vector<8x128xf32>
    %cst_96 = arith.constant dense<0xFF800000> : vector<8xf32>
    %288 = vector.multi_reduction <maximumf>, %287, %cst_96 [1] : vector<8x128xf32> to vector<8xf32>
    %289 = vector.shape_cast %288 : vector<8xf32> to vector<8x1xf32>
    %290 = vector.broadcast %289 : vector<8x1xf32> to vector<8x128xf32>
    %291 = arith.subf %287, %290 : vector<8x128xf32>
    %292 = math.exp %291 : vector<8x128xf32>
    %cst_97 = arith.constant dense<0.000000e+00> : vector<8xf32>
    %293 = vector.multi_reduction <add>, %292, %cst_97 [1] : vector<8x128xf32> to vector<8xf32>
    %294 = vector.shape_cast %293 : vector<8xf32> to vector<8x1xf32>
    %295 = math.log %294 : vector<8x1xf32>
    %296 = arith.addf %289, %295 : vector<8x1xf32>
    %297 = vector.broadcast %296 : vector<8x1xf32> to vector<8x128xf32>
    %298 = arith.subf %287, %297 : vector<8x128xf32>
    %c0_98 = arith.constant 0 : index
    %c0_99 = arith.constant 0 : index
    %299 = vector.load %arg5[%c0_98, %c0_99] : memref<8x128xf32, #tpu.memory_space<vmem>>, vector<8x128xf32>
    tpu.vector_store %arg5[%c0_98, %c0_99], %298 {strides = array<i32>} : memref<8x128xf32, #tpu.memory_space<vmem>>, vector<8x128xf32>,
    return
  }
}

</mosaic_0001>

<llo_original>
// kernel: topknet_forward.1
$region0: #{topknet_forward.1}
  #allocation0 [shape = 'u32[]', space=smem, size = 0x4, offset = 0x4, fixed_abs, tag = 'smem constant byte address 0x4 - core index']
  #allocation1 [shape = 'u32[144,128]{1,0:T(1,128)}', space=vmem, size = 0x12000, scoped, tag = 'internal scratch']
  %s0 = inlined_call_operand.vmem [shape: bf16[32,4], index: 0, kind: input, shape index: {}]
  %s1 = inlined_call_operand.vmem [shape: bf16[32,32], index: 1, kind: input, shape index: {}]
  %s2 = inlined_call_operand.vmem [shape: f32[32,1], index: 2, kind: input, shape index: {}]
  %s3 = inlined_call_operand.vmem [shape: bf16[256,128], index: 3, kind: input, shape index: {}]
  %s4 = inlined_call_operand.vmem [shape: f32[104,128], index: 4, kind: input, shape index: {}]
  %s5 = inlined_call_operand.vmem [shape: f32[8,128], index: 5, kind: output, shape index: {}]
  %s6 = sld [smem:[#allocation0]]
  $region30: #{topknet_forward.1} parent=0
    _
  %s8 = ssub.s32 1, %s6
  %s9 = scalar_select 0, %s8, %s6
  // Predicated region
  $region2: #{topknet_forward.1} parent=0 // pred_check
    _
  $region3: #{topknet_forward.1} parent=0 // pred_check_branch
    %11 = sbr.rel (0) target = $region5
  $region4: #{topknet_forward.1} parent=0 // pred_region
    _
  $region5: #{topknet_forward.1} parent=0 // pred_fallthru
    _
  // Predicated region
  $region6: #{topknet_forward.1} parent=0 // pred_check
    _
  $region7: #{topknet_forward.1} parent=0 // pred_check_branch
    %13 = sbr.rel (0) target = $region9
  $region8: #{topknet_forward.1} parent=0 // pred_region
    _
  $region9: #{topknet_forward.1} parent=0 // pred_fallthru
    _
  // Predicated region
  $region10: #{topknet_forward.1} parent=0 // pred_check
    _
  $region11: #{topknet_forward.1} parent=0 // pred_check_branch
    %15 = sbr.rel (0) target = $region13
  $region12: #{topknet_forward.1} parent=0 // pred_region
    _
  $region13: #{topknet_forward.1} parent=0 // pred_fallthru
    _
  // Predicated region
  $region14: #{topknet_forward.1} parent=0 // pred_check
    _
  $region15: #{topknet_forward.1} parent=0 // pred_check_branch
    %17 = sbr.rel (0) target = $region17
  $region16: #{topknet_forward.1} parent=0 // pred_region
    _
  $region17: #{topknet_forward.1} parent=0 // pred_fallthru
    _
  // Predicated region
  $region18: #{topknet_forward.1} parent=0 // pred_check
    _
  $region19: #{topknet_forward.1} parent=0 // pred_check_branch
    %19 = sbr.rel (0) target = $region21
  $region20: #{topknet_forward.1} parent=0 // pred_region
    _
  $region21: #{topknet_forward.1} parent=0 // pred_fallthru
    _
  %v21 = vld [vmem:[%s0] sm:$0xf]
  %v22 = vld [vmem:[%s0 + $0x4] sm:$0xf]
  %v23 = vld [vmem:[%s0 + $0x8] sm:$0xf]
  %v24 = vld [vmem:[%s0 + $0xc] sm:$0xf]
  %v25 = vld [vmem:[%s1] sm:$0xf]
  %v26 = vld [vmem:[%s1 + $0x4] sm:$0xf]
  %v27 = vld [vmem:[%s1 + $0x8] sm:$0xf]
  %v28 = vld [vmem:[%s1 + $0xc] sm:$0xf]
  %v29 = vld [vmem:[%s2] sm:$0xff]
  %v30 = vld [vmem:[%s2 + $0x8] sm:$0xff]
  %v31 = vld [vmem:[%s2 + $0x10] sm:$0xff]
  %v32 = vld [vmem:[%s2 + $0x18] sm:$0xff]
  %v33 = vld [vmem:[%s4 + $0x48] sm:$0xff]
  %v34 = vld [vmem:[%s4 + $0x50] sm:$0xff]
  %v35 = vld [vmem:[%s4 + $0x58] sm:$0xff]
  %v36 = vld [vmem:[%s4 + $0x60] sm:$0xff]
  %vm37 = vcmp.gt.f32.partialorder %v33, 0.0
  %vm38 = vcmp.gt.f32.partialorder %v34, 0.0
  %vm39 = vcmp.gt.f32.partialorder %v35, 0.0
  %vm40 = vcmp.gt.f32.partialorder %v36, 0.0
  %v41 = vlaneseq
  %v42 = vshrl.u32 %v41, 7
  %v43 = vadd.s32 %v42, 8
  %v44 = vadd.s32 %v42, 16
  %v45 = vadd.s32 %v42, 24
  %v46 = vlaneseq
  %v47 = vand.u32 %v46, 127
  %vm48 = vcmp.lt.s32.totalorder %v47, %v42
  %vm49 = vcmp.lt.s32.totalorder %v47, %v43
  %vm50 = vcmp.lt.s32.totalorder %v47, %v44
  %vm51 = vcmp.lt.s32.totalorder %v47, %v45
  %v52 = vld [vmem:[%s3] sm:$0xf]
  %v53 = vld [vmem:[%s4] sm:$0x1]
  %v58 = vunpack.c.l.b16 %v25
  %v59 = vunpack.c.l.b16 %v26
  %v60 = vunpack.c.l.b16 %v27
  %v61 = vunpack.c.l.b16 %v28
  %v62 = vpack.c.b16 %v59, %v58
  %v63 = vpack.c.b16 %v61, %v60
  %v68 = vunpack.c.l.b16 %v21
  %v69 = vunpack.c.l.b16 %v22
  %v70 = vunpack.c.l.b16 %v23
  %v71 = vunpack.c.l.b16 %v24
  %v72 = vpack.c.b16 %v69, %v68
  %v73 = vpack.c.b16 %v71, %v70
  %vm76 = vcmask 261120
  %v78 = vsel %vm76, %v62, 0
  %v81 = vsel %vm76, %v63, 0
  %83 = vmatprep.subr.bf16.mxu0 0
  %84 = vmatpush1.bf16.msra.mxu0 %v72
  %85 = vmatprep.subr.bf16.mxu0 0
  %86 = vmatpush1.bf16.msra.mxu0 %v73
  %87 = vmatprep.subr.bf16.mxu0 0
  %88 = vmatpush1.bf16.msra.mxu0 0
  %89 = vmatprep.subr.bf16.mxu0 0
  %90 = vmatpush1.bf16.msra.mxu0 0
  %91 = vmatprep.subr.bf16.mxu0 0
  %92 = vmatpush1.bf16.msra.mxu0 0
  %93 = vmatprep.subr.bf16.mxu0 0
  %94 = vmatpush1.bf16.msra.mxu0 0
  %95 = vmatprep.subr.bf16.mxu0 0
  %96 = vmatpush1.bf16.msra.mxu0 0
  %97 = vmatprep.subr.bf16.mxu0 0
  %98 = vmatpush1.bf16.msra.mxu0 0
  %99 = vmatprep.subr.bf16.mxu0 0
  %100 = vmatpush1.bf16.msra.mxu0 0
  %101 = vmatprep.subr.bf16.mxu0 0
  %102 = vmatpush1.bf16.msra.mxu0 0
  %103 = vmatprep.subr.bf16.mxu0 0
  %104 = vmatpush1.bf16.msra.mxu0 0
  %105 = vmatprep.subr.bf16.mxu0 0
  %106 = vmatpush1.bf16.msra.mxu0 0
  %107 = vmatprep.subr.bf16.mxu0 0
  %108 = vmatpush1.bf16.msra.mxu0 0
  %109 = vmatprep.subr.bf16.mxu0 0
  %110 = vmatpush1.bf16.msra.mxu0 0
  %111 = vmatprep.subr.bf16.mxu0 0
  %112 = vmatpush1.bf16.msra.mxu0 0
  %113 = vmatprep.subr.bf16.mxu0 0
  %114 = vmatpush1.bf16.msra.mxu0 0
  %115 = vmatprep.mubr.bf16.mxu0 0
  %116 = vmatmul.mubr.bf16.gmra.mrb[0].mxu0 %v78
  %v117 = vpop.f32.mrb[0].mxu0
  %v118 = vadd.f32 0.0, %v117
  %v119 = vpop.f32.mrb[0].mxu0
  %v120 = vpop.f32.mrb[0].mxu0
  %v121 = vadd.f32 0.0, %v120
  %v122 = vpop.f32.mrb[0].mxu0
  %123 = vmatprep.mubr.bf16.mxu0 0
  %124 = vmatmul.mubr.bf16.gmra.mrb[0].mxu0 %v81
  %v125 = vpop.f32.mrb[0].mxu0
  %v126 = vadd.f32 0.0, %v125
  %v127 = vpop.f32.mrb[0].mxu0
  %v128 = vpop.f32.mrb[0].mxu0
  %v129 = vadd.f32 0.0, %v128
  %v130 = vpop.f32.mrb[0].mxu0
  %131 = vdwg.mxu0
  %v132 = vpack.c.bf16 %v121, %v118
  %v133 = vpack.c.bf16 %v129, %v126
  %134 = vrot.lane.b32.xlu0 %v72, 4
  %v135 = vpop.permute.xlu0 %134
  %136 = vrot.lane.b32.xlu0 %v73, 4
  %v137 = vpop.permute.xlu0 %136
  %vm138 = vcmask 31744
  %v141 = vsel %vm138, %v132, %v135
  %v144 = vsel %vm138, %v133, %v137
  %v145 = vlaneseq
  %v146 = vshrl.u32 %v145, 7
  %v147 = vsub.s32 0, %v146
  %v148 = vrot.slane %v53, %v147
  %vm149 = vcmask 64512
  %v150 = vsel %vm149, %v141, 0
  %v152 = vsel %vm149, %v144, 0
  %vm154 = vcmask 1043456
  %v156 = vsel %vm154, %v52, 0
  %158 = vmatprep.subr.bf16.mxu0 0
  %159 = vmatpush1.bf16.msra.mxu0 %v156
  %160 = vmatprep.subr.bf16.mxu0 0
  %161 = vmatpush1.bf16.msra.mxu0 0
  %162 = vmatprep.subr.bf16.mxu0 0
  %163 = vmatpush1.bf16.msra.mxu0 0
  %164 = vmatprep.subr.bf16.mxu0 0
  %165 = vmatpush1.bf16.msra.mxu0 0
  %166 = vmatprep.subr.bf16.mxu0 0
  %167 = vmatpush1.bf16.msra.mxu0 0
  %168 = vmatprep.subr.bf16.mxu0 0
  %169 = vmatpush1.bf16.msra.mxu0 0
  %170 = vmatprep.subr.bf16.mxu0 0
  %171 = vmatpush1.bf16.msra.mxu0 0
  %172 = vmatprep.subr.bf16.mxu0 0
  %173 = vmatpush1.bf16.msra.mxu0 0
  %174 = vmatprep.subr.bf16.mxu0 0
  %175 = vmatpush1.bf16.msra.mxu0 0
  %176 = vmatprep.subr.bf16.mxu0 0
  %177 = vmatpush1.bf16.msra.mxu0 0
  %178 = vmatprep.subr.bf16.mxu0 0
  %179 = vmatpush1.bf16.msra.mxu0 0
  %180 = vmatprep.subr.bf16.mxu0 0
  %181 = vmatpush1.bf16.msra.mxu0 0
  %182 = vmatprep.subr.bf16.mxu0 0
  %183 = vmatpush1.bf16.msra.mxu0 0
  %184 = vmatprep.subr.bf16.mxu0 0
  %185 = vmatpush1.bf16.msra.mxu0 0
  %186 = vmatprep.subr.bf16.mxu0 0
  %187 = vmatpush1.bf16.msra.mxu0 0
  %188 = vmatprep.subr.bf16.mxu0 0
  %189 = vmatpush1.bf16.msra.mxu0 0
  %190 = vmatprep.mubr.bf16.mxu0 0
  %191 = vmatmul.mubr.bf16.gmra.mrb[0].mxu0 %v150
  %v192 = vpop.f32.mrb[0].mxu0
  %v193 = vadd.f32 %v148, %v192
  %v194 = vpop.f32.mrb[0].mxu0
  %v195 = vpop.f32.mrb[0].mxu0
  %v196 = vadd.f32 %v148, %v195
  %v197 = vpop.f32.mrb[0].mxu0
  %198 = vmatprep.mubr.bf16.mxu0 0
  %199 = vmatmul.mubr.bf16.gmra.mrb[0].mxu0 %v152
  %v200 = vpop.f32.mrb[0].mxu0
  %v201 = vadd.f32 %v148, %v200
  %v202 = vpop.f32.mrb[0].mxu0
  %v203 = vpop.f32.mrb[0].mxu0
  %v204 = vadd.f32 %v148, %v203
  %v205 = vpop.f32.mrb[0].mxu0
  %206 = vdwg.mxu0
  %v207 = vmax.f32 %v193, 0.0
  %v208 = vmax.f32 %v196, 0.0
  %v209 = vmax.f32 %v201, 0.0
  %v210 = vmax.f32 %v204, 0.0
  %v211 = vld [vmem:[%s4 + $0x18] sm:$0x1]
  %v212 = vlaneseq
  %v213 = vshrl.u32 %v212, 7
  %v214 = vsub.s32 0, %v213
  %v215 = vrot.slane %v211, %v214
  %v216 = vmul.f32 %v207, %v215
  %v217 = vmul.f32 %v208, %v215
  %v218 = vmul.f32 %v209, %v215
  %v219 = vmul.f32 %v210, %v215
  %v220 = vsel %vm76, %v216, 0.0
  %221 = vadd.xlane.f32.xlu0 %v220
  %v222 = vpop.xlane.xlu0 %221
  %v223 = vsel %vm76, %v217, 0.0
  %224 = vadd.xlane.f32.xlu0 %v223
  %v225 = vpop.xlane.xlu0 %224
  %v226 = vsel %vm76, %v218, 0.0
  %227 = vadd.xlane.f32.xlu0 %v226
  %v228 = vpop.xlane.xlu0 %227
  %v229 = vsel %vm76, %v219, 0.0
  %230 = vadd.xlane.f32.xlu0 %v229
  %v231 = vpop.xlane.xlu0 %230
  %v232 = vtanh.pop %v222
  %v233 = vtanh.pop %v225
  %v234 = vtanh.pop %v228
  %v235 = vtanh.pop %v231
  %vm236 = vcmp.gt.f32.partialorder %v29, 0.0
  %vm237 = vcmp.gt.f32.partialorder %v30, 0.0
  %vm238 = vcmp.gt.f32.partialorder %v31, 0.0
  %vm239 = vcmp.gt.f32.partialorder %v32, 0.0
  %v240 = vsel %vm236, %v232, -2.0
  %v241 = vsel %vm237, %v233, -2.0
  %v242 = vsel %vm238, %v234, -2.0
  %v243 = vsel %vm239, %v235, -2.0
  %245 = vset.pattern.permute.xlu0 0
  %246 = vperm.xlu0 %245, %v240
  %v247 = vpop.permute.xlu0 %246
  %249 = vset.pattern.permute.xlu0 0
  %250 = vperm.xlu0 %249, %v241
  %v251 = vpop.permute.xlu0 %250
  %253 = vset.pattern.permute.xlu0 0
  %254 = vperm.xlu0 %253, %v242
  %v255 = vpop.permute.xlu0 %254
  %257 = vset.pattern.permute.xlu0 0
  %258 = vperm.xlu0 %257, %v243
  %v259 = vpop.permute.xlu0 %258
  %v260 = vlaneseq
  %v261 = vshrl.u32 %v260, 7
  %v262 = vsub.s32 0, %v261
  %v263 = vrot.slane %v247, %v262
  %v264 = vlaneseq
  %v265 = vshrl.u32 %v264, 7
  %v266 = vsub.s32 1, %v265
  %v267 = vrot.slane %v247, %v266
  %v268 = vlaneseq
  %v269 = vshrl.u32 %v268, 7
  %v270 = vsub.s32 2, %v269
  %v271 = vrot.slane %v247, %v270
  %v272 = vlaneseq
  %v273 = vshrl.u32 %v272, 7
  %v274 = vsub.s32 3, %v273
  %v275 = vrot.slane %v247, %v274
  %v276 = vlaneseq
  %v277 = vshrl.u32 %v276, 7
  %v278 = vsub.s32 4, %v277
  %v279 = vrot.slane %v247, %v278
  %v280 = vlaneseq
  %v281 = vshrl.u32 %v280, 7
  %v282 = vsub.s32 5, %v281
  %v283 = vrot.slane %v247, %v282
  %v284 = vlaneseq
  %v285 = vshrl.u32 %v284, 7
  %v286 = vsub.s32 6, %v285
  %v287 = vrot.slane %v247, %v286
  %v288 = vlaneseq
  %v289 = vshrl.u32 %v288, 7
  %v290 = vsub.s32 7, %v289
  %v291 = vrot.slane %v247, %v290
  %v292 = vlaneseq
  %v293 = vshrl.u32 %v292, 7
  %v294 = vsub.s32 0, %v293
  %v295 = vrot.slane %v251, %v294
  %v296 = vlaneseq
  %v297 = vshrl.u32 %v296, 7
  %v298 = vsub.s32 1, %v297
  %v299 = vrot.slane %v251, %v298
  %v300 = vlaneseq
  %v301 = vshrl.u32 %v300, 7
  %v302 = vsub.s32 2, %v301
  %v303 = vrot.slane %v251, %v302
  %v304 = vlaneseq
  %v305 = vshrl.u32 %v304, 7
  %v306 = vsub.s32 3, %v305
  %v307 = vrot.slane %v251, %v306
  %v308 = vlaneseq
  %v309 = vshrl.u32 %v308, 7
  %v310 = vsub.s32 4, %v309
  %v311 = vrot.slane %v251, %v310
  %v312 = vlaneseq
  %v313 = vshrl.u32 %v312, 7
  %v314 = vsub.s32 5, %v313
  %v315 = vrot.slane %v251, %v314
  %v316 = vlaneseq
  %v317 = vshrl.u32 %v316, 7
  %v318 = vsub.s32 6, %v317
  %v319 = vrot.slane %v251, %v318
  %v320 = vlaneseq
  %v321 = vshrl.u32 %v320, 7
  %v322 = vsub.s32 7, %v321
  %v323 = vrot.slane %v251, %v322
  %v324 = vlaneseq
  %v325 = vshrl.u32 %v324, 7
  %v326 = vsub.s32 0, %v325
  %v327 = vrot.slane %v255, %v326
  %v328 = vlaneseq
  %v329 = vshrl.u32 %v328, 7
  %v330 = vsub.s32 1, %v329
  %v331 = vrot.slane %v255, %v330
  %v332 = vlaneseq
  %v333 = vshrl.u32 %v332, 7
  %v334 = vsub.s32 2, %v333
  %v335 = vrot.slane %v255, %v334
  %v336 = vlaneseq
  %v337 = vshrl.u32 %v336, 7
  %v338 = vsub.s32 3, %v337
  %v339 = vrot.slane %v255, %v338
  %v340 = vlaneseq
  %v341 = vshrl.u32 %v340, 7
  %v342 = vsub.s32 4, %v341
  %v343 = vrot.slane %v255, %v342
  %v344 = vlaneseq
  %v345 = vshrl.u32 %v344, 7
  %v346 = vsub.s32 5, %v345
  %v347 = vrot.slane %v255, %v346
  %v348 = vlaneseq
  %v349 = vshrl.u32 %v348, 7
  %v350 = vsub.s32 6, %v349
  %v351 = vrot.slane %v255, %v350
  %v352 = vlaneseq
  %v353 = vshrl.u32 %v352, 7
  %v354 = vsub.s32 7, %v353
  %v355 = vrot.slane %v255, %v354
  %v356 = vlaneseq
  %v357 = vshrl.u32 %v356, 7
  %v358 = vsub.s32 0, %v357
  %v359 = vrot.slane %v259, %v358
  %v360 = vlaneseq
  %v361 = vshrl.u32 %v360, 7
  %v362 = vsub.s32 1, %v361
  %v363 = vrot.slane %v259, %v362
  %v364 = vlaneseq
  %v365 = vshrl.u32 %v364, 7
  %v366 = vsub.s32 2, %v365
  %v367 = vrot.slane %v259, %v366
  %v368 = vlaneseq
  %v369 = vshrl.u32 %v368, 7
  %v370 = vsub.s32 3, %v369
  %v371 = vrot.slane %v259, %v370
  %v372 = vlaneseq
  %v373 = vshrl.u32 %v372, 7
  %v374 = vsub.s32 4, %v373
  %v375 = vrot.slane %v259, %v374
  %v376 = vlaneseq
  %v377 = vshrl.u32 %v376, 7
  %v378 = vsub.s32 5, %v377
  %v379 = vrot.slane %v259, %v378
  %v380 = vlaneseq
  %v381 = vshrl.u32 %v380, 7
  %v382 = vsub.s32 6, %v381
  %v383 = vrot.slane %v259, %v382
  %v384 = vlaneseq
  %v385 = vshrl.u32 %v384, 7
  %v386 = vsub.s32 7, %v385
  %v387 = vrot.slane %v259, %v386
  %vm420 = vcmp.gt.f32.partialorder %v240, %v263
  %vm421 = vcmp.gt.f32.partialorder %v241, %v263
  %vm422 = vcmp.gt.f32.partialorder %v242, %v263
  %vm423 = vcmp.gt.f32.partialorder %v243, %v263
  %vm424 = vcmp.gt.f32.partialorder %v240, %v267
  %vm425 = vcmp.gt.f32.partialorder %v241, %v267
  %vm426 = vcmp.gt.f32.partialorder %v242, %v267
  %vm427 = vcmp.gt.f32.partialorder %v243, %v267
  %vm428 = vcmp.gt.f32.partialorder %v240, %v271
  %vm429 = vcmp.gt.f32.partialorder %v241, %v271
  %vm430 = vcmp.gt.f32.partialorder %v242, %v271
  %vm431 = vcmp.gt.f32.partialorder %v243, %v271
  %vm432 = vcmp.gt.f32.partialorder %v240, %v275
  %vm433 = vcmp.gt.f32.partialorder %v241, %v275
  %vm434 = vcmp.gt.f32.partialorder %v242, %v275
  %vm435 = vcmp.gt.f32.partialorder %v243, %v275
  %vm436 = vcmp.gt.f32.partialorder %v240, %v279
  %vm437 = vcmp.gt.f32.partialorder %v241, %v279
  %vm438 = vcmp.gt.f32.partialorder %v242, %v279
  %vm439 = vcmp.gt.f32.partialorder %v243, %v279
  %vm440 = vcmp.gt.f32.partialorder %v240, %v283
  %vm441 = vcmp.gt.f32.partialorder %v241, %v283
  %vm442 = vcmp.gt.f32.partialorder %v242, %v283
  %vm443 = vcmp.gt.f32.partialorder %v243, %v283
  %vm444 = vcmp.gt.f32.partialorder %v240, %v287
  %vm445 = vcmp.gt.f32.partialorder %v241, %v287
  %vm446 = vcmp.gt.f32.partialorder %v242, %v287
  %vm447 = vcmp.gt.f32.partialorder %v243, %v287
  %vm448 = vcmp.gt.f32.partialorder %v240, %v291
  %vm449 = vcmp.gt.f32.partialorder %v241, %v291
  %vm450 = vcmp.gt.f32.partialorder %v242, %v291
  %vm451 = vcmp.gt.f32.partialorder %v243, %v291
  %vm452 = vcmp.gt.f32.partialorder %v240, %v295
  %vm453 = vcmp.gt.f32.partialorder %v241, %v295
  %vm454 = vcmp.gt.f32.partialorder %v242, %v295
  %vm455 = vcmp.gt.f32.partialorder %v243, %v295
  %vm456 = vcmp.gt.f32.partialorder %v240, %v299
  %vm457 = vcmp.gt.f32.partialorder %v241, %v299
  %vm458 = vcmp.gt.f32.partialorder %v242, %v299
  %vm459 = vcmp.gt.f32.partialorder %v243, %v299
  %vm460 = vcmp.gt.f32.partialorder %v240, %v303
  %vm461 = vcmp.gt.f32.partialorder %v241, %v303
  %vm462 = vcmp.gt.f32.partialorder %v242, %v303
  %vm463 = vcmp.gt.f32.partialorder %v243, %v303
  %vm464 = vcmp.gt.f32.partialorder %v240, %v307
  %vm465 = vcmp.gt.f32.partialorder %v241, %v307
  %vm466 = vcmp.gt.f32.partialorder %v242, %v307
  %vm467 = vcmp.gt.f32.partialorder %v243, %v307
  %vm468 = vcmp.gt.f32.partialorder %v240, %v311
  %vm469 = vcmp.gt.f32.partialorder %v241, %v311
  %vm470 = vcmp.gt.f32.partialorder %v242, %v311
  %vm471 = vcmp.gt.f32.partialorder %v243, %v311
  %vm472 = vcmp.gt.f32.partialorder %v240, %v315
  %vm473 = vcmp.gt.f32.partialorder %v241, %v315
  %vm474 = vcmp.gt.f32.partialorder %v242, %v315
  %vm475 = vcmp.gt.f32.partialorder %v243, %v315
  %vm476 = vcmp.gt.f32.partialorder %v240, %v319
  %vm477 = vcmp.gt.f32.partialorder %v241, %v319
  %vm478 = vcmp.gt.f32.partialorder %v242, %v319
  %vm479 = vcmp.gt.f32.partialorder %v243, %v319
  %vm480 = vcmp.gt.f32.partialorder %v240, %v323
  %vm481 = vcmp.gt.f32.partialorder %v241, %v323
  %vm482 = vcmp.gt.f32.partialorder %v242, %v323
  %vm483 = vcmp.gt.f32.partialorder %v243, %v323
  %vm484 = vcmp.gt.f32.partialorder %v240, %v327
  %vm485 = vcmp.gt.f32.partialorder %v241, %v327
  %vm486 = vcmp.gt.f32.partialorder %v242, %v327
  %vm487 = vcmp.gt.f32.partialorder %v243, %v327
  %vm488 = vcmp.gt.f32.partialorder %v240, %v331
  %vm489 = vcmp.gt.f32.partialorder %v241, %v331
  %vm490 = vcmp.gt.f32.partialorder %v242, %v331
  %vm491 = vcmp.gt.f32.partialorder %v243, %v331
  %vm492 = vcmp.gt.f32.partialorder %v240, %v335
  %vm493 = vcmp.gt.f32.partialorder %v241, %v335
  %vm494 = vcmp.gt.f32.partialorder %v242, %v335
  %vm495 = vcmp.gt.f32.partialorder %v243, %v335
  %vm496 = vcmp.gt.f32.partialorder %v240, %v339
  %vm497 = vcmp.gt.f32.partialorder %v241, %v339
  %vm498 = vcmp.gt.f32.partialorder %v242, %v339
  %vm499 = vcmp.gt.f32.partialorder %v243, %v339
  %vm500 = vcmp.gt.f32.partialorder %v240, %v343
  %vm501 = vcmp.gt.f32.partialorder %v241, %v343
  %vm502 = vcmp.gt.f32.partialorder %v242, %v343
  %vm503 = vcmp.gt.f32.partialorder %v243, %v343
  %vm504 = vcmp.gt.f32.partialorder %v240, %v347
  %vm505 = vcmp.gt.f32.partialorder %v241, %v347
  %vm506 = vcmp.gt.f32.partialorder %v242, %v347
  %vm507 = vcmp.gt.f32.partialorder %v243, %v347
  %vm508 = vcmp.gt.f32.partialorder %v240, %v351
  %vm509 = vcmp.gt.f32.partialorder %v241, %v351
  %vm510 = vcmp.gt.f32.partialorder %v242, %v351
  %vm511 = vcmp.gt.f32.partialorder %v243, %v351
  %vm512 = vcmp.gt.f32.partialorder %v240, %v355
  %vm513 = vcmp.gt.f32.partialorder %v241, %v355
  %vm514 = vcmp.gt.f32.partialorder %v242, %v355
  %vm515 = vcmp.gt.f32.partialorder %v243, %v355
  %vm516 = vcmp.gt.f32.partialorder %v240, %v359
  %vm517 = vcmp.gt.f32.partialorder %v241, %v359
  %vm518 = vcmp.gt.f32.partialorder %v242, %v359
  %vm519 = vcmp.gt.f32.partialorder %v243, %v359
  %vm520 = vcmp.gt.f32.partialorder %v240, %v363
  %vm521 = vcmp.gt.f32.partialorder %v241, %v363
  %vm522 = vcmp.gt.f32.partialorder %v242, %v363
  %vm523 = vcmp.gt.f32.partialorder %v243, %v363
  %vm524 = vcmp.gt.f32.partialorder %v240, %v367
  %vm525 = vcmp.gt.f32.partialorder %v241, %v367
  %vm526 = vcmp.gt.f32.partialorder %v242, %v367
  %vm527 = vcmp.gt.f32.partialorder %v243, %v367
  %vm528 = vcmp.gt.f32.partialorder %v240, %v371
  %vm529 = vcmp.gt.f32.partialorder %v241, %v371
  %vm530 = vcmp.gt.f32.partialorder %v242, %v371
  %vm531 = vcmp.gt.f32.partialorder %v243, %v371
  %vm532 = vcmp.gt.f32.partialorder %v240, %v375
  %vm533 = vcmp.gt.f32.partialorder %v241, %v375
  %vm534 = vcmp.gt.f32.partialorder %v242, %v375
  %vm535 = vcmp.gt.f32.partialorder %v243, %v375
  %vm536 = vcmp.gt.f32.partialorder %v240, %v379
  %vm537 = vcmp.gt.f32.partialorder %v241, %v379
  %vm538 = vcmp.gt.f32.partialorder %v242, %v379
  %vm539 = vcmp.gt.f32.partialorder %v243, %v379
  %vm540 = vcmp.gt.f32.partialorder %v240, %v383
  %vm541 = vcmp.gt.f32.partialorder %v241, %v383
  %vm542 = vcmp.gt.f32.partialorder %v242, %v383
  %vm543 = vcmp.gt.f32.partialorder %v243, %v383
  %vm544 = vcmp.gt.f32.partialorder %v240, %v387
  %vm545 = vcmp.gt.f32.partialorder %v241, %v387
  %vm546 = vcmp.gt.f32.partialorder %v242, %v387
  %vm547 = vcmp.gt.f32.partialorder %v243, %v387
  %vm548 = vcmp.eq.f32.partialorder %v240, %v263
  %vm549 = vcmp.eq.f32.partialorder %v241, %v263
  %vm550 = vcmp.eq.f32.partialorder %v242, %v263
  %vm551 = vcmp.eq.f32.partialorder %v243, %v263
  %vm552 = vcmp.eq.f32.partialorder %v240, %v267
  %vm553 = vcmp.eq.f32.partialorder %v241, %v267
  %vm554 = vcmp.eq.f32.partialorder %v242, %v267
  %vm555 = vcmp.eq.f32.partialorder %v243, %v267
  %vm556 = vcmp.eq.f32.partialorder %v240, %v271
  %vm557 = vcmp.eq.f32.partialorder %v241, %v271
  %vm558 = vcmp.eq.f32.partialorder %v242, %v271
  %vm559 = vcmp.eq.f32.partialorder %v243, %v271
  %vm560 = vcmp.eq.f32.partialorder %v240, %v275
  %vm561 = vcmp.eq.f32.partialorder %v241, %v275
  %vm562 = vcmp.eq.f32.partialorder %v242, %v275
  %vm563 = vcmp.eq.f32.partialorder %v243, %v275
  %vm564 = vcmp.eq.f32.partialorder %v240, %v279
  %vm565 = vcmp.eq.f32.partialorder %v241, %v279
  %vm566 = vcmp.eq.f32.partialorder %v242, %v279
  %vm567 = vcmp.eq.f32.partialorder %v243, %v279
  %vm568 = vcmp.eq.f32.partialorder %v240, %v283
  %vm569 = vcmp.eq.f32.partialorder %v241, %v283
  %vm570 = vcmp.eq.f32.partialorder %v242, %v283
  %vm571 = vcmp.eq.f32.partialorder %v243, %v283
  %vm572 = vcmp.eq.f32.partialorder %v240, %v287
  %vm573 = vcmp.eq.f32.partialorder %v241, %v287
  %vm574 = vcmp.eq.f32.partialorder %v242, %v287
  %vm575 = vcmp.eq.f32.partialorder %v243, %v287
  %vm576 = vcmp.eq.f32.partialorder %v240, %v291
  %vm577 = vcmp.eq.f32.partialorder %v241, %v291
  %vm578 = vcmp.eq.f32.partialorder %v242, %v291
  %vm579 = vcmp.eq.f32.partialorder %v243, %v291
  %vm580 = vcmp.eq.f32.partialorder %v240, %v295
  %vm581 = vcmp.eq.f32.partialorder %v241, %v295
  %vm582 = vcmp.eq.f32.partialorder %v242, %v295
  %vm583 = vcmp.eq.f32.partialorder %v243, %v295
  %vm584 = vcmp.eq.f32.partialorder %v240, %v299
  %vm585 = vcmp.eq.f32.partialorder %v241, %v299
  %vm586 = vcmp.eq.f32.partialorder %v242, %v299
  %vm587 = vcmp.eq.f32.partialorder %v243, %v299
  %vm588 = vcmp.eq.f32.partialorder %v240, %v303
  %vm589 = vcmp.eq.f32.partialorder %v241, %v303
  %vm590 = vcmp.eq.f32.partialorder %v242, %v303
  %vm591 = vcmp.eq.f32.partialorder %v243, %v303
  %vm592 = vcmp.eq.f32.partialorder %v240, %v307
  %vm593 = vcmp.eq.f32.partialorder %v241, %v307
  %vm594 = vcmp.eq.f32.partialorder %v242, %v307
  %vm595 = vcmp.eq.f32.partialorder %v243, %v307
  %vm596 = vcmp.eq.f32.partialorder %v240, %v311
  %vm597 = vcmp.eq.f32.partialorder %v241, %v311
  %vm598 = vcmp.eq.f32.partialorder %v242, %v311
  %vm599 = vcmp.eq.f32.partialorder %v243, %v311
  %vm600 = vcmp.eq.f32.partialorder %v240, %v315
  %vm601 = vcmp.eq.f32.partialorder %v241, %v315
  %vm602 = vcmp.eq.f32.partialorder %v242, %v315
  %vm603 = vcmp.eq.f32.partialorder %v243, %v315
  %vm604 = vcmp.eq.f32.partialorder %v240, %v319
  %vm605 = vcmp.eq.f32.partialorder %v241, %v319
  %vm606 = vcmp.eq.f32.partialorder %v242, %v319
  %vm607 = vcmp.eq.f32.partialorder %v243, %v319
  %vm608 = vcmp.eq.f32.partialorder %v240, %v323
  %vm609 = vcmp.eq.f32.partialorder %v241, %v323
  %vm610 = vcmp.eq.f32.partialorder %v242, %v323
  %vm611 = vcmp.eq.f32.partialorder %v243, %v323
  %vm612 = vcmp.eq.f32.partialorder %v240, %v327
  %vm613 = vcmp.eq.f32.partialorder %v241, %v327
  %vm614 = vcmp.eq.f32.partialorder %v242, %v327
  %vm615 = vcmp.eq.f32.partialorder %v243, %v327
  %vm616 = vcmp.eq.f32.partialorder %v240, %v331
  %vm617 = vcmp.eq.f32.partialorder %v241, %v331
  %vm618 = vcmp.eq.f32.partialorder %v242, %v331
  %vm619 = vcmp.eq.f32.partialorder %v243, %v331
  %vm620 = vcmp.eq.f32.partialorder %v240, %v335
  %vm621 = vcmp.eq.f32.partialorder %v241, %v335
  %vm622 = vcmp.eq.f32.partialorder %v242, %v335
  %vm623 = vcmp.eq.f32.partialorder %v243, %v335
  %vm624 = vcmp.eq.f32.partialorder %v240, %v339
  %vm625 = vcmp.eq.f32.partialorder %v241, %v339
  %vm626 = vcmp.eq.f32.partialorder %v242, %v339
  %vm627 = vcmp.eq.f32.partialorder %v243, %v339
  %vm628 = vcmp.eq.f32.partialorder %v240, %v343
  %vm629 = vcmp.eq.f32.partialorder %v241, %v343
  %vm630 = vcmp.eq.f32.partialorder %v242, %v343
  %vm631 = vcmp.eq.f32.partialorder %v243, %v343
  %vm632 = vcmp.eq.f32.partialorder %v240, %v347
  %vm633 = vcmp.eq.f32.partialorder %v241, %v347
  %vm634 = vcmp.eq.f32.partialorder %v242, %v347
  %vm635 = vcmp.eq.f32.partialorder %v243, %v347
  %vm636 = vcmp.eq.f32.partialorder %v240, %v351
  %vm637 = vcmp.eq.f32.partialorder %v241, %v351
  %vm638 = vcmp.eq.f32.partialorder %v242, %v351
  %vm639 = vcmp.eq.f32.partialorder %v243, %v351
  %vm640 = vcmp.eq.f32.partialorder %v240, %v355
  %vm641 = vcmp.eq.f32.partialorder %v241, %v355
  %vm642 = vcmp.eq.f32.partialorder %v242, %v355
  %vm643 = vcmp.eq.f32.partialorder %v243, %v355
  %vm644 = vcmp.eq.f32.partialorder %v240, %v359
  %vm645 = vcmp.eq.f32.partialorder %v241, %v359
  %vm646 = vcmp.eq.f32.partialorder %v242, %v359
  %vm647 = vcmp.eq.f32.partialorder %v243, %v359
  %vm648 = vcmp.eq.f32.partialorder %v240, %v363
  %vm649 = vcmp.eq.f32.partialorder %v241, %v363
  %vm650 = vcmp.eq.f32.partialorder %v242, %v363
  %vm651 = vcmp.eq.f32.partialorder %v243, %v363
  %vm652 = vcmp.eq.f32.partialorder %v240, %v367
  %vm653 = vcmp.eq.f32.partialorder %v241, %v367
  %vm654 = vcmp.eq.f32.partialorder %v242, %v367
  %vm655 = vcmp.eq.f32.partialorder %v243, %v367
  %vm656 = vcmp.eq.f32.partialorder %v240, %v371
  %vm657 = vcmp.eq.f32.partialorder %v241, %v371
  %vm658 = vcmp.eq.f32.partialorder %v242, %v371
  %vm659 = vcmp.eq.f32.partialorder %v243, %v371
  %vm660 = vcmp.eq.f32.partialorder %v240, %v375
  %vm661 = vcmp.eq.f32.partialorder %v241, %v375
  %vm662 = vcmp.eq.f32.partialorder %v242, %v375
  %vm663 = vcmp.eq.f32.partialorder %v243, %v375
  %vm664 = vcmp.eq.f32.partialorder %v240, %v379
  %vm665 = vcmp.eq.f32.partialorder %v241, %v379
  %vm666 = vcmp.eq.f32.partialorder %v242, %v379
  %vm667 = vcmp.eq.f32.partialorder %v243, %v379
  %vm668 = vcmp.eq.f32.partialorder %v240, %v383
  %vm669 = vcmp.eq.f32.partialorder %v241, %v383
  %vm670 = vcmp.eq.f32.partialorder %v242, %v383
  %vm671 = vcmp.eq.f32.partialorder %v243, %v383
  %vm672 = vcmp.eq.f32.partialorder %v240, %v387
  %vm673 = vcmp.eq.f32.partialorder %v241, %v387
  %vm674 = vcmp.eq.f32.partialorder %v242, %v387
  %vm675 = vcmp.eq.f32.partialorder %v243, %v387
  %v676 = vsel %vm48, 1, 0
  %v677 = vsel %vm49, 1, 0
  %v678 = vsel %vm50, 1, 0
  %v679 = vsel %vm51, 1, 0
  %v680 = vlaneseq
  %v681 = vshrl.u32 %v680, 7
  %v682 = vsub.s32 0, %v681
  %v683 = vrot.slane %v676, %v682
  %685 = vbcast.lane.b32.xlu0 %v683, 256
  %v686 = vpop.permute.xlu0 %685
  %s688 = sor.u32 256, 8
  %689 = vbcast.lane.b32.xlu0 %v683, %s688
  %v690 = vpop.permute.xlu0 %689
  %s692 = sor.u32 256, 16
  %693 = vbcast.lane.b32.xlu0 %v683, %s692
  %v694 = vpop.permute.xlu0 %693
  %s696 = sor.u32 256, 24
  %697 = vbcast.lane.b32.xlu0 %v683, %s696
  %v698 = vpop.permute.xlu0 %697
  %v699 = vlaneseq
  %v700 = vshrl.u32 %v699, 7
  %v701 = vsub.s32 1, %v700
  %v702 = vrot.slane %v676, %v701
  %704 = vbcast.lane.b32.xlu0 %v702, 256
  %v705 = vpop.permute.xlu0 %704
  %s707 = sor.u32 256, 8
  %708 = vbcast.lane.b32.xlu0 %v702, %s707
  %v709 = vpop.permute.xlu0 %708
  %s711 = sor.u32 256, 16
  %712 = vbcast.lane.b32.xlu0 %v702, %s711
  %v713 = vpop.permute.xlu0 %712
  %s715 = sor.u32 256, 24
  %716 = vbcast.lane.b32.xlu0 %v702, %s715
  %v717 = vpop.permute.xlu0 %716
  %v718 = vlaneseq
  %v719 = vshrl.u32 %v718, 7
  %v720 = vsub.s32 2, %v719
  %v721 = vrot.slane %v676, %v720
  %723 = vbcast.lane.b32.xlu0 %v721, 256
  %v724 = vpop.permute.xlu0 %723
  %s726 = sor.u32 256, 8
  %727 = vbcast.lane.b32.xlu0 %v721, %s726
  %v728 = vpop.permute.xlu0 %727
  %s730 = sor.u32 256, 16
  %731 = vbcast.lane.b32.xlu0 %v721, %s730
  %v732 = vpop.permute.xlu0 %731
  %s734 = sor.u32 256, 24
  %735 = vbcast.lane.b32.xlu0 %v721, %s734
  %v736 = vpop.permute.xlu0 %735
  %v737 = vlaneseq
  %v738 = vshrl.u32 %v737, 7
  %v739 = vsub.s32 3, %v738
  %v740 = vrot.slane %v676, %v739
  %742 = vbcast.lane.b32.xlu0 %v740, 256
  %v743 = vpop.permute.xlu0 %742
  %s745 = sor.u32 256, 8
  %746 = vbcast.lane.b32.xlu0 %v740, %s745
  %v747 = vpop.permute.xlu0 %746
  %s749 = sor.u32 256, 16
  %750 = vbcast.lane.b32.xlu0 %v740, %s749
  %v751 = vpop.permute.xlu0 %750
  %s753 = sor.u32 256, 24
  %754 = vbcast.lane.b32.xlu0 %v740, %s753
  %v755 = vpop.permute.xlu0 %754
  %v756 = vlaneseq
  %v757 = vshrl.u32 %v756, 7
  %v758 = vsub.s32 4, %v757
  %v759 = vrot.slane %v676, %v758
  %761 = vbcast.lane.b32.xlu0 %v759, 256
  %v762 = vpop.permute.xlu0 %761
  %s764 = sor.u32 256, 8
  %765 = vbcast.lane.b32.xlu0 %v759, %s764
  %v766 = vpop.permute.xlu0 %765
  %s768 = sor.u32 256, 16
  %769 = vbcast.lane.b32.xlu0 %v759, %s768
  %v770 = vpop.permute.xlu0 %769
  %s772 = sor.u32 256, 24
  %773 = vbcast.lane.b32.xlu0 %v759, %s772
  %v774 = vpop.permute.xlu0 %773
  %v775 = vlaneseq
  %v776 = vshrl.u32 %v775, 7
  %v777 = vsub.s32 5, %v776
  %v778 = vrot.slane %v676, %v777
  %780 = vbcast.lane.b32.xlu0 %v778, 256
  %v781 = vpop.permute.xlu0 %780
  %s783 = sor.u32 256, 8
  %784 = vbcast.lane.b32.xlu0 %v778, %s783
  %v785 = vpop.permute.xlu0 %784
  %s787 = sor.u32 256, 16
  %788 = vbcast.lane.b32.xlu0 %v778, %s787
  %v789 = vpop.permute.xlu0 %788
  %s791 = sor.u32 256, 24
  %792 = vbcast.lane.b32.xlu0 %v778, %s791
  %v793 = vpop.permute.xlu0 %792
  %v794 = vlaneseq
  %v795 = vshrl.u32 %v794, 7
  %v796 = vsub.s32 6, %v795
  %v797 = vrot.slane %v676, %v796
  %799 = vbcast.lane.b32.xlu0 %v797, 256
  %v800 = vpop.permute.xlu0 %799
  %s802 = sor.u32 256, 8
  %803 = vbcast.lane.b32.xlu0 %v797, %s802
  %v804 = vpop.permute.xlu0 %803
  %s806 = sor.u32 256, 16
  %807 = vbcast.lane.b32.xlu0 %v797, %s806
  %v808 = vpop.permute.xlu0 %807
  %s810 = sor.u32 256, 24
  %811 = vbcast.lane.b32.xlu0 %v797, %s810
  %v812 = vpop.permute.xlu0 %811
  %v813 = vlaneseq
  %v814 = vshrl.u32 %v813, 7
  %v815 = vsub.s32 7, %v814
  %v816 = vrot.slane %v676, %v815
  %818 = vbcast.lane.b32.xlu0 %v816, 256
  %v819 = vpop.permute.xlu0 %818
  %s821 = sor.u32 256, 8
  %822 = vbcast.lane.b32.xlu0 %v816, %s821
  %v823 = vpop.permute.xlu0 %822
  %s825 = sor.u32 256, 16
  %826 = vbcast.lane.b32.xlu0 %v816, %s825
  %v827 = vpop.permute.xlu0 %826
  %s829 = sor.u32 256, 24
  %830 = vbcast.lane.b32.xlu0 %v816, %s829
  %v831 = vpop.permute.xlu0 %830
  %v832 = vlaneseq
  %v833 = vshrl.u32 %v832, 7
  %v834 = vsub.s32 0, %v833
  %v835 = vrot.slane %v677, %v834
  %837 = vbcast.lane.b32.xlu0 %v835, 256
  %v838 = vpop.permute.xlu0 %837
  %s840 = sor.u32 256, 8
  %841 = vbcast.lane.b32.xlu0 %v835, %s840
  %v842 = vpop.permute.xlu0 %841
  %s844 = sor.u32 256, 16
  %845 = vbcast.lane.b32.xlu0 %v835, %s844
  %v846 = vpop.permute.xlu0 %845
  %s848 = sor.u32 256, 24
  %849 = vbcast.lane.b32.xlu0 %v835, %s848
  %v850 = vpop.permute.xlu0 %849
  %v851 = vlaneseq
  %v852 = vshrl.u32 %v851, 7
  %v853 = vsub.s32 1, %v852
  %v854 = vrot.slane %v677, %v853
  %856 = vbcast.lane.b32.xlu0 %v854, 256
  %v857 = vpop.permute.xlu0 %856
  %s859 = sor.u32 256, 8
  %860 = vbcast.lane.b32.xlu0 %v854, %s859
  %v861 = vpop.permute.xlu0 %860
  %s863 = sor.u32 256, 16
  %864 = vbcast.lane.b32.xlu0 %v854, %s863
  %v865 = vpop.permute.xlu0 %864
  %s867 = sor.u32 256, 24
  %868 = vbcast.lane.b32.xlu0 %v854, %s867
  %v869 = vpop.permute.xlu0 %868
  %v870 = vlaneseq
  %v871 = vshrl.u32 %v870, 7
  %v872 = vsub.s32 2, %v871
  %v873 = vrot.slane %v677, %v872
  %875 = vbcast.lane.b32.xlu0 %v873, 256
  %v876 = vpop.permute.xlu0 %875
  %s878 = sor.u32 256, 8
  %879 = vbcast.lane.b32.xlu0 %v873, %s878
  %v880 = vpop.permute.xlu0 %879
  %s882 = sor.u32 256, 16
  %883 = vbcast.lane.b32.xlu0 %v873, %s882
  %v884 = vpop.permute.xlu0 %883
  %s886 = sor.u32 256, 24
  %887 = vbcast.lane.b32.xlu0 %v873, %s886
  %v888 = vpop.permute.xlu0 %887
  %v889 = vlaneseq
  %v890 = vshrl.u32 %v889, 7
  %v891 = vsub.s32 3, %v890
  %v892 = vrot.slane %v677, %v891
  %894 = vbcast.lane.b32.xlu0 %v892, 256
  %v895 = vpop.permute.xlu0 %894
  %s897 = sor.u32 256, 8
  %898 = vbcast.lane.b32.xlu0 %v892, %s897
  %v899 = vpop.permute.xlu0 %898
  %s901 = sor.u32 256, 16
  %902 = vbcast.lane.b32.xlu0 %v892, %s901
  %v903 = vpop.permute.xlu0 %902
  %s905 = sor.u32 256, 24
  %906 = vbcast.lane.b32.xlu0 %v892, %s905
  %v907 = vpop.permute.xlu0 %906
  %v908 = vlaneseq
  %v909 = vshrl.u32 %v908, 7
  %v910 = vsub.s32 4, %v909
  %v911 = vrot.slane %v677, %v910
  %913 = vbcast.lane.b32.xlu0 %v911, 256
  %v914 = vpop.permute.xlu0 %913
  %s916 = sor.u32 256, 8
  %917 = vbcast.lane.b32.xlu0 %v911, %s916
  %v918 = vpop.permute.xlu0 %917
  %s920 = sor.u32 256, 16
  %921 = vbcast.lane.b32.xlu0 %v911, %s920
  %v922 = vpop.permute.xlu0 %921
  %s924 = sor.u32 256, 24
  %925 = vbcast.lane.b32.xlu0 %v911, %s924
  %v926 = vpop.permute.xlu0 %925
  %v927 = vlaneseq
  %v928 = vshrl.u32 %v927, 7
  %v929 = vsub.s32 5, %v928
  %v930 = vrot.slane %v677, %v929
  %932 = vbcast.lane.b32.xlu0 %v930, 256
  %v933 = vpop.permute.xlu0 %932
  %s935 = sor.u32 256, 8
  %936 = vbcast.lane.b32.xlu0 %v930, %s935
  %v937 = vpop.permute.xlu0 %936
  %s939 = sor.u32 256, 16
  %940 = vbcast.lane.b32.xlu0 %v930, %s939
  %v941 = vpop.permute.xlu0 %940
  %s943 = sor.u32 256, 24
  %944 = vbcast.lane.b32.xlu0 %v930, %s943
  %v945 = vpop.permute.xlu0 %944
  %v946 = vlaneseq
  %v947 = vshrl.u32 %v946, 7
  %v948 = vsub.s32 6, %v947
  %v949 = vrot.slane %v677, %v948
  %951 = vbcast.lane.b32.xlu0 %v949, 256
  %v952 = vpop.permute.xlu0 %951
  %s954 = sor.u32 256, 8
  %955 = vbcast.lane.b32.xlu0 %v949, %s954
  %v956 = vpop.permute.xlu0 %955
  %s958 = sor.u32 256, 16
  %959 = vbcast.lane.b32.xlu0 %v949, %s958
  %v960 = vpop.permute.xlu0 %959
  %s962 = sor.u32 256, 24
  %963 = vbcast.lane.b32.xlu0 %v949, %s962
  %v964 = vpop.permute.xlu0 %963
  %v965 = vlaneseq
  %v966 = vshrl.u32 %v965, 7
  %v967 = vsub.s32 7, %v966
  %v968 = vrot.slane %v677, %v967
  %970 = vbcast.lane.b32.xlu0 %v968, 256
  %v971 = vpop.permute.xlu0 %970
  %s973 = sor.u32 256, 8
  %974 = vbcast.lane.b32.xlu0 %v968, %s973
  %v975 = vpop.permute.xlu0 %974
  %s977 = sor.u32 256, 16
  %978 = vbcast.lane.b32.xlu0 %v968, %s977
  %v979 = vpop.permute.xlu0 %978
  %s981 = sor.u32 256, 24
  %982 = vbcast.lane.b32.xlu0 %v968, %s981
  %v983 = vpop.permute.xlu0 %982
  %v984 = vlaneseq
  %v985 = vshrl.u32 %v984, 7
  %v986 = vsub.s32 0, %v985
  %v987 = vrot.slane %v678, %v986
  %989 = vbcast.lane.b32.xlu0 %v987, 256
  %v990 = vpop.permute.xlu0 %989
  %s992 = sor.u32 256, 8
  %993 = vbcast.lane.b32.xlu0 %v987, %s992
  %v994 = vpop.permute.xlu0 %993
  %s996 = sor.u32 256, 16
  %997 = vbcast.lane.b32.xlu0 %v987, %s996
  %v998 = vpop.permute.xlu0 %997
  %s1000 = sor.u32 256, 24
  %1001 = vbcast.lane.b32.xlu0 %v987, %s1000
  %v1002 = vpop.permute.xlu0 %1001
  %v1003 = vlaneseq
  %v1004 = vshrl.u32 %v1003, 7
  %v1005 = vsub.s32 1, %v1004
  %v1006 = vrot.slane %v678, %v1005
  %1008 = vbcast.lane.b32.xlu0 %v1006, 256
  %v1009 = vpop.permute.xlu0 %1008
  %s1011 = sor.u32 256, 8
  %1012 = vbcast.lane.b32.xlu0 %v1006, %s1011
  %v1013 = vpop.permute.xlu0 %1012
  %s1015 = sor.u32 256, 16
  %1016 = vbcast.lane.b32.xlu0 %v1006, %s1015
  %v1017 = vpop.permute.xlu0 %1016
  %s1019 = sor.u32 256, 24
  %1020 = vbcast.lane.b32.xlu0 %v1006, %s1019
  %v1021 = vpop.permute.xlu0 %1020
  %v1022 = vlaneseq
  %v1023 = vshrl.u32 %v1022, 7
  %v1024 = vsub.s32 2, %v1023
  %v1025 = vrot.slane %v678, %v1024
  %1027 = vbcast.lane.b32.xlu0 %v1025, 256
  %v1028 = vpop.permute.xlu0 %1027
  %s1030 = sor.u32 256, 8
  %1031 = vbcast.lane.b32.xlu0 %v1025, %s1030
  %v1032 = vpop.permute.xlu0 %1031
  %s1034 = sor.u32 256, 16
  %1035 = vbcast.lane.b32.xlu0 %v1025, %s1034
  %v1036 = vpop.permute.xlu0 %1035
  %s1038 = sor.u32 256, 24
  %1039 = vbcast.lane.b32.xlu0 %v1025, %s1038
  %v1040 = vpop.permute.xlu0 %1039
  %v1041 = vlaneseq
  %v1042 = vshrl.u32 %v1041, 7
  %v1043 = vsub.s32 3, %v1042
  %v1044 = vrot.slane %v678, %v1043
  %1046 = vbcast.lane.b32.xlu0 %v1044, 256
  %v1047 = vpop.permute.xlu0 %1046
  %s1049 = sor.u32 256, 8
  %1050 = vbcast.lane.b32.xlu0 %v1044, %s1049
  %v1051 = vpop.permute.xlu0 %1050
  %s1053 = sor.u32 256, 16
  %1054 = vbcast.lane.b32.xlu0 %v1044, %s1053
  %v1055 = vpop.permute.xlu0 %1054
  %s1057 = sor.u32 256, 24
  %1058 = vbcast.lane.b32.xlu0 %v1044, %s1057
  %v1059 = vpop.permute.xlu0 %1058
  %v1060 = vlaneseq
  %v1061 = vshrl.u32 %v1060, 7
  %v1062 = vsub.s32 4, %v1061
  %v1063 = vrot.slane %v678, %v1062
  %1065 = vbcast.lane.b32.xlu0 %v1063, 256
  %v1066 = vpop.permute.xlu0 %1065
  %s1068 = sor.u32 256, 8
  %1069 = vbcast.lane.b32.xlu0 %v1063, %s1068
  %v1070 = vpop.permute.xlu0 %1069
  %s1072 = sor.u32 256, 16
  %1073 = vbcast.lane.b32.xlu0 %v1063, %s1072
  %v1074 = vpop.permute.xlu0 %1073
  %s1076 = sor.u32 256, 24
  %1077 = vbcast.lane.b32.xlu0 %v1063, %s1076
  %v1078 = vpop.permute.xlu0 %1077
  %v1079 = vlaneseq
  %v1080 = vshrl.u32 %v1079, 7
  %v1081 = vsub.s32 5, %v1080
  %v1082 = vrot.slane %v678, %v1081
  %1084 = vbcast.lane.b32.xlu0 %v1082, 256
  %v1085 = vpop.permute.xlu0 %1084
  %s1087 = sor.u32 256, 8
  %1088 = vbcast.lane.b32.xlu0 %v1082, %s1087
  %v1089 = vpop.permute.xlu0 %1088
  %s1091 = sor.u32 256, 16
  %1092 = vbcast.lane.b32.xlu0 %v1082, %s1091
  %v1093 = vpop.permute.xlu0 %1092
  %s1095 = sor.u32 256, 24
  %1096 = vbcast.lane.b32.xlu0 %v1082, %s1095
  %v1097 = vpop.permute.xlu0 %1096
  %v1098 = vlaneseq
  %v1099 = vshrl.u32 %v1098, 7
  %v1100 = vsub.s32 6, %v1099
  %v1101 = vrot.slane %v678, %v1100
  %1103 = vbcast.lane.b32.xlu0 %v1101, 256
  %v1104 = vpop.permute.xlu0 %1103
  %s1106 = sor.u32 256, 8
  %1107 = vbcast.lane.b32.xlu0 %v1101, %s1106
  %v1108 = vpop.permute.xlu0 %1107
  %s1110 = sor.u32 256, 16
  %1111 = vbcast.lane.b32.xlu0 %v1101, %s1110
  %v1112 = vpop.permute.xlu0 %1111
  %s1114 = sor.u32 256, 24
  %1115 = vbcast.lane.b32.xlu0 %v1101, %s1114
  %v1116 = vpop.permute.xlu0 %1115
  %v1117 = vlaneseq
  %v1118 = vshrl.u32 %v1117, 7
  %v1119 = vsub.s32 7, %v1118
  %v1120 = vrot.slane %v678, %v1119
  %1122 = vbcast.lane.b32.xlu0 %v1120, 256
  %v1123 = vpop.permute.xlu0 %1122
  %s1125 = sor.u32 256, 8
  %1126 = vbcast.lane.b32.xlu0 %v1120, %s1125
  %v1127 = vpop.permute.xlu0 %1126
  %s1129 = sor.u32 256, 16
  %1130 = vbcast.lane.b32.xlu0 %v1120, %s1129
  %v1131 = vpop.permute.xlu0 %1130
  %s1133 = sor.u32 256, 24
  %1134 = vbcast.lane.b32.xlu0 %v1120, %s1133
  %v1135 = vpop.permute.xlu0 %1134
  %v1136 = vlaneseq
  %v1137 = vshrl.u32 %v1136, 7
  %v1138 = vsub.s32 0, %v1137
  %v1139 = vrot.slane %v679, %v1138
  %1141 = vbcast.lane.b32.xlu0 %v1139, 256
  %v1142 = vpop.permute.xlu0 %1141
  %s1144 = sor.u32 256, 8
  %1145 = vbcast.lane.b32.xlu0 %v1139, %s1144
  %v1146 = vpop.permute.xlu0 %1145
  %s1148 = sor.u32 256, 16
  %1149 = vbcast.lane.b32.xlu0 %v1139, %s1148
  %v1150 = vpop.permute.xlu0 %1149
  %s1152 = sor.u32 256, 24
  %1153 = vbcast.lane.b32.xlu0 %v1139, %s1152
  %v1154 = vpop.permute.xlu0 %1153
  %v1155 = vlaneseq
  %v1156 = vshrl.u32 %v1155, 7
  %v1157 = vsub.s32 1, %v1156
  %v1158 = vrot.slane %v679, %v1157
  %1160 = vbcast.lane.b32.xlu0 %v1158, 256
  %v1161 = vpop.permute.xlu0 %1160
  %s1163 = sor.u32 256, 8
  %1164 = vbcast.lane.b32.xlu0 %v1158, %s1163
  %v1165 = vpop.permute.xlu0 %1164
  %s1167 = sor.u32 256, 16
  %1168 = vbcast.lane.b32.xlu0 %v1158, %s1167
  %v1169 = vpop.permute.xlu0 %1168
  %s1171 = sor.u32 256, 24
  %1172 = vbcast.lane.b32.xlu0 %v1158, %s1171
  %v1173 = vpop.permute.xlu0 %1172
  %v1174 = vlaneseq
  %v1175 = vshrl.u32 %v1174, 7
  %v1176 = vsub.s32 2, %v1175
  %v1177 = vrot.slane %v679, %v1176
  %1179 = vbcast.lane.b32.xlu0 %v1177, 256
  %v1180 = vpop.permute.xlu0 %1179
  %s1182 = sor.u32 256, 8
  %1183 = vbcast.lane.b32.xlu0 %v1177, %s1182
  %v1184 = vpop.permute.xlu0 %1183
  %s1186 = sor.u32 256, 16
  %1187 = vbcast.lane.b32.xlu0 %v1177, %s1186
  %v1188 = vpop.permute.xlu0 %1187
  %s1190 = sor.u32 256, 24
  %1191 = vbcast.lane.b32.xlu0 %v1177, %s1190
  %v1192 = vpop.permute.xlu0 %1191
  %v1193 = vlaneseq
  %v1194 = vshrl.u32 %v1193, 7
  %v1195 = vsub.s32 3, %v1194
  %v1196 = vrot.slane %v679, %v1195
  %1198 = vbcast.lane.b32.xlu0 %v1196, 256
  %v1199 = vpop.permute.xlu0 %1198
  %s1201 = sor.u32 256, 8
  %1202 = vbcast.lane.b32.xlu0 %v1196, %s1201
  %v1203 = vpop.permute.xlu0 %1202
  %s1205 = sor.u32 256, 16
  %1206 = vbcast.lane.b32.xlu0 %v1196, %s1205
  %v1207 = vpop.permute.xlu0 %1206
  %s1209 = sor.u32 256, 24
  %1210 = vbcast.lane.b32.xlu0 %v1196, %s1209
  %v1211 = vpop.permute.xlu0 %1210
  %v1212 = vlaneseq
  %v1213 = vshrl.u32 %v1212, 7
  %v1214 = vsub.s32 4, %v1213
  %v1215 = vrot.slane %v679, %v1214
  %1217 = vbcast.lane.b32.xlu0 %v1215, 256
  %v1218 = vpop.permute.xlu0 %1217
  %s1220 = sor.u32 256, 8
  %1221 = vbcast.lane.b32.xlu0 %v1215, %s1220
  %v1222 = vpop.permute.xlu0 %1221
  %s1224 = sor.u32 256, 16
  %1225 = vbcast.lane.b32.xlu0 %v1215, %s1224
  %v1226 = vpop.permute.xlu0 %1225
  %s1228 = sor.u32 256, 24
  %1229 = vbcast.lane.b32.xlu0 %v1215, %s1228
  %v1230 = vpop.permute.xlu0 %1229
  %v1231 = vlaneseq
  %v1232 = vshrl.u32 %v1231, 7
  %v1233 = vsub.s32 5, %v1232
  %v1234 = vrot.slane %v679, %v1233
  %1236 = vbcast.lane.b32.xlu0 %v1234, 256
  %v1237 = vpop.permute.xlu0 %1236
  %s1239 = sor.u32 256, 8
  %1240 = vbcast.lane.b32.xlu0 %v1234, %s1239
  %v1241 = vpop.permute.xlu0 %1240
  %s1243 = sor.u32 256, 16
  %1244 = vbcast.lane.b32.xlu0 %v1234, %s1243
  %v1245 = vpop.permute.xlu0 %1244
  %s1247 = sor.u32 256, 24
  %1248 = vbcast.lane.b32.xlu0 %v1234, %s1247
  %v1249 = vpop.permute.xlu0 %1248
  %v1250 = vlaneseq
  %v1251 = vshrl.u32 %v1250, 7
  %v1252 = vsub.s32 6, %v1251
  %v1253 = vrot.slane %v679, %v1252
  %1255 = vbcast.lane.b32.xlu0 %v1253, 256
  %v1256 = vpop.permute.xlu0 %1255
  %s1258 = sor.u32 256, 8
  %1259 = vbcast.lane.b32.xlu0 %v1253, %s1258
  %v1260 = vpop.permute.xlu0 %1259
  %s1262 = sor.u32 256, 16
  %1263 = vbcast.lane.b32.xlu0 %v1253, %s1262
  %v1264 = vpop.permute.xlu0 %1263
  %s1266 = sor.u32 256, 24
  %1267 = vbcast.lane.b32.xlu0 %v1253, %s1266
  %v1268 = vpop.permute.xlu0 %1267
  %v1269 = vlaneseq
  %v1270 = vshrl.u32 %v1269, 7
  %v1271 = vsub.s32 7, %v1270
  %v1272 = vrot.slane %v679, %v1271
  %1274 = vbcast.lane.b32.xlu0 %v1272, 256
  %v1275 = vpop.permute.xlu0 %1274
  %s1277 = sor.u32 256, 8
  %1278 = vbcast.lane.b32.xlu0 %v1272, %s1277
  %v1279 = vpop.permute.xlu0 %1278
  %s1281 = sor.u32 256, 16
  %1282 = vbcast.lane.b32.xlu0 %v1272, %s1281
  %v1283 = vpop.permute.xlu0 %1282
  %s1285 = sor.u32 256, 24
  %1286 = vbcast.lane.b32.xlu0 %v1272, %s1285
  %v1287 = vpop.permute.xlu0 %1286
  %vm1288 = vcmp.ne.s32.totalorder %v686, 0
  %vm1289 = vcmp.ne.s32.totalorder %v690, 0
  %vm1290 = vcmp.ne.s32.totalorder %v694, 0
  %vm1291 = vcmp.ne.s32.totalorder %v698, 0
  %vm1292 = vcmp.ne.s32.totalorder %v705, 0
  %vm1293 = vcmp.ne.s32.totalorder %v709, 0
  %vm1294 = vcmp.ne.s32.totalorder %v713, 0
  %vm1295 = vcmp.ne.s32.totalorder %v717, 0
  %vm1296 = vcmp.ne.s32.totalorder %v724, 0
  %vm1297 = vcmp.ne.s32.totalorder %v728, 0
  %vm1298 = vcmp.ne.s32.totalorder %v732, 0
  %vm1299 = vcmp.ne.s32.totalorder %v736, 0
  %vm1300 = vcmp.ne.s32.totalorder %v743, 0
  %vm1301 = vcmp.ne.s32.totalorder %v747, 0
  %vm1302 = vcmp.ne.s32.totalorder %v751, 0
  %vm1303 = vcmp.ne.s32.totalorder %v755, 0
  %vm1304 = vcmp.ne.s32.totalorder %v762, 0
  %vm1305 = vcmp.ne.s32.totalorder %v766, 0
  %vm1306 = vcmp.ne.s32.totalorder %v770, 0
  %vm1307 = vcmp.ne.s32.totalorder %v774, 0
  %vm1308 = vcmp.ne.s32.totalorder %v781, 0
  %vm1309 = vcmp.ne.s32.totalorder %v785, 0
  %vm1310 = vcmp.ne.s32.totalorder %v789, 0
  %vm1311 = vcmp.ne.s32.totalorder %v793, 0
  %vm1312 = vcmp.ne.s32.totalorder %v800, 0
  %vm1313 = vcmp.ne.s32.totalorder %v804, 0
  %vm1314 = vcmp.ne.s32.totalorder %v808, 0
  %vm1315 = vcmp.ne.s32.totalorder %v812, 0
  %vm1316 = vcmp.ne.s32.totalorder %v819, 0
  %vm1317 = vcmp.ne.s32.totalorder %v823, 0
  %vm1318 = vcmp.ne.s32.totalorder %v827, 0
  %vm1319 = vcmp.ne.s32.totalorder %v831, 0
  %vm1320 = vcmp.ne.s32.totalorder %v838, 0
  %vm1321 = vcmp.ne.s32.totalorder %v842, 0
  %vm1322 = vcmp.ne.s32.totalorder %v846, 0
  %vm1323 = vcmp.ne.s32.totalorder %v850, 0
  %vm1324 = vcmp.ne.s32.totalorder %v857, 0
  %vm1325 = vcmp.ne.s32.totalorder %v861, 0
  %vm1326 = vcmp.ne.s32.totalorder %v865, 0
  %vm1327 = vcmp.ne.s32.totalorder %v869, 0
  %vm1328 = vcmp.ne.s32.totalorder %v876, 0
  %vm1329 = vcmp.ne.s32.totalorder %v880, 0
  %vm1330 = vcmp.ne.s32.totalorder %v884, 0
  %vm1331 = vcmp.ne.s32.totalorder %v888, 0
  %vm1332 = vcmp.ne.s32.totalorder %v895, 0
  %vm1333 = vcmp.ne.s32.totalorder %v899, 0
  %vm1334 = vcmp.ne.s32.totalorder %v903, 0
  %vm1335 = vcmp.ne.s32.totalorder %v907, 0
  %vm1336 = vcmp.ne.s32.totalorder %v914, 0
  %vm1337 = vcmp.ne.s32.totalorder %v918, 0
  %vm1338 = vcmp.ne.s32.totalorder %v922, 0
  %vm1339 = vcmp.ne.s32.totalorder %v926, 0
  %vm1340 = vcmp.ne.s32.totalorder %v933, 0
  %vm1341 = vcmp.ne.s32.totalorder %v937, 0
  %vm1342 = vcmp.ne.s32.totalorder %v941, 0
  %vm1343 = vcmp.ne.s32.totalorder %v945, 0
  %vm1344 = vcmp.ne.s32.totalorder %v952, 0
  %vm1345 = vcmp.ne.s32.totalorder %v956, 0
  %vm1346 = vcmp.ne.s32.totalorder %v960, 0
  %vm1347 = vcmp.ne.s32.totalorder %v964, 0
  %vm1348 = vcmp.ne.s32.totalorder %v971, 0
  %vm1349 = vcmp.ne.s32.totalorder %v975, 0
  %vm1350 = vcmp.ne.s32.totalorder %v979, 0
  %vm1351 = vcmp.ne.s32.totalorder %v983, 0
  %vm1352 = vcmp.ne.s32.totalorder %v990, 0
  %vm1353 = vcmp.ne.s32.totalorder %v994, 0
  %vm1354 = vcmp.ne.s32.totalorder %v998, 0
  %vm1355 = vcmp.ne.s32.totalorder %v1002, 0
  %vm1356 = vcmp.ne.s32.totalorder %v1009, 0
  %vm1357 = vcmp.ne.s32.totalorder %v1013, 0
  %vm1358 = vcmp.ne.s32.totalorder %v1017, 0
  %vm1359 = vcmp.ne.s32.totalorder %v1021, 0
  %vm1360 = vcmp.ne.s32.totalorder %v1028, 0
  %vm1361 = vcmp.ne.s32.totalorder %v1032, 0
  %vm1362 = vcmp.ne.s32.totalorder %v1036, 0
  %vm1363 = vcmp.ne.s32.totalorder %v1040, 0
  %vm1364 = vcmp.ne.s32.totalorder %v1047, 0
  %vm1365 = vcmp.ne.s32.totalorder %v1051, 0
  %vm1366 = vcmp.ne.s32.totalorder %v1055, 0
  %vm1367 = vcmp.ne.s32.totalorder %v1059, 0
  %vm1368 = vcmp.ne.s32.totalorder %v1066, 0
  %vm1369 = vcmp.ne.s32.totalorder %v1070, 0
  %vm1370 = vcmp.ne.s32.totalorder %v1074, 0
  %vm1371 = vcmp.ne.s32.totalorder %v1078, 0
  %vm1372 = vcmp.ne.s32.totalorder %v1085, 0
  %vm1373 = vcmp.ne.s32.totalorder %v1089, 0
  %vm1374 = vcmp.ne.s32.totalorder %v1093, 0
  %vm1375 = vcmp.ne.s32.totalorder %v1097, 0
  %vm1376 = vcmp.ne.s32.totalorder %v1104, 0
  %vm1377 = vcmp.ne.s32.totalorder %v1108, 0
  %vm1378 = vcmp.ne.s32.totalorder %v1112, 0
  %vm1379 = vcmp.ne.s32.totalorder %v1116, 0
  %vm1380 = vcmp.ne.s32.totalorder %v1123, 0
  %vm1381 = vcmp.ne.s32.totalorder %v1127, 0
  %vm1382 = vcmp.ne.s32.totalorder %v1131, 0
  %vm1383 = vcmp.ne.s32.totalorder %v1135, 0
  %vm1384 = vcmp.ne.s32.totalorder %v1142, 0
  %vm1385 = vcmp.ne.s32.totalorder %v1146, 0
  %vm1386 = vcmp.ne.s32.totalorder %v1150, 0
  %vm1387 = vcmp.ne.s32.totalorder %v1154, 0
  %vm1388 = vcmp.ne.s32.totalorder %v1161, 0
  %vm1389 = vcmp.ne.s32.totalorder %v1165, 0
  %vm1390 = vcmp.ne.s32.totalorder %v1169, 0
  %vm1391 = vcmp.ne.s32.totalorder %v1173, 0
  %vm1392 = vcmp.ne.s32.totalorder %v1180, 0
  %vm1393 = vcmp.ne.s32.totalorder %v1184, 0
  %vm1394 = vcmp.ne.s32.totalorder %v1188, 0
  %vm1395 = vcmp.ne.s32.totalorder %v1192, 0
  %vm1396 = vcmp.ne.s32.totalorder %v1199, 0
  %vm1397 = vcmp.ne.s32.totalorder %v1203, 0
  %vm1398 = vcmp.ne.s32.totalorder %v1207, 0
  %vm1399 = vcmp.ne.s32.totalorder %v1211, 0
  %vm1400 = vcmp.ne.s32.totalorder %v1218, 0
  %vm1401 = vcmp.ne.s32.totalorder %v1222, 0
  %vm1402 = vcmp.ne.s32.totalorder %v1226, 0
  %vm1403 = vcmp.ne.s32.totalorder %v1230, 0
  %vm1404 = vcmp.ne.s32.totalorder %v1237, 0
  %vm1405 = vcmp.ne.s32.totalorder %v1241, 0
  %vm1406 = vcmp.ne.s32.totalorder %v1245, 0
  %vm1407 = vcmp.ne.s32.totalorder %v1249, 0
  %vm1408 = vcmp.ne.s32.totalorder %v1256, 0
  %vm1409 = vcmp.ne.s32.totalorder %v1260, 0
  %vm1410 = vcmp.ne.s32.totalorder %v1264, 0
  %vm1411 = vcmp.ne.s32.totalorder %v1268, 0
  %vm1412 = vcmp.ne.s32.totalorder %v1275, 0
  %vm1413 = vcmp.ne.s32.totalorder %v1279, 0
  %vm1414 = vcmp.ne.s32.totalorder %v1283, 0
  %vm1415 = vcmp.ne.s32.totalorder %v1287, 0
  %vm1416 = vmand %vm548, %vm1288
  %vm1417 = vmand %vm549, %vm1289
  %vm1418 = vmand %vm550, %vm1290
  %vm1419 = vmand %vm551, %vm1291
  %vm1420 = vmand %vm552, %vm1292
  %vm1421 = vmand %vm553, %vm1293
  %vm1422 = vmand %vm554, %vm1294
  %vm1423 = vmand %vm555, %vm1295
  %vm1424 = vmand %vm556, %vm1296
  %vm1425 = vmand %vm557, %vm1297
  %vm1426 = vmand %vm558, %vm1298
  %vm1427 = vmand %vm559, %vm1299
  %vm1428 = vmand %vm560, %vm1300
  %vm1429 = vmand %vm561, %vm1301
  %vm1430 = vmand %vm562, %vm1302
  %vm1431 = vmand %vm563, %vm1303
  %vm1432 = vmand %vm564, %vm1304
  %vm1433 = vmand %vm565, %vm1305
  %vm1434 = vmand %vm566, %vm1306
  %vm1435 = vmand %vm567, %vm1307
  %vm1436 = vmand %vm568, %vm1308
  %vm1437 = vmand %vm569, %vm1309
  %vm1438 = vmand %vm570, %vm1310
  %vm1439 = vmand %vm571, %vm1311
  %vm1440 = vmand %vm572, %vm1312
  %vm1441 = vmand %vm573, %vm1313
  %vm1442 = vmand %vm574, %vm1314
  %vm1443 = vmand %vm575, %vm1315
  %vm1444 = vmand %vm576, %vm1316
  %vm1445 = vmand %vm577, %vm1317
  %vm1446 = vmand %vm578, %vm1318
  %vm1447 = vmand %vm579, %vm1319
  %vm1448 = vmand %vm580, %vm1320
  %vm1449 = vmand %vm581, %vm1321
  %vm1450 = vmand %vm582, %vm1322
  %vm1451 = vmand %vm583, %vm1323
  %vm1452 = vmand %vm584, %vm1324
  %vm1453 = vmand %vm585, %vm1325
  %vm1454 = vmand %vm586, %vm1326
  %vm1455 = vmand %vm587, %vm1327
  %vm1456 = vmand %vm588, %vm1328
  %vm1457 = vmand %vm589, %vm1329
  %vm1458 = vmand %vm590, %vm1330
  %vm1459 = vmand %vm591, %vm1331
  %vm1460 = vmand %vm592, %vm1332
  %vm1461 = vmand %vm593, %vm1333
  %vm1462 = vmand %vm594, %vm1334
  %vm1463 = vmand %vm595, %vm1335
  %vm1464 = vmand %vm596, %vm1336
  %vm1465 = vmand %vm597, %vm1337
  %vm1466 = vmand %vm598, %vm1338
  %vm1467 = vmand %vm599, %vm1339
  %vm1468 = vmand %vm600, %vm1340
  %vm1469 = vmand %vm601, %vm1341
  %vm1470 = vmand %vm602, %vm1342
  %vm1471 = vmand %vm603, %vm1343
  %vm1472 = vmand %vm604, %vm1344
  %vm1473 = vmand %vm605, %vm1345
  %vm1474 = vmand %vm606, %vm1346
  %vm1475 = vmand %vm607, %vm1347
  %vm1476 = vmand %vm608, %vm1348
  %vm1477 = vmand %vm609, %vm1349
  %vm1478 = vmand %vm610, %vm1350
  %vm1479 = vmand %vm611, %vm1351
  %vm1480 = vmand %vm612, %vm1352
  %vm1481 = vmand %vm613, %vm1353
  %vm1482 = vmand %vm614, %vm1354
  %vm1483 = vmand %vm615, %vm1355
  %vm1484 = vmand %vm616, %vm1356
  %vm1485 = vmand %vm617, %vm1357
  %vm1486 = vmand %vm618, %vm1358
  %vm1487 = vmand %vm619, %vm1359
  %vm1488 = vmand %vm620, %vm1360
  %vm1489 = vmand %vm621, %vm1361
  %vm1490 = vmand %vm622, %vm1362
  %vm1491 = vmand %vm623, %vm1363
  %vm1492 = vmand %vm624, %vm1364
  %vm1493 = vmand %vm625, %vm1365
  %vm1494 = vmand %vm626, %vm1366
  %vm1495 = vmand %vm627, %vm1367
  %vm1496 = vmand %vm628, %vm1368
  %vm1497 = vmand %vm629, %vm1369
  %vm1498 = vmand %vm630, %vm1370
  %vm1499 = vmand %vm631, %vm1371
  %vm1500 = vmand %vm632, %vm1372
  %vm1501 = vmand %vm633, %vm1373
  %vm1502 = vmand %vm634, %vm1374
  %vm1503 = vmand %vm635, %vm1375
  %vm1504 = vmand %vm636, %vm1376
  %vm1505 = vmand %vm637, %vm1377
  %vm1506 = vmand %vm638, %vm1378
  %vm1507 = vmand %vm639, %vm1379
  %vm1508 = vmand %vm640, %vm1380
  %vm1509 = vmand %vm641, %vm1381
  %vm1510 = vmand %vm642, %vm1382
  %vm1511 = vmand %vm643, %vm1383
  %vm1512 = vmand %vm644, %vm1384
  %vm1513 = vmand %vm645, %vm1385
  %vm1514 = vmand %vm646, %vm1386
  %vm1515 = vmand %vm647, %vm1387
  %vm1516 = vmand %vm648, %vm1388
  %vm1517 = vmand %vm649, %vm1389
  %vm1518 = vmand %vm650, %vm1390
  %vm1519 = vmand %vm651, %vm1391
  %vm1520 = vmand %vm652, %vm1392
  %vm1521 = vmand %vm653, %vm1393
  %vm1522 = vmand %vm654, %vm1394
  %vm1523 = vmand %vm655, %vm1395
  %vm1524 = vmand %vm656, %vm1396
  %vm1525 = vmand %vm657, %vm1397
  %vm1526 = vmand %vm658, %vm1398
  %vm1527 = vmand %vm659, %vm1399
  %vm1528 = vmand %vm660, %vm1400
  %vm1529 = vmand %vm661, %vm1401
  %vm1530 = vmand %vm662, %vm1402
  %vm1531 = vmand %vm663, %vm1403
  %vm1532 = vmand %vm664, %vm1404
  %vm1533 = vmand %vm665, %vm1405
  %vm1534 = vmand %vm666, %vm1406
  %vm1535 = vmand %vm667, %vm1407
  %vm1536 = vmand %vm668, %vm1408
  %vm1537 = vmand %vm669, %vm1409
  %vm1538 = vmand %vm670, %vm1410
  %vm1539 = vmand %vm671, %vm1411
  %vm1540 = vmand %vm672, %vm1412
  %vm1541 = vmand %vm673, %vm1413
  %vm1542 = vmand %vm674, %vm1414
  %vm1543 = vmand %vm675, %vm1415
  %vm1544 = vmor %vm420, %vm1416
  %vm1545 = vmor %vm421, %vm1417
  %vm1546 = vmor %vm422, %vm1418
  %vm1547 = vmor %vm423, %vm1419
  %vm1548 = vmor %vm424, %vm1420
  %vm1549 = vmor %vm425, %vm1421
  %vm1550 = vmor %vm426, %vm1422
  %vm1551 = vmor %vm427, %vm1423
  %vm1552 = vmor %vm428, %vm1424
  %vm1553 = vmor %vm429, %vm1425
  %vm1554 = vmor %vm430, %vm1426
  %vm1555 = vmor %vm431, %vm1427
  %vm1556 = vmor %vm432, %vm1428
  %vm1557 = vmor %vm433, %vm1429
  %vm1558 = vmor %vm434, %vm1430
  %vm1559 = vmor %vm435, %vm1431
  %vm1560 = vmor %vm436, %vm1432
  %vm1561 = vmor %vm437, %vm1433
  %vm1562 = vmor %vm438, %vm1434
  %vm1563 = vmor %vm439, %vm1435
  %vm1564 = vmor %vm440, %vm1436
  %vm1565 = vmor %vm441, %vm1437
  %vm1566 = vmor %vm442, %vm1438
  %vm1567 = vmor %vm443, %vm1439
  %vm1568 = vmor %vm444, %vm1440
  %vm1569 = vmor %vm445, %vm1441
  %vm1570 = vmor %vm446, %vm1442
  %vm1571 = vmor %vm447, %vm1443
  %vm1572 = vmor %vm448, %vm1444
  %vm1573 = vmor %vm449, %vm1445
  %vm1574 = vmor %vm450, %vm1446
  %vm1575 = vmor %vm451, %vm1447
  %vm1576 = vmor %vm452, %vm1448
  %vm1577 = vmor %vm453, %vm1449
  %vm1578 = vmor %vm454, %vm1450
  %vm1579 = vmor %vm455, %vm1451
  %vm1580 = vmor %vm456, %vm1452
  %vm1581 = vmor %vm457, %vm1453
  %vm1582 = vmor %vm458, %vm1454
  %vm1583 = vmor %vm459, %vm1455
  %vm1584 = vmor %vm460, %vm1456
  %vm1585 = vmor %vm461, %vm1457
  %vm1586 = vmor %vm462, %vm1458
  %vm1587 = vmor %vm463, %vm1459
  %vm1588 = vmor %vm464, %vm1460
  %vm1589 = vmor %vm465, %vm1461
  %vm1590 = vmor %vm466, %vm1462
  %vm1591 = vmor %vm467, %vm1463
  %vm1592 = vmor %vm468, %vm1464
  %vm1593 = vmor %vm469, %vm1465
  %vm1594 = vmor %vm470, %vm1466
  %vm1595 = vmor %vm471, %vm1467
  %vm1596 = vmor %vm472, %vm1468
  %vm1597 = vmor %vm473, %vm1469
  %vm1598 = vmor %vm474, %vm1470
  %vm1599 = vmor %vm475, %vm1471
  %vm1600 = vmor %vm476, %vm1472
  %vm1601 = vmor %vm477, %vm1473
  %vm1602 = vmor %vm478, %vm1474
  %vm1603 = vmor %vm479, %vm1475
  %vm1604 = vmor %vm480, %vm1476
  %vm1605 = vmor %vm481, %vm1477
  %vm1606 = vmor %vm482, %vm1478
  %vm1607 = vmor %vm483, %vm1479
  %vm1608 = vmor %vm484, %vm1480
  %vm1609 = vmor %vm485, %vm1481
  %vm1610 = vmor %vm486, %vm1482
  %vm1611 = vmor %vm487, %vm1483
  %vm1612 = vmor %vm488, %vm1484
  %vm1613 = vmor %vm489, %vm1485
  %vm1614 = vmor %vm490, %vm1486
  %vm1615 = vmor %vm491, %vm1487
  %vm1616 = vmor %vm492, %vm1488
  %vm1617 = vmor %vm493, %vm1489
  %vm1618 = vmor %vm494, %vm1490
  %vm1619 = vmor %vm495, %vm1491
  %vm1620 = vmor %vm496, %vm1492
  %vm1621 = vmor %vm497, %vm1493
  %vm1622 = vmor %vm498, %vm1494
  %vm1623 = vmor %vm499, %vm1495
  %vm1624 = vmor %vm500, %vm1496
  %vm1625 = vmor %vm501, %vm1497
  %vm1626 = vmor %vm502, %vm1498
  %vm1627 = vmor %vm503, %vm1499
  %vm1628 = vmor %vm504, %vm1500
  %vm1629 = vmor %vm505, %vm1501
  %vm1630 = vmor %vm506, %vm1502
  %vm1631 = vmor %vm507, %vm1503
  %vm1632 = vmor %vm508, %vm1504
  %vm1633 = vmor %vm509, %vm1505
  %vm1634 = vmor %vm510, %vm1506
  %vm1635 = vmor %vm511, %vm1507
  %vm1636 = vmor %vm512, %vm1508
  %vm1637 = vmor %vm513, %vm1509
  %vm1638 = vmor %vm514, %vm1510
  %vm1639 = vmor %vm515, %vm1511
  %vm1640 = vmor %vm516, %vm1512
  %vm1641 = vmor %vm517, %vm1513
  %vm1642 = vmor %vm518, %vm1514
  %vm1643 = vmor %vm519, %vm1515
  %vm1644 = vmor %vm520, %vm1516
  %vm1645 = vmor %vm521, %vm1517
  %vm1646 = vmor %vm522, %vm1518
  %vm1647 = vmor %vm523, %vm1519
  %vm1648 = vmor %vm524, %vm1520
  %vm1649 = vmor %vm525, %vm1521
  %vm1650 = vmor %vm526, %vm1522
  %vm1651 = vmor %vm527, %vm1523
  %vm1652 = vmor %vm528, %vm1524
  %vm1653 = vmor %vm529, %vm1525
  %vm1654 = vmor %vm530, %vm1526
  %vm1655 = vmor %vm531, %vm1527
  %vm1656 = vmor %vm532, %vm1528
  %vm1657 = vmor %vm533, %vm1529
  %vm1658 = vmor %vm534, %vm1530
  %vm1659 = vmor %vm535, %vm1531
  %vm1660 = vmor %vm536, %vm1532
  %vm1661 = vmor %vm537, %vm1533
  %vm1662 = vmor %vm538, %vm1534
  %vm1663 = vmor %vm539, %vm1535
  %vm1664 = vmor %vm540, %vm1536
  %vm1665 = vmor %vm541, %vm1537
  %vm1666 = vmor %vm542, %vm1538
  %vm1667 = vmor %vm543, %vm1539
  %vm1668 = vmor %vm544, %vm1540
  %vm1669 = vmor %vm545, %vm1541
  %vm1670 = vmor %vm546, %vm1542
  %vm1671 = vmor %vm547, %vm1543
  %v1672 = vsel %vm1544, 1, 0
  %v1673 = vsel %vm1545, 1, 0
  %v1674 = vsel %vm1546, 1, 0
  %v1675 = vsel %vm1547, 1, 0
  %v1676 = vsel %vm1548, 1, 0
  %v1677 = vsel %vm1549, 1, 0
  %v1678 = vsel %vm1550, 1, 0
  %v1679 = vsel %vm1551, 1, 0
  %v1680 = vsel %vm1552, 1, 0
  %v1681 = vsel %vm1553, 1, 0
  %v1682 = vsel %vm1554, 1, 0
  %v1683 = vsel %vm1555, 1, 0
  %v1684 = vsel %vm1556, 1, 0
  %v1685 = vsel %vm1557, 1, 0
  %v1686 = vsel %vm1558, 1, 0
  %v1687 = vsel %vm1559, 1, 0
  %v1688 = vsel %vm1560, 1, 0
  %v1689 = vsel %vm1561, 1, 0
  %v1690 = vsel %vm1562, 1, 0
  %v1691 = vsel %vm1563, 1, 0
  %v1692 = vsel %vm1564, 1, 0
  %v1693 = vsel %vm1565, 1, 0
  %v1694 = vsel %vm1566, 1, 0
  %v1695 = vsel %vm1567, 1, 0
  %v1696 = vsel %vm1568, 1, 0
  %v1697 = vsel %vm1569, 1, 0
  %v1698 = vsel %vm1570, 1, 0
  %v1699 = vsel %vm1571, 1, 0
  %v1700 = vsel %vm1572, 1, 0
  %v1701 = vsel %vm1573, 1, 0
  %v1702 = vsel %vm1574, 1, 0
  %v1703 = vsel %vm1575, 1, 0
  %v1704 = vsel %vm1576, 1, 0
  %v1705 = vsel %vm1577, 1, 0
  %v1706 = vsel %vm1578, 1, 0
  %v1707 = vsel %vm1579, 1, 0
  %v1708 = vsel %vm1580, 1, 0
  %v1709 = vsel %vm1581, 1, 0
  %v1710 = vsel %vm1582, 1, 0
  %v1711 = vsel %vm1583, 1, 0
  %v1712 = vsel %vm1584, 1, 0
  %v1713 = vsel %vm1585, 1, 0
  %v1714 = vsel %vm1586, 1, 0
  %v1715 = vsel %vm1587, 1, 0
  %v1716 = vsel %vm1588, 1, 0
  %v1717 = vsel %vm1589, 1, 0
  %v1718 = vsel %vm1590, 1, 0
  %v1719 = vsel %vm1591, 1, 0
  %v1720 = vsel %vm1592, 1, 0
  %v1721 = vsel %vm1593, 1, 0
  %v1722 = vsel %vm1594, 1, 0
  %v1723 = vsel %vm1595, 1, 0
  %v1724 = vsel %vm1596, 1, 0
  %v1725 = vsel %vm1597, 1, 0
  %v1726 = vsel %vm1598, 1, 0
  %v1727 = vsel %vm1599, 1, 0
  %v1728 = vsel %vm1600, 1, 0
  %v1729 = vsel %vm1601, 1, 0
  %v1730 = vsel %vm1602, 1, 0
  %v1731 = vsel %vm1603, 1, 0
  %v1732 = vsel %vm1604, 1, 0
  %v1733 = vsel %vm1605, 1, 0
  %v1734 = vsel %vm1606, 1, 0
  %v1735 = vsel %vm1607, 1, 0
  %v1736 = vsel %vm1608, 1, 0
  %v1737 = vsel %vm1609, 1, 0
  %v1738 = vsel %vm1610, 1, 0
  %v1739 = vsel %vm1611, 1, 0
  %v1740 = vsel %vm1612, 1, 0
  %v1741 = vsel %vm1613, 1, 0
  %v1742 = vsel %vm1614, 1, 0
  %v1743 = vsel %vm1615, 1, 0
  %v1744 = vsel %vm1616, 1, 0
  %v1745 = vsel %vm1617, 1, 0
  %v1746 = vsel %vm1618, 1, 0
  %v1747 = vsel %vm1619, 1, 0
  %v1748 = vsel %vm1620, 1, 0
  %v1749 = vsel %vm1621, 1, 0
  %v1750 = vsel %vm1622, 1, 0
  %v1751 = vsel %vm1623, 1, 0
  %v1752 = vsel %vm1624, 1, 0
  %v1753 = vsel %vm1625, 1, 0
  %v1754 = vsel %vm1626, 1, 0
  %v1755 = vsel %vm1627, 1, 0
  %v1756 = vsel %vm1628, 1, 0
  %v1757 = vsel %vm1629, 1, 0
  %v1758 = vsel %vm1630, 1, 0
  %v1759 = vsel %vm1631, 1, 0
  %v1760 = vsel %vm1632, 1, 0
  %v1761 = vsel %vm1633, 1, 0
  %v1762 = vsel %vm1634, 1, 0
  %v1763 = vsel %vm1635, 1, 0
  %v1764 = vsel %vm1636, 1, 0
  %v1765 = vsel %vm1637, 1, 0
  %v1766 = vsel %vm1638, 1, 0
  %v1767 = vsel %vm1639, 1, 0
  %v1768 = vsel %vm1640, 1, 0
  %v1769 = vsel %vm1641, 1, 0
  %v1770 = vsel %vm1642, 1, 0
  %v1771 = vsel %vm1643, 1, 0
  %v1772 = vsel %vm1644, 1, 0
  %v1773 = vsel %vm1645, 1, 0
  %v1774 = vsel %vm1646, 1, 0
  %v1775 = vsel %vm1647, 1, 0
  %v1776 = vsel %vm1648, 1, 0
  %v1777 = vsel %vm1649, 1, 0
  %v1778 = vsel %vm1650, 1, 0
  %v1779 = vsel %vm1651, 1, 0
  %v1780 = vsel %vm1652, 1, 0
  %v1781 = vsel %vm1653, 1, 0
  %v1782 = vsel %vm1654, 1, 0
  %v1783 = vsel %vm1655, 1, 0
  %v1784 = vsel %vm1656, 1, 0
  %v1785 = vsel %vm1657, 1, 0
  %v1786 = vsel %vm1658, 1, 0
  %v1787 = vsel %vm1659, 1, 0
  %v1788 = vsel %vm1660, 1, 0
  %v1789 = vsel %vm1661, 1, 0
  %v1790 = vsel %vm1662, 1, 0
  %v1791 = vsel %vm1663, 1, 0
  %v1792 = vsel %vm1664, 1, 0
  %v1793 = vsel %vm1665, 1, 0
  %v1794 = vsel %vm1666, 1, 0
  %v1795 = vsel %vm1667, 1, 0
  %v1796 = vsel %vm1668, 1, 0
  %v1797 = vsel %vm1669, 1, 0
  %v1798 = vsel %vm1670, 1, 0
  %v1799 = vsel %vm1671, 1, 0
  %1800 = vset.pattern.permute.xlu0 0
  %1801 = vperm.xlu0 %1800, %v1672
  %v1802 = vpop.permute.xlu0 %1801
  %1803 = vset.pattern.permute.xlu0 0
  %1804 = vperm.xlu0 %1803, %v1673
  %v1805 = vpop.permute.xlu0 %1804
  %1806 = vset.pattern.permute.xlu0 0
  %1807 = vperm.xlu0 %1806, %v1674
  %v1808 = vpop.permute.xlu0 %1807
  %1809 = vset.pattern.permute.xlu0 0
  %1810 = vperm.xlu0 %1809, %v1675
  %v1811 = vpop.permute.xlu0 %1810
  %1812 = vset.pattern.permute.xlu0 0
  %1813 = vperm.xlu0 %1812, %v1676
  %v1814 = vpop.permute.xlu0 %1813
  %1815 = vset.pattern.permute.xlu0 0
  %1816 = vperm.xlu0 %1815, %v1677
  %v1817 = vpop.permute.xlu0 %1816
  %1818 = vset.pattern.permute.xlu0 0
  %1819 = vperm.xlu0 %1818, %v1678
  %v1820 = vpop.permute.xlu0 %1819
  %1821 = vset.pattern.permute.xlu0 0
  %1822 = vperm.xlu0 %1821, %v1679
  %v1823 = vpop.permute.xlu0 %1822
  %1824 = vset.pattern.permute.xlu0 0
  %1825 = vperm.xlu0 %1824, %v1680
  %v1826 = vpop.permute.xlu0 %1825
  %1827 = vset.pattern.permute.xlu0 0
  %1828 = vperm.xlu0 %1827, %v1681
  %v1829 = vpop.permute.xlu0 %1828
  %1830 = vset.pattern.permute.xlu0 0
  %1831 = vperm.xlu0 %1830, %v1682
  %v1832 = vpop.permute.xlu0 %1831
  %1833 = vset.pattern.permute.xlu0 0
  %1834 = vperm.xlu0 %1833, %v1683
  %v1835 = vpop.permute.xlu0 %1834
  %1836 = vset.pattern.permute.xlu0 0
  %1837 = vperm.xlu0 %1836, %v1684
  %v1838 = vpop.permute.xlu0 %1837
  %1839 = vset.pattern.permute.xlu0 0
  %1840 = vperm.xlu0 %1839, %v1685
  %v1841 = vpop.permute.xlu0 %1840
  %1842 = vset.pattern.permute.xlu0 0
  %1843 = vperm.xlu0 %1842, %v1686
  %v1844 = vpop.permute.xlu0 %1843
  %1845 = vset.pattern.permute.xlu0 0
  %1846 = vperm.xlu0 %1845, %v1687
  %v1847 = vpop.permute.xlu0 %1846
  %1848 = vset.pattern.permute.xlu0 0
  %1849 = vperm.xlu0 %1848, %v1688
  %v1850 = vpop.permute.xlu0 %1849
  %1851 = vset.pattern.permute.xlu0 0
  %1852 = vperm.xlu0 %1851, %v1689
  %v1853 = vpop.permute.xlu0 %1852
  %1854 = vset.pattern.permute.xlu0 0
  %1855 = vperm.xlu0 %1854, %v1690
  %v1856 = vpop.permute.xlu0 %1855
  %1857 = vset.pattern.permute.xlu0 0
  %1858 = vperm.xlu0 %1857, %v1691
  %v1859 = vpop.permute.xlu0 %1858
  %1860 = vset.pattern.permute.xlu0 0
  %1861 = vperm.xlu0 %1860, %v1692
  %v1862 = vpop.permute.xlu0 %1861
  %1863 = vset.pattern.permute.xlu0 0
  %1864 = vperm.xlu0 %1863, %v1693
  %v1865 = vpop.permute.xlu0 %1864
  %1866 = vset.pattern.permute.xlu0 0
  %1867 = vperm.xlu0 %1866, %v1694
  %v1868 = vpop.permute.xlu0 %1867
  %1869 = vset.pattern.permute.xlu0 0
  %1870 = vperm.xlu0 %1869, %v1695
  %v1871 = vpop.permute.xlu0 %1870
  %1872 = vset.pattern.permute.xlu0 0
  %1873 = vperm.xlu0 %1872, %v1696
  %v1874 = vpop.permute.xlu0 %1873
  %1875 = vset.pattern.permute.xlu0 0
  %1876 = vperm.xlu0 %1875, %v1697
  %v1877 = vpop.permute.xlu0 %1876
  %1878 = vset.pattern.permute.xlu0 0
  %1879 = vperm.xlu0 %1878, %v1698
  %v1880 = vpop.permute.xlu0 %1879
  %1881 = vset.pattern.permute.xlu0 0
  %1882 = vperm.xlu0 %1881, %v1699
  %v1883 = vpop.permute.xlu0 %1882
  %1884 = vset.pattern.permute.xlu0 0
  %1885 = vperm.xlu0 %1884, %v1700
  %v1886 = vpop.permute.xlu0 %1885
  %1887 = vset.pattern.permute.xlu0 0
  %1888 = vperm.xlu0 %1887, %v1701
  %v1889 = vpop.permute.xlu0 %1888
  %1890 = vset.pattern.permute.xlu0 0
  %1891 = vperm.xlu0 %1890, %v1702
  %v1892 = vpop.permute.xlu0 %1891
  %1893 = vset.pattern.permute.xlu0 0
  %1894 = vperm.xlu0 %1893, %v1703
  %v1895 = vpop.permute.xlu0 %1894
  %1896 = vset.pattern.permute.xlu0 0
  %1897 = vperm.xlu0 %1896, %v1704
  %v1898 = vpop.permute.xlu0 %1897
  %1899 = vset.pattern.permute.xlu0 0
  %1900 = vperm.xlu0 %1899, %v1705
  %v1901 = vpop.permute.xlu0 %1900
  %1902 = vset.pattern.permute.xlu0 0
  %1903 = vperm.xlu0 %1902, %v1706
  %v1904 = vpop.permute.xlu0 %1903
  %1905 = vset.pattern.permute.xlu0 0
  %1906 = vperm.xlu0 %1905, %v1707
  %v1907 = vpop.permute.xlu0 %1906
  %1908 = vset.pattern.permute.xlu0 0
  %1909 = vperm.xlu0 %1908, %v1708
  %v1910 = vpop.permute.xlu0 %1909
  %1911 = vset.pattern.permute.xlu0 0
  %1912 = vperm.xlu0 %1911, %v1709
  %v1913 = vpop.permute.xlu0 %1912
  %1914 = vset.pattern.permute.xlu0 0
  %1915 = vperm.xlu0 %1914, %v1710
  %v1916 = vpop.permute.xlu0 %1915
  %1917 = vset.pattern.permute.xlu0 0
  %1918 = vperm.xlu0 %1917, %v1711
  %v1919 = vpop.permute.xlu0 %1918
  %1920 = vset.pattern.permute.xlu0 0
  %1921 = vperm.xlu0 %1920, %v1712
  %v1922 = vpop.permute.xlu0 %1921
  %1923 = vset.pattern.permute.xlu0 0
  %1924 = vperm.xlu0 %1923, %v1713
  %v1925 = vpop.permute.xlu0 %1924
  %1926 = vset.pattern.permute.xlu0 0
  %1927 = vperm.xlu0 %1926, %v1714
  %v1928 = vpop.permute.xlu0 %1927
  %1929 = vset.pattern.permute.xlu0 0
  %1930 = vperm.xlu0 %1929, %v1715
  %v1931 = vpop.permute.xlu0 %1930
  %1932 = vset.pattern.permute.xlu0 0
  %1933 = vperm.xlu0 %1932, %v1716
  %v1934 = vpop.permute.xlu0 %1933
  %1935 = vset.pattern.permute.xlu0 0
  %1936 = vperm.xlu0 %1935, %v1717
  %v1937 = vpop.permute.xlu0 %1936
  %1938 = vset.pattern.permute.xlu0 0
  %1939 = vperm.xlu0 %1938, %v1718
  %v1940 = vpop.permute.xlu0 %1939
  %1941 = vset.pattern.permute.xlu0 0
  %1942 = vperm.xlu0 %1941, %v1719
  %v1943 = vpop.permute.xlu0 %1942
  %1944 = vset.pattern.permute.xlu0 0
  %1945 = vperm.xlu0 %1944, %v1720
  %v1946 = vpop.permute.xlu0 %1945
  %1947 = vset.pattern.permute.xlu0 0
  %1948 = vperm.xlu0 %1947, %v1721
  %v1949 = vpop.permute.xlu0 %1948
  %1950 = vset.pattern.permute.xlu0 0
  %1951 = vperm.xlu0 %1950, %v1722
  %v1952 = vpop.permute.xlu0 %1951
  %1953 = vset.pattern.permute.xlu0 0
  %1954 = vperm.xlu0 %1953, %v1723
  %v1955 = vpop.permute.xlu0 %1954
  %1956 = vset.pattern.permute.xlu0 0
  %1957 = vperm.xlu0 %1956, %v1724
  %v1958 = vpop.permute.xlu0 %1957
  %1959 = vset.pattern.permute.xlu0 0
  %1960 = vperm.xlu0 %1959, %v1725
  %v1961 = vpop.permute.xlu0 %1960
  %1962 = vset.pattern.permute.xlu0 0
  %1963 = vperm.xlu0 %1962, %v1726
  %v1964 = vpop.permute.xlu0 %1963
  %1965 = vset.pattern.permute.xlu0 0
  %1966 = vperm.xlu0 %1965, %v1727
  %v1967 = vpop.permute.xlu0 %1966
  %1968 = vset.pattern.permute.xlu0 0
  %1969 = vperm.xlu0 %1968, %v1728
  %v1970 = vpop.permute.xlu0 %1969
  %1971 = vset.pattern.permute.xlu0 0
  %1972 = vperm.xlu0 %1971, %v1729
  %v1973 = vpop.permute.xlu0 %1972
  %1974 = vset.pattern.permute.xlu0 0
  %1975 = vperm.xlu0 %1974, %v1730
  %v1976 = vpop.permute.xlu0 %1975
  %1977 = vset.pattern.permute.xlu0 0
  %1978 = vperm.xlu0 %1977, %v1731
  %v1979 = vpop.permute.xlu0 %1978
  %1980 = vset.pattern.permute.xlu0 0
  %1981 = vperm.xlu0 %1980, %v1732
  %v1982 = vpop.permute.xlu0 %1981
  %1983 = vset.pattern.permute.xlu0 0
  %1984 = vperm.xlu0 %1983, %v1733
  %v1985 = vpop.permute.xlu0 %1984
  %1986 = vset.pattern.permute.xlu0 0
  %1987 = vperm.xlu0 %1986, %v1734
  %v1988 = vpop.permute.xlu0 %1987
  %1989 = vset.pattern.permute.xlu0 0
  %1990 = vperm.xlu0 %1989, %v1735
  %v1991 = vpop.permute.xlu0 %1990
  %1992 = vset.pattern.permute.xlu0 0
  %1993 = vperm.xlu0 %1992, %v1736
  %v1994 = vpop.permute.xlu0 %1993
  %1995 = vset.pattern.permute.xlu0 0
  %1996 = vperm.xlu0 %1995, %v1737
  %v1997 = vpop.permute.xlu0 %1996
  %1998 = vset.pattern.permute.xlu0 0
  %1999 = vperm.xlu0 %1998, %v1738
  %v2000 = vpop.permute.xlu0 %1999
  %2001 = vset.pattern.permute.xlu0 0
  %2002 = vperm.xlu0 %2001, %v1739
  %v2003 = vpop.permute.xlu0 %2002
  %2004 = vset.pattern.permute.xlu0 0
  %2005 = vperm.xlu0 %2004, %v1740
  %v2006 = vpop.permute.xlu0 %2005
  %2007 = vset.pattern.permute.xlu0 0
  %2008 = vperm.xlu0 %2007, %v1741
  %v2009 = vpop.permute.xlu0 %2008
  %2010 = vset.pattern.permute.xlu0 0
  %2011 = vperm.xlu0 %2010, %v1742
  %v2012 = vpop.permute.xlu0 %2011
  %2013 = vset.pattern.permute.xlu0 0
  %2014 = vperm.xlu0 %2013, %v1743
  %v2015 = vpop.permute.xlu0 %2014
  %2016 = vset.pattern.permute.xlu0 0
  %2017 = vperm.xlu0 %2016, %v1744
  %v2018 = vpop.permute.xlu0 %2017
  %2019 = vset.pattern.permute.xlu0 0
  %2020 = vperm.xlu0 %2019, %v1745
  %v2021 = vpop.permute.xlu0 %2020
  %2022 = vset.pattern.permute.xlu0 0
  %2023 = vperm.xlu0 %2022, %v1746
  %v2024 = vpop.permute.xlu0 %2023
  %2025 = vset.pattern.permute.xlu0 0
  %2026 = vperm.xlu0 %2025, %v1747
  %v2027 = vpop.permute.xlu0 %2026
  %2028 = vset.pattern.permute.xlu0 0
  %2029 = vperm.xlu0 %2028, %v1748
  %v2030 = vpop.permute.xlu0 %2029
  %2031 = vset.pattern.permute.xlu0 0
  %2032 = vperm.xlu0 %2031, %v1749
  %v2033 = vpop.permute.xlu0 %2032
  %2034 = vset.pattern.permute.xlu0 0
  %2035 = vperm.xlu0 %2034, %v1750
  %v2036 = vpop.permute.xlu0 %2035
  %2037 = vset.pattern.permute.xlu0 0
  %2038 = vperm.xlu0 %2037, %v1751
  %v2039 = vpop.permute.xlu0 %2038
  %2040 = vset.pattern.permute.xlu0 0
  %2041 = vperm.xlu0 %2040, %v1752
  %v2042 = vpop.permute.xlu0 %2041
  %2043 = vset.pattern.permute.xlu0 0
  %2044 = vperm.xlu0 %2043, %v1753
  %v2045 = vpop.permute.xlu0 %2044
  %2046 = vset.pattern.permute.xlu0 0
  %2047 = vperm.xlu0 %2046, %v1754
  %v2048 = vpop.permute.xlu0 %2047
  %2049 = vset.pattern.permute.xlu0 0
  %2050 = vperm.xlu0 %2049, %v1755
  %v2051 = vpop.permute.xlu0 %2050
  %2052 = vset.pattern.permute.xlu0 0
  %2053 = vperm.xlu0 %2052, %v1756
  %v2054 = vpop.permute.xlu0 %2053
  %2055 = vset.pattern.permute.xlu0 0
  %2056 = vperm.xlu0 %2055, %v1757
  %v2057 = vpop.permute.xlu0 %2056
  %2058 = vset.pattern.permute.xlu0 0
  %2059 = vperm.xlu0 %2058, %v1758
  %v2060 = vpop.permute.xlu0 %2059
  %2061 = vset.pattern.permute.xlu0 0
  %2062 = vperm.xlu0 %2061, %v1759
  %v2063 = vpop.permute.xlu0 %2062
  %2064 = vset.pattern.permute.xlu0 0
  %2065 = vperm.xlu0 %2064, %v1760
  %v2066 = vpop.permute.xlu0 %2065
  %2067 = vset.pattern.permute.xlu0 0
  %2068 = vperm.xlu0 %2067, %v1761
  %v2069 = vpop.permute.xlu0 %2068
  %2070 = vset.pattern.permute.xlu0 0
  %2071 = vperm.xlu0 %2070, %v1762
  %v2072 = vpop.permute.xlu0 %2071
  %2073 = vset.pattern.permute.xlu0 0
  %2074 = vperm.xlu0 %2073, %v1763
  %v2075 = vpop.permute.xlu0 %2074
  %2076 = vset.pattern.permute.xlu0 0
  %2077 = vperm.xlu0 %2076, %v1764
  %v2078 = vpop.permute.xlu0 %2077
  %2079 = vset.pattern.permute.xlu0 0
  %2080 = vperm.xlu0 %2079, %v1765
  %v2081 = vpop.permute.xlu0 %2080
  %2082 = vset.pattern.permute.xlu0 0
  %2083 = vperm.xlu0 %2082, %v1766
  %v2084 = vpop.permute.xlu0 %2083
  %2085 = vset.pattern.permute.xlu0 0
  %2086 = vperm.xlu0 %2085, %v1767
  %v2087 = vpop.permute.xlu0 %2086
  %2088 = vset.pattern.permute.xlu0 0
  %2089 = vperm.xlu0 %2088, %v1768
  %v2090 = vpop.permute.xlu0 %2089
  %2091 = vset.pattern.permute.xlu0 0
  %2092 = vperm.xlu0 %2091, %v1769
  %v2093 = vpop.permute.xlu0 %2092
  %2094 = vset.pattern.permute.xlu0 0
  %2095 = vperm.xlu0 %2094, %v1770
  %v2096 = vpop.permute.xlu0 %2095
  %2097 = vset.pattern.permute.xlu0 0
  %2098 = vperm.xlu0 %2097, %v1771
  %v2099 = vpop.permute.xlu0 %2098
  %2100 = vset.pattern.permute.xlu0 0
  %2101 = vperm.xlu0 %2100, %v1772
  %v2102 = vpop.permute.xlu0 %2101
  %2103 = vset.pattern.permute.xlu0 0
  %2104 = vperm.xlu0 %2103, %v1773
  %v2105 = vpop.permute.xlu0 %2104
  %2106 = vset.pattern.permute.xlu0 0
  %2107 = vperm.xlu0 %2106, %v1774
  %v2108 = vpop.permute.xlu0 %2107
  %2109 = vset.pattern.permute.xlu0 0
  %2110 = vperm.xlu0 %2109, %v1775
  %v2111 = vpop.permute.xlu0 %2110
  %2112 = vset.pattern.permute.xlu0 0
  %2113 = vperm.xlu0 %2112, %v1776
  %v2114 = vpop.permute.xlu0 %2113
  %2115 = vset.pattern.permute.xlu0 0
  %2116 = vperm.xlu0 %2115, %v1777
  %v2117 = vpop.permute.xlu0 %2116
  %2118 = vset.pattern.permute.xlu0 0
  %2119 = vperm.xlu0 %2118, %v1778
  %v2120 = vpop.permute.xlu0 %2119
  %2121 = vset.pattern.permute.xlu0 0
  %2122 = vperm.xlu0 %2121, %v1779
  %v2123 = vpop.permute.xlu0 %2122
  %2124 = vset.pattern.permute.xlu0 0
  %2125 = vperm.xlu0 %2124, %v1780
  %v2126 = vpop.permute.xlu0 %2125
  %2127 = vset.pattern.permute.xlu0 0
  %2128 = vperm.xlu0 %2127, %v1781
  %v2129 = vpop.permute.xlu0 %2128
  %2130 = vset.pattern.permute.xlu0 0
  %2131 = vperm.xlu0 %2130, %v1782
  %v2132 = vpop.permute.xlu0 %2131
  %2133 = vset.pattern.permute.xlu0 0
  %2134 = vperm.xlu0 %2133, %v1783
  %v2135 = vpop.permute.xlu0 %2134
  %2136 = vset.pattern.permute.xlu0 0
  %2137 = vperm.xlu0 %2136, %v1784
  %v2138 = vpop.permute.xlu0 %2137
  %2139 = vset.pattern.permute.xlu0 0
  %2140 = vperm.xlu0 %2139, %v1785
  %v2141 = vpop.permute.xlu0 %2140
  %2142 = vset.pattern.permute.xlu0 0
  %2143 = vperm.xlu0 %2142, %v1786
  %v2144 = vpop.permute.xlu0 %2143
  %2145 = vset.pattern.permute.xlu0 0
  %2146 = vperm.xlu0 %2145, %v1787
  %v2147 = vpop.permute.xlu0 %2146
  %2148 = vset.pattern.permute.xlu0 0
  %2149 = vperm.xlu0 %2148, %v1788
  %v2150 = vpop.permute.xlu0 %2149
  %2151 = vset.pattern.permute.xlu0 0
  %2152 = vperm.xlu0 %2151, %v1789
  %v2153 = vpop.permute.xlu0 %2152
  %2154 = vset.pattern.permute.xlu0 0
  %2155 = vperm.xlu0 %2154, %v1790
  %v2156 = vpop.permute.xlu0 %2155
  %2157 = vset.pattern.permute.xlu0 0
  %2158 = vperm.xlu0 %2157, %v1791
  %v2159 = vpop.permute.xlu0 %2158
  %2160 = vset.pattern.permute.xlu0 0
  %2161 = vperm.xlu0 %2160, %v1792
  %v2162 = vpop.permute.xlu0 %2161
  %2163 = vset.pattern.permute.xlu0 0
  %2164 = vperm.xlu0 %2163, %v1793
  %v2165 = vpop.permute.xlu0 %2164
  %2166 = vset.pattern.permute.xlu0 0
  %2167 = vperm.xlu0 %2166, %v1794
  %v2168 = vpop.permute.xlu0 %2167
  %2169 = vset.pattern.permute.xlu0 0
  %2170 = vperm.xlu0 %2169, %v1795
  %v2171 = vpop.permute.xlu0 %2170
  %2172 = vset.pattern.permute.xlu0 0
  %2173 = vperm.xlu0 %2172, %v1796
  %v2174 = vpop.permute.xlu0 %2173
  %2175 = vset.pattern.permute.xlu0 0
  %2176 = vperm.xlu0 %2175, %v1797
  %v2177 = vpop.permute.xlu0 %2176
  %2178 = vset.pattern.permute.xlu0 0
  %2179 = vperm.xlu0 %2178, %v1798
  %v2180 = vpop.permute.xlu0 %2179
  %2181 = vset.pattern.permute.xlu0 0
  %2182 = vperm.xlu0 %2181, %v1799
  %v2183 = vpop.permute.xlu0 %2182
  %v2184 = vlaneseq
  %v2185 = vshrl.u32 %v2184, 7
  %v2186 = vsub.s32 %v47, %v2185
  %v2187 = vrot.slane %v1802, %v2186
  %v2188 = vadd.s32 %v47, 4294967288
  %v2189 = vlaneseq
  %v2190 = vshrl.u32 %v2189, 7
  %v2191 = vsub.s32 %v2188, %v2190
  %v2192 = vrot.slane %v1805, %v2191
  %vm2193 = vcmask 130112
  %v2194 = vsel %vm2193, %v2192, %v2187
  %v2195 = vadd.s32 %v47, 4294967280
  %v2196 = vlaneseq
  %v2197 = vshrl.u32 %v2196, 7
  %v2198 = vsub.s32 %v2195, %v2197
  %v2199 = vrot.slane %v1808, %v2198
  %vm2200 = vcmask 195712
  %v2201 = vsel %vm2200, %v2199, %v2194
  %v2202 = vadd.s32 %v47, 4294967272
  %v2203 = vlaneseq
  %v2204 = vshrl.u32 %v2203, 7
  %v2205 = vsub.s32 %v2202, %v2204
  %v2206 = vrot.slane %v1811, %v2205
  %vm2207 = vcmask 261312
  %v2208 = vsel %vm2207, %v2206, %v2201
  %v2209 = vlaneseq
  %v2210 = vshrl.u32 %v2209, 7
  %v2211 = vsub.s32 %v47, %v2210
  %v2212 = vrot.slane %v1814, %v2211
  %v2213 = vlaneseq
  %v2214 = vshrl.u32 %v2213, 7
  %v2215 = vsub.s32 %v2188, %v2214
  %v2216 = vrot.slane %v1817, %v2215
  %v2217 = vsel %vm2193, %v2216, %v2212
  %v2218 = vlaneseq
  %v2219 = vshrl.u32 %v2218, 7
  %v2220 = vsub.s32 %v2195, %v2219
  %v2221 = vrot.slane %v1820, %v2220
  %v2222 = vsel %vm2200, %v2221, %v2217
  %v2223 = vlaneseq
  %v2224 = vshrl.u32 %v2223, 7
  %v2225 = vsub.s32 %v2202, %v2224
  %v2226 = vrot.slane %v1823, %v2225
  %v2227 = vsel %vm2207, %v2226, %v2222
  %v2228 = vlaneseq
  %v2229 = vshrl.u32 %v2228, 7
  %v2230 = vsub.s32 %v47, %v2229
  %v2231 = vrot.slane %v1826, %v2230
  %v2232 = vlaneseq
  %v2233 = vshrl.u32 %v2232, 7
  %v2234 = vsub.s32 %v2188, %v2233
  %v2235 = vrot.slane %v1829, %v2234
  %v2236 = vsel %vm2193, %v2235, %v2231
  %v2237 = vlaneseq
  %v2238 = vshrl.u32 %v2237, 7
  %v2239 = vsub.s32 %v2195, %v2238
  %v2240 = vrot.slane %v1832, %v2239
  %v2241 = vsel %vm2200, %v2240, %v2236
  %v2242 = vlaneseq
  %v2243 = vshrl.u32 %v2242, 7
  %v2244 = vsub.s32 %v2202, %v2243
  %v2245 = vrot.slane %v1835, %v2244
  %v2246 = vsel %vm2207, %v2245, %v2241
  %v2247 = vlaneseq
  %v2248 = vshrl.u32 %v2247, 7
  %v2249 = vsub.s32 %v47, %v2248
  %v2250 = vrot.slane %v1838, %v2249
  %v2251 = vlaneseq
  %v2252 = vshrl.u32 %v2251, 7
  %v2253 = vsub.s32 %v2188, %v2252
  %v2254 = vrot.slane %v1841, %v2253
  %v2255 = vsel %vm2193, %v2254, %v2250
  %v2256 = vlaneseq
  %v2257 = vshrl.u32 %v2256, 7
  %v2258 = vsub.s32 %v2195, %v2257
  %v2259 = vrot.slane %v1844, %v2258
  %v2260 = vsel %vm2200, %v2259, %v2255
  %v2261 = vlaneseq
  %v2262 = vshrl.u32 %v2261, 7
  %v2263 = vsub.s32 %v2202, %v2262
  %v2264 = vrot.slane %v1847, %v2263
  %v2265 = vsel %vm2207, %v2264, %v2260
  %v2266 = vlaneseq
  %v2267 = vshrl.u32 %v2266, 7
  %v2268 = vsub.s32 %v47, %v2267
  %v2269 = vrot.slane %v1850, %v2268
  %v2270 = vlaneseq
  %v2271 = vshrl.u32 %v2270, 7
  %v2272 = vsub.s32 %v2188, %v2271
  %v2273 = vrot.slane %v1853, %v2272
  %v2274 = vsel %vm2193, %v2273, %v2269
  %v2275 = vlaneseq
  %v2276 = vshrl.u32 %v2275, 7
  %v2277 = vsub.s32 %v2195, %v2276
  %v2278 = vrot.slane %v1856, %v2277
  %v2279 = vsel %vm2200, %v2278, %v2274
  %v2280 = vlaneseq
  %v2281 = vshrl.u32 %v2280, 7
  %v2282 = vsub.s32 %v2202, %v2281
  %v2283 = vrot.slane %v1859, %v2282
  %v2284 = vsel %vm2207, %v2283, %v2279
  %v2285 = vlaneseq
  %v2286 = vshrl.u32 %v2285, 7
  %v2287 = vsub.s32 %v47, %v2286
  %v2288 = vrot.slane %v1862, %v2287
  %v2289 = vlaneseq
  %v2290 = vshrl.u32 %v2289, 7
  %v2291 = vsub.s32 %v2188, %v2290
  %v2292 = vrot.slane %v1865, %v2291
  %v2293 = vsel %vm2193, %v2292, %v2288
  %v2294 = vlaneseq
  %v2295 = vshrl.u32 %v2294, 7
  %v2296 = vsub.s32 %v2195, %v2295
  %v2297 = vrot.slane %v1868, %v2296
  %v2298 = vsel %vm2200, %v2297, %v2293
  %v2299 = vlaneseq
  %v2300 = vshrl.u32 %v2299, 7
  %v2301 = vsub.s32 %v2202, %v2300
  %v2302 = vrot.slane %v1871, %v2301
  %v2303 = vsel %vm2207, %v2302, %v2298
  %v2304 = vlaneseq
  %v2305 = vshrl.u32 %v2304, 7
  %v2306 = vsub.s32 %v47, %v2305
  %v2307 = vrot.slane %v1874, %v2306
  %v2308 = vlaneseq
  %v2309 = vshrl.u32 %v2308, 7
  %v2310 = vsub.s32 %v2188, %v2309
  %v2311 = vrot.slane %v1877, %v2310
  %v2312 = vsel %vm2193, %v2311, %v2307
  %v2313 = vlaneseq
  %v2314 = vshrl.u32 %v2313, 7
  %v2315 = vsub.s32 %v2195, %v2314
  %v2316 = vrot.slane %v1880, %v2315
  %v2317 = vsel %vm2200, %v2316, %v2312
  %v2318 = vlaneseq
  %v2319 = vshrl.u32 %v2318, 7
  %v2320 = vsub.s32 %v2202, %v2319
  %v2321 = vrot.slane %v1883, %v2320
  %v2322 = vsel %vm2207, %v2321, %v2317
  %v2323 = vlaneseq
  %v2324 = vshrl.u32 %v2323, 7
  %v2325 = vsub.s32 %v47, %v2324
  %v2326 = vrot.slane %v1886, %v2325
  %v2327 = vlaneseq
  %v2328 = vshrl.u32 %v2327, 7
  %v2329 = vsub.s32 %v2188, %v2328
  %v2330 = vrot.slane %v1889, %v2329
  %v2331 = vsel %vm2193, %v2330, %v2326
  %v2332 = vlaneseq
  %v2333 = vshrl.u32 %v2332, 7
  %v2334 = vsub.s32 %v2195, %v2333
  %v2335 = vrot.slane %v1892, %v2334
  %v2336 = vsel %vm2200, %v2335, %v2331
  %v2337 = vlaneseq
  %v2338 = vshrl.u32 %v2337, 7
  %v2339 = vsub.s32 %v2202, %v2338
  %v2340 = vrot.slane %v1895, %v2339
  %v2341 = vsel %vm2207, %v2340, %v2336
  %v2342 = vlaneseq
  %v2343 = vshrl.u32 %v2342, 7
  %v2344 = vsub.s32 %v47, %v2343
  %v2345 = vrot.slane %v1898, %v2344
  %v2346 = vlaneseq
  %v2347 = vshrl.u32 %v2346, 7
  %v2348 = vsub.s32 %v2188, %v2347
  %v2349 = vrot.slane %v1901, %v2348
  %v2350 = vsel %vm2193, %v2349, %v2345
  %v2351 = vlaneseq
  %v2352 = vshrl.u32 %v2351, 7
  %v2353 = vsub.s32 %v2195, %v2352
  %v2354 = vrot.slane %v1904, %v2353
  %v2355 = vsel %vm2200, %v2354, %v2350
  %v2356 = vlaneseq
  %v2357 = vshrl.u32 %v2356, 7
  %v2358 = vsub.s32 %v2202, %v2357
  %v2359 = vrot.slane %v1907, %v2358
  %v2360 = vsel %vm2207, %v2359, %v2355
  %v2361 = vlaneseq
  %v2362 = vshrl.u32 %v2361, 7
  %v2363 = vsub.s32 %v47, %v2362
  %v2364 = vrot.slane %v1910, %v2363
  %v2365 = vlaneseq
  %v2366 = vshrl.u32 %v2365, 7
  %v2367 = vsub.s32 %v2188, %v2366
  %v2368 = vrot.slane %v1913, %v2367
  %v2369 = vsel %vm2193, %v2368, %v2364
  %v2370 = vlaneseq
  %v2371 = vshrl.u32 %v2370, 7
  %v2372 = vsub.s32 %v2195, %v2371
  %v2373 = vrot.slane %v1916, %v2372
  %v2374 = vsel %vm2200, %v2373, %v2369
  %v2375 = vlaneseq
  %v2376 = vshrl.u32 %v2375, 7
  %v2377 = vsub.s32 %v2202, %v2376
  %v2378 = vrot.slane %v1919, %v2377
  %v2379 = vsel %vm2207, %v2378, %v2374
  %v2380 = vlaneseq
  %v2381 = vshrl.u32 %v2380, 7
  %v2382 = vsub.s32 %v47, %v2381
  %v2383 = vrot.slane %v1922, %v2382
  %v2384 = vlaneseq
  %v2385 = vshrl.u32 %v2384, 7
  %v2386 = vsub.s32 %v2188, %v2385
  %v2387 = vrot.slane %v1925, %v2386
  %v2388 = vsel %vm2193, %v2387, %v2383
  %v2389 = vlaneseq
  %v2390 = vshrl.u32 %v2389, 7
  %v2391 = vsub.s32 %v2195, %v2390
  %v2392 = vrot.slane %v1928, %v2391
  %v2393 = vsel %vm2200, %v2392, %v2388
  %v2394 = vlaneseq
  %v2395 = vshrl.u32 %v2394, 7
  %v2396 = vsub.s32 %v2202, %v2395
  %v2397 = vrot.slane %v1931, %v2396
  %v2398 = vsel %vm2207, %v2397, %v2393
  %v2399 = vlaneseq
  %v2400 = vshrl.u32 %v2399, 7
  %v2401 = vsub.s32 %v47, %v2400
  %v2402 = vrot.slane %v1934, %v2401
  %v2403 = vlaneseq
  %v2404 = vshrl.u32 %v2403, 7
  %v2405 = vsub.s32 %v2188, %v2404
  %v2406 = vrot.slane %v1937, %v2405
  %v2407 = vsel %vm2193, %v2406, %v2402
  %v2408 = vlaneseq
  %v2409 = vshrl.u32 %v2408, 7
  %v2410 = vsub.s32 %v2195, %v2409
  %v2411 = vrot.slane %v1940, %v2410
  %v2412 = vsel %vm2200, %v2411, %v2407
  %v2413 = vlaneseq
  %v2414 = vshrl.u32 %v2413, 7
  %v2415 = vsub.s32 %v2202, %v2414
  %v2416 = vrot.slane %v1943, %v2415
  %v2417 = vsel %vm2207, %v2416, %v2412
  %v2418 = vlaneseq
  %v2419 = vshrl.u32 %v2418, 7
  %v2420 = vsub.s32 %v47, %v2419
  %v2421 = vrot.slane %v1946, %v2420
  %v2422 = vlaneseq
  %v2423 = vshrl.u32 %v2422, 7
  %v2424 = vsub.s32 %v2188, %v2423
  %v2425 = vrot.slane %v1949, %v2424
  %v2426 = vsel %vm2193, %v2425, %v2421
  %v2427 = vlaneseq
  %v2428 = vshrl.u32 %v2427, 7
  %v2429 = vsub.s32 %v2195, %v2428
  %v2430 = vrot.slane %v1952, %v2429
  %v2431 = vsel %vm2200, %v2430, %v2426
  %v2432 = vlaneseq
  %v2433 = vshrl.u32 %v2432, 7
  %v2434 = vsub.s32 %v2202, %v2433
  %v2435 = vrot.slane %v1955, %v2434
  %v2436 = vsel %vm2207, %v2435, %v2431
  %v2437 = vlaneseq
  %v2438 = vshrl.u32 %v2437, 7
  %v2439 = vsub.s32 %v47, %v2438
  %v2440 = vrot.slane %v1958, %v2439
  %v2441 = vlaneseq
  %v2442 = vshrl.u32 %v2441, 7
  %v2443 = vsub.s32 %v2188, %v2442
  %v2444 = vrot.slane %v1961, %v2443
  %v2445 = vsel %vm2193, %v2444, %v2440
  %v2446 = vlaneseq
  %v2447 = vshrl.u32 %v2446, 7
  %v2448 = vsub.s32 %v2195, %v2447
  %v2449 = vrot.slane %v1964, %v2448
  %v2450 = vsel %vm2200, %v2449, %v2445
  %v2451 = vlaneseq
  %v2452 = vshrl.u32 %v2451, 7
  %v2453 = vsub.s32 %v2202, %v2452
  %v2454 = vrot.slane %v1967, %v2453
  %v2455 = vsel %vm2207, %v2454, %v2450
  %v2456 = vlaneseq
  %v2457 = vshrl.u32 %v2456, 7
  %v2458 = vsub.s32 %v47, %v2457
  %v2459 = vrot.slane %v1970, %v2458
  %v2460 = vlaneseq
  %v2461 = vshrl.u32 %v2460, 7
  %v2462 = vsub.s32 %v2188, %v2461
  %v2463 = vrot.slane %v1973, %v2462
  %v2464 = vsel %vm2193, %v2463, %v2459
  %v2465 = vlaneseq
  %v2466 = vshrl.u32 %v2465, 7
  %v2467 = vsub.s32 %v2195, %v2466
  %v2468 = vrot.slane %v1976, %v2467
  %v2469 = vsel %vm2200, %v2468, %v2464
  %v2470 = vlaneseq
  %v2471 = vshrl.u32 %v2470, 7
  %v2472 = vsub.s32 %v2202, %v2471
  %v2473 = vrot.slane %v1979, %v2472
  %v2474 = vsel %vm2207, %v2473, %v2469
  %v2475 = vlaneseq
  %v2476 = vshrl.u32 %v2475, 7
  %v2477 = vsub.s32 %v47, %v2476
  %v2478 = vrot.slane %v1982, %v2477
  %v2479 = vlaneseq
  %v2480 = vshrl.u32 %v2479, 7
  %v2481 = vsub.s32 %v2188, %v2480
  %v2482 = vrot.slane %v1985, %v2481
  %v2483 = vsel %vm2193, %v2482, %v2478
  %v2484 = vlaneseq
  %v2485 = vshrl.u32 %v2484, 7
  %v2486 = vsub.s32 %v2195, %v2485
  %v2487 = vrot.slane %v1988, %v2486
  %v2488 = vsel %vm2200, %v2487, %v2483
  %v2489 = vlaneseq
  %v2490 = vshrl.u32 %v2489, 7
  %v2491 = vsub.s32 %v2202, %v2490
  %v2492 = vrot.slane %v1991, %v2491
  %v2493 = vsel %vm2207, %v2492, %v2488
  %v2494 = vlaneseq
  %v2495 = vshrl.u32 %v2494, 7
  %v2496 = vsub.s32 %v47, %v2495
  %v2497 = vrot.slane %v1994, %v2496
  %v2498 = vlaneseq
  %v2499 = vshrl.u32 %v2498, 7
  %v2500 = vsub.s32 %v2188, %v2499
  %v2501 = vrot.slane %v1997, %v2500
  %v2502 = vsel %vm2193, %v2501, %v2497
  %v2503 = vlaneseq
  %v2504 = vshrl.u32 %v2503, 7
  %v2505 = vsub.s32 %v2195, %v2504
  %v2506 = vrot.slane %v2000, %v2505
  %v2507 = vsel %vm2200, %v2506, %v2502
  %v2508 = vlaneseq
  %v2509 = vshrl.u32 %v2508, 7
  %v2510 = vsub.s32 %v2202, %v2509
  %v2511 = vrot.slane %v2003, %v2510
  %v2512 = vsel %vm2207, %v2511, %v2507
  %v2513 = vlaneseq
  %v2514 = vshrl.u32 %v2513, 7
  %v2515 = vsub.s32 %v47, %v2514
  %v2516 = vrot.slane %v2006, %v2515
  %v2517 = vlaneseq
  %v2518 = vshrl.u32 %v2517, 7
  %v2519 = vsub.s32 %v2188, %v2518
  %v2520 = vrot.slane %v2009, %v2519
  %v2521 = vsel %vm2193, %v2520, %v2516
  %v2522 = vlaneseq
  %v2523 = vshrl.u32 %v2522, 7
  %v2524 = vsub.s32 %v2195, %v2523
  %v2525 = vrot.slane %v2012, %v2524
  %v2526 = vsel %vm2200, %v2525, %v2521
  %v2527 = vlaneseq
  %v2528 = vshrl.u32 %v2527, 7
  %v2529 = vsub.s32 %v2202, %v2528
  %v2530 = vrot.slane %v2015, %v2529
  %v2531 = vsel %vm2207, %v2530, %v2526
  %v2532 = vlaneseq
  %v2533 = vshrl.u32 %v2532, 7
  %v2534 = vsub.s32 %v47, %v2533
  %v2535 = vrot.slane %v2018, %v2534
  %v2536 = vlaneseq
  %v2537 = vshrl.u32 %v2536, 7
  %v2538 = vsub.s32 %v2188, %v2537
  %v2539 = vrot.slane %v2021, %v2538
  %v2540 = vsel %vm2193, %v2539, %v2535
  %v2541 = vlaneseq
  %v2542 = vshrl.u32 %v2541, 7
  %v2543 = vsub.s32 %v2195, %v2542
  %v2544 = vrot.slane %v2024, %v2543
  %v2545 = vsel %vm2200, %v2544, %v2540
  %v2546 = vlaneseq
  %v2547 = vshrl.u32 %v2546, 7
  %v2548 = vsub.s32 %v2202, %v2547
  %v2549 = vrot.slane %v2027, %v2548
  %v2550 = vsel %vm2207, %v2549, %v2545
  %v2551 = vlaneseq
  %v2552 = vshrl.u32 %v2551, 7
  %v2553 = vsub.s32 %v47, %v2552
  %v2554 = vrot.slane %v2030, %v2553
  %v2555 = vlaneseq
  %v2556 = vshrl.u32 %v2555, 7
  %v2557 = vsub.s32 %v2188, %v2556
  %v2558 = vrot.slane %v2033, %v2557
  %v2559 = vsel %vm2193, %v2558, %v2554
  %v2560 = vlaneseq
  %v2561 = vshrl.u32 %v2560, 7
  %v2562 = vsub.s32 %v2195, %v2561
  %v2563 = vrot.slane %v2036, %v2562
  %v2564 = vsel %vm2200, %v2563, %v2559
  %v2565 = vlaneseq
  %v2566 = vshrl.u32 %v2565, 7
  %v2567 = vsub.s32 %v2202, %v2566
  %v2568 = vrot.slane %v2039, %v2567
  %v2569 = vsel %vm2207, %v2568, %v2564
  %v2570 = vlaneseq
  %v2571 = vshrl.u32 %v2570, 7
  %v2572 = vsub.s32 %v47, %v2571
  %v2573 = vrot.slane %v2042, %v2572
  %v2574 = vlaneseq
  %v2575 = vshrl.u32 %v2574, 7
  %v2576 = vsub.s32 %v2188, %v2575
  %v2577 = vrot.slane %v2045, %v2576
  %v2578 = vsel %vm2193, %v2577, %v2573
  %v2579 = vlaneseq
  %v2580 = vshrl.u32 %v2579, 7
  %v2581 = vsub.s32 %v2195, %v2580
  %v2582 = vrot.slane %v2048, %v2581
  %v2583 = vsel %vm2200, %v2582, %v2578
  %v2584 = vlaneseq
  %v2585 = vshrl.u32 %v2584, 7
  %v2586 = vsub.s32 %v2202, %v2585
  %v2587 = vrot.slane %v2051, %v2586
  %v2588 = vsel %vm2207, %v2587, %v2583
  %v2589 = vlaneseq
  %v2590 = vshrl.u32 %v2589, 7
  %v2591 = vsub.s32 %v47, %v2590
  %v2592 = vrot.slane %v2054, %v2591
  %v2593 = vlaneseq
  %v2594 = vshrl.u32 %v2593, 7
  %v2595 = vsub.s32 %v2188, %v2594
  %v2596 = vrot.slane %v2057, %v2595
  %v2597 = vsel %vm2193, %v2596, %v2592
  %v2598 = vlaneseq
  %v2599 = vshrl.u32 %v2598, 7
  %v2600 = vsub.s32 %v2195, %v2599
  %v2601 = vrot.slane %v2060, %v2600
  %v2602 = vsel %vm2200, %v2601, %v2597
  %v2603 = vlaneseq
  %v2604 = vshrl.u32 %v2603, 7
  %v2605 = vsub.s32 %v2202, %v2604
  %v2606 = vrot.slane %v2063, %v2605
  %v2607 = vsel %vm2207, %v2606, %v2602
  %v2608 = vlaneseq
  %v2609 = vshrl.u32 %v2608, 7
  %v2610 = vsub.s32 %v47, %v2609
  %v2611 = vrot.slane %v2066, %v2610
  %v2612 = vlaneseq
  %v2613 = vshrl.u32 %v2612, 7
  %v2614 = vsub.s32 %v2188, %v2613
  %v2615 = vrot.slane %v2069, %v2614
  %v2616 = vsel %vm2193, %v2615, %v2611
  %v2617 = vlaneseq
  %v2618 = vshrl.u32 %v2617, 7
  %v2619 = vsub.s32 %v2195, %v2618
  %v2620 = vrot.slane %v2072, %v2619
  %v2621 = vsel %vm2200, %v2620, %v2616
  %v2622 = vlaneseq
  %v2623 = vshrl.u32 %v2622, 7
  %v2624 = vsub.s32 %v2202, %v2623
  %v2625 = vrot.slane %v2075, %v2624
  %v2626 = vsel %vm2207, %v2625, %v2621
  %v2627 = vlaneseq
  %v2628 = vshrl.u32 %v2627, 7
  %v2629 = vsub.s32 %v47, %v2628
  %v2630 = vrot.slane %v2078, %v2629
  %v2631 = vlaneseq
  %v2632 = vshrl.u32 %v2631, 7
  %v2633 = vsub.s32 %v2188, %v2632
  %v2634 = vrot.slane %v2081, %v2633
  %v2635 = vsel %vm2193, %v2634, %v2630
  %v2636 = vlaneseq
  %v2637 = vshrl.u32 %v2636, 7
  %v2638 = vsub.s32 %v2195, %v2637
  %v2639 = vrot.slane %v2084, %v2638
  %v2640 = vsel %vm2200, %v2639, %v2635
  %v2641 = vlaneseq
  %v2642 = vshrl.u32 %v2641, 7
  %v2643 = vsub.s32 %v2202, %v2642
  %v2644 = vrot.slane %v2087, %v2643
  %v2645 = vsel %vm2207, %v2644, %v2640
  %v2646 = vlaneseq
  %v2647 = vshrl.u32 %v2646, 7
  %v2648 = vsub.s32 %v47, %v2647
  %v2649 = vrot.slane %v2090, %v2648
  %v2650 = vlaneseq
  %v2651 = vshrl.u32 %v2650, 7
  %v2652 = vsub.s32 %v2188, %v2651
  %v2653 = vrot.slane %v2093, %v2652
  %v2654 = vsel %vm2193, %v2653, %v2649
  %v2655 = vlaneseq
  %v2656 = vshrl.u32 %v2655, 7
  %v2657 = vsub.s32 %v2195, %v2656
  %v2658 = vrot.slane %v2096, %v2657
  %v2659 = vsel %vm2200, %v2658, %v2654
  %v2660 = vlaneseq
  %v2661 = vshrl.u32 %v2660, 7
  %v2662 = vsub.s32 %v2202, %v2661
  %v2663 = vrot.slane %v2099, %v2662
  %v2664 = vsel %vm2207, %v2663, %v2659
  %v2665 = vlaneseq
  %v2666 = vshrl.u32 %v2665, 7
  %v2667 = vsub.s32 %v47, %v2666
  %v2668 = vrot.slane %v2102, %v2667
  %v2669 = vlaneseq
  %v2670 = vshrl.u32 %v2669, 7
  %v2671 = vsub.s32 %v2188, %v2670
  %v2672 = vrot.slane %v2105, %v2671
  %v2673 = vsel %vm2193, %v2672, %v2668
  %v2674 = vlaneseq
  %v2675 = vshrl.u32 %v2674, 7
  %v2676 = vsub.s32 %v2195, %v2675
  %v2677 = vrot.slane %v2108, %v2676
  %v2678 = vsel %vm2200, %v2677, %v2673
  %v2679 = vlaneseq
  %v2680 = vshrl.u32 %v2679, 7
  %v2681 = vsub.s32 %v2202, %v2680
  %v2682 = vrot.slane %v2111, %v2681
  %v2683 = vsel %vm2207, %v2682, %v2678
  %v2684 = vlaneseq
  %v2685 = vshrl.u32 %v2684, 7
  %v2686 = vsub.s32 %v47, %v2685
  %v2687 = vrot.slane %v2114, %v2686
  %v2688 = vlaneseq
  %v2689 = vshrl.u32 %v2688, 7
  %v2690 = vsub.s32 %v2188, %v2689
  %v2691 = vrot.slane %v2117, %v2690
  %v2692 = vsel %vm2193, %v2691, %v2687
  %v2693 = vlaneseq
  %v2694 = vshrl.u32 %v2693, 7
  %v2695 = vsub.s32 %v2195, %v2694
  %v2696 = vrot.slane %v2120, %v2695
  %v2697 = vsel %vm2200, %v2696, %v2692
  %v2698 = vlaneseq
  %v2699 = vshrl.u32 %v2698, 7
  %v2700 = vsub.s32 %v2202, %v2699
  %v2701 = vrot.slane %v2123, %v2700
  %v2702 = vsel %vm2207, %v2701, %v2697
  %v2703 = vlaneseq
  %v2704 = vshrl.u32 %v2703, 7
  %v2705 = vsub.s32 %v47, %v2704
  %v2706 = vrot.slane %v2126, %v2705
  %v2707 = vlaneseq
  %v2708 = vshrl.u32 %v2707, 7
  %v2709 = vsub.s32 %v2188, %v2708
  %v2710 = vrot.slane %v2129, %v2709
  %v2711 = vsel %vm2193, %v2710, %v2706
  %v2712 = vlaneseq
  %v2713 = vshrl.u32 %v2712, 7
  %v2714 = vsub.s32 %v2195, %v2713
  %v2715 = vrot.slane %v2132, %v2714
  %v2716 = vsel %vm2200, %v2715, %v2711
  %v2717 = vlaneseq
  %v2718 = vshrl.u32 %v2717, 7
  %v2719 = vsub.s32 %v2202, %v2718
  %v2720 = vrot.slane %v2135, %v2719
  %v2721 = vsel %vm2207, %v2720, %v2716
  %v2722 = vlaneseq
  %v2723 = vshrl.u32 %v2722, 7
  %v2724 = vsub.s32 %v47, %v2723
  %v2725 = vrot.slane %v2138, %v2724
  %v2726 = vlaneseq
  %v2727 = vshrl.u32 %v2726, 7
  %v2728 = vsub.s32 %v2188, %v2727
  %v2729 = vrot.slane %v2141, %v2728
  %v2730 = vsel %vm2193, %v2729, %v2725
  %v2731 = vlaneseq
  %v2732 = vshrl.u32 %v2731, 7
  %v2733 = vsub.s32 %v2195, %v2732
  %v2734 = vrot.slane %v2144, %v2733
  %v2735 = vsel %vm2200, %v2734, %v2730
  %v2736 = vlaneseq
  %v2737 = vshrl.u32 %v2736, 7
  %v2738 = vsub.s32 %v2202, %v2737
  %v2739 = vrot.slane %v2147, %v2738
  %v2740 = vsel %vm2207, %v2739, %v2735
  %v2741 = vlaneseq
  %v2742 = vshrl.u32 %v2741, 7
  %v2743 = vsub.s32 %v47, %v2742
  %v2744 = vrot.slane %v2150, %v2743
  %v2745 = vlaneseq
  %v2746 = vshrl.u32 %v2745, 7
  %v2747 = vsub.s32 %v2188, %v2746
  %v2748 = vrot.slane %v2153, %v2747
  %v2749 = vsel %vm2193, %v2748, %v2744
  %v2750 = vlaneseq
  %v2751 = vshrl.u32 %v2750, 7
  %v2752 = vsub.s32 %v2195, %v2751
  %v2753 = vrot.slane %v2156, %v2752
  %v2754 = vsel %vm2200, %v2753, %v2749
  %v2755 = vlaneseq
  %v2756 = vshrl.u32 %v2755, 7
  %v2757 = vsub.s32 %v2202, %v2756
  %v2758 = vrot.slane %v2159, %v2757
  %v2759 = vsel %vm2207, %v2758, %v2754
  %v2760 = vlaneseq
  %v2761 = vshrl.u32 %v2760, 7
  %v2762 = vsub.s32 %v47, %v2761
  %v2763 = vrot.slane %v2162, %v2762
  %v2764 = vlaneseq
  %v2765 = vshrl.u32 %v2764, 7
  %v2766 = vsub.s32 %v2188, %v2765
  %v2767 = vrot.slane %v2165, %v2766
  %v2768 = vsel %vm2193, %v2767, %v2763
  %v2769 = vlaneseq
  %v2770 = vshrl.u32 %v2769, 7
  %v2771 = vsub.s32 %v2195, %v2770
  %v2772 = vrot.slane %v2168, %v2771
  %v2773 = vsel %vm2200, %v2772, %v2768
  %v2774 = vlaneseq
  %v2775 = vshrl.u32 %v2774, 7
  %v2776 = vsub.s32 %v2202, %v2775
  %v2777 = vrot.slane %v2171, %v2776
  %v2778 = vsel %vm2207, %v2777, %v2773
  %v2779 = vlaneseq
  %v2780 = vshrl.u32 %v2779, 7
  %v2781 = vsub.s32 %v47, %v2780
  %v2782 = vrot.slane %v2174, %v2781
  %v2783 = vlaneseq
  %v2784 = vshrl.u32 %v2783, 7
  %v2785 = vsub.s32 %v2188, %v2784
  %v2786 = vrot.slane %v2177, %v2785
  %v2787 = vsel %vm2193, %v2786, %v2782
  %v2788 = vlaneseq
  %v2789 = vshrl.u32 %v2788, 7
  %v2790 = vsub.s32 %v2195, %v2789
  %v2791 = vrot.slane %v2180, %v2790
  %v2792 = vsel %vm2200, %v2791, %v2787
  %v2793 = vlaneseq
  %v2794 = vshrl.u32 %v2793, 7
  %v2795 = vsub.s32 %v2202, %v2794
  %v2796 = vrot.slane %v2183, %v2795
  %v2797 = vsel %vm2207, %v2796, %v2792
  %vm2798 = vcmask 1041409
  %v2799 = vsel %vm2798, %v2227, %v2208
  %vm2800 = vcmask 1042434
  %v2801 = vsel %vm2800, %v2246, %v2799
  %vm2802 = vcmask 1043459
  %v2803 = vsel %vm2802, %v2265, %v2801
  %vm2804 = vcmask 1044484
  %v2805 = vsel %vm2804, %v2284, %v2803
  %vm2806 = vcmask 1045509
  %v2807 = vsel %vm2806, %v2303, %v2805
  %vm2808 = vcmask 1046534
  %v2809 = vsel %vm2808, %v2322, %v2807
  %vm2810 = vcmask 1047559
  %v2811 = vsel %vm2810, %v2341, %v2809
  %v2812 = vsel %vm2798, %v2379, %v2360
  %v2813 = vsel %vm2800, %v2398, %v2812
  %v2814 = vsel %vm2802, %v2417, %v2813
  %v2815 = vsel %vm2804, %v2436, %v2814
  %v2816 = vsel %vm2806, %v2455, %v2815
  %v2817 = vsel %vm2808, %v2474, %v2816
  %v2818 = vsel %vm2810, %v2493, %v2817
  %v2819 = vsel %vm2798, %v2531, %v2512
  %v2820 = vsel %vm2800, %v2550, %v2819
  %v2821 = vsel %vm2802, %v2569, %v2820
  %v2822 = vsel %vm2804, %v2588, %v2821
  %v2823 = vsel %vm2806, %v2607, %v2822
  %v2824 = vsel %vm2808, %v2626, %v2823
  %v2825 = vsel %vm2810, %v2645, %v2824
  %v2826 = vsel %vm2798, %v2683, %v2664
  %v2827 = vsel %vm2800, %v2702, %v2826
  %v2828 = vsel %vm2802, %v2721, %v2827
  %v2829 = vsel %vm2804, %v2740, %v2828
  %v2830 = vsel %vm2806, %v2759, %v2829
  %v2831 = vsel %vm2808, %v2778, %v2830
  %v2832 = vsel %vm2810, %v2797, %v2831
  %vm2833 = vcmp.ne.s32.totalorder %v2811, 0
  %vm2834 = vcmp.ne.s32.totalorder %v2818, 0
  %vm2835 = vcmp.ne.s32.totalorder %v2825, 0
  %vm2836 = vcmp.ne.s32.totalorder %v2832, 0
  %vm2837 = vmand %vm37, %vm2833
  %vm2838 = vmand %vm38, %vm2834
  %vm2839 = vmand %vm39, %vm2835
  %vm2840 = vmand %vm40, %vm2836
  %v2841 = vsel %vm2837, 1.0, 0.0
  %v2842 = vsel %vm2838, 1.0, 0.0
  %v2843 = vsel %vm2839, 1.0, 0.0
  %v2844 = vsel %vm2840, 1.0, 0.0
  %v2845 = vsel %vm76, %v2841, 0.0
  %2846 = vadd.xlane.f32.xlu0 %v2845
  %v2847 = vpop.xlane.xlu0 %2846
  %v2848 = vsel %vm76, %v2842, 0.0
  %2849 = vadd.xlane.f32.xlu0 %v2848
  %v2850 = vpop.xlane.xlu0 %2849
  %v2851 = vsel %vm76, %v2843, 0.0
  %2852 = vadd.xlane.f32.xlu0 %v2851
  %v2853 = vpop.xlane.xlu0 %2852
  %v2854 = vsel %vm76, %v2844, 0.0
  %2855 = vadd.xlane.f32.xlu0 %v2854
  %v2856 = vpop.xlane.xlu0 %2855
  %2861 = vset.pattern.permute.xlu0 0
  %2862 = vperm.xlu0 %2861, %v29
  %v2863 = vpop.permute.xlu0 %2862
  %2864 = vset.pattern.permute.xlu0 0
  %2865 = vperm.xlu0 %2864, %v30
  %v2866 = vpop.permute.xlu0 %2865
  %2867 = vset.pattern.permute.xlu0 0
  %2868 = vperm.xlu0 %2867, %v31
  %v2869 = vpop.permute.xlu0 %2868
  %2870 = vset.pattern.permute.xlu0 0
  %2871 = vperm.xlu0 %2870, %v32
  %v2872 = vpop.permute.xlu0 %2871
  %v2873 = vlaneseq
  %v2874 = vshrl.u32 %v2873, 7
  %v2875 = vsub.s32 %v47, %v2874
  %v2876 = vrot.slane %v2863, %v2875
  %v2877 = vlaneseq
  %v2878 = vshrl.u32 %v2877, 7
  %v2879 = vsub.s32 %v2188, %v2878
  %v2880 = vrot.slane %v2866, %v2879
  %v2881 = vsel %vm2193, %v2880, %v2876
  %v2882 = vlaneseq
  %v2883 = vshrl.u32 %v2882, 7
  %v2884 = vsub.s32 %v2195, %v2883
  %v2885 = vrot.slane %v2869, %v2884
  %v2886 = vsel %vm2200, %v2885, %v2881
  %v2887 = vlaneseq
  %v2888 = vshrl.u32 %v2887, 7
  %v2889 = vsub.s32 %v2202, %v2888
  %v2890 = vrot.slane %v2872, %v2889
  %v2891 = vsel %vm2207, %v2890, %v2886
  %v2892 = vsel %vm2800, %v2891, %v2891
  %v2893 = vsel %vm2802, %v2891, %v2892
  %v2894 = vsel %vm2804, %v2891, %v2893
  %v2895 = vsel %vm2806, %v2891, %v2894
  %v2896 = vsel %vm2808, %v2891, %v2895
  %v2897 = vsel %vm2810, %v2891, %v2896
  %v2899 = vmul.f32 %v33, %v2897
  %v2900 = vmul.f32 %v34, %v2897
  %v2901 = vmul.f32 %v35, %v2897
  %v2902 = vmul.f32 %v36, %v2897
  %v2903 = vsel %vm76, %v2899, 0.0
  %2904 = vadd.xlane.f32.xlu0 %v2903
  %v2905 = vpop.xlane.xlu0 %2904
  %v2906 = vsel %vm76, %v2900, 0.0
  %2907 = vadd.xlane.f32.xlu0 %v2906
  %v2908 = vpop.xlane.xlu0 %2907
  %v2909 = vsel %vm76, %v2901, 0.0
  %2910 = vadd.xlane.f32.xlu0 %v2909
  %v2911 = vpop.xlane.xlu0 %2910
  %v2912 = vsel %vm76, %v2902, 0.0
  %2913 = vadd.xlane.f32.xlu0 %v2912
  %v2914 = vpop.xlane.xlu0 %2913
  %v2915 = vmul.f32 %v2905, 4.0
  %v2916 = vmul.f32 %v2908, 4.0
  %v2917 = vmul.f32 %v2911, 4.0
  %v2918 = vmul.f32 %v2914, 4.0
  %v2919 = vadd.f32 %v2915, 4.0
  %v2920 = vadd.f32 %v2916, 4.0
  %v2921 = vadd.f32 %v2917, 4.0
  %v2922 = vadd.f32 %v2918, 4.0
  %v2923 = vrcp.pop 5.0
  %v2924 = vmul.f32 %v2919, %v2923
  %v2925 = vmul.f32 %v2920, %v2923
  %v2926 = vmul.f32 %v2921, %v2923
  %v2927 = vmul.f32 %v2922, %v2923
  %v2928 = vfloor.f32 %v2924
  %v2929 = vfloor.f32 %v2925
  %v2930 = vfloor.f32 %v2926
  %v2931 = vfloor.f32 %v2927
  %vm2932 = vcmp.lt.f32.partialorder %v2847, %v2928
  %vm2933 = vcmp.lt.f32.partialorder %v2850, %v2929
  %vm2934 = vcmp.lt.f32.partialorder %v2853, %v2930
  %vm2935 = vcmp.lt.f32.partialorder %v2856, %v2931
  %vm2936 = vmand %vm2932, %vm236
  %vm2937 = vmand %vm2933, %vm237
  %vm2938 = vmand %vm2934, %vm238
  %vm2939 = vmand %vm2935, %vm239
  %v2940 = vsel %vm2936, 1.0, 0.0
  %v2941 = vsel %vm2937, 1.0, 0.0
  %v2942 = vsel %vm2938, 1.0, 0.0
  %v2943 = vsel %vm2939, 1.0, 0.0
  %v2944 = vmul.f32 %v207, %v232
  %v2945 = vmul.f32 %v208, %v233
  %v2946 = vmul.f32 %v209, %v234
  %v2947 = vmul.f32 %v210, %v235
  %2949 = vset.pattern.permute.xlu0 0
  %2950 = vperm.xlu0 %2949, %v2940
  %v2951 = vpop.permute.xlu0 %2950
  %2954 = vset.pattern.permute.xlu0 0
  %2955 = vperm.xlu0 %2954, %v2941
  %v2956 = vpop.permute.xlu0 %2955
  %2959 = vset.pattern.permute.xlu0 0
  %2960 = vperm.xlu0 %2959, %v2942
  %v2961 = vpop.permute.xlu0 %2960
  %2964 = vset.pattern.permute.xlu0 0
  %2965 = vperm.xlu0 %2964, %v2943
  %v2966 = vpop.permute.xlu0 %2965
  %v2968 = vmul.f32 %v2944, %v2951
  %v2969 = vmul.f32 %v2945, %v2956
  %v2970 = vmul.f32 %v2946, %v2961
  %v2971 = vmul.f32 %v2947, %v2966
  %v2972 = vpack.c.bf16 %v2941, %v2940
  %v2973 = vpack.c.bf16 %v2943, %v2942
  %2975 = vset.pattern.permute.xlu0 0
  %2976 = vperm.xlu0 %2975, %v2972
  %v2977 = vpop.permute.xlu0 %2976
  %2979 = vset.pattern.permute.xlu0 0
  %2980 = vperm.xlu0 %2979, %v2973
  %v2981 = vpop.permute.xlu0 %2980
  %v2985 = vunpack.c.l.s4 839922192
  %v2986 = vunpack.c.0.s8 %v2985
  %v2987 = vlaneseq
  %v2988 = vshrl.u32 %v2987, 7
  %v2989 = vsub.s32 %v2986, %v2988
  %v2990 = vrot.slane %v2977, %v2989
  %v2992 = vunpack.c.l.s4 1985246804
  %v2993 = vunpack.c.0.s8 %v2992
  %v2994 = vlaneseq
  %v2995 = vshrl.u32 %v2994, 7
  %v2996 = vsub.s32 %v2993, %v2995
  %v2997 = vrot.slane %v2977, %v2996
  %v2999 = vunpack.c.l.s4 839922192
  %v3000 = vunpack.c.0.s8 %v2999
  %v3001 = vlaneseq
  %v3002 = vshrl.u32 %v3001, 7
  %v3003 = vsub.s32 %v3000, %v3002
  %v3004 = vrot.slane %v2981, %v3003
  %v3006 = vunpack.c.l.s4 1985246804
  %v3007 = vunpack.c.0.s8 %v3006
  %v3008 = vlaneseq
  %v3009 = vshrl.u32 %v3008, 7
  %v3010 = vsub.s32 %v3007, %v3009
  %v3011 = vrot.slane %v2981, %v3010
  %v3016 = vmul.bf16 %v25, %v2990
  %v3017 = vmul.bf16 %v26, %v2997
  %v3018 = vmul.bf16 %v27, %v3004
  %v3019 = vmul.bf16 %v28, %v3011
  %v3022 = vunpack.c.l.b16 %v2972
  %v3023 = vunpack.c.h.b16 %v2972
  %v3024 = vunpack.c.l.b16 %v2973
  %v3025 = vunpack.c.h.b16 %v2973
  %v3026 = vpack.c.b16 %v3022, %v3022
  %v3027 = vpack.c.b16 %v3023, %v3023
  %v3028 = vpack.c.b16 %v3024, %v3024
  %v3029 = vpack.c.b16 %v3025, %v3025
  %v3030 = vunpack.c.l.b16 %v3026
  %v3031 = vunpack.c.l.b16 %v3027
  %v3032 = vunpack.c.l.b16 %v3028
  %v3033 = vunpack.c.l.b16 %v3029
  %3034 = vset.pattern.permute.xlu0 0
  %3035 = vperm.xlu0 %3034, %v3030
  %v3036 = vpop.permute.xlu0 %3035
  %3037 = vset.pattern.permute.xlu0 0
  %3038 = vperm.xlu0 %3037, %v3031
  %v3039 = vpop.permute.xlu0 %3038
  %3040 = vset.pattern.permute.xlu0 0
  %3041 = vperm.xlu0 %3040, %v3032
  %v3042 = vpop.permute.xlu0 %3041
  %3043 = vset.pattern.permute.xlu0 0
  %3044 = vperm.xlu0 %3043, %v3033
  %v3045 = vpop.permute.xlu0 %3044
  %v3046 = vlaneseq
  %v3047 = vshrl.u32 %v3046, 7
  %v3048 = vsub.s32 %v47, %v3047
  %v3049 = vrot.slane %v3036, %v3048
  %v3050 = vlaneseq
  %v3051 = vshrl.u32 %v3050, 7
  %v3052 = vsub.s32 %v2188, %v3051
  %v3053 = vrot.slane %v3039, %v3052
  %v3054 = vsel %vm2193, %v3053, %v3049
  %v3055 = vlaneseq
  %v3056 = vshrl.u32 %v3055, 7
  %v3057 = vsub.s32 %v2195, %v3056
  %v3058 = vrot.slane %v3042, %v3057
  %v3059 = vsel %vm2200, %v3058, %v3054
  %v3060 = vlaneseq
  %v3061 = vshrl.u32 %v3060, 7
  %v3062 = vsub.s32 %v2202, %v3061
  %v3063 = vrot.slane %v3045, %v3062
  %v3064 = vsel %vm2207, %v3063, %v3059
  %v3065 = vsel %vm2800, %v3064, %v3064
  %v3066 = vsel %vm2802, %v3064, %v3065
  %v3067 = vsel %vm2804, %v3064, %v3066
  %v3068 = vsel %vm2806, %v3064, %v3067
  %v3069 = vsel %vm2808, %v3064, %v3068
  %v3070 = vsel %vm2810, %v3064, %v3069
  %v3071 = vpack.c.b16 %v3070, %v3070
  %v3073 = vmul.bf16 %v3016, %v3071
  %v3074 = vmul.bf16 %v3017, %v3071
  %v3075 = vmul.bf16 %v3018, %v3071
  %v3076 = vmul.bf16 %v3019, %v3071
  %vm3077 = vcmp.gt.f32.partialorder %v2940, 0.0
  %vm3078 = vcmp.gt.f32.partialorder %v2941, 0.0
  %vm3079 = vcmp.gt.f32.partialorder %v2942, 0.0
  %vm3080 = vcmp.gt.f32.partialorder %v2943, 0.0
  %v3081 = vsel %vm3077, 1, 0
  %v3082 = vsel %vm3078, 1, 0
  %v3083 = vsel %vm3079, 1, 0
  %v3084 = vsel %vm3080, 1, 0
  %3085 = vset.pattern.permute.xlu0 0
  %3086 = vperm.xlu0 %3085, %v3081
  %v3087 = vpop.permute.xlu0 %3086
  %3088 = vset.pattern.permute.xlu0 0
  %3089 = vperm.xlu0 %3088, %v3082
  %v3090 = vpop.permute.xlu0 %3089
  %3091 = vset.pattern.permute.xlu0 0
  %3092 = vperm.xlu0 %3091, %v3083
  %v3093 = vpop.permute.xlu0 %3092
  %3094 = vset.pattern.permute.xlu0 0
  %3095 = vperm.xlu0 %3094, %v3084
  %v3096 = vpop.permute.xlu0 %3095
  %vm3097 = vcmp.eq.s32.totalorder %v3087, 1
  %vm3098 = vcmp.eq.s32.totalorder %v3090, 1
  %vm3099 = vcmp.eq.s32.totalorder %v3093, 1
  %vm3100 = vcmp.eq.s32.totalorder %v3096, 1
  %v3101 = vsel %vm3097, %v2968, -1e+30
  %v3102 = vsel %vm3098, %v2969, -1e+30
  %v3103 = vsel %vm3099, %v2970, -1e+30
  %v3104 = vsel %vm3100, %v2971, -1e+30
  %v3105 = vsel %vm76, %v3101, -inf
  %v3106 = vsel %vm76, %v3102, -inf
  %v3107 = vmax.f32 %v3105, %v3106
  %v3108 = vrot.slane %v3107, 4
  %v3109 = vmax.f32 %v3107, %v3108
  %v3110 = vrot.slane %v3109, 2
  %v3111 = vmax.f32 %v3109, %v3110
  %v3112 = vrot.slane %v3111, 1
  %v3113 = vmax.f32 %v3111, %v3112
  %v3114 = vsel %vm76, %v3103, -inf
  %v3115 = vsel %vm76, %v3104, -inf
  %v3116 = vmax.f32 %v3114, %v3115
  %v3117 = vrot.slane %v3116, 4
  %v3118 = vmax.f32 %v3116, %v3117
  %v3119 = vrot.slane %v3118, 2
  %v3120 = vmax.f32 %v3118, %v3119
  %v3121 = vrot.slane %v3120, 1
  %v3122 = vmax.f32 %v3120, %v3121
  %vm3123 = vcmask 7168
  %v3124 = vsel %vm3123, %v2940, 0.0
  %v3125 = vsel %vm3123, %v2941, 0.0
  %v3126 = vadd.f32 %v3124, %v3125
  %v3127 = vrot.slane %v3126, 4
  %v3128 = vadd.f32 %v3126, %v3127
  %v3129 = vrot.slane %v3128, 2
  %v3130 = vadd.f32 %v3128, %v3129
  %v3131 = vrot.slane %v3130, 1
  %v3132 = vadd.f32 %v3130, %v3131
  %v3133 = vsel %vm3123, %v2942, 0.0
  %v3134 = vsel %vm3123, %v2943, 0.0
  %v3135 = vadd.f32 %v3133, %v3134
  %v3136 = vrot.slane %v3135, 4
  %v3137 = vadd.f32 %v3135, %v3136
  %v3138 = vrot.slane %v3137, 2
  %v3139 = vadd.f32 %v3137, %v3138
  %v3140 = vrot.slane %v3139, 1
  %v3141 = vadd.f32 %v3139, %v3140
  %v3142 = vmax.f32 %v3132, 1.0
  %v3143 = vmax.f32 %v3141, 1.0
  %v3144 = vmul.f32 %v2968, %v2951
  %v3145 = vmul.f32 %v2969, %v2956
  %v3146 = vmul.f32 %v2970, %v2961
  %v3147 = vmul.f32 %v2971, %v2966
  %v3148 = vsel %vm76, %v3144, 0.0
  %v3149 = vsel %vm76, %v3145, 0.0
  %v3150 = vadd.f32 %v3148, %v3149
  %v3151 = vrot.slane %v3150, 4
  %v3152 = vadd.f32 %v3150, %v3151
  %v3153 = vrot.slane %v3152, 2
  %v3154 = vadd.f32 %v3152, %v3153
  %v3155 = vrot.slane %v3154, 1
  %v3156 = vadd.f32 %v3154, %v3155
  %v3157 = vsel %vm76, %v3146, 0.0
  %v3158 = vsel %vm76, %v3147, 0.0
  %v3159 = vadd.f32 %v3157, %v3158
  %v3160 = vrot.slane %v3159, 4
  %v3161 = vadd.f32 %v3159, %v3160
  %v3162 = vrot.slane %v3161, 2
  %v3163 = vadd.f32 %v3161, %v3162
  %v3164 = vrot.slane %v3163, 1
  %v3165 = vadd.f32 %v3163, %v3164
  %3167 = vset.pattern.permute.xlu0 0
  %3168 = vperm.xlu0 %3167, %v3142
  %v3169 = vpop.permute.xlu0 %3168
  %3172 = vset.pattern.permute.xlu0 0
  %3173 = vperm.xlu0 %3172, %v3143
  %v3174 = vpop.permute.xlu0 %3173
  %v3176 = vrcp.pop %v3169
  %v3177 = vmul.f32 %v3156, %v3176
  %v3178 = vrcp.pop %v3174
  %v3179 = vmul.f32 %v3165, %v3178
  %v3182 = vsel %vm2798, %v3122, %v3113
  %v3186 = vsel %vm2798, %v3179, %v3177
  %3187 = vrot.lane.b32.xlu0 %v3186, 32
  %v3188 = vpop.permute.xlu0 %3187
  %v3190 = vsel %vm76, %v3182, %v3188
  %v3191 = vld [vmem:[%s3 + $0x8] sm:$0xf]
  %v3192 = vld [vmem:[%s3 + $0xc] sm:$0xf]
  %v3193 = vld [vmem:[%s3 + $0x10] sm:$0xf]
  %v3194 = vld [vmem:[%s3 + $0x14] sm:$0xf]
  %v3195 = vld [vmem:[%s3 + $0x18] sm:$0xf]
  %v3196 = vld [vmem:[%s3 + $0x1c] sm:$0xf]
  %v3197 = vld [vmem:[%s3 + $0x20] sm:$0xf]
  %v3198 = vld [vmem:[%s3 + $0x24] sm:$0xf]
  %v3199 = vld [vmem:[%s4 + $0x8] sm:$0x1]
  %v3200 = vpack.c.bf16 %v2969, %v2968
  %v3201 = vpack.c.bf16 %v2971, %v2970
  %v3206 = vunpack.c.l.b16 %v3073
  %v3207 = vunpack.c.l.b16 %v3074
  %v3208 = vunpack.c.l.b16 %v3075
  %v3209 = vunpack.c.l.b16 %v3076
  %v3210 = vpack.c.b16 %v3207, %v3206
  %v3211 = vpack.c.b16 %v3209, %v3208
  %v3213 = vsel %vm76, %v3210, 0
  %v3216 = vsel %vm76, %v3211, 0
  %3218 = vmatprep.subr.bf16.mxu0 0
  %3219 = vmatpush1.bf16.msra.mxu0 %v3200
  %3220 = vmatprep.subr.bf16.mxu0 0
  %3221 = vmatpush1.bf16.msra.mxu0 %v3201
  %3222 = vmatprep.subr.bf16.mxu0 0
  %3223 = vmatpush1.bf16.msra.mxu0 0
  %3224 = vmatprep.subr.bf16.mxu0 0
  %3225 = vmatpush1.bf16.msra.mxu0 0
  %3226 = vmatprep.subr.bf16.mxu0 0
  %3227 = vmatpush1.bf16.msra.mxu0 0
  %3228 = vmatprep.subr.bf16.mxu0 0
  %3229 = vmatpush1.bf16.msra.mxu0 0
  %3230 = vmatprep.subr.bf16.mxu0 0
  %3231 = vmatpush1.bf16.msra.mxu0 0
  %3232 = vmatprep.subr.bf16.mxu0 0
  %3233 = vmatpush1.bf16.msra.mxu0 0
  %3234 = vmatprep.subr.bf16.mxu0 0
  %3235 = vmatpush1.bf16.msra.mxu0 0
  %3236 = vmatprep.subr.bf16.mxu0 0
  %3237 = vmatpush1.bf16.msra.mxu0 0
  %3238 = vmatprep.subr.bf16.mxu0 0
  %3239 = vmatpush1.bf16.msra.mxu0 0
  %3240 = vmatprep.subr.bf16.mxu0 0
  %3241 = vmatpush1.bf16.msra.mxu0 0
  %3242 = vmatprep.subr.bf16.mxu0 0
  %3243 = vmatpush1.bf16.msra.mxu0 0
  %3244 = vmatprep.subr.bf16.mxu0 0
  %3245 = vmatpush1.bf16.msra.mxu0 0
  %3246 = vmatprep.subr.bf16.mxu0 0
  %3247 = vmatpush1.bf16.msra.mxu0 0
  %3248 = vmatprep.subr.bf16.mxu0 0
  %3249 = vmatpush1.bf16.msra.mxu0 0
  %3250 = vmatprep.mubr.bf16.mxu0 0
  %3251 = vmatmul.mubr.bf16.gmra.mrb[0].mxu0 %v3213
  %v3252 = vpop.f32.mrb[0].mxu0
  %v3253 = vadd.f32 0.0, %v3252
  %v3254 = vpop.f32.mrb[0].mxu0
  %v3255 = vpop.f32.mrb[0].mxu0
  %v3256 = vadd.f32 0.0, %v3255
  %v3257 = vpop.f32.mrb[0].mxu0
  %3258 = vmatprep.mubr.bf16.mxu0 0
  %3259 = vmatmul.mubr.bf16.gmra.mrb[0].mxu0 %v3216
  %v3260 = vpop.f32.mrb[0].mxu0
  %v3261 = vadd.f32 0.0, %v3260
  %v3262 = vpop.f32.mrb[0].mxu0
  %v3263 = vpop.f32.mrb[0].mxu0
  %v3264 = vadd.f32 0.0, %v3263
  %v3265 = vpop.f32.mrb[0].mxu0
  %3266 = vdwg.mxu0
  %v3267 = vpack.c.bf16 %v3256, %v3253
  %v3268 = vpack.c.bf16 %v3264, %v3261
  %3271 = vrot.lane.b32.xlu0 %v3200, 32
  %v3272 = vpop.permute.xlu0 %3271
  %3273 = vrot.lane.b32.xlu0 %v3201, 32
  %v3274 = vpop.permute.xlu0 %3273
  %v3277 = vsel %vm76, %v3267, %v3272
  %v3280 = vsel %vm76, %v3268, %v3274
  %v3281 = vlaneseq
  %v3282 = vshrl.u32 %v3281, 7
  %v3283 = vsub.s32 0, %v3282
  %v3284 = vrot.slane %v3199, %v3283
  %v3293 = vunpack.c.l.b16 %v3191
  %v3294 = vunpack.c.l.b16 %v3192
  %v3295 = vunpack.c.l.b16 %v3193
  %v3296 = vunpack.c.l.b16 %v3194
  %v3297 = vunpack.c.l.b16 %v3195
  %v3298 = vunpack.c.l.b16 %v3196
  %v3299 = vunpack.c.l.b16 %v3197
  %v3300 = vunpack.c.l.b16 %v3198
  %v3301 = vpack.c.b16 %v3294, %v3293
  %v3302 = vpack.c.b16 %v3296, %v3295
  %v3303 = vpack.c.b16 %v3298, %v3297
  %v3304 = vpack.c.b16 %v3300, %v3299
  %vm3309 = vcmask 523264
  %v3310 = vsel %vm3309, %v3277, 0
  %v3312 = vsel %vm3309, %v3280, 0
  %3314 = vmatprep.subr.bf16.mxu0 0
  %3315 = vmatpush1.bf16.msra.mxu0 %v3301
  %3316 = vmatprep.subr.bf16.mxu0 0
  %3317 = vmatpush1.bf16.msra.mxu0 %v3302
  %3318 = vmatprep.subr.bf16.mxu0 0
  %3319 = vmatpush1.bf16.msra.mxu0 %v3303
  %3320 = vmatprep.subr.bf16.mxu0 0
  %3321 = vmatpush1.bf16.msra.mxu0 %v3304
  %3322 = vmatprep.subr.bf16.mxu0 0
  %3323 = vmatpush1.bf16.msra.mxu0 0
  %3324 = vmatprep.subr.bf16.mxu0 0
  %3325 = vmatpush1.bf16.msra.mxu0 0
  %3326 = vmatprep.subr.bf16.mxu0 0
  %3327 = vmatpush1.bf16.msra.mxu0 0
  %3328 = vmatprep.subr.bf16.mxu0 0
  %3329 = vmatpush1.bf16.msra.mxu0 0
  %3330 = vmatprep.subr.bf16.mxu0 0
  %3331 = vmatpush1.bf16.msra.mxu0 0
  %3332 = vmatprep.subr.bf16.mxu0 0
  %3333 = vmatpush1.bf16.msra.mxu0 0
  %3334 = vmatprep.subr.bf16.mxu0 0
  %3335 = vmatpush1.bf16.msra.mxu0 0
  %3336 = vmatprep.subr.bf16.mxu0 0
  %3337 = vmatpush1.bf16.msra.mxu0 0
  %3338 = vmatprep.subr.bf16.mxu0 0
  %3339 = vmatpush1.bf16.msra.mxu0 0
  %3340 = vmatprep.subr.bf16.mxu0 0
  %3341 = vmatpush1.bf16.msra.mxu0 0
  %3342 = vmatprep.subr.bf16.mxu0 0
  %3343 = vmatpush1.bf16.msra.mxu0 0
  %3344 = vmatprep.subr.bf16.mxu0 0
  %3345 = vmatpush1.bf16.msra.mxu0 0
  %3346 = vmatprep.mubr.bf16.mxu0 0
  %3347 = vmatmul.mubr.bf16.gmra.mrb[0].mxu0 %v3310
  %v3348 = vpop.f32.mrb[0].mxu0
  %v3349 = vadd.f32 %v3284, %v3348
  %v3350 = vpop.f32.mrb[0].mxu0
  %v3351 = vpop.f32.mrb[0].mxu0
  %v3352 = vadd.f32 %v3284, %v3351
  %v3353 = vpop.f32.mrb[0].mxu0
  %3354 = vmatprep.mubr.bf16.mxu0 0
  %3355 = vmatmul.mubr.bf16.gmra.mrb[0].mxu0 %v3312
  %v3356 = vpop.f32.mrb[0].mxu0
  %v3357 = vadd.f32 %v3284, %v3356
  %v3358 = vpop.f32.mrb[0].mxu0
  %v3359 = vpop.f32.mrb[0].mxu0
  %v3360 = vadd.f32 %v3284, %v3359
  %v3361 = vpop.f32.mrb[0].mxu0
  %3362 = vdwg.mxu0
  %v3363 = vmax.f32 %v3349, 0.0
  %v3364 = vmax.f32 %v3352, 0.0
  %v3365 = vmax.f32 %v3357, 0.0
  %v3366 = vmax.f32 %v3360, 0.0
  %v3367 = vld [vmem:[%s4 + $0x20] sm:$0x1]
  %v3368 = vlaneseq
  %v3369 = vshrl.u32 %v3368, 7
  %v3370 = vsub.s32 0, %v3369
  %v3371 = vrot.slane %v3367, %v3370
  %v3372 = vmul.f32 %v3363, %v3371
  %v3373 = vmul.f32 %v3364, %v3371
  %v3374 = vmul.f32 %v3365, %v3371
  %v3375 = vmul.f32 %v3366, %v3371
  %v3376 = vsel %vm76, %v3372, 0.0
  %3377 = vadd.xlane.f32.xlu0 %v3376
  %v3378 = vpop.xlane.xlu0 %3377
  %v3379 = vsel %vm76, %v3373, 0.0
  %3380 = vadd.xlane.f32.xlu0 %v3379
  %v3381 = vpop.xlane.xlu0 %3380
  %v3382 = vsel %vm76, %v3374, 0.0
  %3383 = vadd.xlane.f32.xlu0 %v3382
  %v3384 = vpop.xlane.xlu0 %3383
  %v3385 = vsel %vm76, %v3375, 0.0
  %3386 = vadd.xlane.f32.xlu0 %v3385
  %v3387 = vpop.xlane.xlu0 %3386
  %v3388 = vtanh.pop %v3378
  %v3389 = vtanh.pop %v3381
  %v3390 = vtanh.pop %v3384
  %v3391 = vtanh.pop %v3387
  %v3392 = vsel %vm3077, %v3388, -2.0
  %v3393 = vsel %vm3078, %v3389, -2.0
  %v3394 = vsel %vm3079, %v3390, -2.0
  %v3395 = vsel %vm3080, %v3391, -2.0
  %3397 = vset.pattern.permute.xlu0 0
  %3398 = vperm.xlu0 %3397, %v3392
  %v3399 = vpop.permute.xlu0 %3398
  %3401 = vset.pattern.permute.xlu0 0
  %3402 = vperm.xlu0 %3401, %v3393
  %v3403 = vpop.permute.xlu0 %3402
  %3405 = vset.pattern.permute.xlu0 0
  %3406 = vperm.xlu0 %3405, %v3394
  %v3407 = vpop.permute.xlu0 %3406
  %3409 = vset.pattern.permute.xlu0 0
  %3410 = vperm.xlu0 %3409, %v3395
  %v3411 = vpop.permute.xlu0 %3410
  %v3412 = vlaneseq
  %v3413 = vshrl.u32 %v3412, 7
  %v3414 = vsub.s32 0, %v3413
  %v3415 = vrot.slane %v3399, %v3414
  %v3416 = vlaneseq
  %v3417 = vshrl.u32 %v3416, 7
  %v3418 = vsub.s32 1, %v3417
  %v3419 = vrot.slane %v3399, %v3418
  %v3420 = vlaneseq
  %v3421 = vshrl.u32 %v3420, 7
  %v3422 = vsub.s32 2, %v3421
  %v3423 = vrot.slane %v3399, %v3422
  %v3424 = vlaneseq
  %v3425 = vshrl.u32 %v3424, 7
  %v3426 = vsub.s32 3, %v3425
  %v3427 = vrot.slane %v3399, %v3426
  %v3428 = vlaneseq
  %v3429 = vshrl.u32 %v3428, 7
  %v3430 = vsub.s32 4, %v3429
  %v3431 = vrot.slane %v3399, %v3430
  %v3432 = vlaneseq
  %v3433 = vshrl.u32 %v3432, 7
  %v3434 = vsub.s32 5, %v3433
  %v3435 = vrot.slane %v3399, %v3434
  %v3436 = vlaneseq
  %v3437 = vshrl.u32 %v3436, 7
  %v3438 = vsub.s32 6, %v3437
  %v3439 = vrot.slane %v3399, %v3438
  %v3440 = vlaneseq
  %v3441 = vshrl.u32 %v3440, 7
  %v3442 = vsub.s32 7, %v3441
  %v3443 = vrot.slane %v3399, %v3442
  %v3444 = vlaneseq
  %v3445 = vshrl.u32 %v3444, 7
  %v3446 = vsub.s32 0, %v3445
  %v3447 = vrot.slane %v3403, %v3446
  %v3448 = vlaneseq
  %v3449 = vshrl.u32 %v3448, 7
  %v3450 = vsub.s32 1, %v3449
  %v3451 = vrot.slane %v3403, %v3450
  %v3452 = vlaneseq
  %v3453 = vshrl.u32 %v3452, 7
  %v3454 = vsub.s32 2, %v3453
  %v3455 = vrot.slane %v3403, %v3454
  %v3456 = vlaneseq
  %v3457 = vshrl.u32 %v3456, 7
  %v3458 = vsub.s32 3, %v3457
  %v3459 = vrot.slane %v3403, %v3458
  %v3460 = vlaneseq
  %v3461 = vshrl.u32 %v3460, 7
  %v3462 = vsub.s32 4, %v3461
  %v3463 = vrot.slane %v3403, %v3462
  %v3464 = vlaneseq
  %v3465 = vshrl.u32 %v3464, 7
  %v3466 = vsub.s32 5, %v3465
  %v3467 = vrot.slane %v3403, %v3466
  %v3468 = vlaneseq
  %v3469 = vshrl.u32 %v3468, 7
  %v3470 = vsub.s32 6, %v3469
  %v3471 = vrot.slane %v3403, %v3470
  %v3472 = vlaneseq
  %v3473 = vshrl.u32 %v3472, 7
  %v3474 = vsub.s32 7, %v3473
  %v3475 = vrot.slane %v3403, %v3474
  %v3476 = vlaneseq
  %v3477 = vshrl.u32 %v3476, 7
  %v3478 = vsub.s32 0, %v3477
  %v3479 = vrot.slane %v3407, %v3478
  %v3480 = vlaneseq
  %v3481 = vshrl.u32 %v3480, 7
  %v3482 = vsub.s32 1, %v3481
  %v3483 = vrot.slane %v3407, %v3482
  %v3484 = vlaneseq
  %v3485 = vshrl.u32 %v3484, 7
  %v3486 = vsub.s32 2, %v3485
  %v3487 = vrot.slane %v3407, %v3486
  %v3488 = vlaneseq
  %v3489 = vshrl.u32 %v3488, 7
  %v3490 = vsub.s32 3, %v3489
  %v3491 = vrot.slane %v3407, %v3490
  %v3492 = vlaneseq
  %v3493 = vshrl.u32 %v3492, 7
  %v3494 = vsub.s32 4, %v3493
  %v3495 = vrot.slane %v3407, %v3494
  %v3496 = vlaneseq
  %v3497 = vshrl.u32 %v3496, 7
  %v3498 = vsub.s32 5, %v3497
  %v3499 = vrot.slane %v3407, %v3498
  %v3500 = vlaneseq
  %v3501 = vshrl.u32 %v3500, 7
  %v3502 = vsub.s32 6, %v3501
  %v3503 = vrot.slane %v3407, %v3502
  %v3504 = vlaneseq
  %v3505 = vshrl.u32 %v3504, 7
  %v3506 = vsub.s32 7, %v3505
  %v3507 = vrot.slane %v3407, %v3506
  %v3508 = vlaneseq
  %v3509 = vshrl.u32 %v3508, 7
  %v3510 = vsub.s32 0, %v3509
  %v3511 = vrot.slane %v3411, %v3510
  %v3512 = vlaneseq
  %v3513 = vshrl.u32 %v3512, 7
  %v3514 = vsub.s32 1, %v3513
  %v3515 = vrot.slane %v3411, %v3514
  %v3516 = vlaneseq
  %v3517 = vshrl.u32 %v3516, 7
  %v3518 = vsub.s32 2, %v3517
  %v3519 = vrot.slane %v3411, %v3518
  %v3520 = vlaneseq
  %v3521 = vshrl.u32 %v3520, 7
  %v3522 = vsub.s32 3, %v3521
  %v3523 = vrot.slane %v3411, %v3522
  %v3524 = vlaneseq
  %v3525 = vshrl.u32 %v3524, 7
  %v3526 = vsub.s32 4, %v3525
  %v3527 = vrot.slane %v3411, %v3526
  %v3528 = vlaneseq
  %v3529 = vshrl.u32 %v3528, 7
  %v3530 = vsub.s32 5, %v3529
  %v3531 = vrot.slane %v3411, %v3530
  %v3532 = vlaneseq
  %v3533 = vshrl.u32 %v3532, 7
  %v3534 = vsub.s32 6, %v3533
  %v3535 = vrot.slane %v3411, %v3534
  %v3536 = vlaneseq
  %v3537 = vshrl.u32 %v3536, 7
  %v3538 = vsub.s32 7, %v3537
  %v3539 = vrot.slane %v3411, %v3538
  %vm3572 = vcmp.gt.f32.partialorder %v3392, %v3415
  %vm3573 = vcmp.gt.f32.partialorder %v3393, %v3415
  %vm3574 = vcmp.gt.f32.partialorder %v3394, %v3415
  %vm3575 = vcmp.gt.f32.partialorder %v3395, %v3415
  %vm3576 = vcmp.gt.f32.partialorder %v3392, %v3419
  %vm3577 = vcmp.gt.f32.partialorder %v3393, %v3419
  %vm3578 = vcmp.gt.f32.partialorder %v3394, %v3419
  %vm3579 = vcmp.gt.f32.partialorder %v3395, %v3419
  %vm3580 = vcmp.gt.f32.partialorder %v3392, %v3423
  %vm3581 = vcmp.gt.f32.partialorder %v3393, %v3423
  %vm3582 = vcmp.gt.f32.partialorder %v3394, %v3423
  %vm3583 = vcmp.gt.f32.partialorder %v3395, %v3423
  %vm3584 = vcmp.gt.f32.partialorder %v3392, %v3427
  %vm3585 = vcmp.gt.f32.partialorder %v3393, %v3427
  %vm3586 = vcmp.gt.f32.partialorder %v3394, %v3427
  %vm3587 = vcmp.gt.f32.partialorder %v3395, %v3427
  %vm3588 = vcmp.gt.f32.partialorder %v3392, %v3431
  %vm3589 = vcmp.gt.f32.partialorder %v3393, %v3431
  %vm3590 = vcmp.gt.f32.partialorder %v3394, %v3431
  %vm3591 = vcmp.gt.f32.partialorder %v3395, %v3431
  %vm3592 = vcmp.gt.f32.partialorder %v3392, %v3435
  %vm3593 = vcmp.gt.f32.partialorder %v3393, %v3435
  %vm3594 = vcmp.gt.f32.partialorder %v3394, %v3435
  %vm3595 = vcmp.gt.f32.partialorder %v3395, %v3435
  %vm3596 = vcmp.gt.f32.partialorder %v3392, %v3439
  %vm3597 = vcmp.gt.f32.partialorder %v3393, %v3439
  %vm3598 = vcmp.gt.f32.partialorder %v3394, %v3439
  %vm3599 = vcmp.gt.f32.partialorder %v3395, %v3439
  %vm3600 = vcmp.gt.f32.partialorder %v3392, %v3443
  %vm3601 = vcmp.gt.f32.partialorder %v3393, %v3443
  %vm3602 = vcmp.gt.f32.partialorder %v3394, %v3443
  %vm3603 = vcmp.gt.f32.partialorder %v3395, %v3443
  %vm3604 = vcmp.gt.f32.partialorder %v3392, %v3447
  %vm3605 = vcmp.gt.f32.partialorder %v3393, %v3447
  %vm3606 = vcmp.gt.f32.partialorder %v3394, %v3447
  %vm3607 = vcmp.gt.f32.partialorder %v3395, %v3447
  %vm3608 = vcmp.gt.f32.partialorder %v3392, %v3451
  %vm3609 = vcmp.gt.f32.partialorder %v3393, %v3451
  %vm3610 = vcmp.gt.f32.partialorder %v3394, %v3451
  %vm3611 = vcmp.gt.f32.partialorder %v3395, %v3451
  %vm3612 = vcmp.gt.f32.partialorder %v3392, %v3455
  %vm3613 = vcmp.gt.f32.partialorder %v3393, %v3455
  %vm3614 = vcmp.gt.f32.partialorder %v3394, %v3455
  %vm3615 = vcmp.gt.f32.partialorder %v3395, %v3455
  %vm3616 = vcmp.gt.f32.partialorder %v3392, %v3459
  %vm3617 = vcmp.gt.f32.partialorder %v3393, %v3459
  %vm3618 = vcmp.gt.f32.partialorder %v3394, %v3459
  %vm3619 = vcmp.gt.f32.partialorder %v3395, %v3459
  %vm3620 = vcmp.gt.f32.partialorder %v3392, %v3463
  %vm3621 = vcmp.gt.f32.partialorder %v3393, %v3463
  %vm3622 = vcmp.gt.f32.partialorder %v3394, %v3463
  %vm3623 = vcmp.gt.f32.partialorder %v3395, %v3463
  %vm3624 = vcmp.gt.f32.partialorder %v3392, %v3467
  %vm3625 = vcmp.gt.f32.partialorder %v3393, %v3467
  %vm3626 = vcmp.gt.f32.partialorder %v3394, %v3467
  %vm3627 = vcmp.gt.f32.partialorder %v3395, %v3467
  %vm3628 = vcmp.gt.f32.partialorder %v3392, %v3471
  %vm3629 = vcmp.gt.f32.partialorder %v3393, %v3471
  %vm3630 = vcmp.gt.f32.partialorder %v3394, %v3471
  %vm3631 = vcmp.gt.f32.partialorder %v3395, %v3471
  %vm3632 = vcmp.gt.f32.partialorder %v3392, %v3475
  %vm3633 = vcmp.gt.f32.partialorder %v3393, %v3475
  %vm3634 = vcmp.gt.f32.partialorder %v3394, %v3475
  %vm3635 = vcmp.gt.f32.partialorder %v3395, %v3475
  %vm3636 = vcmp.gt.f32.partialorder %v3392, %v3479
  %vm3637 = vcmp.gt.f32.partialorder %v3393, %v3479
  %vm3638 = vcmp.gt.f32.partialorder %v3394, %v3479
  %vm3639 = vcmp.gt.f32.partialorder %v3395, %v3479
  %vm3640 = vcmp.gt.f32.partialorder %v3392, %v3483
  %vm3641 = vcmp.gt.f32.partialorder %v3393, %v3483
  %vm3642 = vcmp.gt.f32.partialorder %v3394, %v3483
  %vm3643 = vcmp.gt.f32.partialorder %v3395, %v3483
  %vm3644 = vcmp.gt.f32.partialorder %v3392, %v3487
  %vm3645 = vcmp.gt.f32.partialorder %v3393, %v3487
  %vm3646 = vcmp.gt.f32.partialorder %v3394, %v3487
  %vm3647 = vcmp.gt.f32.partialorder %v3395, %v3487
  %vm3648 = vcmp.gt.f32.partialorder %v3392, %v3491
  %vm3649 = vcmp.gt.f32.partialorder %v3393, %v3491
  %vm3650 = vcmp.gt.f32.partialorder %v3394, %v3491
  %vm3651 = vcmp.gt.f32.partialorder %v3395, %v3491
  %vm3652 = vcmp.gt.f32.partialorder %v3392, %v3495
  %vm3653 = vcmp.gt.f32.partialorder %v3393, %v3495
  %vm3654 = vcmp.gt.f32.partialorder %v3394, %v3495
  %vm3655 = vcmp.gt.f32.partialorder %v3395, %v3495
  %vm3656 = vcmp.gt.f32.partialorder %v3392, %v3499
  %vm3657 = vcmp.gt.f32.partialorder %v3393, %v3499
  %vm3658 = vcmp.gt.f32.partialorder %v3394, %v3499
  %vm3659 = vcmp.gt.f32.partialorder %v3395, %v3499
  %vm3660 = vcmp.gt.f32.partialorder %v3392, %v3503
  %vm3661 = vcmp.gt.f32.partialorder %v3393, %v3503
  %vm3662 = vcmp.gt.f32.partialorder %v3394, %v3503
  %vm3663 = vcmp.gt.f32.partialorder %v3395, %v3503
  %vm3664 = vcmp.gt.f32.partialorder %v3392, %v3507
  %vm3665 = vcmp.gt.f32.partialorder %v3393, %v3507
  %vm3666 = vcmp.gt.f32.partialorder %v3394, %v3507
  %vm3667 = vcmp.gt.f32.partialorder %v3395, %v3507
  %vm3668 = vcmp.gt.f32.partialorder %v3392, %v3511
  %vm3669 = vcmp.gt.f32.partialorder %v3393, %v3511
  %vm3670 = vcmp.gt.f32.partialorder %v3394, %v3511
  %vm3671 = vcmp.gt.f32.partialorder %v3395, %v3511
  %vm3672 = vcmp.gt.f32.partialorder %v3392, %v3515
  %vm3673 = vcmp.gt.f32.partialorder %v3393, %v3515
  %vm3674 = vcmp.gt.f32.partialorder %v3394, %v3515
  %vm3675 = vcmp.gt.f32.partialorder %v3395, %v3515
  %vm3676 = vcmp.gt.f32.partialorder %v3392, %v3519
  %vm3677 = vcmp.gt.f32.partialorder %v3393, %v3519
  %vm3678 = vcmp.gt.f32.partialorder %v3394, %v3519
  %vm3679 = vcmp.gt.f32.partialorder %v3395, %v3519
  %vm3680 = vcmp.gt.f32.partialorder %v3392, %v3523
  %vm3681 = vcmp.gt.f32.partialorder %v3393, %v3523
  %vm3682 = vcmp.gt.f32.partialorder %v3394, %v3523
  %vm3683 = vcmp.gt.f32.partialorder %v3395, %v3523
  %vm3684 = vcmp.gt.f32.partialorder %v3392, %v3527
  %vm3685 = vcmp.gt.f32.partialorder %v3393, %v3527
  %vm3686 = vcmp.gt.f32.partialorder %v3394, %v3527
  %vm3687 = vcmp.gt.f32.partialorder %v3395, %v3527
  %vm3688 = vcmp.gt.f32.partialorder %v3392, %v3531
  %vm3689 = vcmp.gt.f32.partialorder %v3393, %v3531
  %vm3690 = vcmp.gt.f32.partialorder %v3394, %v3531
  %vm3691 = vcmp.gt.f32.partialorder %v3395, %v3531
  %vm3692 = vcmp.gt.f32.partialorder %v3392, %v3535
  %vm3693 = vcmp.gt.f32.partialorder %v3393, %v3535
  %vm3694 = vcmp.gt.f32.partialorder %v3394, %v3535
  %vm3695 = vcmp.gt.f32.partialorder %v3395, %v3535
  %vm3696 = vcmp.gt.f32.partialorder %v3392, %v3539
  %vm3697 = vcmp.gt.f32.partialorder %v3393, %v3539
  %vm3698 = vcmp.gt.f32.partialorder %v3394, %v3539
  %vm3699 = vcmp.gt.f32.partialorder %v3395, %v3539
  %vm3700 = vcmp.eq.f32.partialorder %v3392, %v3415
  %vm3701 = vcmp.eq.f32.partialorder %v3393, %v3415
  %vm3702 = vcmp.eq.f32.partialorder %v3394, %v3415
  %vm3703 = vcmp.eq.f32.partialorder %v3395, %v3415
  %vm3704 = vcmp.eq.f32.partialorder %v3392, %v3419
  %vm3705 = vcmp.eq.f32.partialorder %v3393, %v3419
  %vm3706 = vcmp.eq.f32.partialorder %v3394, %v3419
  %vm3707 = vcmp.eq.f32.partialorder %v3395, %v3419
  %vm3708 = vcmp.eq.f32.partialorder %v3392, %v3423
  %vm3709 = vcmp.eq.f32.partialorder %v3393, %v3423
  %vm3710 = vcmp.eq.f32.partialorder %v3394, %v3423
  %vm3711 = vcmp.eq.f32.partialorder %v3395, %v3423
  %vm3712 = vcmp.eq.f32.partialorder %v3392, %v3427
  %vm3713 = vcmp.eq.f32.partialorder %v3393, %v3427
  %vm3714 = vcmp.eq.f32.partialorder %v3394, %v3427
  %vm3715 = vcmp.eq.f32.partialorder %v3395, %v3427
  %vm3716 = vcmp.eq.f32.partialorder %v3392, %v3431
  %vm3717 = vcmp.eq.f32.partialorder %v3393, %v3431
  %vm3718 = vcmp.eq.f32.partialorder %v3394, %v3431
  %vm3719 = vcmp.eq.f32.partialorder %v3395, %v3431
  %vm3720 = vcmp.eq.f32.partialorder %v3392, %v3435
  %vm3721 = vcmp.eq.f32.partialorder %v3393, %v3435
  %vm3722 = vcmp.eq.f32.partialorder %v3394, %v3435
  %vm3723 = vcmp.eq.f32.partialorder %v3395, %v3435
  %vm3724 = vcmp.eq.f32.partialorder %v3392, %v3439
  %vm3725 = vcmp.eq.f32.partialorder %v3393, %v3439
  %vm3726 = vcmp.eq.f32.partialorder %v3394, %v3439
  %vm3727 = vcmp.eq.f32.partialorder %v3395, %v3439
  %vm3728 = vcmp.eq.f32.partialorder %v3392, %v3443
  %vm3729 = vcmp.eq.f32.partialorder %v3393, %v3443
  %vm3730 = vcmp.eq.f32.partialorder %v3394, %v3443
  %vm3731 = vcmp.eq.f32.partialorder %v3395, %v3443
  %vm3732 = vcmp.eq.f32.partialorder %v3392, %v3447
  %vm3733 = vcmp.eq.f32.partialorder %v3393, %v3447
  %vm3734 = vcmp.eq.f32.partialorder %v3394, %v3447
  %vm3735 = vcmp.eq.f32.partialorder %v3395, %v3447
  %vm3736 = vcmp.eq.f32.partialorder %v3392, %v3451
  %vm3737 = vcmp.eq.f32.partialorder %v3393, %v3451
  %vm3738 = vcmp.eq.f32.partialorder %v3394, %v3451
  %vm3739 = vcmp.eq.f32.partialorder %v3395, %v3451
  %vm3740 = vcmp.eq.f32.partialorder %v3392, %v3455
  %vm3741 = vcmp.eq.f32.partialorder %v3393, %v3455
  %vm3742 = vcmp.eq.f32.partialorder %v3394, %v3455
  %vm3743 = vcmp.eq.f32.partialorder %v3395, %v3455
  %vm3744 = vcmp.eq.f32.partialorder %v3392, %v3459
  %vm3745 = vcmp.eq.f32.partialorder %v3393, %v3459
  %vm3746 = vcmp.eq.f32.partialorder %v3394, %v3459
  %vm3747 = vcmp.eq.f32.partialorder %v3395, %v3459
  %vm3748 = vcmp.eq.f32.partialorder %v3392, %v3463
  %vm3749 = vcmp.eq.f32.partialorder %v3393, %v3463
  %vm3750 = vcmp.eq.f32.partialorder %v3394, %v3463
  %vm3751 = vcmp.eq.f32.partialorder %v3395, %v3463
  %vm3752 = vcmp.eq.f32.partialorder %v3392, %v3467
  %vm3753 = vcmp.eq.f32.partialorder %v3393, %v3467
  %vm3754 = vcmp.eq.f32.partialorder %v3394, %v3467
  %vm3755 = vcmp.eq.f32.partialorder %v3395, %v3467
  %vm3756 = vcmp.eq.f32.partialorder %v3392, %v3471
  %vm3757 = vcmp.eq.f32.partialorder %v3393, %v3471
  %vm3758 = vcmp.eq.f32.partialorder %v3394, %v3471
  %vm3759 = vcmp.eq.f32.partialorder %v3395, %v3471
  %vm3760 = vcmp.eq.f32.partialorder %v3392, %v3475
  %vm3761 = vcmp.eq.f32.partialorder %v3393, %v3475
  %vm3762 = vcmp.eq.f32.partialorder %v3394, %v3475
  %vm3763 = vcmp.eq.f32.partialorder %v3395, %v3475
  %vm3764 = vcmp.eq.f32.partialorder %v3392, %v3479
  %vm3765 = vcmp.eq.f32.partialorder %v3393, %v3479
  %vm3766 = vcmp.eq.f32.partialorder %v3394, %v3479
  %vm3767 = vcmp.eq.f32.partialorder %v3395, %v3479
  %vm3768 = vcmp.eq.f32.partialorder %v3392, %v3483
  %vm3769 = vcmp.eq.f32.partialorder %v3393, %v3483
  %vm3770 = vcmp.eq.f32.partialorder %v3394, %v3483
  %vm3771 = vcmp.eq.f32.partialorder %v3395, %v3483
  %vm3772 = vcmp.eq.f32.partialorder %v3392, %v3487
  %vm3773 = vcmp.eq.f32.partialorder %v3393, %v3487
  %vm3774 = vcmp.eq.f32.partialorder %v3394, %v3487
  %vm3775 = vcmp.eq.f32.partialorder %v3395, %v3487
  %vm3776 = vcmp.eq.f32.partialorder %v3392, %v3491
  %vm3777 = vcmp.eq.f32.partialorder %v3393, %v3491
  %vm3778 = vcmp.eq.f32.partialorder %v3394, %v3491
  %vm3779 = vcmp.eq.f32.partialorder %v3395, %v3491
  %vm3780 = vcmp.eq.f32.partialorder %v3392, %v3495
  %vm3781 = vcmp.eq.f32.partialorder %v3393, %v3495
  %vm3782 = vcmp.eq.f32.partialorder %v3394, %v3495
  %vm3783 = vcmp.eq.f32.partialorder %v3395, %v3495
  %vm3784 = vcmp.eq.f32.partialorder %v3392, %v3499
  %vm3785 = vcmp.eq.f32.partialorder %v3393, %v3499
  %vm3786 = vcmp.eq.f32.partialorder %v3394, %v3499
  %vm3787 = vcmp.eq.f32.partialorder %v3395, %v3499
  %vm3788 = vcmp.eq.f32.partialorder %v3392, %v3503
  %vm3789 = vcmp.eq.f32.partialorder %v3393, %v3503
  %vm3790 = vcmp.eq.f32.partialorder %v3394, %v3503
  %vm3791 = vcmp.eq.f32.partialorder %v3395, %v3503
  %vm3792 = vcmp.eq.f32.partialorder %v3392, %v3507
  %vm3793 = vcmp.eq.f32.partialorder %v3393, %v3507
  %vm3794 = vcmp.eq.f32.partialorder %v3394, %v3507
  %vm3795 = vcmp.eq.f32.partialorder %v3395, %v3507
  %vm3796 = vcmp.eq.f32.partialorder %v3392, %v3511
  %vm3797 = vcmp.eq.f32.partialorder %v3393, %v3511
  %vm3798 = vcmp.eq.f32.partialorder %v3394, %v3511
  %vm3799 = vcmp.eq.f32.partialorder %v3395, %v3511
  %vm3800 = vcmp.eq.f32.partialorder %v3392, %v3515
  %vm3801 = vcmp.eq.f32.partialorder %v3393, %v3515
  %vm3802 = vcmp.eq.f32.partialorder %v3394, %v3515
  %vm3803 = vcmp.eq.f32.partialorder %v3395, %v3515
  %vm3804 = vcmp.eq.f32.partialorder %v3392, %v3519
  %vm3805 = vcmp.eq.f32.partialorder %v3393, %v3519
  %vm3806 = vcmp.eq.f32.partialorder %v3394, %v3519
  %vm3807 = vcmp.eq.f32.partialorder %v3395, %v3519
  %vm3808 = vcmp.eq.f32.partialorder %v3392, %v3523
  %vm3809 = vcmp.eq.f32.partialorder %v3393, %v3523
  %vm3810 = vcmp.eq.f32.partialorder %v3394, %v3523
  %vm3811 = vcmp.eq.f32.partialorder %v3395, %v3523
  %vm3812 = vcmp.eq.f32.partialorder %v3392, %v3527
  %vm3813 = vcmp.eq.f32.partialorder %v3393, %v3527
  %vm3814 = vcmp.eq.f32.partialorder %v3394, %v3527
  %vm3815 = vcmp.eq.f32.partialorder %v3395, %v3527
  %vm3816 = vcmp.eq.f32.partialorder %v3392, %v3531
  %vm3817 = vcmp.eq.f32.partialorder %v3393, %v3531
  %vm3818 = vcmp.eq.f32.partialorder %v3394, %v3531
  %vm3819 = vcmp.eq.f32.partialorder %v3395, %v3531
  %vm3820 = vcmp.eq.f32.partialorder %v3392, %v3535
  %vm3821 = vcmp.eq.f32.partialorder %v3393, %v3535
  %vm3822 = vcmp.eq.f32.partialorder %v3394, %v3535
  %vm3823 = vcmp.eq.f32.partialorder %v3395, %v3535
  %vm3824 = vcmp.eq.f32.partialorder %v3392, %v3539
  %vm3825 = vcmp.eq.f32.partialorder %v3393, %v3539
  %vm3826 = vcmp.eq.f32.partialorder %v3394, %v3539
  %vm3827 = vcmp.eq.f32.partialorder %v3395, %v3539
  %vm3828 = vmand %vm3700, %vm1288
  %vm3829 = vmand %vm3701, %vm1289
  %vm3830 = vmand %vm3702, %vm1290
  %vm3831 = vmand %vm3703, %vm1291
  %vm3832 = vmand %vm3704, %vm1292
  %vm3833 = vmand %vm3705, %vm1293
  %vm3834 = vmand %vm3706, %vm1294
  %vm3835 = vmand %vm3707, %vm1295
  %vm3836 = vmand %vm3708, %vm1296
  %vm3837 = vmand %vm3709, %vm1297
  %vm3838 = vmand %vm3710, %vm1298
  %vm3839 = vmand %vm3711, %vm1299
  %vm3840 = vmand %vm3712, %vm1300
  %vm3841 = vmand %vm3713, %vm1301
  %vm3842 = vmand %vm3714, %vm1302
  %vm3843 = vmand %vm3715, %vm1303
  %vm3844 = vmand %vm3716, %vm1304
  %vm3845 = vmand %vm3717, %vm1305
  %vm3846 = vmand %vm3718, %vm1306
  %vm3847 = vmand %vm3719, %vm1307
  %vm3848 = vmand %vm3720, %vm1308
  %vm3849 = vmand %vm3721, %vm1309
  %vm3850 = vmand %vm3722, %vm1310
  %vm3851 = vmand %vm3723, %vm1311
  %vm3852 = vmand %vm3724, %vm1312
  %vm3853 = vmand %vm3725, %vm1313
  %vm3854 = vmand %vm3726, %vm1314
  %vm3855 = vmand %vm3727, %vm1315
  %vm3856 = vmand %vm3728, %vm1316
  %vm3857 = vmand %vm3729, %vm1317
  %vm3858 = vmand %vm3730, %vm1318
  %vm3859 = vmand %vm3731, %vm1319
  %vm3860 = vmand %vm3732, %vm1320
  %vm3861 = vmand %vm3733, %vm1321
  %vm3862 = vmand %vm3734, %vm1322
  %vm3863 = vmand %vm3735, %vm1323
  %vm3864 = vmand %vm3736, %vm1324
  %vm3865 = vmand %vm3737, %vm1325
  %vm3866 = vmand %vm3738, %vm1326
  %vm3867 = vmand %vm3739, %vm1327
  %vm3868 = vmand %vm3740, %vm1328
  %vm3869 = vmand %vm3741, %vm1329
  %vm3870 = vmand %vm3742, %vm1330
  %vm3871 = vmand %vm3743, %vm1331
  %vm3872 = vmand %vm3744, %vm1332
  %vm3873 = vmand %vm3745, %vm1333
  %vm3874 = vmand %vm3746, %vm1334
  %vm3875 = vmand %vm3747, %vm1335
  %vm3876 = vmand %vm3748, %vm1336
  %vm3877 = vmand %vm3749, %vm1337
  %vm3878 = vmand %vm3750, %vm1338
  %vm3879 = vmand %vm3751, %vm1339
  %vm3880 = vmand %vm3752, %vm1340
  %vm3881 = vmand %vm3753, %vm1341
  %vm3882 = vmand %vm3754, %vm1342
  %vm3883 = vmand %vm3755, %vm1343
  %vm3884 = vmand %vm3756, %vm1344
  %vm3885 = vmand %vm3757, %vm1345
  %vm3886 = vmand %vm3758, %vm1346
  %vm3887 = vmand %vm3759, %vm1347
  %vm3888 = vmand %vm3760, %vm1348
  %vm3889 = vmand %vm3761, %vm1349
  %vm3890 = vmand %vm3762, %vm1350
  %vm3891 = vmand %vm3763, %vm1351
  %vm3892 = vmand %vm3764, %vm1352
  %vm3893 = vmand %vm3765, %vm1353
  %vm3894 = vmand %vm3766, %vm1354
  %vm3895 = vmand %vm3767, %vm1355
  %vm3896 = vmand %vm3768, %vm1356
  %vm3897 = vmand %vm3769, %vm1357
  %vm3898 = vmand %vm3770, %vm1358
  %vm3899 = vmand %vm3771, %vm1359
  %vm3900 = vmand %vm3772, %vm1360
  %vm3901 = vmand %vm3773, %vm1361
  %vm3902 = vmand %vm3774, %vm1362
  %vm3903 = vmand %vm3775, %vm1363
  %vm3904 = vmand %vm3776, %vm1364
  %vm3905 = vmand %vm3777, %vm1365
  %vm3906 = vmand %vm3778, %vm1366
  %vm3907 = vmand %vm3779, %vm1367
  %vm3908 = vmand %vm3780, %vm1368
  %vm3909 = vmand %vm3781, %vm1369
  %vm3910 = vmand %vm3782, %vm1370
  %vm3911 = vmand %vm3783, %vm1371
  %vm3912 = vmand %vm3784, %vm1372
  %vm3913 = vmand %vm3785, %vm1373
  %vm3914 = vmand %vm3786, %vm1374
  %vm3915 = vmand %vm3787, %vm1375
  %vm3916 = vmand %vm3788, %vm1376
  %vm3917 = vmand %vm3789, %vm1377
  %vm3918 = vmand %vm3790, %vm1378
  %vm3919 = vmand %vm3791, %vm1379
  %vm3920 = vmand %vm3792, %vm1380
  %vm3921 = vmand %vm3793, %vm1381
  %vm3922 = vmand %vm3794, %vm1382
  %vm3923 = vmand %vm3795, %vm1383
  %vm3924 = vmand %vm3796, %vm1384
  %vm3925 = vmand %vm3797, %vm1385
  %vm3926 = vmand %vm3798, %vm1386
  %vm3927 = vmand %vm3799, %vm1387
  %vm3928 = vmand %vm3800, %vm1388
  %vm3929 = vmand %vm3801, %vm1389
  %vm3930 = vmand %vm3802, %vm1390
  %vm3931 = vmand %vm3803, %vm1391
  %vm3932 = vmand %vm3804, %vm1392
  %vm3933 = vmand %vm3805, %vm1393
  %vm3934 = vmand %vm3806, %vm1394
  %vm3935 = vmand %vm3807, %vm1395
  %vm3936 = vmand %vm3808, %vm1396
  %vm3937 = vmand %vm3809, %vm1397
  %vm3938 = vmand %vm3810, %vm1398
  %vm3939 = vmand %vm3811, %vm1399
  %vm3940 = vmand %vm3812, %vm1400
  %vm3941 = vmand %vm3813, %vm1401
  %vm3942 = vmand %vm3814, %vm1402
  %vm3943 = vmand %vm3815, %vm1403
  %vm3944 = vmand %vm3816, %vm1404
  %vm3945 = vmand %vm3817, %vm1405
  %vm3946 = vmand %vm3818, %vm1406
  %vm3947 = vmand %vm3819, %vm1407
  %vm3948 = vmand %vm3820, %vm1408
  %vm3949 = vmand %vm3821, %vm1409
  %vm3950 = vmand %vm3822, %vm1410
  %vm3951 = vmand %vm3823, %vm1411
  %vm3952 = vmand %vm3824, %vm1412
  %vm3953 = vmand %vm3825, %vm1413
  %vm3954 = vmand %vm3826, %vm1414
  %vm3955 = vmand %vm3827, %vm1415
  %vm3956 = vmor %vm3572, %vm3828
  %vm3957 = vmor %vm3573, %vm3829
  %vm3958 = vmor %vm3574, %vm3830
  %vm3959 = vmor %vm3575, %vm3831
  %vm3960 = vmor %vm3576, %vm3832
  %vm3961 = vmor %vm3577, %vm3833
  %vm3962 = vmor %vm3578, %vm3834
  %vm3963 = vmor %vm3579, %vm3835
  %vm3964 = vmor %vm3580, %vm3836
  %vm3965 = vmor %vm3581, %vm3837
  %vm3966 = vmor %vm3582, %vm3838
  %vm3967 = vmor %vm3583, %vm3839
  %vm3968 = vmor %vm3584, %vm3840
  %vm3969 = vmor %vm3585, %vm3841
  %vm3970 = vmor %vm3586, %vm3842
  %vm3971 = vmor %vm3587, %vm3843
  %vm3972 = vmor %vm3588, %vm3844
  %vm3973 = vmor %vm3589, %vm3845
  %vm3974 = vmor %vm3590, %vm3846
  %vm3975 = vmor %vm3591, %vm3847
  %vm3976 = vmor %vm3592, %vm3848
  %vm3977 = vmor %vm3593, %vm3849
  %vm3978 = vmor %vm3594, %vm3850
  %vm3979 = vmor %vm3595, %vm3851
  %vm3980 = vmor %vm3596, %vm3852
  %vm3981 = vmor %vm3597, %vm3853
  %vm3982 = vmor %vm3598, %vm3854
  %vm3983 = vmor %vm3599, %vm3855
  %vm3984 = vmor %vm3600, %vm3856
  %vm3985 = vmor %vm3601, %vm3857
  %vm3986 = vmor %vm3602, %vm3858
  %vm3987 = vmor %vm3603, %vm3859
  %vm3988 = vmor %vm3604, %vm3860
  %vm3989 = vmor %vm3605, %vm3861
  %vm3990 = vmor %vm3606, %vm3862
  %vm3991 = vmor %vm3607, %vm3863
  %vm3992 = vmor %vm3608, %vm3864
  %vm3993 = vmor %vm3609, %vm3865
  %vm3994 = vmor %vm3610, %vm3866
  %vm3995 = vmor %vm3611, %vm3867
  %vm3996 = vmor %vm3612, %vm3868
  %vm3997 = vmor %vm3613, %vm3869
  %vm3998 = vmor %vm3614, %vm3870
  %vm3999 = vmor %vm3615, %vm3871
  %vm4000 = vmor %vm3616, %vm3872
  %vm4001 = vmor %vm3617, %vm3873
  %vm4002 = vmor %vm3618, %vm3874
  %vm4003 = vmor %vm3619, %vm3875
  %vm4004 = vmor %vm3620, %vm3876
  %vm4005 = vmor %vm3621, %vm3877
  %vm4006 = vmor %vm3622, %vm3878
  %vm4007 = vmor %vm3623, %vm3879
  %vm4008 = vmor %vm3624, %vm3880
  %vm4009 = vmor %vm3625, %vm3881
  %vm4010 = vmor %vm3626, %vm3882
  %vm4011 = vmor %vm3627, %vm3883
  %vm4012 = vmor %vm3628, %vm3884
  %vm4013 = vmor %vm3629, %vm3885
  %vm4014 = vmor %vm3630, %vm3886
  %vm4015 = vmor %vm3631, %vm3887
  %vm4016 = vmor %vm3632, %vm3888
  %vm4017 = vmor %vm3633, %vm3889
  %vm4018 = vmor %vm3634, %vm3890
  %vm4019 = vmor %vm3635, %vm3891
  %vm4020 = vmor %vm3636, %vm3892
  %vm4021 = vmor %vm3637, %vm3893
  %vm4022 = vmor %vm3638, %vm3894
  %vm4023 = vmor %vm3639, %vm3895
  %vm4024 = vmor %vm3640, %vm3896
  %vm4025 = vmor %vm3641, %vm3897
  %vm4026 = vmor %vm3642, %vm3898
  %vm4027 = vmor %vm3643, %vm3899
  %vm4028 = vmor %vm3644, %vm3900
  %vm4029 = vmor %vm3645, %vm3901
  %vm4030 = vmor %vm3646, %vm3902
  %vm4031 = vmor %vm3647, %vm3903
  %vm4032 = vmor %vm3648, %vm3904
  %vm4033 = vmor %vm3649, %vm3905
  %vm4034 = vmor %vm3650, %vm3906
  %vm4035 = vmor %vm3651, %vm3907
  %vm4036 = vmor %vm3652, %vm3908
  %vm4037 = vmor %vm3653, %vm3909
  %vm4038 = vmor %vm3654, %vm3910
  %vm4039 = vmor %vm3655, %vm3911
  %vm4040 = vmor %vm3656, %vm3912
  %vm4041 = vmor %vm3657, %vm3913
  %vm4042 = vmor %vm3658, %vm3914
  %vm4043 = vmor %vm3659, %vm3915
  %vm4044 = vmor %vm3660, %vm3916
  %vm4045 = vmor %vm3661, %vm3917
  %vm4046 = vmor %vm3662, %vm3918
  %vm4047 = vmor %vm3663, %vm3919
  %vm4048 = vmor %vm3664, %vm3920
  %vm4049 = vmor %vm3665, %vm3921
  %vm4050 = vmor %vm3666, %vm3922
  %vm4051 = vmor %vm3667, %vm3923
  %vm4052 = vmor %vm3668, %vm3924
  %vm4053 = vmor %vm3669, %vm3925
  %vm4054 = vmor %vm3670, %vm3926
  %vm4055 = vmor %vm3671, %vm3927
  %vm4056 = vmor %vm3672, %vm3928
  %vm4057 = vmor %vm3673, %vm3929
  %vm4058 = vmor %vm3674, %vm3930
  %vm4059 = vmor %vm3675, %vm3931
  %vm4060 = vmor %vm3676, %vm3932
  %vm4061 = vmor %vm3677, %vm3933
  %vm4062 = vmor %vm3678, %vm3934
  %vm4063 = vmor %vm3679, %vm3935
  %vm4064 = vmor %vm3680, %vm3936
  %vm4065 = vmor %vm3681, %vm3937
  %vm4066 = vmor %vm3682, %vm3938
  %vm4067 = vmor %vm3683, %vm3939
  %vm4068 = vmor %vm3684, %vm3940
  %vm4069 = vmor %vm3685, %vm3941
  %vm4070 = vmor %vm3686, %vm3942
  %vm4071 = vmor %vm3687, %vm3943
  %vm4072 = vmor %vm3688, %vm3944
  %vm4073 = vmor %vm3689, %vm3945
  %vm4074 = vmor %vm3690, %vm3946
  %vm4075 = vmor %vm3691, %vm3947
  %vm4076 = vmor %vm3692, %vm3948
  %vm4077 = vmor %vm3693, %vm3949
  %vm4078 = vmor %vm3694, %vm3950
  %vm4079 = vmor %vm3695, %vm3951
  %vm4080 = vmor %vm3696, %vm3952
  %vm4081 = vmor %vm3697, %vm3953
  %vm4082 = vmor %vm3698, %vm3954
  %vm4083 = vmor %vm3699, %vm3955
  %v4084 = vsel %vm3956, 1, 0
  %v4085 = vsel %vm3957, 1, 0
  %v4086 = vsel %vm3958, 1, 0
  %v4087 = vsel %vm3959, 1, 0
  %v4088 = vsel %vm3960, 1, 0
  %v4089 = vsel %vm3961, 1, 0
  %v4090 = vsel %vm3962, 1, 0
  %v4091 = vsel %vm3963, 1, 0
  %v4092 = vsel %vm3964, 1, 0
  %v4093 = vsel %vm3965, 1, 0
  %v4094 = vsel %vm3966, 1, 0
  %v4095 = vsel %vm3967, 1, 0
  %v4096 = vsel %vm3968, 1, 0
  %v4097 = vsel %vm3969, 1, 0
  %v4098 = vsel %vm3970, 1, 0
  %v4099 = vsel %vm3971, 1, 0
  %v4100 = vsel %vm3972, 1, 0
  %v4101 = vsel %vm3973, 1, 0
  %v4102 = vsel %vm3974, 1, 0
  %v4103 = vsel %vm3975, 1, 0
  %v4104 = vsel %vm3976, 1, 0
  %v4105 = vsel %vm3977, 1, 0
  %v4106 = vsel %vm3978, 1, 0
  %v4107 = vsel %vm3979, 1, 0
  %v4108 = vsel %vm3980, 1, 0
  %v4109 = vsel %vm3981, 1, 0
  %v4110 = vsel %vm3982, 1, 0
  %v4111 = vsel %vm3983, 1, 0
  %v4112 = vsel %vm3984, 1, 0
  %v4113 = vsel %vm3985, 1, 0
  %v4114 = vsel %vm3986, 1, 0
  %v4115 = vsel %vm3987, 1, 0
  %v4116 = vsel %vm3988, 1, 0
  %v4117 = vsel %vm3989, 1, 0
  %v4118 = vsel %vm3990, 1, 0
  %v4119 = vsel %vm3991, 1, 0
  %v4120 = vsel %vm3992, 1, 0
  %v4121 = vsel %vm3993, 1, 0
  %v4122 = vsel %vm3994, 1, 0
  %v4123 = vsel %vm3995, 1, 0
  %v4124 = vsel %vm3996, 1, 0
  %v4125 = vsel %vm3997, 1, 0
  %v4126 = vsel %vm3998, 1, 0
  %v4127 = vsel %vm3999, 1, 0
  %v4128 = vsel %vm4000, 1, 0
  %v4129 = vsel %vm4001, 1, 0
  %v4130 = vsel %vm4002, 1, 0
  %v4131 = vsel %vm4003, 1, 0
  %v4132 = vsel %vm4004, 1, 0
  %v4133 = vsel %vm4005, 1, 0
  %v4134 = vsel %vm4006, 1, 0
  %v4135 = vsel %vm4007, 1, 0
  %v4136 = vsel %vm4008, 1, 0
  %v4137 = vsel %vm4009, 1, 0
  %v4138 = vsel %vm4010, 1, 0
  %v4139 = vsel %vm4011, 1, 0
  %v4140 = vsel %vm4012, 1, 0
  %v4141 = vsel %vm4013, 1, 0
  %v4142 = vsel %vm4014, 1, 0
  %v4143 = vsel %vm4015, 1, 0
  %v4144 = vsel %vm4016, 1, 0
  %v4145 = vsel %vm4017, 1, 0
  %v4146 = vsel %vm4018, 1, 0
  %v4147 = vsel %vm4019, 1, 0
  %v4148 = vsel %vm4020, 1, 0
  %v4149 = vsel %vm4021, 1, 0
  %v4150 = vsel %vm4022, 1, 0
  %v4151 = vsel %vm4023, 1, 0
  %v4152 = vsel %vm4024, 1, 0
  %v4153 = vsel %vm4025, 1, 0
  %v4154 = vsel %vm4026, 1, 0
  %v4155 = vsel %vm4027, 1, 0
  %v4156 = vsel %vm4028, 1, 0
  %v4157 = vsel %vm4029, 1, 0
  %v4158 = vsel %vm4030, 1, 0
  %v4159 = vsel %vm4031, 1, 0
  %v4160 = vsel %vm4032, 1, 0
  %v4161 = vsel %vm4033, 1, 0
  %v4162 = vsel %vm4034, 1, 0
  %v4163 = vsel %vm4035, 1, 0
  %v4164 = vsel %vm4036, 1, 0
  %v4165 = vsel %vm4037, 1, 0
  %v4166 = vsel %vm4038, 1, 0
  %v4167 = vsel %vm4039, 1, 0
  %v4168 = vsel %vm4040, 1, 0
  %v4169 = vsel %vm4041, 1, 0
  %v4170 = vsel %vm4042, 1, 0
  %v4171 = vsel %vm4043, 1, 0
  %v4172 = vsel %vm4044, 1, 0
  %v4173 = vsel %vm4045, 1, 0
  %v4174 = vsel %vm4046, 1, 0
  %v4175 = vsel %vm4047, 1, 0
  %v4176 = vsel %vm4048, 1, 0
  %v4177 = vsel %vm4049, 1, 0
  %v4178 = vsel %vm4050, 1, 0
  %v4179 = vsel %vm4051, 1, 0
  %v4180 = vsel %vm4052, 1, 0
  %v4181 = vsel %vm4053, 1, 0
  %v4182 = vsel %vm4054, 1, 0
  %v4183 = vsel %vm4055, 1, 0
  %v4184 = vsel %vm4056, 1, 0
  %v4185 = vsel %vm4057, 1, 0
  %v4186 = vsel %vm4058, 1, 0
  %v4187 = vsel %vm4059, 1, 0
  %v4188 = vsel %vm4060, 1, 0
  %v4189 = vsel %vm4061, 1, 0
  %v4190 = vsel %vm4062, 1, 0
  %v4191 = vsel %vm4063, 1, 0
  %v4192 = vsel %vm4064, 1, 0
  %v4193 = vsel %vm4065, 1, 0
  %v4194 = vsel %vm4066, 1, 0
  %v4195 = vsel %vm4067, 1, 0
  %v4196 = vsel %vm4068, 1, 0
  %v4197 = vsel %vm4069, 1, 0
  %v4198 = vsel %vm4070, 1, 0
  %v4199 = vsel %vm4071, 1, 0
  %v4200 = vsel %vm4072, 1, 0
  %v4201 = vsel %vm4073, 1, 0
  %v4202 = vsel %vm4074, 1, 0
  %v4203 = vsel %vm4075, 1, 0
  %v4204 = vsel %vm4076, 1, 0
  %v4205 = vsel %vm4077, 1, 0
  %v4206 = vsel %vm4078, 1, 0
  %v4207 = vsel %vm4079, 1, 0
  %v4208 = vsel %vm4080, 1, 0
  %v4209 = vsel %vm4081, 1, 0
  %v4210 = vsel %vm4082, 1, 0
  %v4211 = vsel %vm4083, 1, 0
  %4212 = vset.pattern.permute.xlu0 0
  %4213 = vperm.xlu0 %4212, %v4084
  %v4214 = vpop.permute.xlu0 %4213
  %4215 = vset.pattern.permute.xlu0 0
  %4216 = vperm.xlu0 %4215, %v4085
  %v4217 = vpop.permute.xlu0 %4216
  %4218 = vset.pattern.permute.xlu0 0
  %4219 = vperm.xlu0 %4218, %v4086
  %v4220 = vpop.permute.xlu0 %4219
  %4221 = vset.pattern.permute.xlu0 0
  %4222 = vperm.xlu0 %4221, %v4087
  %v4223 = vpop.permute.xlu0 %4222
  %4224 = vset.pattern.permute.xlu0 0
  %4225 = vperm.xlu0 %4224, %v4088
  %v4226 = vpop.permute.xlu0 %4225
  %4227 = vset.pattern.permute.xlu0 0
  %4228 = vperm.xlu0 %4227, %v4089
  %v4229 = vpop.permute.xlu0 %4228
  %4230 = vset.pattern.permute.xlu0 0
  %4231 = vperm.xlu0 %4230, %v4090
  %v4232 = vpop.permute.xlu0 %4231
  %4233 = vset.pattern.permute.xlu0 0
  %4234 = vperm.xlu0 %4233, %v4091
  %v4235 = vpop.permute.xlu0 %4234
  %4236 = vset.pattern.permute.xlu0 0
  %4237 = vperm.xlu0 %4236, %v4092
  %v4238 = vpop.permute.xlu0 %4237
  %4239 = vset.pattern.permute.xlu0 0
  %4240 = vperm.xlu0 %4239, %v4093
  %v4241 = vpop.permute.xlu0 %4240
  %4242 = vset.pattern.permute.xlu0 0
  %4243 = vperm.xlu0 %4242, %v4094
  %v4244 = vpop.permute.xlu0 %4243
  %4245 = vset.pattern.permute.xlu0 0
  %4246 = vperm.xlu0 %4245, %v4095
  %v4247 = vpop.permute.xlu0 %4246
  %4248 = vset.pattern.permute.xlu0 0
  %4249 = vperm.xlu0 %4248, %v4096
  %v4250 = vpop.permute.xlu0 %4249
  %4251 = vset.pattern.permute.xlu0 0
  %4252 = vperm.xlu0 %4251, %v4097
  %v4253 = vpop.permute.xlu0 %4252
  %4254 = vset.pattern.permute.xlu0 0
  %4255 = vperm.xlu0 %4254, %v4098
  %v4256 = vpop.permute.xlu0 %4255
  %4257 = vset.pattern.permute.xlu0 0
  %4258 = vperm.xlu0 %4257, %v4099
  %v4259 = vpop.permute.xlu0 %4258
  %4260 = vset.pattern.permute.xlu0 0
  %4261 = vperm.xlu0 %4260, %v4100
  %v4262 = vpop.permute.xlu0 %4261
  %4263 = vset.pattern.permute.xlu0 0
  %4264 = vperm.xlu0 %4263, %v4101
  %v4265 = vpop.permute.xlu0 %4264
  %4266 = vset.pattern.permute.xlu0 0
  %4267 = vperm.xlu0 %4266, %v4102
  %v4268 = vpop.permute.xlu0 %4267
  %4269 = vset.pattern.permute.xlu0 0
  %4270 = vperm.xlu0 %4269, %v4103
  %v4271 = vpop.permute.xlu0 %4270
  %4272 = vset.pattern.permute.xlu0 0
  %4273 = vperm.xlu0 %4272, %v4104
  %v4274 = vpop.permute.xlu0 %4273
  %4275 = vset.pattern.permute.xlu0 0
  %4276 = vperm.xlu0 %4275, %v4105
  %v4277 = vpop.permute.xlu0 %4276
  %4278 = vset.pattern.permute.xlu0 0
  %4279 = vperm.xlu0 %4278, %v4106
  %v4280 = vpop.permute.xlu0 %4279
  %4281 = vset.pattern.permute.xlu0 0
  %4282 = vperm.xlu0 %4281, %v4107
  %v4283 = vpop.permute.xlu0 %4282
  %4284 = vset.pattern.permute.xlu0 0
  %4285 = vperm.xlu0 %4284, %v4108
  %v4286 = vpop.permute.xlu0 %4285
  %4287 = vset.pattern.permute.xlu0 0
  %4288 = vperm.xlu0 %4287, %v4109
  %v4289 = vpop.permute.xlu0 %4288
  %4290 = vset.pattern.permute.xlu0 0
  %4291 = vperm.xlu0 %4290, %v4110
  %v4292 = vpop.permute.xlu0 %4291
  %4293 = vset.pattern.permute.xlu0 0
  %4294 = vperm.xlu0 %4293, %v4111
  %v4295 = vpop.permute.xlu0 %4294
  %4296 = vset.pattern.permute.xlu0 0
  %4297 = vperm.xlu0 %4296, %v4112
  %v4298 = vpop.permute.xlu0 %4297
  %4299 = vset.pattern.permute.xlu0 0
  %4300 = vperm.xlu0 %4299, %v4113
  %v4301 = vpop.permute.xlu0 %4300
  %4302 = vset.pattern.permute.xlu0 0
  %4303 = vperm.xlu0 %4302, %v4114
  %v4304 = vpop.permute.xlu0 %4303
  %4305 = vset.pattern.permute.xlu0 0
  %4306 = vperm.xlu0 %4305, %v4115
  %v4307 = vpop.permute.xlu0 %4306
  %4308 = vset.pattern.permute.xlu0 0
  %4309 = vperm.xlu0 %4308, %v4116
  %v4310 = vpop.permute.xlu0 %4309
  %4311 = vset.pattern.permute.xlu0 0
  %4312 = vperm.xlu0 %4311, %v4117
  %v4313 = vpop.permute.xlu0 %4312
  %4314 = vset.pattern.permute.xlu0 0
  %4315 = vperm.xlu0 %4314, %v4118
  %v4316 = vpop.permute.xlu0 %4315
  %4317 = vset.pattern.permute.xlu0 0
  %4318 = vperm.xlu0 %4317, %v4119
  %v4319 = vpop.permute.xlu0 %4318
  %4320 = vset.pattern.permute.xlu0 0
  %4321 = vperm.xlu0 %4320, %v4120
  %v4322 = vpop.permute.xlu0 %4321
  %4323 = vset.pattern.permute.xlu0 0
  %4324 = vperm.xlu0 %4323, %v4121
  %v4325 = vpop.permute.xlu0 %4324
  %4326 = vset.pattern.permute.xlu0 0
  %4327 = vperm.xlu0 %4326, %v4122
  %v4328 = vpop.permute.xlu0 %4327
  %4329 = vset.pattern.permute.xlu0 0
  %4330 = vperm.xlu0 %4329, %v4123
  %v4331 = vpop.permute.xlu0 %4330
  %4332 = vset.pattern.permute.xlu0 0
  %4333 = vperm.xlu0 %4332, %v4124
  %v4334 = vpop.permute.xlu0 %4333
  %4335 = vset.pattern.permute.xlu0 0
  %4336 = vperm.xlu0 %4335, %v4125
  %v4337 = vpop.permute.xlu0 %4336
  %4338 = vset.pattern.permute.xlu0 0
  %4339 = vperm.xlu0 %4338, %v4126
  %v4340 = vpop.permute.xlu0 %4339
  %4341 = vset.pattern.permute.xlu0 0
  %4342 = vperm.xlu0 %4341, %v4127
  %v4343 = vpop.permute.xlu0 %4342
  %4344 = vset.pattern.permute.xlu0 0
  %4345 = vperm.xlu0 %4344, %v4128
  %v4346 = vpop.permute.xlu0 %4345
  %4347 = vset.pattern.permute.xlu0 0
  %4348 = vperm.xlu0 %4347, %v4129
  %v4349 = vpop.permute.xlu0 %4348
  %4350 = vset.pattern.permute.xlu0 0
  %4351 = vperm.xlu0 %4350, %v4130
  %v4352 = vpop.permute.xlu0 %4351
  %4353 = vset.pattern.permute.xlu0 0
  %4354 = vperm.xlu0 %4353, %v4131
  %v4355 = vpop.permute.xlu0 %4354
  %4356 = vset.pattern.permute.xlu0 0
  %4357 = vperm.xlu0 %4356, %v4132
  %v4358 = vpop.permute.xlu0 %4357
  %4359 = vset.pattern.permute.xlu0 0
  %4360 = vperm.xlu0 %4359, %v4133
  %v4361 = vpop.permute.xlu0 %4360
  %4362 = vset.pattern.permute.xlu0 0
  %4363 = vperm.xlu0 %4362, %v4134
  %v4364 = vpop.permute.xlu0 %4363
  %4365 = vset.pattern.permute.xlu0 0
  %4366 = vperm.xlu0 %4365, %v4135
  %v4367 = vpop.permute.xlu0 %4366
  %4368 = vset.pattern.permute.xlu0 0
  %4369 = vperm.xlu0 %4368, %v4136
  %v4370 = vpop.permute.xlu0 %4369
  %4371 = vset.pattern.permute.xlu0 0
  %4372 = vperm.xlu0 %4371, %v4137
  %v4373 = vpop.permute.xlu0 %4372
  %4374 = vset.pattern.permute.xlu0 0
  %4375 = vperm.xlu0 %4374, %v4138
  %v4376 = vpop.permute.xlu0 %4375
  %4377 = vset.pattern.permute.xlu0 0
  %4378 = vperm.xlu0 %4377, %v4139
  %v4379 = vpop.permute.xlu0 %4378
  %4380 = vset.pattern.permute.xlu0 0
  %4381 = vperm.xlu0 %4380, %v4140
  %v4382 = vpop.permute.xlu0 %4381
  %4383 = vset.pattern.permute.xlu0 0
  %4384 = vperm.xlu0 %4383, %v4141
  %v4385 = vpop.permute.xlu0 %4384
  %4386 = vset.pattern.permute.xlu0 0
  %4387 = vperm.xlu0 %4386, %v4142
  %v4388 = vpop.permute.xlu0 %4387
  %4389 = vset.pattern.permute.xlu0 0
  %4390 = vperm.xlu0 %4389, %v4143
  %v4391 = vpop.permute.xlu0 %4390
  %4392 = vset.pattern.permute.xlu0 0
  %4393 = vperm.xlu0 %4392, %v4144
  %v4394 = vpop.permute.xlu0 %4393
  %4395 = vset.pattern.permute.xlu0 0
  %4396 = vperm.xlu0 %4395, %v4145
  %v4397 = vpop.permute.xlu0 %4396
  %4398 = vset.pattern.permute.xlu0 0
  %4399 = vperm.xlu0 %4398, %v4146
  %v4400 = vpop.permute.xlu0 %4399
  %4401 = vset.pattern.permute.xlu0 0
  %4402 = vperm.xlu0 %4401, %v4147
  %v4403 = vpop.permute.xlu0 %4402
  %4404 = vset.pattern.permute.xlu0 0
  %4405 = vperm.xlu0 %4404, %v4148
  %v4406 = vpop.permute.xlu0 %4405
  %4407 = vset.pattern.permute.xlu0 0
  %4408 = vperm.xlu0 %4407, %v4149
  %v4409 = vpop.permute.xlu0 %4408
  %4410 = vset.pattern.permute.xlu0 0
  %4411 = vperm.xlu0 %4410, %v4150
  %v4412 = vpop.permute.xlu0 %4411
  %4413 = vset.pattern.permute.xlu0 0
  %4414 = vperm.xlu0 %4413, %v4151
  %v4415 = vpop.permute.xlu0 %4414
  %4416 = vset.pattern.permute.xlu0 0
  %4417 = vperm.xlu0 %4416, %v4152
  %v4418 = vpop.permute.xlu0 %4417
  %4419 = vset.pattern.permute.xlu0 0
  %4420 = vperm.xlu0 %4419, %v4153
  %v4421 = vpop.permute.xlu0 %4420
  %4422 = vset.pattern.permute.xlu0 0
  %4423 = vperm.xlu0 %4422, %v4154
  %v4424 = vpop.permute.xlu0 %4423
  %4425 = vset.pattern.permute.xlu0 0
  %4426 = vperm.xlu0 %4425, %v4155
  %v4427 = vpop.permute.xlu0 %4426
  %4428 = vset.pattern.permute.xlu0 0
  %4429 = vperm.xlu0 %4428, %v4156
  %v4430 = vpop.permute.xlu0 %4429
  %4431 = vset.pattern.permute.xlu0 0
  %4432 = vperm.xlu0 %4431, %v4157
  %v4433 = vpop.permute.xlu0 %4432
  %4434 = vset.pattern.permute.xlu0 0
  %4435 = vperm.xlu0 %4434, %v4158
  %v4436 = vpop.permute.xlu0 %4435
  %4437 = vset.pattern.permute.xlu0 0
  %4438 = vperm.xlu0 %4437, %v4159
  %v4439 = vpop.permute.xlu0 %4438
  %4440 = vset.pattern.permute.xlu0 0
  %4441 = vperm.xlu0 %4440, %v4160
  %v4442 = vpop.permute.xlu0 %4441
  %4443 = vset.pattern.permute.xlu0 0
  %4444 = vperm.xlu0 %4443, %v4161
  %v4445 = vpop.permute.xlu0 %4444
  %4446 = vset.pattern.permute.xlu0 0
  %4447 = vperm.xlu0 %4446, %v4162
  %v4448 = vpop.permute.xlu0 %4447
  %4449 = vset.pattern.permute.xlu0 0
  %4450 = vperm.xlu0 %4449, %v4163
  %v4451 = vpop.permute.xlu0 %4450
  %4452 = vset.pattern.permute.xlu0 0
  %4453 = vperm.xlu0 %4452, %v4164
  %v4454 = vpop.permute.xlu0 %4453
  %4455 = vset.pattern.permute.xlu0 0
  %4456 = vperm.xlu0 %4455, %v4165
  %v4457 = vpop.permute.xlu0 %4456
  %4458 = vset.pattern.permute.xlu0 0
  %4459 = vperm.xlu0 %4458, %v4166
  %v4460 = vpop.permute.xlu0 %4459
  %4461 = vset.pattern.permute.xlu0 0
  %4462 = vperm.xlu0 %4461, %v4167
  %v4463 = vpop.permute.xlu0 %4462
  %4464 = vset.pattern.permute.xlu0 0
  %4465 = vperm.xlu0 %4464, %v4168
  %v4466 = vpop.permute.xlu0 %4465
  %4467 = vset.pattern.permute.xlu0 0
  %4468 = vperm.xlu0 %4467, %v4169
  %v4469 = vpop.permute.xlu0 %4468
  %4470 = vset.pattern.permute.xlu0 0
  %4471 = vperm.xlu0 %4470, %v4170
  %v4472 = vpop.permute.xlu0 %4471
  %4473 = vset.pattern.permute.xlu0 0
  %4474 = vperm.xlu0 %4473, %v4171
  %v4475 = vpop.permute.xlu0 %4474
  %4476 = vset.pattern.permute.xlu0 0
  %4477 = vperm.xlu0 %4476, %v4172
  %v4478 = vpop.permute.xlu0 %4477
  %4479 = vset.pattern.permute.xlu0 0
  %4480 = vperm.xlu0 %4479, %v4173
  %v4481 = vpop.permute.xlu0 %4480
  %4482 = vset.pattern.permute.xlu0 0
  %4483 = vperm.xlu0 %4482, %v4174
  %v4484 = vpop.permute.xlu0 %4483
  %4485 = vset.pattern.permute.xlu0 0
  %4486 = vperm.xlu0 %4485, %v4175
  %v4487 = vpop.permute.xlu0 %4486
  %4488 = vset.pattern.permute.xlu0 0
  %4489 = vperm.xlu0 %4488, %v4176
  %v4490 = vpop.permute.xlu0 %4489
  %4491 = vset.pattern.permute.xlu0 0
  %4492 = vperm.xlu0 %4491, %v4177
  %v4493 = vpop.permute.xlu0 %4492
  %4494 = vset.pattern.permute.xlu0 0
  %4495 = vperm.xlu0 %4494, %v4178
  %v4496 = vpop.permute.xlu0 %4495
  %4497 = vset.pattern.permute.xlu0 0
  %4498 = vperm.xlu0 %4497, %v4179
  %v4499 = vpop.permute.xlu0 %4498
  %4500 = vset.pattern.permute.xlu0 0
  %4501 = vperm.xlu0 %4500, %v4180
  %v4502 = vpop.permute.xlu0 %4501
  %4503 = vset.pattern.permute.xlu0 0
  %4504 = vperm.xlu0 %4503, %v4181
  %v4505 = vpop.permute.xlu0 %4504
  %4506 = vset.pattern.permute.xlu0 0
  %4507 = vperm.xlu0 %4506, %v4182
  %v4508 = vpop.permute.xlu0 %4507
  %4509 = vset.pattern.permute.xlu0 0
  %4510 = vperm.xlu0 %4509, %v4183
  %v4511 = vpop.permute.xlu0 %4510
  %4512 = vset.pattern.permute.xlu0 0
  %4513 = vperm.xlu0 %4512, %v4184
  %v4514 = vpop.permute.xlu0 %4513
  %4515 = vset.pattern.permute.xlu0 0
  %4516 = vperm.xlu0 %4515, %v4185
  %v4517 = vpop.permute.xlu0 %4516
  %4518 = vset.pattern.permute.xlu0 0
  %4519 = vperm.xlu0 %4518, %v4186
  %v4520 = vpop.permute.xlu0 %4519
  %4521 = vset.pattern.permute.xlu0 0
  %4522 = vperm.xlu0 %4521, %v4187
  %v4523 = vpop.permute.xlu0 %4522
  %4524 = vset.pattern.permute.xlu0 0
  %4525 = vperm.xlu0 %4524, %v4188
  %v4526 = vpop.permute.xlu0 %4525
  %4527 = vset.pattern.permute.xlu0 0
  %4528 = vperm.xlu0 %4527, %v4189
  %v4529 = vpop.permute.xlu0 %4528
  %4530 = vset.pattern.permute.xlu0 0
  %4531 = vperm.xlu0 %4530, %v4190
  %v4532 = vpop.permute.xlu0 %4531
  %4533 = vset.pattern.permute.xlu0 0
  %4534 = vperm.xlu0 %4533, %v4191
  %v4535 = vpop.permute.xlu0 %4534
  %4536 = vset.pattern.permute.xlu0 0
  %4537 = vperm.xlu0 %4536, %v4192
  %v4538 = vpop.permute.xlu0 %4537
  %4539 = vset.pattern.permute.xlu0 0
  %4540 = vperm.xlu0 %4539, %v4193
  %v4541 = vpop.permute.xlu0 %4540
  %4542 = vset.pattern.permute.xlu0 0
  %4543 = vperm.xlu0 %4542, %v4194
  %v4544 = vpop.permute.xlu0 %4543
  %4545 = vset.pattern.permute.xlu0 0
  %4546 = vperm.xlu0 %4545, %v4195
  %v4547 = vpop.permute.xlu0 %4546
  %4548 = vset.pattern.permute.xlu0 0
  %4549 = vperm.xlu0 %4548, %v4196
  %v4550 = vpop.permute.xlu0 %4549
  %4551 = vset.pattern.permute.xlu0 0
  %4552 = vperm.xlu0 %4551, %v4197
  %v4553 = vpop.permute.xlu0 %4552
  %4554 = vset.pattern.permute.xlu0 0
  %4555 = vperm.xlu0 %4554, %v4198
  %v4556 = vpop.permute.xlu0 %4555
  %4557 = vset.pattern.permute.xlu0 0
  %4558 = vperm.xlu0 %4557, %v4199
  %v4559 = vpop.permute.xlu0 %4558
  %4560 = vset.pattern.permute.xlu0 0
  %4561 = vperm.xlu0 %4560, %v4200
  %v4562 = vpop.permute.xlu0 %4561
  %4563 = vset.pattern.permute.xlu0 0
  %4564 = vperm.xlu0 %4563, %v4201
  %v4565 = vpop.permute.xlu0 %4564
  %4566 = vset.pattern.permute.xlu0 0
  %4567 = vperm.xlu0 %4566, %v4202
  %v4568 = vpop.permute.xlu0 %4567
  %4569 = vset.pattern.permute.xlu0 0
  %4570 = vperm.xlu0 %4569, %v4203
  %v4571 = vpop.permute.xlu0 %4570
  %4572 = vset.pattern.permute.xlu0 0
  %4573 = vperm.xlu0 %4572, %v4204
  %v4574 = vpop.permute.xlu0 %4573
  %4575 = vset.pattern.permute.xlu0 0
  %4576 = vperm.xlu0 %4575, %v4205
  %v4577 = vpop.permute.xlu0 %4576
  %4578 = vset.pattern.permute.xlu0 0
  %4579 = vperm.xlu0 %4578, %v4206
  %v4580 = vpop.permute.xlu0 %4579
  %4581 = vset.pattern.permute.xlu0 0
  %4582 = vperm.xlu0 %4581, %v4207
  %v4583 = vpop.permute.xlu0 %4582
  %4584 = vset.pattern.permute.xlu0 0
  %4585 = vperm.xlu0 %4584, %v4208
  %v4586 = vpop.permute.xlu0 %4585
  %4587 = vset.pattern.permute.xlu0 0
  %4588 = vperm.xlu0 %4587, %v4209
  %v4589 = vpop.permute.xlu0 %4588
  %4590 = vset.pattern.permute.xlu0 0
  %4591 = vperm.xlu0 %4590, %v4210
  %v4592 = vpop.permute.xlu0 %4591
  %4593 = vset.pattern.permute.xlu0 0
  %4594 = vperm.xlu0 %4593, %v4211
  %v4595 = vpop.permute.xlu0 %4594
  %v4596 = vlaneseq
  %v4597 = vshrl.u32 %v4596, 7
  %v4598 = vsub.s32 %v47, %v4597
  %v4599 = vrot.slane %v4214, %v4598
  %v4600 = vlaneseq
  %v4601 = vshrl.u32 %v4600, 7
  %v4602 = vsub.s32 %v2188, %v4601
  %v4603 = vrot.slane %v4217, %v4602
  %v4604 = vsel %vm2193, %v4603, %v4599
  %v4605 = vlaneseq
  %v4606 = vshrl.u32 %v4605, 7
  %v4607 = vsub.s32 %v2195, %v4606
  %v4608 = vrot.slane %v4220, %v4607
  %v4609 = vsel %vm2200, %v4608, %v4604
  %v4610 = vlaneseq
  %v4611 = vshrl.u32 %v4610, 7
  %v4612 = vsub.s32 %v2202, %v4611
  %v4613 = vrot.slane %v4223, %v4612
  %v4614 = vsel %vm2207, %v4613, %v4609
  %v4615 = vlaneseq
  %v4616 = vshrl.u32 %v4615, 7
  %v4617 = vsub.s32 %v47, %v4616
  %v4618 = vrot.slane %v4226, %v4617
  %v4619 = vlaneseq
  %v4620 = vshrl.u32 %v4619, 7
  %v4621 = vsub.s32 %v2188, %v4620
  %v4622 = vrot.slane %v4229, %v4621
  %v4623 = vsel %vm2193, %v4622, %v4618
  %v4624 = vlaneseq
  %v4625 = vshrl.u32 %v4624, 7
  %v4626 = vsub.s32 %v2195, %v4625
  %v4627 = vrot.slane %v4232, %v4626
  %v4628 = vsel %vm2200, %v4627, %v4623
  %v4629 = vlaneseq
  %v4630 = vshrl.u32 %v4629, 7
  %v4631 = vsub.s32 %v2202, %v4630
  %v4632 = vrot.slane %v4235, %v4631
  %v4633 = vsel %vm2207, %v4632, %v4628
  %v4634 = vlaneseq
  %v4635 = vshrl.u32 %v4634, 7
  %v4636 = vsub.s32 %v47, %v4635
  %v4637 = vrot.slane %v4238, %v4636
  %v4638 = vlaneseq
  %v4639 = vshrl.u32 %v4638, 7
  %v4640 = vsub.s32 %v2188, %v4639
  %v4641 = vrot.slane %v4241, %v4640
  %v4642 = vsel %vm2193, %v4641, %v4637
  %v4643 = vlaneseq
  %v4644 = vshrl.u32 %v4643, 7
  %v4645 = vsub.s32 %v2195, %v4644
  %v4646 = vrot.slane %v4244, %v4645
  %v4647 = vsel %vm2200, %v4646, %v4642
  %v4648 = vlaneseq
  %v4649 = vshrl.u32 %v4648, 7
  %v4650 = vsub.s32 %v2202, %v4649
  %v4651 = vrot.slane %v4247, %v4650
  %v4652 = vsel %vm2207, %v4651, %v4647
  %v4653 = vlaneseq
  %v4654 = vshrl.u32 %v4653, 7
  %v4655 = vsub.s32 %v47, %v4654
  %v4656 = vrot.slane %v4250, %v4655
  %v4657 = vlaneseq
  %v4658 = vshrl.u32 %v4657, 7
  %v4659 = vsub.s32 %v2188, %v4658
  %v4660 = vrot.slane %v4253, %v4659
  %v4661 = vsel %vm2193, %v4660, %v4656
  %v4662 = vlaneseq
  %v4663 = vshrl.u32 %v4662, 7
  %v4664 = vsub.s32 %v2195, %v4663
  %v4665 = vrot.slane %v4256, %v4664
  %v4666 = vsel %vm2200, %v4665, %v4661
  %v4667 = vlaneseq
  %v4668 = vshrl.u32 %v4667, 7
  %v4669 = vsub.s32 %v2202, %v4668
  %v4670 = vrot.slane %v4259, %v4669
  %v4671 = vsel %vm2207, %v4670, %v4666
  %v4672 = vlaneseq
  %v4673 = vshrl.u32 %v4672, 7
  %v4674 = vsub.s32 %v47, %v4673
  %v4675 = vrot.slane %v4262, %v4674
  %v4676 = vlaneseq
  %v4677 = vshrl.u32 %v4676, 7
  %v4678 = vsub.s32 %v2188, %v4677
  %v4679 = vrot.slane %v4265, %v4678
  %v4680 = vsel %vm2193, %v4679, %v4675
  %v4681 = vlaneseq
  %v4682 = vshrl.u32 %v4681, 7
  %v4683 = vsub.s32 %v2195, %v4682
  %v4684 = vrot.slane %v4268, %v4683
  %v4685 = vsel %vm2200, %v4684, %v4680
  %v4686 = vlaneseq
  %v4687 = vshrl.u32 %v4686, 7
  %v4688 = vsub.s32 %v2202, %v4687
  %v4689 = vrot.slane %v4271, %v4688
  %v4690 = vsel %vm2207, %v4689, %v4685
  %v4691 = vlaneseq
  %v4692 = vshrl.u32 %v4691, 7
  %v4693 = vsub.s32 %v47, %v4692
  %v4694 = vrot.slane %v4274, %v4693
  %v4695 = vlaneseq
  %v4696 = vshrl.u32 %v4695, 7
  %v4697 = vsub.s32 %v2188, %v4696
  %v4698 = vrot.slane %v4277, %v4697
  %v4699 = vsel %vm2193, %v4698, %v4694
  %v4700 = vlaneseq
  %v4701 = vshrl.u32 %v4700, 7
  %v4702 = vsub.s32 %v2195, %v4701
  %v4703 = vrot.slane %v4280, %v4702
  %v4704 = vsel %vm2200, %v4703, %v4699
  %v4705 = vlaneseq
  %v4706 = vshrl.u32 %v4705, 7
  %v4707 = vsub.s32 %v2202, %v4706
  %v4708 = vrot.slane %v4283, %v4707
  %v4709 = vsel %vm2207, %v4708, %v4704
  %v4710 = vlaneseq
  %v4711 = vshrl.u32 %v4710, 7
  %v4712 = vsub.s32 %v47, %v4711
  %v4713 = vrot.slane %v4286, %v4712
  %v4714 = vlaneseq
  %v4715 = vshrl.u32 %v4714, 7
  %v4716 = vsub.s32 %v2188, %v4715
  %v4717 = vrot.slane %v4289, %v4716
  %v4718 = vsel %vm2193, %v4717, %v4713
  %v4719 = vlaneseq
  %v4720 = vshrl.u32 %v4719, 7
  %v4721 = vsub.s32 %v2195, %v4720
  %v4722 = vrot.slane %v4292, %v4721
  %v4723 = vsel %vm2200, %v4722, %v4718
  %v4724 = vlaneseq
  %v4725 = vshrl.u32 %v4724, 7
  %v4726 = vsub.s32 %v2202, %v4725
  %v4727 = vrot.slane %v4295, %v4726
  %v4728 = vsel %vm2207, %v4727, %v4723
  %v4729 = vlaneseq
  %v4730 = vshrl.u32 %v4729, 7
  %v4731 = vsub.s32 %v47, %v4730
  %v4732 = vrot.slane %v4298, %v4731
  %v4733 = vlaneseq
  %v4734 = vshrl.u32 %v4733, 7
  %v4735 = vsub.s32 %v2188, %v4734
  %v4736 = vrot.slane %v4301, %v4735
  %v4737 = vsel %vm2193, %v4736, %v4732
  %v4738 = vlaneseq
  %v4739 = vshrl.u32 %v4738, 7
  %v4740 = vsub.s32 %v2195, %v4739
  %v4741 = vrot.slane %v4304, %v4740
  %v4742 = vsel %vm2200, %v4741, %v4737
  %v4743 = vlaneseq
  %v4744 = vshrl.u32 %v4743, 7
  %v4745 = vsub.s32 %v2202, %v4744
  %v4746 = vrot.slane %v4307, %v4745
  %v4747 = vsel %vm2207, %v4746, %v4742
  %v4748 = vlaneseq
  %v4749 = vshrl.u32 %v4748, 7
  %v4750 = vsub.s32 %v47, %v4749
  %v4751 = vrot.slane %v4310, %v4750
  %v4752 = vlaneseq
  %v4753 = vshrl.u32 %v4752, 7
  %v4754 = vsub.s32 %v2188, %v4753
  %v4755 = vrot.slane %v4313, %v4754
  %v4756 = vsel %vm2193, %v4755, %v4751
  %v4757 = vlaneseq
  %v4758 = vshrl.u32 %v4757, 7
  %v4759 = vsub.s32 %v2195, %v4758
  %v4760 = vrot.slane %v4316, %v4759
  %v4761 = vsel %vm2200, %v4760, %v4756
  %v4762 = vlaneseq
  %v4763 = vshrl.u32 %v4762, 7
  %v4764 = vsub.s32 %v2202, %v4763
  %v4765 = vrot.slane %v4319, %v4764
  %v4766 = vsel %vm2207, %v4765, %v4761
  %v4767 = vlaneseq
  %v4768 = vshrl.u32 %v4767, 7
  %v4769 = vsub.s32 %v47, %v4768
  %v4770 = vrot.slane %v4322, %v4769
  %v4771 = vlaneseq
  %v4772 = vshrl.u32 %v4771, 7
  %v4773 = vsub.s32 %v2188, %v4772
  %v4774 = vrot.slane %v4325, %v4773
  %v4775 = vsel %vm2193, %v4774, %v4770
  %v4776 = vlaneseq
  %v4777 = vshrl.u32 %v4776, 7
  %v4778 = vsub.s32 %v2195, %v4777
  %v4779 = vrot.slane %v4328, %v4778
  %v4780 = vsel %vm2200, %v4779, %v4775
  %v4781 = vlaneseq
  %v4782 = vshrl.u32 %v4781, 7
  %v4783 = vsub.s32 %v2202, %v4782
  %v4784 = vrot.slane %v4331, %v4783
  %v4785 = vsel %vm2207, %v4784, %v4780
  %v4786 = vlaneseq
  %v4787 = vshrl.u32 %v4786, 7
  %v4788 = vsub.s32 %v47, %v4787
  %v4789 = vrot.slane %v4334, %v4788
  %v4790 = vlaneseq
  %v4791 = vshrl.u32 %v4790, 7
  %v4792 = vsub.s32 %v2188, %v4791
  %v4793 = vrot.slane %v4337, %v4792
  %v4794 = vsel %vm2193, %v4793, %v4789
  %v4795 = vlaneseq
  %v4796 = vshrl.u32 %v4795, 7
  %v4797 = vsub.s32 %v2195, %v4796
  %v4798 = vrot.slane %v4340, %v4797
  %v4799 = vsel %vm2200, %v4798, %v4794
  %v4800 = vlaneseq
  %v4801 = vshrl.u32 %v4800, 7
  %v4802 = vsub.s32 %v2202, %v4801
  %v4803 = vrot.slane %v4343, %v4802
  %v4804 = vsel %vm2207, %v4803, %v4799
  %v4805 = vlaneseq
  %v4806 = vshrl.u32 %v4805, 7
  %v4807 = vsub.s32 %v47, %v4806
  %v4808 = vrot.slane %v4346, %v4807
  %v4809 = vlaneseq
  %v4810 = vshrl.u32 %v4809, 7
  %v4811 = vsub.s32 %v2188, %v4810
  %v4812 = vrot.slane %v4349, %v4811
  %v4813 = vsel %vm2193, %v4812, %v4808
  %v4814 = vlaneseq
  %v4815 = vshrl.u32 %v4814, 7
  %v4816 = vsub.s32 %v2195, %v4815
  %v4817 = vrot.slane %v4352, %v4816
  %v4818 = vsel %vm2200, %v4817, %v4813
  %v4819 = vlaneseq
  %v4820 = vshrl.u32 %v4819, 7
  %v4821 = vsub.s32 %v2202, %v4820
  %v4822 = vrot.slane %v4355, %v4821
  %v4823 = vsel %vm2207, %v4822, %v4818
  %v4824 = vlaneseq
  %v4825 = vshrl.u32 %v4824, 7
  %v4826 = vsub.s32 %v47, %v4825
  %v4827 = vrot.slane %v4358, %v4826
  %v4828 = vlaneseq
  %v4829 = vshrl.u32 %v4828, 7
  %v4830 = vsub.s32 %v2188, %v4829
  %v4831 = vrot.slane %v4361, %v4830
  %v4832 = vsel %vm2193, %v4831, %v4827
  %v4833 = vlaneseq
  %v4834 = vshrl.u32 %v4833, 7
  %v4835 = vsub.s32 %v2195, %v4834
  %v4836 = vrot.slane %v4364, %v4835
  %v4837 = vsel %vm2200, %v4836, %v4832
  %v4838 = vlaneseq
  %v4839 = vshrl.u32 %v4838, 7
  %v4840 = vsub.s32 %v2202, %v4839
  %v4841 = vrot.slane %v4367, %v4840
  %v4842 = vsel %vm2207, %v4841, %v4837
  %v4843 = vlaneseq
  %v4844 = vshrl.u32 %v4843, 7
  %v4845 = vsub.s32 %v47, %v4844
  %v4846 = vrot.slane %v4370, %v4845
  %v4847 = vlaneseq
  %v4848 = vshrl.u32 %v4847, 7
  %v4849 = vsub.s32 %v2188, %v4848
  %v4850 = vrot.slane %v4373, %v4849
  %v4851 = vsel %vm2193, %v4850, %v4846
  %v4852 = vlaneseq
  %v4853 = vshrl.u32 %v4852, 7
  %v4854 = vsub.s32 %v2195, %v4853
  %v4855 = vrot.slane %v4376, %v4854
  %v4856 = vsel %vm2200, %v4855, %v4851
  %v4857 = vlaneseq
  %v4858 = vshrl.u32 %v4857, 7
  %v4859 = vsub.s32 %v2202, %v4858
  %v4860 = vrot.slane %v4379, %v4859
  %v4861 = vsel %vm2207, %v4860, %v4856
  %v4862 = vlaneseq
  %v4863 = vshrl.u32 %v4862, 7
  %v4864 = vsub.s32 %v47, %v4863
  %v4865 = vrot.slane %v4382, %v4864
  %v4866 = vlaneseq
  %v4867 = vshrl.u32 %v4866, 7
  %v4868 = vsub.s32 %v2188, %v4867
  %v4869 = vrot.slane %v4385, %v4868
  %v4870 = vsel %vm2193, %v4869, %v4865
  %v4871 = vlaneseq
  %v4872 = vshrl.u32 %v4871, 7
  %v4873 = vsub.s32 %v2195, %v4872
  %v4874 = vrot.slane %v4388, %v4873
  %v4875 = vsel %vm2200, %v4874, %v4870
  %v4876 = vlaneseq
  %v4877 = vshrl.u32 %v4876, 7
  %v4878 = vsub.s32 %v2202, %v4877
  %v4879 = vrot.slane %v4391, %v4878
  %v4880 = vsel %vm2207, %v4879, %v4875
  %v4881 = vlaneseq
  %v4882 = vshrl.u32 %v4881, 7
  %v4883 = vsub.s32 %v47, %v4882
  %v4884 = vrot.slane %v4394, %v4883
  %v4885 = vlaneseq
  %v4886 = vshrl.u32 %v4885, 7
  %v4887 = vsub.s32 %v2188, %v4886
  %v4888 = vrot.slane %v4397, %v4887
  %v4889 = vsel %vm2193, %v4888, %v4884
  %v4890 = vlaneseq
  %v4891 = vshrl.u32 %v4890, 7
  %v4892 = vsub.s32 %v2195, %v4891
  %v4893 = vrot.slane %v4400, %v4892
  %v4894 = vsel %vm2200, %v4893, %v4889
  %v4895 = vlaneseq
  %v4896 = vshrl.u32 %v4895, 7
  %v4897 = vsub.s32 %v2202, %v4896
  %v4898 = vrot.slane %v4403, %v4897
  %v4899 = vsel %vm2207, %v4898, %v4894
  %v4900 = vlaneseq
  %v4901 = vshrl.u32 %v4900, 7
  %v4902 = vsub.s32 %v47, %v4901
  %v4903 = vrot.slane %v4406, %v4902
  %v4904 = vlaneseq
  %v4905 = vshrl.u32 %v4904, 7
  %v4906 = vsub.s32 %v2188, %v4905
  %v4907 = vrot.slane %v4409, %v4906
  %v4908 = vsel %vm2193, %v4907, %v4903
  %v4909 = vlaneseq
  %v4910 = vshrl.u32 %v4909, 7
  %v4911 = vsub.s32 %v2195, %v4910
  %v4912 = vrot.slane %v4412, %v4911
  %v4913 = vsel %vm2200, %v4912, %v4908
  %v4914 = vlaneseq
  %v4915 = vshrl.u32 %v4914, 7
  %v4916 = vsub.s32 %v2202, %v4915
  %v4917 = vrot.slane %v4415, %v4916
  %v4918 = vsel %vm2207, %v4917, %v4913
  %v4919 = vlaneseq
  %v4920 = vshrl.u32 %v4919, 7
  %v4921 = vsub.s32 %v47, %v4920
  %v4922 = vrot.slane %v4418, %v4921
  %v4923 = vlaneseq
  %v4924 = vshrl.u32 %v4923, 7
  %v4925 = vsub.s32 %v2188, %v4924
  %v4926 = vrot.slane %v4421, %v4925
  %v4927 = vsel %vm2193, %v4926, %v4922
  %v4928 = vlaneseq
  %v4929 = vshrl.u32 %v4928, 7
  %v4930 = vsub.s32 %v2195, %v4929
  %v4931 = vrot.slane %v4424, %v4930
  %v4932 = vsel %vm2200, %v4931, %v4927
  %v4933 = vlaneseq
  %v4934 = vshrl.u32 %v4933, 7
  %v4935 = vsub.s32 %v2202, %v4934
  %v4936 = vrot.slane %v4427, %v4935
  %v4937 = vsel %vm2207, %v4936, %v4932
  %v4938 = vlaneseq
  %v4939 = vshrl.u32 %v4938, 7
  %v4940 = vsub.s32 %v47, %v4939
  %v4941 = vrot.slane %v4430, %v4940
  %v4942 = vlaneseq
  %v4943 = vshrl.u32 %v4942, 7
  %v4944 = vsub.s32 %v2188, %v4943
  %v4945 = vrot.slane %v4433, %v4944
  %v4946 = vsel %vm2193, %v4945, %v4941
  %v4947 = vlaneseq
  %v4948 = vshrl.u32 %v4947, 7
  %v4949 = vsub.s32 %v2195, %v4948
  %v4950 = vrot.slane %v4436, %v4949
  %v4951 = vsel %vm2200, %v4950, %v4946
  %v4952 = vlaneseq
  %v4953 = vshrl.u32 %v4952, 7
  %v4954 = vsub.s32 %v2202, %v4953
  %v4955 = vrot.slane %v4439, %v4954
  %v4956 = vsel %vm2207, %v4955, %v4951
  %v4957 = vlaneseq
  %v4958 = vshrl.u32 %v4957, 7
  %v4959 = vsub.s32 %v47, %v4958
  %v4960 = vrot.slane %v4442, %v4959
  %v4961 = vlaneseq
  %v4962 = vshrl.u32 %v4961, 7
  %v4963 = vsub.s32 %v2188, %v4962
  %v4964 = vrot.slane %v4445, %v4963
  %v4965 = vsel %vm2193, %v4964, %v4960
  %v4966 = vlaneseq
  %v4967 = vshrl.u32 %v4966, 7
  %v4968 = vsub.s32 %v2195, %v4967
  %v4969 = vrot.slane %v4448, %v4968
  %v4970 = vsel %vm2200, %v4969, %v4965
  %v4971 = vlaneseq
  %v4972 = vshrl.u32 %v4971, 7
  %v4973 = vsub.s32 %v2202, %v4972
  %v4974 = vrot.slane %v4451, %v4973
  %v4975 = vsel %vm2207, %v4974, %v4970
  %v4976 = vlaneseq
  %v4977 = vshrl.u32 %v4976, 7
  %v4978 = vsub.s32 %v47, %v4977
  %v4979 = vrot.slane %v4454, %v4978
  %v4980 = vlaneseq
  %v4981 = vshrl.u32 %v4980, 7
  %v4982 = vsub.s32 %v2188, %v4981
  %v4983 = vrot.slane %v4457, %v4982
  %v4984 = vsel %vm2193, %v4983, %v4979
  %v4985 = vlaneseq
  %v4986 = vshrl.u32 %v4985, 7
  %v4987 = vsub.s32 %v2195, %v4986
  %v4988 = vrot.slane %v4460, %v4987
  %v4989 = vsel %vm2200, %v4988, %v4984
  %v4990 = vlaneseq
  %v4991 = vshrl.u32 %v4990, 7
  %v4992 = vsub.s32 %v2202, %v4991
  %v4993 = vrot.slane %v4463, %v4992
  %v4994 = vsel %vm2207, %v4993, %v4989
  %v4995 = vlaneseq
  %v4996 = vshrl.u32 %v4995, 7
  %v4997 = vsub.s32 %v47, %v4996
  %v4998 = vrot.slane %v4466, %v4997
  %v4999 = vlaneseq
  %v5000 = vshrl.u32 %v4999, 7
  %v5001 = vsub.s32 %v2188, %v5000
  %v5002 = vrot.slane %v4469, %v5001
  %v5003 = vsel %vm2193, %v5002, %v4998
  %v5004 = vlaneseq
  %v5005 = vshrl.u32 %v5004, 7
  %v5006 = vsub.s32 %v2195, %v5005
  %v5007 = vrot.slane %v4472, %v5006
  %v5008 = vsel %vm2200, %v5007, %v5003
  %v5009 = vlaneseq
  %v5010 = vshrl.u32 %v5009, 7
  %v5011 = vsub.s32 %v2202, %v5010
  %v5012 = vrot.slane %v4475, %v5011
  %v5013 = vsel %vm2207, %v5012, %v5008
  %v5014 = vlaneseq
  %v5015 = vshrl.u32 %v5014, 7
  %v5016 = vsub.s32 %v47, %v5015
  %v5017 = vrot.slane %v4478, %v5016
  %v5018 = vlaneseq
  %v5019 = vshrl.u32 %v5018, 7
  %v5020 = vsub.s32 %v2188, %v5019
  %v5021 = vrot.slane %v4481, %v5020
  %v5022 = vsel %vm2193, %v5021, %v5017
  %v5023 = vlaneseq
  %v5024 = vshrl.u32 %v5023, 7
  %v5025 = vsub.s32 %v2195, %v5024
  %v5026 = vrot.slane %v4484, %v5025
  %v5027 = vsel %vm2200, %v5026, %v5022
  %v5028 = vlaneseq
  %v5029 = vshrl.u32 %v5028, 7
  %v5030 = vsub.s32 %v2202, %v5029
  %v5031 = vrot.slane %v4487, %v5030
  %v5032 = vsel %vm2207, %v5031, %v5027
  %v5033 = vlaneseq
  %v5034 = vshrl.u32 %v5033, 7
  %v5035 = vsub.s32 %v47, %v5034
  %v5036 = vrot.slane %v4490, %v5035
  %v5037 = vlaneseq
  %v5038 = vshrl.u32 %v5037, 7
  %v5039 = vsub.s32 %v2188, %v5038
  %v5040 = vrot.slane %v4493, %v5039
  %v5041 = vsel %vm2193, %v5040, %v5036
  %v5042 = vlaneseq
  %v5043 = vshrl.u32 %v5042, 7
  %v5044 = vsub.s32 %v2195, %v5043
  %v5045 = vrot.slane %v4496, %v5044
  %v5046 = vsel %vm2200, %v5045, %v5041
  %v5047 = vlaneseq
  %v5048 = vshrl.u32 %v5047, 7
  %v5049 = vsub.s32 %v2202, %v5048
  %v5050 = vrot.slane %v4499, %v5049
  %v5051 = vsel %vm2207, %v5050, %v5046
  %v5052 = vlaneseq
  %v5053 = vshrl.u32 %v5052, 7
  %v5054 = vsub.s32 %v47, %v5053
  %v5055 = vrot.slane %v4502, %v5054
  %v5056 = vlaneseq
  %v5057 = vshrl.u32 %v5056, 7
  %v5058 = vsub.s32 %v2188, %v5057
  %v5059 = vrot.slane %v4505, %v5058
  %v5060 = vsel %vm2193, %v5059, %v5055
  %v5061 = vlaneseq
  %v5062 = vshrl.u32 %v5061, 7
  %v5063 = vsub.s32 %v2195, %v5062
  %v5064 = vrot.slane %v4508, %v5063
  %v5065 = vsel %vm2200, %v5064, %v5060
  %v5066 = vlaneseq
  %v5067 = vshrl.u32 %v5066, 7
  %v5068 = vsub.s32 %v2202, %v5067
  %v5069 = vrot.slane %v4511, %v5068
  %v5070 = vsel %vm2207, %v5069, %v5065
  %v5071 = vlaneseq
  %v5072 = vshrl.u32 %v5071, 7
  %v5073 = vsub.s32 %v47, %v5072
  %v5074 = vrot.slane %v4514, %v5073
  %v5075 = vlaneseq
  %v5076 = vshrl.u32 %v5075, 7
  %v5077 = vsub.s32 %v2188, %v5076
  %v5078 = vrot.slane %v4517, %v5077
  %v5079 = vsel %vm2193, %v5078, %v5074
  %v5080 = vlaneseq
  %v5081 = vshrl.u32 %v5080, 7
  %v5082 = vsub.s32 %v2195, %v5081
  %v5083 = vrot.slane %v4520, %v5082
  %v5084 = vsel %vm2200, %v5083, %v5079
  %v5085 = vlaneseq
  %v5086 = vshrl.u32 %v5085, 7
  %v5087 = vsub.s32 %v2202, %v5086
  %v5088 = vrot.slane %v4523, %v5087
  %v5089 = vsel %vm2207, %v5088, %v5084
  %v5090 = vlaneseq
  %v5091 = vshrl.u32 %v5090, 7
  %v5092 = vsub.s32 %v47, %v5091
  %v5093 = vrot.slane %v4526, %v5092
  %v5094 = vlaneseq
  %v5095 = vshrl.u32 %v5094, 7
  %v5096 = vsub.s32 %v2188, %v5095
  %v5097 = vrot.slane %v4529, %v5096
  %v5098 = vsel %vm2193, %v5097, %v5093
  %v5099 = vlaneseq
  %v5100 = vshrl.u32 %v5099, 7
  %v5101 = vsub.s32 %v2195, %v5100
  %v5102 = vrot.slane %v4532, %v5101
  %v5103 = vsel %vm2200, %v5102, %v5098
  %v5104 = vlaneseq
  %v5105 = vshrl.u32 %v5104, 7
  %v5106 = vsub.s32 %v2202, %v5105
  %v5107 = vrot.slane %v4535, %v5106
  %v5108 = vsel %vm2207, %v5107, %v5103
  %v5109 = vlaneseq
  %v5110 = vshrl.u32 %v5109, 7
  %v5111 = vsub.s32 %v47, %v5110
  %v5112 = vrot.slane %v4538, %v5111
  %v5113 = vlaneseq
  %v5114 = vshrl.u32 %v5113, 7
  %v5115 = vsub.s32 %v2188, %v5114
  %v5116 = vrot.slane %v4541, %v5115
  %v5117 = vsel %vm2193, %v5116, %v5112
  %v5118 = vlaneseq
  %v5119 = vshrl.u32 %v5118, 7
  %v5120 = vsub.s32 %v2195, %v5119
  %v5121 = vrot.slane %v4544, %v5120
  %v5122 = vsel %vm2200, %v5121, %v5117
  %v5123 = vlaneseq
  %v5124 = vshrl.u32 %v5123, 7
  %v5125 = vsub.s32 %v2202, %v5124
  %v5126 = vrot.slane %v4547, %v5125
  %v5127 = vsel %vm2207, %v5126, %v5122
  %v5128 = vlaneseq
  %v5129 = vshrl.u32 %v5128, 7
  %v5130 = vsub.s32 %v47, %v5129
  %v5131 = vrot.slane %v4550, %v5130
  %v5132 = vlaneseq
  %v5133 = vshrl.u32 %v5132, 7
  %v5134 = vsub.s32 %v2188, %v5133
  %v5135 = vrot.slane %v4553, %v5134
  %v5136 = vsel %vm2193, %v5135, %v5131
  %v5137 = vlaneseq
  %v5138 = vshrl.u32 %v5137, 7
  %v5139 = vsub.s32 %v2195, %v5138
  %v5140 = vrot.slane %v4556, %v5139
  %v5141 = vsel %vm2200, %v5140, %v5136
  %v5142 = vlaneseq
  %v5143 = vshrl.u32 %v5142, 7
  %v5144 = vsub.s32 %v2202, %v5143
  %v5145 = vrot.slane %v4559, %v5144
  %v5146 = vsel %vm2207, %v5145, %v5141
  %v5147 = vlaneseq
  %v5148 = vshrl.u32 %v5147, 7
  %v5149 = vsub.s32 %v47, %v5148
  %v5150 = vrot.slane %v4562, %v5149
  %v5151 = vlaneseq
  %v5152 = vshrl.u32 %v5151, 7
  %v5153 = vsub.s32 %v2188, %v5152
  %v5154 = vrot.slane %v4565, %v5153
  %v5155 = vsel %vm2193, %v5154, %v5150
  %v5156 = vlaneseq
  %v5157 = vshrl.u32 %v5156, 7
  %v5158 = vsub.s32 %v2195, %v5157
  %v5159 = vrot.slane %v4568, %v5158
  %v5160 = vsel %vm2200, %v5159, %v5155
  %v5161 = vlaneseq
  %v5162 = vshrl.u32 %v5161, 7
  %v5163 = vsub.s32 %v2202, %v5162
  %v5164 = vrot.slane %v4571, %v5163
  %v5165 = vsel %vm2207, %v5164, %v5160
  %v5166 = vlaneseq
  %v5167 = vshrl.u32 %v5166, 7
  %v5168 = vsub.s32 %v47, %v5167
  %v5169 = vrot.slane %v4574, %v5168
  %v5170 = vlaneseq
  %v5171 = vshrl.u32 %v5170, 7
  %v5172 = vsub.s32 %v2188, %v5171
  %v5173 = vrot.slane %v4577, %v5172
  %v5174 = vsel %vm2193, %v5173, %v5169
  %v5175 = vlaneseq
  %v5176 = vshrl.u32 %v5175, 7
  %v5177 = vsub.s32 %v2195, %v5176
  %v5178 = vrot.slane %v4580, %v5177
  %v5179 = vsel %vm2200, %v5178, %v5174
  %v5180 = vlaneseq
  %v5181 = vshrl.u32 %v5180, 7
  %v5182 = vsub.s32 %v2202, %v5181
  %v5183 = vrot.slane %v4583, %v5182
  %v5184 = vsel %vm2207, %v5183, %v5179
  %v5185 = vlaneseq
  %v5186 = vshrl.u32 %v5185, 7
  %v5187 = vsub.s32 %v47, %v5186
  %v5188 = vrot.slane %v4586, %v5187
  %v5189 = vlaneseq
  %v5190 = vshrl.u32 %v5189, 7
  %v5191 = vsub.s32 %v2188, %v5190
  %v5192 = vrot.slane %v4589, %v5191
  %v5193 = vsel %vm2193, %v5192, %v5188
  %v5194 = vlaneseq
  %v5195 = vshrl.u32 %v5194, 7
  %v5196 = vsub.s32 %v2195, %v5195
  %v5197 = vrot.slane %v4592, %v5196
  %v5198 = vsel %vm2200, %v5197, %v5193
  %v5199 = vlaneseq
  %v5200 = vshrl.u32 %v5199, 7
  %v5201 = vsub.s32 %v2202, %v5200
  %v5202 = vrot.slane %v4595, %v5201
  %v5203 = vsel %vm2207, %v5202, %v5198
  %v5204 = vsel %vm2798, %v4633, %v4614
  %v5205 = vsel %vm2800, %v4652, %v5204
  %v5206 = vsel %vm2802, %v4671, %v5205
  %v5207 = vsel %vm2804, %v4690, %v5206
  %v5208 = vsel %vm2806, %v4709, %v5207
  %v5209 = vsel %vm2808, %v4728, %v5208
  %v5210 = vsel %vm2810, %v4747, %v5209
  %v5211 = vsel %vm2798, %v4785, %v4766
  %v5212 = vsel %vm2800, %v4804, %v5211
  %v5213 = vsel %vm2802, %v4823, %v5212
  %v5214 = vsel %vm2804, %v4842, %v5213
  %v5215 = vsel %vm2806, %v4861, %v5214
  %v5216 = vsel %vm2808, %v4880, %v5215
  %v5217 = vsel %vm2810, %v4899, %v5216
  %v5218 = vsel %vm2798, %v4937, %v4918
  %v5219 = vsel %vm2800, %v4956, %v5218
  %v5220 = vsel %vm2802, %v4975, %v5219
  %v5221 = vsel %vm2804, %v4994, %v5220
  %v5222 = vsel %vm2806, %v5013, %v5221
  %v5223 = vsel %vm2808, %v5032, %v5222
  %v5224 = vsel %vm2810, %v5051, %v5223
  %v5225 = vsel %vm2798, %v5089, %v5070
  %v5226 = vsel %vm2800, %v5108, %v5225
  %v5227 = vsel %vm2802, %v5127, %v5226
  %v5228 = vsel %vm2804, %v5146, %v5227
  %v5229 = vsel %vm2806, %v5165, %v5228
  %v5230 = vsel %vm2808, %v5184, %v5229
  %v5231 = vsel %vm2810, %v5203, %v5230
  %vm5232 = vcmp.ne.s32.totalorder %v5210, 0
  %vm5233 = vcmp.ne.s32.totalorder %v5217, 0
  %vm5234 = vcmp.ne.s32.totalorder %v5224, 0
  %vm5235 = vcmp.ne.s32.totalorder %v5231, 0
  %vm5236 = vmand %vm37, %vm5232
  %vm5237 = vmand %vm38, %vm5233
  %vm5238 = vmand %vm39, %vm5234
  %vm5239 = vmand %vm40, %vm5235
  %v5240 = vsel %vm5236, 1.0, 0.0
  %v5241 = vsel %vm5237, 1.0, 0.0
  %v5242 = vsel %vm5238, 1.0, 0.0
  %v5243 = vsel %vm5239, 1.0, 0.0
  %v5244 = vsel %vm76, %v5240, 0.0
  %5245 = vadd.xlane.f32.xlu0 %v5244
  %v5246 = vpop.xlane.xlu0 %5245
  %v5247 = vsel %vm76, %v5241, 0.0
  %5248 = vadd.xlane.f32.xlu0 %v5247
  %v5249 = vpop.xlane.xlu0 %5248
  %v5250 = vsel %vm76, %v5242, 0.0
  %5251 = vadd.xlane.f32.xlu0 %v5250
  %v5252 = vpop.xlane.xlu0 %5251
  %v5253 = vsel %vm76, %v5243, 0.0
  %5254 = vadd.xlane.f32.xlu0 %v5253
  %v5255 = vpop.xlane.xlu0 %5254
  %v5256 = vlaneseq
  %v5257 = vshrl.u32 %v5256, 7
  %v5258 = vsub.s32 %v47, %v5257
  %v5259 = vrot.slane %v2951, %v5258
  %v5260 = vlaneseq
  %v5261 = vshrl.u32 %v5260, 7
  %v5262 = vsub.s32 %v2188, %v5261
  %v5263 = vrot.slane %v2956, %v5262
  %v5264 = vsel %vm2193, %v5263, %v5259
  %v5265 = vlaneseq
  %v5266 = vshrl.u32 %v5265, 7
  %v5267 = vsub.s32 %v2195, %v5266
  %v5268 = vrot.slane %v2961, %v5267
  %v5269 = vsel %vm2200, %v5268, %v5264
  %v5270 = vlaneseq
  %v5271 = vshrl.u32 %v5270, 7
  %v5272 = vsub.s32 %v2202, %v5271
  %v5273 = vrot.slane %v2966, %v5272
  %v5274 = vsel %vm2207, %v5273, %v5269
  %v5275 = vsel %vm2800, %v5274, %v5274
  %v5276 = vsel %vm2802, %v5274, %v5275
  %v5277 = vsel %vm2804, %v5274, %v5276
  %v5278 = vsel %vm2806, %v5274, %v5277
  %v5279 = vsel %vm2808, %v5274, %v5278
  %v5280 = vsel %vm2810, %v5274, %v5279
  %v5282 = vmul.f32 %v33, %v5280
  %v5283 = vmul.f32 %v34, %v5280
  %v5284 = vmul.f32 %v35, %v5280
  %v5285 = vmul.f32 %v36, %v5280
  %v5286 = vsel %vm76, %v5282, 0.0
  %5287 = vadd.xlane.f32.xlu0 %v5286
  %v5288 = vpop.xlane.xlu0 %5287
  %v5289 = vsel %vm76, %v5283, 0.0
  %5290 = vadd.xlane.f32.xlu0 %v5289
  %v5291 = vpop.xlane.xlu0 %5290
  %v5292 = vsel %vm76, %v5284, 0.0
  %5293 = vadd.xlane.f32.xlu0 %v5292
  %v5294 = vpop.xlane.xlu0 %5293
  %v5295 = vsel %vm76, %v5285, 0.0
  %5296 = vadd.xlane.f32.xlu0 %v5295
  %v5297 = vpop.xlane.xlu0 %5296
  %v5298 = vmul.f32 %v5288, 4.0
  %v5299 = vmul.f32 %v5291, 4.0
  %v5300 = vmul.f32 %v5294, 4.0
  %v5301 = vmul.f32 %v5297, 4.0
  %v5302 = vadd.f32 %v5298, 4.0
  %v5303 = vadd.f32 %v5299, 4.0
  %v5304 = vadd.f32 %v5300, 4.0
  %v5305 = vadd.f32 %v5301, 4.0
  %v5306 = vmul.f32 %v5302, %v2923
  %v5307 = vmul.f32 %v5303, %v2923
  %v5308 = vmul.f32 %v5304, %v2923
  %v5309 = vmul.f32 %v5305, %v2923
  %v5310 = vfloor.f32 %v5306
  %v5311 = vfloor.f32 %v5307
  %v5312 = vfloor.f32 %v5308
  %v5313 = vfloor.f32 %v5309
  %vm5314 = vcmp.lt.f32.partialorder %v5246, %v5310
  %vm5315 = vcmp.lt.f32.partialorder %v5249, %v5311
  %vm5316 = vcmp.lt.f32.partialorder %v5252, %v5312
  %vm5317 = vcmp.lt.f32.partialorder %v5255, %v5313
  %vm5318 = vmand %vm5314, %vm3077
  %vm5319 = vmand %vm5315, %vm3078
  %vm5320 = vmand %vm5316, %vm3079
  %vm5321 = vmand %vm5317, %vm3080
  %v5322 = vsel %vm5318, 1.0, 0.0
  %v5323 = vsel %vm5319, 1.0, 0.0
  %v5324 = vsel %vm5320, 1.0, 0.0
  %v5325 = vsel %vm5321, 1.0, 0.0
  %v5326 = vmul.f32 %v3363, %v3388
  %v5327 = vmul.f32 %v3364, %v3389
  %v5328 = vmul.f32 %v3365, %v3390
  %v5329 = vmul.f32 %v3366, %v3391
  %5331 = vset.pattern.permute.xlu0 0
  %5332 = vperm.xlu0 %5331, %v5322
  %v5333 = vpop.permute.xlu0 %5332
  %5336 = vset.pattern.permute.xlu0 0
  %5337 = vperm.xlu0 %5336, %v5323
  %v5338 = vpop.permute.xlu0 %5337
  %5341 = vset.pattern.permute.xlu0 0
  %5342 = vperm.xlu0 %5341, %v5324
  %v5343 = vpop.permute.xlu0 %5342
  %5346 = vset.pattern.permute.xlu0 0
  %5347 = vperm.xlu0 %5346, %v5325
  %v5348 = vpop.permute.xlu0 %5347
  %v5350 = vmul.f32 %v5326, %v5333
  %v5351 = vmul.f32 %v5327, %v5338
  %v5352 = vmul.f32 %v5328, %v5343
  %v5353 = vmul.f32 %v5329, %v5348
  %v5354 = vpack.c.bf16 %v5323, %v5322
  %v5355 = vpack.c.bf16 %v5325, %v5324
  %5357 = vset.pattern.permute.xlu0 0
  %5358 = vperm.xlu0 %5357, %v5354
  %v5359 = vpop.permute.xlu0 %5358
  %5361 = vset.pattern.permute.xlu0 0
  %5362 = vperm.xlu0 %5361, %v5355
  %v5363 = vpop.permute.xlu0 %5362
  %v5367 = vunpack.c.l.s4 839922192
  %v5368 = vunpack.c.0.s8 %v5367
  %v5369 = vlaneseq
  %v5370 = vshrl.u32 %v5369, 7
  %v5371 = vsub.s32 %v5368, %v5370
  %v5372 = vrot.slane %v5359, %v5371
  %v5374 = vunpack.c.l.s4 1985246804
  %v5375 = vunpack.c.0.s8 %v5374
  %v5376 = vlaneseq
  %v5377 = vshrl.u32 %v5376, 7
  %v5378 = vsub.s32 %v5375, %v5377
  %v5379 = vrot.slane %v5359, %v5378
  %v5381 = vunpack.c.l.s4 839922192
  %v5382 = vunpack.c.0.s8 %v5381
  %v5383 = vlaneseq
  %v5384 = vshrl.u32 %v5383, 7
  %v5385 = vsub.s32 %v5382, %v5384
  %v5386 = vrot.slane %v5363, %v5385
  %v5388 = vunpack.c.l.s4 1985246804
  %v5389 = vunpack.c.0.s8 %v5388
  %v5390 = vlaneseq
  %v5391 = vshrl.u32 %v5390, 7
  %v5392 = vsub.s32 %v5389, %v5391
  %v5393 = vrot.slane %v5363, %v5392
  %v5398 = vmul.bf16 %v3073, %v5372
  %v5399 = vmul.bf16 %v3074, %v5379
  %v5400 = vmul.bf16 %v3075, %v5386
  %v5401 = vmul.bf16 %v3076, %v5393
  %v5404 = vunpack.c.l.b16 %v5354
  %v5405 = vunpack.c.h.b16 %v5354
  %v5406 = vunpack.c.l.b16 %v5355
  %v5407 = vunpack.c.h.b16 %v5355
  %v5408 = vpack.c.b16 %v5404, %v5404
  %v5409 = vpack.c.b16 %v5405, %v5405
  %v5410 = vpack.c.b16 %v5406, %v5406
  %v5411 = vpack.c.b16 %v5407, %v5407
  %v5412 = vunpack.c.l.b16 %v5408
  %v5413 = vunpack.c.l.b16 %v5409
  %v5414 = vunpack.c.l.b16 %v5410
  %v5415 = vunpack.c.l.b16 %v5411
  %5416 = vset.pattern.permute.xlu0 0
  %5417 = vperm.xlu0 %5416, %v5412
  %v5418 = vpop.permute.xlu0 %5417
  %5419 = vset.pattern.permute.xlu0 0
  %5420 = vperm.xlu0 %5419, %v5413
  %v5421 = vpop.permute.xlu0 %5420
  %5422 = vset.pattern.permute.xlu0 0
  %5423 = vperm.xlu0 %5422, %v5414
  %v5424 = vpop.permute.xlu0 %5423
  %5425 = vset.pattern.permute.xlu0 0
  %5426 = vperm.xlu0 %5425, %v5415
  %v5427 = vpop.permute.xlu0 %5426
  %v5428 = vlaneseq
  %v5429 = vshrl.u32 %v5428, 7
  %v5430 = vsub.s32 %v47, %v5429
  %v5431 = vrot.slane %v5418, %v5430
  %v5432 = vlaneseq
  %v5433 = vshrl.u32 %v5432, 7
  %v5434 = vsub.s32 %v2188, %v5433
  %v5435 = vrot.slane %v5421, %v5434
  %v5436 = vsel %vm2193, %v5435, %v5431
  %v5437 = vlaneseq
  %v5438 = vshrl.u32 %v5437, 7
  %v5439 = vsub.s32 %v2195, %v5438
  %v5440 = vrot.slane %v5424, %v5439
  %v5441 = vsel %vm2200, %v5440, %v5436
  %v5442 = vlaneseq
  %v5443 = vshrl.u32 %v5442, 7
  %v5444 = vsub.s32 %v2202, %v5443
  %v5445 = vrot.slane %v5427, %v5444
  %v5446 = vsel %vm2207, %v5445, %v5441
  %v5447 = vsel %vm2800, %v5446, %v5446
  %v5448 = vsel %vm2802, %v5446, %v5447
  %v5449 = vsel %vm2804, %v5446, %v5448
  %v5450 = vsel %vm2806, %v5446, %v5449
  %v5451 = vsel %vm2808, %v5446, %v5450
  %v5452 = vsel %vm2810, %v5446, %v5451
  %v5453 = vpack.c.b16 %v5452, %v5452
  %v5455 = vmul.bf16 %v5398, %v5453
  %v5456 = vmul.bf16 %v5399, %v5453
  %v5457 = vmul.bf16 %v5400, %v5453
  %v5458 = vmul.bf16 %v5401, %v5453
  %vm5459 = vcmp.gt.f32.partialorder %v5322, 0.0
  %vm5460 = vcmp.gt.f32.partialorder %v5323, 0.0
  %vm5461 = vcmp.gt.f32.partialorder %v5324, 0.0
  %vm5462 = vcmp.gt.f32.partialorder %v5325, 0.0
  %v5463 = vsel %vm5459, 1, 0
  %v5464 = vsel %vm5460, 1, 0
  %v5465 = vsel %vm5461, 1, 0
  %v5466 = vsel %vm5462, 1, 0
  %5467 = vset.pattern.permute.xlu0 0
  %5468 = vperm.xlu0 %5467, %v5463
  %v5469 = vpop.permute.xlu0 %5468
  %5470 = vset.pattern.permute.xlu0 0
  %5471 = vperm.xlu0 %5470, %v5464
  %v5472 = vpop.permute.xlu0 %5471
  %5473 = vset.pattern.permute.xlu0 0
  %5474 = vperm.xlu0 %5473, %v5465
  %v5475 = vpop.permute.xlu0 %5474
  %5476 = vset.pattern.permute.xlu0 0
  %5477 = vperm.xlu0 %5476, %v5466
  %v5478 = vpop.permute.xlu0 %5477
  %vm5479 = vcmp.eq.s32.totalorder %v5469, 1
  %vm5480 = vcmp.eq.s32.totalorder %v5472, 1
  %vm5481 = vcmp.eq.s32.totalorder %v5475, 1
  %vm5482 = vcmp.eq.s32.totalorder %v5478, 1
  %v5483 = vsel %vm5479, %v5350, -1e+30
  %v5484 = vsel %vm5480, %v5351, -1e+30
  %v5485 = vsel %vm5481, %v5352, -1e+30
  %v5486 = vsel %vm5482, %v5353, -1e+30
  %v5487 = vsel %vm76, %v5483, -inf
  %v5488 = vsel %vm76, %v5484, -inf
  %v5489 = vmax.f32 %v5487, %v5488
  %v5490 = vrot.slane %v5489, 4
  %v5491 = vmax.f32 %v5489, %v5490
  %v5492 = vrot.slane %v5491, 2
  %v5493 = vmax.f32 %v5491, %v5492
  %v5494 = vrot.slane %v5493, 1
  %v5495 = vmax.f32 %v5493, %v5494
  %v5496 = vsel %vm76, %v5485, -inf
  %v5497 = vsel %vm76, %v5486, -inf
  %v5498 = vmax.f32 %v5496, %v5497
  %v5499 = vrot.slane %v5498, 4
  %v5500 = vmax.f32 %v5498, %v5499
  %v5501 = vrot.slane %v5500, 2
  %v5502 = vmax.f32 %v5500, %v5501
  %v5503 = vrot.slane %v5502, 1
  %v5504 = vmax.f32 %v5502, %v5503
  %v5505 = vsel %vm3123, %v5322, 0.0
  %v5506 = vsel %vm3123, %v5323, 0.0
  %v5507 = vadd.f32 %v5505, %v5506
  %v5508 = vrot.slane %v5507, 4
  %v5509 = vadd.f32 %v5507, %v5508
  %v5510 = vrot.slane %v5509, 2
  %v5511 = vadd.f32 %v5509, %v5510
  %v5512 = vrot.slane %v5511, 1
  %v5513 = vadd.f32 %v5511, %v5512
  %v5514 = vsel %vm3123, %v5324, 0.0
  %v5515 = vsel %vm3123, %v5325, 0.0
  %v5516 = vadd.f32 %v5514, %v5515
  %v5517 = vrot.slane %v5516, 4
  %v5518 = vadd.f32 %v5516, %v5517
  %v5519 = vrot.slane %v5518, 2
  %v5520 = vadd.f32 %v5518, %v5519
  %v5521 = vrot.slane %v5520, 1
  %v5522 = vadd.f32 %v5520, %v5521
  %v5523 = vmax.f32 %v5513, 1.0
  %v5524 = vmax.f32 %v5522, 1.0
  %v5525 = vmul.f32 %v5350, %v5333
  %v5526 = vmul.f32 %v5351, %v5338
  %v5527 = vmul.f32 %v5352, %v5343
  %v5528 = vmul.f32 %v5353, %v5348
  %v5529 = vsel %vm76, %v5525, 0.0
  %v5530 = vsel %vm76, %v5526, 0.0
  %v5531 = vadd.f32 %v5529, %v5530
  %v5532 = vrot.slane %v5531, 4
  %v5533 = vadd.f32 %v5531, %v5532
  %v5534 = vrot.slane %v5533, 2
  %v5535 = vadd.f32 %v5533, %v5534
  %v5536 = vrot.slane %v5535, 1
  %v5537 = vadd.f32 %v5535, %v5536
  %v5538 = vsel %vm76, %v5527, 0.0
  %v5539 = vsel %vm76, %v5528, 0.0
  %v5540 = vadd.f32 %v5538, %v5539
  %v5541 = vrot.slane %v5540, 4
  %v5542 = vadd.f32 %v5540, %v5541
  %v5543 = vrot.slane %v5542, 2
  %v5544 = vadd.f32 %v5542, %v5543
  %v5545 = vrot.slane %v5544, 1
  %v5546 = vadd.f32 %v5544, %v5545
  %5548 = vset.pattern.permute.xlu0 0
  %5549 = vperm.xlu0 %5548, %v5523
  %v5550 = vpop.permute.xlu0 %5549
  %5553 = vset.pattern.permute.xlu0 0
  %5554 = vperm.xlu0 %5553, %v5524
  %v5555 = vpop.permute.xlu0 %5554
  %v5557 = vrcp.pop %v5550
  %v5558 = vmul.f32 %v5537, %v5557
  %v5559 = vrcp.pop %v5555
  %v5560 = vmul.f32 %v5546, %v5559
  %v5563 = vsel %vm2798, %v5504, %v5495
  %v5567 = vsel %vm2798, %v5560, %v5558
  %5568 = vrot.lane.b32.xlu0 %v5567, 32
  %v5569 = vpop.permute.xlu0 %5568
  %v5571 = vsel %vm76, %v5563, %v5569
  %v5572 = vadd.f32 %v3190, %v5571
  %v5573 = vld [vmem:[%s3 + $0x28] sm:$0xf]
  %v5574 = vld [vmem:[%s3 + $0x2c] sm:$0xf]
  %v5575 = vld [vmem:[%s3 + $0x30] sm:$0xf]
  %v5576 = vld [vmem:[%s3 + $0x34] sm:$0xf]
  %v5577 = vld [vmem:[%s3 + $0x38] sm:$0xf]
  %v5578 = vld [vmem:[%s3 + $0x3c] sm:$0xf]
  %v5579 = vld [vmem:[%s3 + $0x40] sm:$0xf]
  %v5580 = vld [vmem:[%s3 + $0x44] sm:$0xf]
  %v5581 = vld [vmem:[%s4 + $0x10] sm:$0x1]
  %v5582 = vpack.c.bf16 %v5351, %v5350
  %v5583 = vpack.c.bf16 %v5353, %v5352
  %v5588 = vunpack.c.l.b16 %v5455
  %v5589 = vunpack.c.l.b16 %v5456
  %v5590 = vunpack.c.l.b16 %v5457
  %v5591 = vunpack.c.l.b16 %v5458
  %v5592 = vpack.c.b16 %v5589, %v5588
  %v5593 = vpack.c.b16 %v5591, %v5590
  %v5595 = vsel %vm76, %v5592, 0
  %v5598 = vsel %vm76, %v5593, 0
  %5600 = vmatprep.subr.bf16.mxu0 0
  %5601 = vmatpush1.bf16.msra.mxu0 %v5582
  %5602 = vmatprep.subr.bf16.mxu0 0
  %5603 = vmatpush1.bf16.msra.mxu0 %v5583
  %5604 = vmatprep.subr.bf16.mxu0 0
  %5605 = vmatpush1.bf16.msra.mxu0 0
  %5606 = vmatprep.subr.bf16.mxu0 0
  %5607 = vmatpush1.bf16.msra.mxu0 0
  %5608 = vmatprep.subr.bf16.mxu0 0
  %5609 = vmatpush1.bf16.msra.mxu0 0
  %5610 = vmatprep.subr.bf16.mxu0 0
  %5611 = vmatpush1.bf16.msra.mxu0 0
  %5612 = vmatprep.subr.bf16.mxu0 0
  %5613 = vmatpush1.bf16.msra.mxu0 0
  %5614 = vmatprep.subr.bf16.mxu0 0
  %5615 = vmatpush1.bf16.msra.mxu0 0
  %5616 = vmatprep.subr.bf16.mxu0 0
  %5617 = vmatpush1.bf16.msra.mxu0 0
  %5618 = vmatprep.subr.bf16.mxu0 0
  %5619 = vmatpush1.bf16.msra.mxu0 0
  %5620 = vmatprep.subr.bf16.mxu0 0
  %5621 = vmatpush1.bf16.msra.mxu0 0
  %5622 = vmatprep.subr.bf16.mxu0 0
  %5623 = vmatpush1.bf16.msra.mxu0 0
  %5624 = vmatprep.subr.bf16.mxu0 0
  %5625 = vmatpush1.bf16.msra.mxu0 0
  %5626 = vmatprep.subr.bf16.mxu0 0
  %5627 = vmatpush1.bf16.msra.mxu0 0
  %5628 = vmatprep.subr.bf16.mxu0 0
  %5629 = vmatpush1.bf16.msra.mxu0 0
  %5630 = vmatprep.subr.bf16.mxu0 0
  %5631 = vmatpush1.bf16.msra.mxu0 0
  %5632 = vmatprep.mubr.bf16.mxu0 0
  %5633 = vmatmul.mubr.bf16.gmra.mrb[0].mxu0 %v5595
  %v5634 = vpop.f32.mrb[0].mxu0
  %v5635 = vadd.f32 0.0, %v5634
  %v5636 = vpop.f32.mrb[0].mxu0
  %v5637 = vpop.f32.mrb[0].mxu0
  %v5638 = vadd.f32 0.0, %v5637
  %v5639 = vpop.f32.mrb[0].mxu0
  %5640 = vmatprep.mubr.bf16.mxu0 0
  %5641 = vmatmul.mubr.bf16.gmra.mrb[0].mxu0 %v5598
  %v5642 = vpop.f32.mrb[0].mxu0
  %v5643 = vadd.f32 0.0, %v5642
  %v5644 = vpop.f32.mrb[0].mxu0
  %v5645 = vpop.f32.mrb[0].mxu0
  %v5646 = vadd.f32 0.0, %v5645
  %v5647 = vpop.f32.mrb[0].mxu0
  %5648 = vdwg.mxu0
  %v5649 = vpack.c.bf16 %v5638, %v5635
  %v5650 = vpack.c.bf16 %v5646, %v5643
  %5653 = vrot.lane.b32.xlu0 %v5582, 32
  %v5654 = vpop.permute.xlu0 %5653
  %5655 = vrot.lane.b32.xlu0 %v5583, 32
  %v5656 = vpop.permute.xlu0 %5655
  %v5659 = vsel %vm76, %v5649, %v5654
  %v5662 = vsel %vm76, %v5650, %v5656
  %v5663 = vlaneseq
  %v5664 = vshrl.u32 %v5663, 7
  %v5665 = vsub.s32 0, %v5664
  %v5666 = vrot.slane %v5581, %v5665
  %v5675 = vunpack.c.l.b16 %v5573
  %v5676 = vunpack.c.l.b16 %v5574
  %v5677 = vunpack.c.l.b16 %v5575
  %v5678 = vunpack.c.l.b16 %v5576
  %v5679 = vunpack.c.l.b16 %v5577
  %v5680 = vunpack.c.l.b16 %v5578
  %v5681 = vunpack.c.l.b16 %v5579
  %v5682 = vunpack.c.l.b16 %v5580
  %v5683 = vpack.c.b16 %v5676, %v5675
  %v5684 = vpack.c.b16 %v5678, %v5677
  %v5685 = vpack.c.b16 %v5680, %v5679
  %v5686 = vpack.c.b16 %v5682, %v5681
  %v5691 = vsel %vm3309, %v5659, 0
  %v5693 = vsel %vm3309, %v5662, 0
  %5695 = vmatprep.subr.bf16.mxu0 0
  %5696 = vmatpush1.bf16.msra.mxu0 %v5683
  %5697 = vmatprep.subr.bf16.mxu0 0
  %5698 = vmatpush1.bf16.msra.mxu0 %v5684
  %5699 = vmatprep.subr.bf16.mxu0 0
  %5700 = vmatpush1.bf16.msra.mxu0 %v5685
  %5701 = vmatprep.subr.bf16.mxu0 0
  %5702 = vmatpush1.bf16.msra.mxu0 %v5686
  %5703 = vmatprep.subr.bf16.mxu0 0
  %5704 = vmatpush1.bf16.msra.mxu0 0
  %5705 = vmatprep.subr.bf16.mxu0 0
  %5706 = vmatpush1.bf16.msra.mxu0 0
  %5707 = vmatprep.subr.bf16.mxu0 0
  %5708 = vmatpush1.bf16.msra.mxu0 0
  %5709 = vmatprep.subr.bf16.mxu0 0
  %5710 = vmatpush1.bf16.msra.mxu0 0
  %5711 = vmatprep.subr.bf16.mxu0 0
  %5712 = vmatpush1.bf16.msra.mxu0 0
  %5713 = vmatprep.subr.bf16.mxu0 0
  %5714 = vmatpush1.bf16.msra.mxu0 0
  %5715 = vmatprep.subr.bf16.mxu0 0
  %5716 = vmatpush1.bf16.msra.mxu0 0
  %5717 = vmatprep.subr.bf16.mxu0 0
  %5718 = vmatpush1.bf16.msra.mxu0 0
  %5719 = vmatprep.subr.bf16.mxu0 0
  %5720 = vmatpush1.bf16.msra.mxu0 0
  %5721 = vmatprep.subr.bf16.mxu0 0
  %5722 = vmatpush1.bf16.msra.mxu0 0
  %5723 = vmatprep.subr.bf16.mxu0 0
  %5724 = vmatpush1.bf16.msra.mxu0 0
  %5725 = vmatprep.subr.bf16.mxu0 0
  %5726 = vmatpush1.bf16.msra.mxu0 0
  %5727 = vmatprep.mubr.bf16.mxu0 0
  %5728 = vmatmul.mubr.bf16.gmra.mrb[0].mxu0 %v5691
  %v5729 = vpop.f32.mrb[0].mxu0
  %v5730 = vadd.f32 %v5666, %v5729
  %v5731 = vpop.f32.mrb[0].mxu0
  %v5732 = vpop.f32.mrb[0].mxu0
  %v5733 = vadd.f32 %v5666, %v5732
  %v5734 = vpop.f32.mrb[0].mxu0
  %5735 = vmatprep.mubr.bf16.mxu0 0
  %5736 = vmatmul.mubr.bf16.gmra.mrb[0].mxu0 %v5693
  %v5737 = vpop.f32.mrb[0].mxu0
  %v5738 = vadd.f32 %v5666, %v5737
  %v5739 = vpop.f32.mrb[0].mxu0
  %v5740 = vpop.f32.mrb[0].mxu0
  %v5741 = vadd.f32 %v5666, %v5740
  %v5742 = vpop.f32.mrb[0].mxu0
  %5743 = vdwg.mxu0
  %v5744 = vmax.f32 %v5730, 0.0
  %v5745 = vmax.f32 %v5733, 0.0
  %v5746 = vmax.f32 %v5738, 0.0
  %v5747 = vmax.f32 %v5741, 0.0
  %v5748 = vld [vmem:[%s4 + $0x28] sm:$0x1]
  %v5749 = vlaneseq
  %v5750 = vshrl.u32 %v5749, 7
  %v5751 = vsub.s32 0, %v5750
  %v5752 = vrot.slane %v5748, %v5751
  %v5753 = vmul.f32 %v5744, %v5752
  %v5754 = vmul.f32 %v5745, %v5752
  %v5755 = vmul.f32 %v5746, %v5752
  %v5756 = vmul.f32 %v5747, %v5752
  %v5757 = vsel %vm76, %v5753, 0.0
  %5758 = vadd.xlane.f32.xlu0 %v5757
  %v5759 = vpop.xlane.xlu0 %5758
  %v5760 = vsel %vm76, %v5754, 0.0
  %5761 = vadd.xlane.f32.xlu0 %v5760
  %v5762 = vpop.xlane.xlu0 %5761
  %v5763 = vsel %vm76, %v5755, 0.0
  %5764 = vadd.xlane.f32.xlu0 %v5763
  %v5765 = vpop.xlane.xlu0 %5764
  %v5766 = vsel %vm76, %v5756, 0.0
  %5767 = vadd.xlane.f32.xlu0 %v5766
  %v5768 = vpop.xlane.xlu0 %5767
  %v5769 = vtanh.pop %v5759
  %v5770 = vtanh.pop %v5762
  %v5771 = vtanh.pop %v5765
  %v5772 = vtanh.pop %v5768
  %v5773 = vsel %vm5459, %v5769, -2.0
  %v5774 = vsel %vm5460, %v5770, -2.0
  %v5775 = vsel %vm5461, %v5771, -2.0
  %v5776 = vsel %vm5462, %v5772, -2.0
  %5778 = vset.pattern.permute.xlu0 0
  %5779 = vperm.xlu0 %5778, %v5773
  %v5780 = vpop.permute.xlu0 %5779
  %5782 = vset.pattern.permute.xlu0 0
  %5783 = vperm.xlu0 %5782, %v5774
  %v5784 = vpop.permute.xlu0 %5783
  %5786 = vset.pattern.permute.xlu0 0
  %5787 = vperm.xlu0 %5786, %v5775
  %v5788 = vpop.permute.xlu0 %5787
  %5790 = vset.pattern.permute.xlu0 0
  %5791 = vperm.xlu0 %5790, %v5776
  %v5792 = vpop.permute.xlu0 %5791
  %v5793 = vlaneseq
  %v5794 = vshrl.u32 %v5793, 7
  %v5795 = vsub.s32 0, %v5794
  %v5796 = vrot.slane %v5780, %v5795
  %v5797 = vlaneseq
  %v5798 = vshrl.u32 %v5797, 7
  %v5799 = vsub.s32 1, %v5798
  %v5800 = vrot.slane %v5780, %v5799
  %v5801 = vlaneseq
  %v5802 = vshrl.u32 %v5801, 7
  %v5803 = vsub.s32 2, %v5802
  %v5804 = vrot.slane %v5780, %v5803
  %v5805 = vlaneseq
  %v5806 = vshrl.u32 %v5805, 7
  %v5807 = vsub.s32 3, %v5806
  %v5808 = vrot.slane %v5780, %v5807
  %v5809 = vlaneseq
  %v5810 = vshrl.u32 %v5809, 7
  %v5811 = vsub.s32 4, %v5810
  %v5812 = vrot.slane %v5780, %v5811
  %v5813 = vlaneseq
  %v5814 = vshrl.u32 %v5813, 7
  %v5815 = vsub.s32 5, %v5814
  %v5816 = vrot.slane %v5780, %v5815
  %v5817 = vlaneseq
  %v5818 = vshrl.u32 %v5817, 7
  %v5819 = vsub.s32 6, %v5818
  %v5820 = vrot.slane %v5780, %v5819
  %v5821 = vlaneseq
  %v5822 = vshrl.u32 %v5821, 7
  %v5823 = vsub.s32 7, %v5822
  %v5824 = vrot.slane %v5780, %v5823
  %v5825 = vlaneseq
  %v5826 = vshrl.u32 %v5825, 7
  %v5827 = vsub.s32 0, %v5826
  %v5828 = vrot.slane %v5784, %v5827
  %v5829 = vlaneseq
  %v5830 = vshrl.u32 %v5829, 7
  %v5831 = vsub.s32 1, %v5830
  %v5832 = vrot.slane %v5784, %v5831
  %v5833 = vlaneseq
  %v5834 = vshrl.u32 %v5833, 7
  %v5835 = vsub.s32 2, %v5834
  %v5836 = vrot.slane %v5784, %v5835
  %v5837 = vlaneseq
  %v5838 = vshrl.u32 %v5837, 7
  %v5839 = vsub.s32 3, %v5838
  %v5840 = vrot.slane %v5784, %v5839
  %v5841 = vlaneseq
  %v5842 = vshrl.u32 %v5841, 7
  %v5843 = vsub.s32 4, %v5842
  %v5844 = vrot.slane %v5784, %v5843
  %v5845 = vlaneseq
  %v5846 = vshrl.u32 %v5845, 7
  %v5847 = vsub.s32 5, %v5846
  %v5848 = vrot.slane %v5784, %v5847
  %v5849 = vlaneseq
  %v5850 = vshrl.u32 %v5849, 7
  %v5851 = vsub.s32 6, %v5850
  %v5852 = vrot.slane %v5784, %v5851
  %v5853 = vlaneseq
  %v5854 = vshrl.u32 %v5853, 7
  %v5855 = vsub.s32 7, %v5854
  %v5856 = vrot.slane %v5784, %v5855
  %v5857 = vlaneseq
  %v5858 = vshrl.u32 %v5857, 7
  %v5859 = vsub.s32 0, %v5858
  %v5860 = vrot.slane %v5788, %v5859
  %v5861 = vlaneseq
  %v5862 = vshrl.u32 %v5861, 7
  %v5863 = vsub.s32 1, %v5862
  %v5864 = vrot.slane %v5788, %v5863
  %v5865 = vlaneseq
  %v5866 = vshrl.u32 %v5865, 7
  %v5867 = vsub.s32 2, %v5866
  %v5868 = vrot.slane %v5788, %v5867
  %v5869 = vlaneseq
  %v5870 = vshrl.u32 %v5869, 7
  %v5871 = vsub.s32 3, %v5870
  %v5872 = vrot.slane %v5788, %v5871
  %v5873 = vlaneseq
  %v5874 = vshrl.u32 %v5873, 7
  %v5875 = vsub.s32 4, %v5874
  %v5876 = vrot.slane %v5788, %v5875
  %v5877 = vlaneseq
  %v5878 = vshrl.u32 %v5877, 7
  %v5879 = vsub.s32 5, %v5878
  %v5880 = vrot.slane %v5788, %v5879
  %v5881 = vlaneseq
  %v5882 = vshrl.u32 %v5881, 7
  %v5883 = vsub.s32 6, %v5882
  %v5884 = vrot.slane %v5788, %v5883
  %v5885 = vlaneseq
  %v5886 = vshrl.u32 %v5885, 7
  %v5887 = vsub.s32 7, %v5886
  %v5888 = vrot.slane %v5788, %v5887
  %v5889 = vlaneseq
  %v5890 = vshrl.u32 %v5889, 7
  %v5891 = vsub.s32 0, %v5890
  %v5892 = vrot.slane %v5792, %v5891
  %v5893 = vlaneseq
  %v5894 = vshrl.u32 %v5893, 7
  %v5895 = vsub.s32 1, %v5894
  %v5896 = vrot.slane %v5792, %v5895
  %v5897 = vlaneseq
  %v5898 = vshrl.u32 %v5897, 7
  %v5899 = vsub.s32 2, %v5898
  %v5900 = vrot.slane %v5792, %v5899
  %v5901 = vlaneseq
  %v5902 = vshrl.u32 %v5901, 7
  %v5903 = vsub.s32 3, %v5902
  %v5904 = vrot.slane %v5792, %v5903
  %v5905 = vlaneseq
  %v5906 = vshrl.u32 %v5905, 7
  %v5907 = vsub.s32 4, %v5906
  %v5908 = vrot.slane %v5792, %v5907
  %v5909 = vlaneseq
  %v5910 = vshrl.u32 %v5909, 7
  %v5911 = vsub.s32 5, %v5910
  %v5912 = vrot.slane %v5792, %v5911
  %v5913 = vlaneseq
  %v5914 = vshrl.u32 %v5913, 7
  %v5915 = vsub.s32 6, %v5914
  %v5916 = vrot.slane %v5792, %v5915
  %v5917 = vlaneseq
  %v5918 = vshrl.u32 %v5917, 7
  %v5919 = vsub.s32 7, %v5918
  %v5920 = vrot.slane %v5792, %v5919
  %vm5953 = vcmp.gt.f32.partialorder %v5773, %v5796
  %vm5954 = vcmp.gt.f32.partialorder %v5774, %v5796
  %vm5955 = vcmp.gt.f32.partialorder %v5775, %v5796
  %vm5956 = vcmp.gt.f32.partialorder %v5776, %v5796
  %vm5957 = vcmp.gt.f32.partialorder %v5773, %v5800
  %vm5958 = vcmp.gt.f32.partialorder %v5774, %v5800
  %vm5959 = vcmp.gt.f32.partialorder %v5775, %v5800
  %vm5960 = vcmp.gt.f32.partialorder %v5776, %v5800
  %vm5961 = vcmp.gt.f32.partialorder %v5773, %v5804
  %vm5962 = vcmp.gt.f32.partialorder %v5774, %v5804
  %vm5963 = vcmp.gt.f32.partialorder %v5775, %v5804
  %vm5964 = vcmp.gt.f32.partialorder %v5776, %v5804
  %vm5965 = vcmp.gt.f32.partialorder %v5773, %v5808
  %vm5966 = vcmp.gt.f32.partialorder %v5774, %v5808
  %vm5967 = vcmp.gt.f32.partialorder %v5775, %v5808
  %vm5968 = vcmp.gt.f32.partialorder %v5776, %v5808
  %vm5969 = vcmp.gt.f32.partialorder %v5773, %v5812
  %vm5970 = vcmp.gt.f32.partialorder %v5774, %v5812
  %vm5971 = vcmp.gt.f32.partialorder %v5775, %v5812
  %vm5972 = vcmp.gt.f32.partialorder %v5776, %v5812
  %vm5973 = vcmp.gt.f32.partialorder %v5773, %v5816
  %vm5974 = vcmp.gt.f32.partialorder %v5774, %v5816
  %vm5975 = vcmp.gt.f32.partialorder %v5775, %v5816
  %vm5976 = vcmp.gt.f32.partialorder %v5776, %v5816
  %vm5977 = vcmp.gt.f32.partialorder %v5773, %v5820
  %vm5978 = vcmp.gt.f32.partialorder %v5774, %v5820
  %vm5979 = vcmp.gt.f32.partialorder %v5775, %v5820
  %vm5980 = vcmp.gt.f32.partialorder %v5776, %v5820
  %vm5981 = vcmp.gt.f32.partialorder %v5773, %v5824
  %vm5982 = vcmp.gt.f32.partialorder %v5774, %v5824
  %vm5983 = vcmp.gt.f32.partialorder %v5775, %v5824
  %vm5984 = vcmp.gt.f32.partialorder %v5776, %v5824
  %vm5985 = vcmp.gt.f32.partialorder %v5773, %v5828
  %vm5986 = vcmp.gt.f32.partialorder %v5774, %v5828
  %vm5987 = vcmp.gt.f32.partialorder %v5775, %v5828
  %vm5988 = vcmp.gt.f32.partialorder %v5776, %v5828
  %vm5989 = vcmp.gt.f32.partialorder %v5773, %v5832
  %vm5990 = vcmp.gt.f32.partialorder %v5774, %v5832
  %vm5991 = vcmp.gt.f32.partialorder %v5775, %v5832
  %vm5992 = vcmp.gt.f32.partialorder %v5776, %v5832
  %vm5993 = vcmp.gt.f32.partialorder %v5773, %v5836
  %vm5994 = vcmp.gt.f32.partialorder %v5774, %v5836
  %vm5995 = vcmp.gt.f32.partialorder %v5775, %v5836
  %vm5996 = vcmp.gt.f32.partialorder %v5776, %v5836
  %vm5997 = vcmp.gt.f32.partialorder %v5773, %v5840
  %vm5998 = vcmp.gt.f32.partialorder %v5774, %v5840
  %vm5999 = vcmp.gt.f32.partialorder %v5775, %v5840
  %vm6000 = vcmp.gt.f32.partialorder %v5776, %v5840
  %vm6001 = vcmp.gt.f32.partialorder %v5773, %v5844
  %vm6002 = vcmp.gt.f32.partialorder %v5774, %v5844
  %vm6003 = vcmp.gt.f32.partialorder %v5775, %v5844
  %vm6004 = vcmp.gt.f32.partialorder %v5776, %v5844
  %vm6005 = vcmp.gt.f32.partialorder %v5773, %v5848
  %vm6006 = vcmp.gt.f32.partialorder %v5774, %v5848
  %vm6007 = vcmp.gt.f32.partialorder %v5775, %v5848
  %vm6008 = vcmp.gt.f32.partialorder %v5776, %v5848
  %vm6009 = vcmp.gt.f32.partialorder %v5773, %v5852
  %vm6010 = vcmp.gt.f32.partialorder %v5774, %v5852
  %vm6011 = vcmp.gt.f32.partialorder %v5775, %v5852
  %vm6012 = vcmp.gt.f32.partialorder %v5776, %v5852
  %vm6013 = vcmp.gt.f32.partialorder %v5773, %v5856
  %vm6014 = vcmp.gt.f32.partialorder %v5774, %v5856
  %vm6015 = vcmp.gt.f32.partialorder %v5775, %v5856
  %vm6016 = vcmp.gt.f32.partialorder %v5776, %v5856
  %vm6017 = vcmp.gt.f32.partialorder %v5773, %v5860
  %vm6018 = vcmp.gt.f32.partialorder %v5774, %v5860
  %vm6019 = vcmp.gt.f32.partialorder %v5775, %v5860
  %vm6020 = vcmp.gt.f32.partialorder %v5776, %v5860
  %vm6021 = vcmp.gt.f32.partialorder %v5773, %v5864
  %vm6022 = vcmp.gt.f32.partialorder %v5774, %v5864
  %vm6023 = vcmp.gt.f32.partialorder %v5775, %v5864
  %vm6024 = vcmp.gt.f32.partialorder %v5776, %v5864
  %vm6025 = vcmp.gt.f32.partialorder %v5773, %v5868
  %vm6026 = vcmp.gt.f32.partialorder %v5774, %v5868
  %vm6027 = vcmp.gt.f32.partialorder %v5775, %v5868
  %vm6028 = vcmp.gt.f32.partialorder %v5776, %v5868
  %vm6029 = vcmp.gt.f32.partialorder %v5773, %v5872
  %vm6030 = vcmp.gt.f32.partialorder %v5774, %v5872
  %vm6031 = vcmp.gt.f32.partialorder %v5775, %v5872
  %vm6032 = vcmp.gt.f32.partialorder %v5776, %v5872
  %vm6033 = vcmp.gt.f32.partialorder %v5773, %v5876
  %vm6034 = vcmp.gt.f32.partialorder %v5774, %v5876
  %vm6035 = vcmp.gt.f32.partialorder %v5775, %v5876
  %vm6036 = vcmp.gt.f32.partialorder %v5776, %v5876
  %vm6037 = vcmp.gt.f32.partialorder %v5773, %v5880
  %vm6038 = vcmp.gt.f32.partialorder %v5774, %v5880
  %vm6039 = vcmp.gt.f32.partialorder %v5775, %v5880
  %vm6040 = vcmp.gt.f32.partialorder %v5776, %v5880
  %vm6041 = vcmp.gt.f32.partialorder %v5773, %v5884
  %vm6042 = vcmp.gt.f32.partialorder %v5774, %v5884
  %vm6043 = vcmp.gt.f32.partialorder %v5775, %v5884
  %vm6044 = vcmp.gt.f32.partialorder %v5776, %v5884
  %vm6045 = vcmp.gt.f32.partialorder %v5773, %v5888
  %vm6046 = vcmp.gt.f32.partialorder %v5774, %v5888
  %vm6047 = vcmp.gt.f32.partialorder %v5775, %v5888
  %vm6048 = vcmp.gt.f32.partialorder %v5776, %v5888
  %vm6049 = vcmp.gt.f32.partialorder %v5773, %v5892
  %vm6050 = vcmp.gt.f32.partialorder %v5774, %v5892
  %vm6051 = vcmp.gt.f32.partialorder %v5775, %v5892
  %vm6052 = vcmp.gt.f32.partialorder %v5776, %v5892
  %vm6053 = vcmp.gt.f32.partialorder %v5773, %v5896
  %vm6054 = vcmp.gt.f32.partialorder %v5774, %v5896
  %vm6055 = vcmp.gt.f32.partialorder %v5775, %v5896
  %vm6056 = vcmp.gt.f32.partialorder %v5776, %v5896
  %vm6057 = vcmp.gt.f32.partialorder %v5773, %v5900
  %vm6058 = vcmp.gt.f32.partialorder %v5774, %v5900
  %vm6059 = vcmp.gt.f32.partialorder %v5775, %v5900
  %vm6060 = vcmp.gt.f32.partialorder %v5776, %v5900
  %vm6061 = vcmp.gt.f32.partialorder %v5773, %v5904
  %vm6062 = vcmp.gt.f32.partialorder %v5774, %v5904
  %vm6063 = vcmp.gt.f32.partialorder %v5775, %v5904
  %vm6064 = vcmp.gt.f32.partialorder %v5776, %v5904
  %vm6065 = vcmp.gt.f32.partialorder %v5773, %v5908
  %vm6066 = vcmp.gt.f32.partialorder %v5774, %v5908
  %vm6067 = vcmp.gt.f32.partialorder %v5775, %v5908
  %vm6068 = vcmp.gt.f32.partialorder %v5776, %v5908
  %vm6069 = vcmp.gt.f32.partialorder %v5773, %v5912
  %vm6070 = vcmp.gt.f32.partialorder %v5774, %v5912
  %vm6071 = vcmp.gt.f32.partialorder %v5775, %v5912
  %vm6072 = vcmp.gt.f32.partialorder %v5776, %v5912
  %vm6073 = vcmp.gt.f32.partialorder %v5773, %v5916
  %vm6074 = vcmp.gt.f32.partialorder %v5774, %v5916
  %vm6075 = vcmp.gt.f32.partialorder %v5775, %v5916
  %vm6076 = vcmp.gt.f32.partialorder %v5776, %v5916
  %vm6077 = vcmp.gt.f32.partialorder %v5773, %v5920
  %vm6078 = vcmp.gt.f32.partialorder %v5774, %v5920
  %vm6079 = vcmp.gt.f32.partialorder %v5775, %v5920
  %vm6080 = vcmp.gt.f32.partialorder %v5776, %v5920
  %vm6081 = vcmp.eq.f32.partialorder %v5773, %v5796
  %vm6082 = vcmp.eq.f32.partialorder %v5774, %v5796
  %vm6083 = vcmp.eq.f32.partialorder %v5775, %v5796
  %vm6084 = vcmp.eq.f32.partialorder %v5776, %v5796
  %vm6085 = vcmp.eq.f32.partialorder %v5773, %v5800
  %vm6086 = vcmp.eq.f32.partialorder %v5774, %v5800
  %vm6087 = vcmp.eq.f32.partialorder %v5775, %v5800
  %vm6088 = vcmp.eq.f32.partialorder %v5776, %v5800
  %vm6089 = vcmp.eq.f32.partialorder %v5773, %v5804
  %vm6090 = vcmp.eq.f32.partialorder %v5774, %v5804
  %vm6091 = vcmp.eq.f32.partialorder %v5775, %v5804
  %vm6092 = vcmp.eq.f32.partialorder %v5776, %v5804
  %vm6093 = vcmp.eq.f32.partialorder %v5773, %v5808
  %vm6094 = vcmp.eq.f32.partialorder %v5774, %v5808
  %vm6095 = vcmp.eq.f32.partialorder %v5775, %v5808
  %vm6096 = vcmp.eq.f32.partialorder %v5776, %v5808
  %vm6097 = vcmp.eq.f32.partialorder %v5773, %v5812
  %vm6098 = vcmp.eq.f32.partialorder %v5774, %v5812
  %vm6099 = vcmp.eq.f32.partialorder %v5775, %v5812
  %vm6100 = vcmp.eq.f32.partialorder %v5776, %v5812
  %vm6101 = vcmp.eq.f32.partialorder %v5773, %v5816
  %vm6102 = vcmp.eq.f32.partialorder %v5774, %v5816
  %vm6103 = vcmp.eq.f32.partialorder %v5775, %v5816
  %vm6104 = vcmp.eq.f32.partialorder %v5776, %v5816
  %vm6105 = vcmp.eq.f32.partialorder %v5773, %v5820
  %vm6106 = vcmp.eq.f32.partialorder %v5774, %v5820
  %vm6107 = vcmp.eq.f32.partialorder %v5775, %v5820
  %vm6108 = vcmp.eq.f32.partialorder %v5776, %v5820
  %vm6109 = vcmp.eq.f32.partialorder %v5773, %v5824
  %vm6110 = vcmp.eq.f32.partialorder %v5774, %v5824
  %vm6111 = vcmp.eq.f32.partialorder %v5775, %v5824
  %vm6112 = vcmp.eq.f32.partialorder %v5776, %v5824
  %vm6113 = vcmp.eq.f32.partialorder %v5773, %v5828
  %vm6114 = vcmp.eq.f32.partialorder %v5774, %v5828
  %vm6115 = vcmp.eq.f32.partialorder %v5775, %v5828
  %vm6116 = vcmp.eq.f32.partialorder %v5776, %v5828
  %vm6117 = vcmp.eq.f32.partialorder %v5773, %v5832
  %vm6118 = vcmp.eq.f32.partialorder %v5774, %v5832
  %vm6119 = vcmp.eq.f32.partialorder %v5775, %v5832
  %vm6120 = vcmp.eq.f32.partialorder %v5776, %v5832
  %vm6121 = vcmp.eq.f32.partialorder %v5773, %v5836
  %vm6122 = vcmp.eq.f32.partialorder %v5774, %v5836
  %vm6123 = vcmp.eq.f32.partialorder %v5775, %v5836
  %vm6124 = vcmp.eq.f32.partialorder %v5776, %v5836
  %vm6125 = vcmp.eq.f32.partialorder %v5773, %v5840
  %vm6126 = vcmp.eq.f32.partialorder %v5774, %v5840
  %vm6127 = vcmp.eq.f32.partialorder %v5775, %v5840
  %vm6128 = vcmp.eq.f32.partialorder %v5776, %v5840
  %vm6129 = vcmp.eq.f32.partialorder %v5773, %v5844
  %vm6130 = vcmp.eq.f32.partialorder %v5774, %v5844
  %vm6131 = vcmp.eq.f32.partialorder %v5775, %v5844
  %vm6132 = vcmp.eq.f32.partialorder %v5776, %v5844
  %vm6133 = vcmp.eq.f32.partialorder %v5773, %v5848
  %vm6134 = vcmp.eq.f32.partialorder %v5774, %v5848
  %vm6135 = vcmp.eq.f32.partialorder %v5775, %v5848
  %vm6136 = vcmp.eq.f32.partialorder %v5776, %v5848
  %vm6137 = vcmp.eq.f32.partialorder %v5773, %v5852
  %vm6138 = vcmp.eq.f32.partialorder %v5774, %v5852
  %vm6139 = vcmp.eq.f32.partialorder %v5775, %v5852
  %vm6140 = vcmp.eq.f32.partialorder %v5776, %v5852
  %vm6141 = vcmp.eq.f32.partialorder %v5773, %v5856
  %vm6142 = vcmp.eq.f32.partialorder %v5774, %v5856
  %vm6143 = vcmp.eq.f32.partialorder %v5775, %v5856
  %vm6144 = vcmp.eq.f32.partialorder %v5776, %v5856
  %vm6145 = vcmp.eq.f32.partialorder %v5773, %v5860
  %vm6146 = vcmp.eq.f32.partialorder %v5774, %v5860
  %vm6147 = vcmp.eq.f32.partialorder %v5775, %v5860
  %vm6148 = vcmp.eq.f32.partialorder %v5776, %v5860
  %vm6149 = vcmp.eq.f32.partialorder %v5773, %v5864
  %vm6150 = vcmp.eq.f32.partialorder %v5774, %v5864
  %vm6151 = vcmp.eq.f32.partialorder %v5775, %v5864
  %vm6152 = vcmp.eq.f32.partialorder %v5776, %v5864
  %vm6153 = vcmp.eq.f32.partialorder %v5773, %v5868
  %vm6154 = vcmp.eq.f32.partialorder %v5774, %v5868
  %vm6155 = vcmp.eq.f32.partialorder %v5775, %v5868
  %vm6156 = vcmp.eq.f32.partialorder %v5776, %v5868
  %vm6157 = vcmp.eq.f32.partialorder %v5773, %v5872
  %vm6158 = vcmp.eq.f32.partialorder %v5774, %v5872
  %vm6159 = vcmp.eq.f32.partialorder %v5775, %v5872
  %vm6160 = vcmp.eq.f32.partialorder %v5776, %v5872
  %vm6161 = vcmp.eq.f32.partialorder %v5773, %v5876
  %vm6162 = vcmp.eq.f32.partialorder %v5774, %v5876
  %vm6163 = vcmp.eq.f32.partialorder %v5775, %v5876
  %vm6164 = vcmp.eq.f32.partialorder %v5776, %v5876
  %vm6165 = vcmp.eq.f32.partialorder %v5773, %v5880
  %vm6166 = vcmp.eq.f32.partialorder %v5774, %v5880
  %vm6167 = vcmp.eq.f32.partialorder %v5775, %v5880
  %vm6168 = vcmp.eq.f32.partialorder %v5776, %v5880
  %vm6169 = vcmp.eq.f32.partialorder %v5773, %v5884
  %vm6170 = vcmp.eq.f32.partialorder %v5774, %v5884
  %vm6171 = vcmp.eq.f32.partialorder %v5775, %v5884
  %vm6172 = vcmp.eq.f32.partialorder %v5776, %v5884
  %vm6173 = vcmp.eq.f32.partialorder %v5773, %v5888
  %vm6174 = vcmp.eq.f32.partialorder %v5774, %v5888
  %vm6175 = vcmp.eq.f32.partialorder %v5775, %v5888
  %vm6176 = vcmp.eq.f32.partialorder %v5776, %v5888
  %vm6177 = vcmp.eq.f32.partialorder %v5773, %v5892
  %vm6178 = vcmp.eq.f32.partialorder %v5774, %v5892
  %vm6179 = vcmp.eq.f32.partialorder %v5775, %v5892
  %vm6180 = vcmp.eq.f32.partialorder %v5776, %v5892
  %vm6181 = vcmp.eq.f32.partialorder %v5773, %v5896
  %vm6182 = vcmp.eq.f32.partialorder %v5774, %v5896
  %vm6183 = vcmp.eq.f32.partialorder %v5775, %v5896
  %vm6184 = vcmp.eq.f32.partialorder %v5776, %v5896
  %vm6185 = vcmp.eq.f32.partialorder %v5773, %v5900
  %vm6186 = vcmp.eq.f32.partialorder %v5774, %v5900
  %vm6187 = vcmp.eq.f32.partialorder %v5775, %v5900
  %vm6188 = vcmp.eq.f32.partialorder %v5776, %v5900
  %vm6189 = vcmp.eq.f32.partialorder %v5773, %v5904
  %vm6190 = vcmp.eq.f32.partialorder %v5774, %v5904
  %vm6191 = vcmp.eq.f32.partialorder %v5775, %v5904
  %vm6192 = vcmp.eq.f32.partialorder %v5776, %v5904
  %vm6193 = vcmp.eq.f32.partialorder %v5773, %v5908
  %vm6194 = vcmp.eq.f32.partialorder %v5774, %v5908
  %vm6195 = vcmp.eq.f32.partialorder %v5775, %v5908
  %vm6196 = vcmp.eq.f32.partialorder %v5776, %v5908
  %vm6197 = vcmp.eq.f32.partialorder %v5773, %v5912
  %vm6198 = vcmp.eq.f32.partialorder %v5774, %v5912
  %vm6199 = vcmp.eq.f32.partialorder %v5775, %v5912
  %vm6200 = vcmp.eq.f32.partialorder %v5776, %v5912
  %vm6201 = vcmp.eq.f32.partialorder %v5773, %v5916
  %vm6202 = vcmp.eq.f32.partialorder %v5774, %v5916
  %vm6203 = vcmp.eq.f32.partialorder %v5775, %v5916
  %vm6204 = vcmp.eq.f32.partialorder %v5776, %v5916
  %vm6205 = vcmp.eq.f32.partialorder %v5773, %v5920
  %vm6206 = vcmp.eq.f32.partialorder %v5774, %v5920
  %vm6207 = vcmp.eq.f32.partialorder %v5775, %v5920
  %vm6208 = vcmp.eq.f32.partialorder %v5776, %v5920
  %vm6209 = vmand %vm6081, %vm1288
  %vm6210 = vmand %vm6082, %vm1289
  %vm6211 = vmand %vm6083, %vm1290
  %vm6212 = vmand %vm6084, %vm1291
  %vm6213 = vmand %vm6085, %vm1292
  %vm6214 = vmand %vm6086, %vm1293
  %vm6215 = vmand %vm6087, %vm1294
  %vm6216 = vmand %vm6088, %vm1295
  %vm6217 = vmand %vm6089, %vm1296
  %vm6218 = vmand %vm6090, %vm1297
  %vm6219 = vmand %vm6091, %vm1298
  %vm6220 = vmand %vm6092, %vm1299
  %vm6221 = vmand %vm6093, %vm1300
  %vm6222 = vmand %vm6094, %vm1301
  %vm6223 = vmand %vm6095, %vm1302
  %vm6224 = vmand %vm6096, %vm1303
  %vm6225 = vmand %vm6097, %vm1304
  %vm6226 = vmand %vm6098, %vm1305
  %vm6227 = vmand %vm6099, %vm1306
  %vm6228 = vmand %vm6100, %vm1307
  %vm6229 = vmand %vm6101, %vm1308
  %vm6230 = vmand %vm6102, %vm1309
  %vm6231 = vmand %vm6103, %vm1310
  %vm6232 = vmand %vm6104, %vm1311
  %vm6233 = vmand %vm6105, %vm1312
  %vm6234 = vmand %vm6106, %vm1313
  %vm6235 = vmand %vm6107, %vm1314
  %vm6236 = vmand %vm6108, %vm1315
  %vm6237 = vmand %vm6109, %vm1316
  %vm6238 = vmand %vm6110, %vm1317
  %vm6239 = vmand %vm6111, %vm1318
  %vm6240 = vmand %vm6112, %vm1319
  %vm6241 = vmand %vm6113, %vm1320
  %vm6242 = vmand %vm6114, %vm1321
  %vm6243 = vmand %vm6115, %vm1322
  %vm6244 = vmand %vm6116, %vm1323
  %vm6245 = vmand %vm6117, %vm1324
  %vm6246 = vmand %vm6118, %vm1325
  %vm6247 = vmand %vm6119, %vm1326
  %vm6248 = vmand %vm6120, %vm1327
  %vm6249 = vmand %vm6121, %vm1328
  %vm6250 = vmand %vm6122, %vm1329
  %vm6251 = vmand %vm6123, %vm1330
  %vm6252 = vmand %vm6124, %vm1331
  %vm6253 = vmand %vm6125, %vm1332
  %vm6254 = vmand %vm6126, %vm1333
  %vm6255 = vmand %vm6127, %vm1334
  %vm6256 = vmand %vm6128, %vm1335
  %vm6257 = vmand %vm6129, %vm1336
  %vm6258 = vmand %vm6130, %vm1337
  %vm6259 = vmand %vm6131, %vm1338
  %vm6260 = vmand %vm6132, %vm1339
  %vm6261 = vmand %vm6133, %vm1340
  %vm6262 = vmand %vm6134, %vm1341
  %vm6263 = vmand %vm6135, %vm1342
  %vm6264 = vmand %vm6136, %vm1343
  %vm6265 = vmand %vm6137, %vm1344
  %vm6266 = vmand %vm6138, %vm1345
  %vm6267 = vmand %vm6139, %vm1346
  %vm6268 = vmand %vm6140, %vm1347
  %vm6269 = vmand %vm6141, %vm1348
  %vm6270 = vmand %vm6142, %vm1349
  %vm6271 = vmand %vm6143, %vm1350
  %vm6272 = vmand %vm6144, %vm1351
  %vm6273 = vmand %vm6145, %vm1352
  %vm6274 = vmand %vm6146, %vm1353
  %vm6275 = vmand %vm6147, %vm1354
  %vm6276 = vmand %vm6148, %vm1355
  %vm6277 = vmand %vm6149, %vm1356
  %vm6278 = vmand %vm6150, %vm1357
  %vm6279 = vmand %vm6151, %vm1358
  %vm6280 = vmand %vm6152, %vm1359
  %vm6281 = vmand %vm6153, %vm1360
  %vm6282 = vmand %vm6154, %vm1361
  %vm6283 = vmand %vm6155, %vm1362
  %vm6284 = vmand %vm6156, %vm1363
  %vm6285 = vmand %vm6157, %vm1364
  %vm6286 = vmand %vm6158, %vm1365
  %vm6287 = vmand %vm6159, %vm1366
  %vm6288 = vmand %vm6160, %vm1367
  %vm6289 = vmand %vm6161, %vm1368
  %vm6290 = vmand %vm6162, %vm1369
  %vm6291 = vmand %vm6163, %vm1370
  %vm6292 = vmand %vm6164, %vm1371
  %vm6293 = vmand %vm6165, %vm1372
  %vm6294 = vmand %vm6166, %vm1373
  %vm6295 = vmand %vm6167, %vm1374
  %vm6296 = vmand %vm6168, %vm1375
  %vm6297 = vmand %vm6169, %vm1376
  %vm6298 = vmand %vm6170, %vm1377
  %vm6299 = vmand %vm6171, %vm1378
  %vm6300 = vmand %vm6172, %vm1379
  %vm6301 = vmand %vm6173, %vm1380
  %vm6302 = vmand %vm6174, %vm1381
  %vm6303 = vmand %vm6175, %vm1382
  %vm6304 = vmand %vm6176, %vm1383
  %vm6305 = vmand %vm6177, %vm1384
  %vm6306 = vmand %vm6178, %vm1385
  %vm6307 = vmand %vm6179, %vm1386
  %vm6308 = vmand %vm6180, %vm1387
  %vm6309 = vmand %vm6181, %vm1388
  %vm6310 = vmand %vm6182, %vm1389
  %vm6311 = vmand %vm6183, %vm1390
  %vm6312 = vmand %vm6184, %vm1391
  %vm6313 = vmand %vm6185, %vm1392
  %vm6314 = vmand %vm6186, %vm1393
  %vm6315 = vmand %vm6187, %vm1394
  %vm6316 = vmand %vm6188, %vm1395
  %vm6317 = vmand %vm6189, %vm1396
  %vm6318 = vmand %vm6190, %vm1397
  %vm6319 = vmand %vm6191, %vm1398
  %vm6320 = vmand %vm6192, %vm1399
  %vm6321 = vmand %vm6193, %vm1400
  %vm6322 = vmand %vm6194, %vm1401
  %vm6323 = vmand %vm6195, %vm1402
  %vm6324 = vmand %vm6196, %vm1403
  %vm6325 = vmand %vm6197, %vm1404
  %vm6326 = vmand %vm6198, %vm1405
  %vm6327 = vmand %vm6199, %vm1406
  %vm6328 = vmand %vm6200, %vm1407
  %vm6329 = vmand %vm6201, %vm1408
  %vm6330 = vmand %vm6202, %vm1409
  %vm6331 = vmand %vm6203, %vm1410
  %vm6332 = vmand %vm6204, %vm1411
  %vm6333 = vmand %vm6205, %vm1412
  %vm6334 = vmand %vm6206, %vm1413
  %vm6335 = vmand %vm6207, %vm1414
  %vm6336 = vmand %vm6208, %vm1415
  %vm6337 = vmor %vm5953, %vm6209
  %vm6338 = vmor %vm5954, %vm6210
  %vm6339 = vmor %vm5955, %vm6211
  %vm6340 = vmor %vm5956, %vm6212
  %vm6341 = vmor %vm5957, %vm6213
  %vm6342 = vmor %vm5958, %vm6214
  %vm6343 = vmor %vm5959, %vm6215
  %vm6344 = vmor %vm5960, %vm6216
  %vm6345 = vmor %vm5961, %vm6217
  %vm6346 = vmor %vm5962, %vm6218
  %vm6347 = vmor %vm5963, %vm6219
  %vm6348 = vmor %vm5964, %vm6220
  %vm6349 = vmor %vm5965, %vm6221
  %vm6350 = vmor %vm5966, %vm6222
  %vm6351 = vmor %vm5967, %vm6223
  %vm6352 = vmor %vm5968, %vm6224
  %vm6353 = vmor %vm5969, %vm6225
  %vm6354 = vmor %vm5970, %vm6226
  %vm6355 = vmor %vm5971, %vm6227
  %vm6356 = vmor %vm5972, %vm6228
  %vm6357 = vmor %vm5973, %vm6229
  %vm6358 = vmor %vm5974, %vm6230
  %vm6359 = vmor %vm5975, %vm6231
  %vm6360 = vmor %vm5976, %vm6232
  %vm6361 = vmor %vm5977, %vm6233
  %vm6362 = vmor %vm5978, %vm6234
  %vm6363 = vmor %vm5979, %vm6235
  %vm6364 = vmor %vm5980, %vm6236
  %vm6365 = vmor %vm5981, %vm6237
  %vm6366 = vmor %vm5982, %vm6238
  %vm6367 = vmor %vm5983, %vm6239
  %vm6368 = vmor %vm5984, %vm6240
  %vm6369 = vmor %vm5985, %vm6241
  %vm6370 = vmor %vm5986, %vm6242
  %vm6371 = vmor %vm5987, %vm6243
  %vm6372 = vmor %vm5988, %vm6244
  %vm6373 = vmor %vm5989, %vm6245
  %vm6374 = vmor %vm5990, %vm6246
  %vm6375 = vmor %vm5991, %vm6247
  %vm6376 = vmor %vm5992, %vm6248
  %vm6377 = vmor %vm5993, %vm6249
  %vm6378 = vmor %vm5994, %vm6250
  %vm6379 = vmor %vm5995, %vm6251
  %vm6380 = vmor %vm5996, %vm6252
  %vm6381 = vmor %vm5997, %vm6253
  %vm6382 = vmor %vm5998, %vm6254
  %vm6383 = vmor %vm5999, %vm6255
  %vm6384 = vmor %vm6000, %vm6256
  %vm6385 = vmor %vm6001, %vm6257
  %vm6386 = vmor %vm6002, %vm6258
  %vm6387 = vmor %vm6003, %vm6259
  %vm6388 = vmor %vm6004, %vm6260
  %vm6389 = vmor %vm6005, %vm6261
  %vm6390 = vmor %vm6006, %vm6262
  %vm6391 = vmor %vm6007, %vm6263
  %vm6392 = vmor %vm6008, %vm6264
  %vm6393 = vmor %vm6009, %vm6265
  %vm6394 = vmor %vm6010, %vm6266
  %vm6395 = vmor %vm6011, %vm6267
  %vm6396 = vmor %vm6012, %vm6268
  %vm6397 = vmor %vm6013, %vm6269
  %vm6398 = vmor %vm6014, %vm6270
  %vm6399 = vmor %vm6015, %vm6271
  %vm6400 = vmor %vm6016, %vm6272
  %vm6401 = vmor %vm6017, %vm6273
  %vm6402 = vmor %vm6018, %vm6274
  %vm6403 = vmor %vm6019, %vm6275
  %vm6404 = vmor %vm6020, %vm6276
  %vm6405 = vmor %vm6021, %vm6277
  %vm6406 = vmor %vm6022, %vm6278
  %vm6407 = vmor %vm6023, %vm6279
  %vm6408 = vmor %vm6024, %vm6280
  %vm6409 = vmor %vm6025, %vm6281
  %vm6410 = vmor %vm6026, %vm6282
  %vm6411 = vmor %vm6027, %vm6283
  %vm6412 = vmor %vm6028, %vm6284
  %vm6413 = vmor %vm6029, %vm6285
  %vm6414 = vmor %vm6030, %vm6286
  %vm6415 = vmor %vm6031, %vm6287
  %vm6416 = vmor %vm6032, %vm6288
  %vm6417 = vmor %vm6033, %vm6289
  %vm6418 = vmor %vm6034, %vm6290
  %vm6419 = vmor %vm6035, %vm6291
  %vm6420 = vmor %vm6036, %vm6292
  %vm6421 = vmor %vm6037, %vm6293
  %vm6422 = vmor %vm6038, %vm6294
  %vm6423 = vmor %vm6039, %vm6295
  %vm6424 = vmor %vm6040, %vm6296
  %vm6425 = vmor %vm6041, %vm6297
  %vm6426 = vmor %vm6042, %vm6298
  %vm6427 = vmor %vm6043, %vm6299
  %vm6428 = vmor %vm6044, %vm6300
  %vm6429 = vmor %vm6045, %vm6301
  %vm6430 = vmor %vm6046, %vm6302
  %vm6431 = vmor %vm6047, %vm6303
  %vm6432 = vmor %vm6048, %vm6304
  %vm6433 = vmor %vm6049, %vm6305
  %vm6434 = vmor %vm6050, %vm6306
  %vm6435 = vmor %vm6051, %vm6307
  %vm6436 = vmor %vm6052, %vm6308
  %vm6437 = vmor %vm6053, %vm6309
  %vm6438 = vmor %vm6054, %vm6310
  %vm6439 = vmor %vm6055, %vm6311
  %vm6440 = vmor %vm6056, %vm6312
  %vm6441 = vmor %vm6057, %vm6313
  %vm6442 = vmor %vm6058, %vm6314
  %vm6443 = vmor %vm6059, %vm6315
  %vm6444 = vmor %vm6060, %vm6316
  %vm6445 = vmor %vm6061, %vm6317
  %vm6446 = vmor %vm6062, %vm6318
  %vm6447 = vmor %vm6063, %vm6319
  %vm6448 = vmor %vm6064, %vm6320
  %vm6449 = vmor %vm6065, %vm6321
  %vm6450 = vmor %vm6066, %vm6322
  %vm6451 = vmor %vm6067, %vm6323
  %vm6452 = vmor %vm6068, %vm6324
  %vm6453 = vmor %vm6069, %vm6325
  %vm6454 = vmor %vm6070, %vm6326
  %vm6455 = vmor %vm6071, %vm6327
  %vm6456 = vmor %vm6072, %vm6328
  %vm6457 = vmor %vm6073, %vm6329
  %vm6458 = vmor %vm6074, %vm6330
  %vm6459 = vmor %vm6075, %vm6331
  %vm6460 = vmor %vm6076, %vm6332
  %vm6461 = vmor %vm6077, %vm6333
  %vm6462 = vmor %vm6078, %vm6334
  %vm6463 = vmor %vm6079, %vm6335
  %vm6464 = vmor %vm6080, %vm6336
  %v6465 = vsel %vm6337, 1, 0
  %v6466 = vsel %vm6338, 1, 0
  %v6467 = vsel %vm6339, 1, 0
  %v6468 = vsel %vm6340, 1, 0
  %v6469 = vsel %vm6341, 1, 0
  %v6470 = vsel %vm6342, 1, 0
  %v6471 = vsel %vm6343, 1, 0
  %v6472 = vsel %vm6344, 1, 0
  %v6473 = vsel %vm6345, 1, 0
  %v6474 = vsel %vm6346, 1, 0
  %v6475 = vsel %vm6347, 1, 0
  %v6476 = vsel %vm6348, 1, 0
  %v6477 = vsel %vm6349, 1, 0
  %v6478 = vsel %vm6350, 1, 0
  %v6479 = vsel %vm6351, 1, 0
  %v6480 = vsel %vm6352, 1, 0
  %v6481 = vsel %vm6353, 1, 0
  %v6482 = vsel %vm6354, 1, 0
  %v6483 = vsel %vm6355, 1, 0
  %v6484 = vsel %vm6356, 1, 0
  %v6485 = vsel %vm6357, 1, 0
  %v6486 = vsel %vm6358, 1, 0
  %v6487 = vsel %vm6359, 1, 0
  %v6488 = vsel %vm6360, 1, 0
  %v6489 = vsel %vm6361, 1, 0
  %v6490 = vsel %vm6362, 1, 0
  %v6491 = vsel %vm6363, 1, 0
  %v6492 = vsel %vm6364, 1, 0
  %v6493 = vsel %vm6365, 1, 0
  %v6494 = vsel %vm6366, 1, 0
  %v6495 = vsel %vm6367, 1, 0
  %v6496 = vsel %vm6368, 1, 0
  %v6497 = vsel %vm6369, 1, 0
  %v6498 = vsel %vm6370, 1, 0
  %v6499 = vsel %vm6371, 1, 0
  %v6500 = vsel %vm6372, 1, 0
  %v6501 = vsel %vm6373, 1, 0
  %v6502 = vsel %vm6374, 1, 0
  %v6503 = vsel %vm6375, 1, 0
  %v6504 = vsel %vm6376, 1, 0
  %v6505 = vsel %vm6377, 1, 0
  %v6506 = vsel %vm6378, 1, 0
  %v6507 = vsel %vm6379, 1, 0
  %v6508 = vsel %vm6380, 1, 0
  %v6509 = vsel %vm6381, 1, 0
  %v6510 = vsel %vm6382, 1, 0
  %v6511 = vsel %vm6383, 1, 0
  %v6512 = vsel %vm6384, 1, 0
  %v6513 = vsel %vm6385, 1, 0
  %v6514 = vsel %vm6386, 1, 0
  %v6515 = vsel %vm6387, 1, 0
  %v6516 = vsel %vm6388, 1, 0
  %v6517 = vsel %vm6389, 1, 0
  %v6518 = vsel %vm6390, 1, 0
  %v6519 = vsel %vm6391, 1, 0
  %v6520 = vsel %vm6392, 1, 0
  %v6521 = vsel %vm6393, 1, 0
  %v6522 = vsel %vm6394, 1, 0
  %v6523 = vsel %vm6395, 1, 0
  %v6524 = vsel %vm6396, 1, 0
  %v6525 = vsel %vm6397, 1, 0
  %v6526 = vsel %vm6398, 1, 0
  %v6527 = vsel %vm6399, 1, 0
  %v6528 = vsel %vm6400, 1, 0
  %v6529 = vsel %vm6401, 1, 0
  %v6530 = vsel %vm6402, 1, 0
  %v6531 = vsel %vm6403, 1, 0
  %v6532 = vsel %vm6404, 1, 0
  %v6533 = vsel %vm6405, 1, 0
  %v6534 = vsel %vm6406, 1, 0
  %v6535 = vsel %vm6407, 1, 0
  %v6536 = vsel %vm6408, 1, 0
  %v6537 = vsel %vm6409, 1, 0
  %v6538 = vsel %vm6410, 1, 0
  %v6539 = vsel %vm6411, 1, 0
  %v6540 = vsel %vm6412, 1, 0
  %v6541 = vsel %vm6413, 1, 0
  %v6542 = vsel %vm6414, 1, 0
  %v6543 = vsel %vm6415, 1, 0
  %v6544 = vsel %vm6416, 1, 0
  %v6545 = vsel %vm6417, 1, 0
  %v6546 = vsel %vm6418, 1, 0
  %v6547 = vsel %vm6419, 1, 0
  %v6548 = vsel %vm6420, 1, 0
  %v6549 = vsel %vm6421, 1, 0
  %v6550 = vsel %vm6422, 1, 0
  %v6551 = vsel %vm6423, 1, 0
  %v6552 = vsel %vm6424, 1, 0
  %v6553 = vsel %vm6425, 1, 0
  %v6554 = vsel %vm6426, 1, 0
  %v6555 = vsel %vm6427, 1, 0
  %v6556 = vsel %vm6428, 1, 0
  %v6557 = vsel %vm6429, 1, 0
  %v6558 = vsel %vm6430, 1, 0
  %v6559 = vsel %vm6431, 1, 0
  %v6560 = vsel %vm6432, 1, 0
  %v6561 = vsel %vm6433, 1, 0
  %v6562 = vsel %vm6434, 1, 0
  %v6563 = vsel %vm6435, 1, 0
  %v6564 = vsel %vm6436, 1, 0
  %v6565 = vsel %vm6437, 1, 0
  %v6566 = vsel %vm6438, 1, 0
  %v6567 = vsel %vm6439, 1, 0
  %v6568 = vsel %vm6440, 1, 0
  %v6569 = vsel %vm6441, 1, 0
  %v6570 = vsel %vm6442, 1, 0
  %v6571 = vsel %vm6443, 1, 0
  %v6572 = vsel %vm6444, 1, 0
  %v6573 = vsel %vm6445, 1, 0
  %v6574 = vsel %vm6446, 1, 0
  %v6575 = vsel %vm6447, 1, 0
  %v6576 = vsel %vm6448, 1, 0
  %v6577 = vsel %vm6449, 1, 0
  %v6578 = vsel %vm6450, 1, 0
  %v6579 = vsel %vm6451, 1, 0
  %v6580 = vsel %vm6452, 1, 0
  %v6581 = vsel %vm6453, 1, 0
  %v6582 = vsel %vm6454, 1, 0
  %v6583 = vsel %vm6455, 1, 0
  %v6584 = vsel %vm6456, 1, 0
  %v6585 = vsel %vm6457, 1, 0
  %v6586 = vsel %vm6458, 1, 0
  %v6587 = vsel %vm6459, 1, 0
  %v6588 = vsel %vm6460, 1, 0
  %v6589 = vsel %vm6461, 1, 0
  %v6590 = vsel %vm6462, 1, 0
  %v6591 = vsel %vm6463, 1, 0
  %v6592 = vsel %vm6464, 1, 0
  %6593 = vset.pattern.permute.xlu0 0
  %6594 = vperm.xlu0 %6593, %v6465
  %v6595 = vpop.permute.xlu0 %6594
  %6596 = vset.pattern.permute.xlu0 0
  %6597 = vperm.xlu0 %6596, %v6466
  %v6598 = vpop.permute.xlu0 %6597
  %6599 = vset.pattern.permute.xlu0 0
  %6600 = vperm.xlu0 %6599, %v6467
  %v6601 = vpop.permute.xlu0 %6600
  %6602 = vset.pattern.permute.xlu0 0
  %6603 = vperm.xlu0 %6602, %v6468
  %v6604 = vpop.permute.xlu0 %6603
  %6605 = vset.pattern.permute.xlu0 0
  %6606 = vperm.xlu0 %6605, %v6469
  %v6607 = vpop.permute.xlu0 %6606
  %6608 = vset.pattern.permute.xlu0 0
  %6609 = vperm.xlu0 %6608, %v6470
  %v6610 = vpop.permute.xlu0 %6609
  %6611 = vset.pattern.permute.xlu0 0
  %6612 = vperm.xlu0 %6611, %v6471
  %v6613 = vpop.permute.xlu0 %6612
  %6614 = vset.pattern.permute.xlu0 0
  %6615 = vperm.xlu0 %6614, %v6472
  %v6616 = vpop.permute.xlu0 %6615
  %6617 = vset.pattern.permute.xlu0 0
  %6618 = vperm.xlu0 %6617, %v6473
  %v6619 = vpop.permute.xlu0 %6618
  %6620 = vset.pattern.permute.xlu0 0
  %6621 = vperm.xlu0 %6620, %v6474
  %v6622 = vpop.permute.xlu0 %6621
  %6623 = vset.pattern.permute.xlu0 0
  %6624 = vperm.xlu0 %6623, %v6475
  %v6625 = vpop.permute.xlu0 %6624
  %6626 = vset.pattern.permute.xlu0 0
  %6627 = vperm.xlu0 %6626, %v6476
  %v6628 = vpop.permute.xlu0 %6627
  %6629 = vset.pattern.permute.xlu0 0
  %6630 = vperm.xlu0 %6629, %v6477
  %v6631 = vpop.permute.xlu0 %6630
  %6632 = vset.pattern.permute.xlu0 0
  %6633 = vperm.xlu0 %6632, %v6478
  %v6634 = vpop.permute.xlu0 %6633
  %6635 = vset.pattern.permute.xlu0 0
  %6636 = vperm.xlu0 %6635, %v6479
  %v6637 = vpop.permute.xlu0 %6636
  %6638 = vset.pattern.permute.xlu0 0
  %6639 = vperm.xlu0 %6638, %v6480
  %v6640 = vpop.permute.xlu0 %6639
  %6641 = vset.pattern.permute.xlu0 0
  %6642 = vperm.xlu0 %6641, %v6481
  %v6643 = vpop.permute.xlu0 %6642
  %6644 = vset.pattern.permute.xlu0 0
  %6645 = vperm.xlu0 %6644, %v6482
  %v6646 = vpop.permute.xlu0 %6645
  %6647 = vset.pattern.permute.xlu0 0
  %6648 = vperm.xlu0 %6647, %v6483
  %v6649 = vpop.permute.xlu0 %6648
  %6650 = vset.pattern.permute.xlu0 0
  %6651 = vperm.xlu0 %6650, %v6484
  %v6652 = vpop.permute.xlu0 %6651
  %6653 = vset.pattern.permute.xlu0 0
  %6654 = vperm.xlu0 %6653, %v6485
  %v6655 = vpop.permute.xlu0 %6654
  %6656 = vset.pattern.permute.xlu0 0
  %6657 = vperm.xlu0 %6656, %v6486
  %v6658 = vpop.permute.xlu0 %6657
  %6659 = vset.pattern.permute.xlu0 0
  %6660 = vperm.xlu0 %6659, %v6487
  %v6661 = vpop.permute.xlu0 %6660
  %6662 = vset.pattern.permute.xlu0 0
  %6663 = vperm.xlu0 %6662, %v6488
  %v6664 = vpop.permute.xlu0 %6663
  %6665 = vset.pattern.permute.xlu0 0
  %6666 = vperm.xlu0 %6665, %v6489
  %v6667 = vpop.permute.xlu0 %6666
  %6668 = vset.pattern.permute.xlu0 0
  %6669 = vperm.xlu0 %6668, %v6490
  %v6670 = vpop.permute.xlu0 %6669
  %6671 = vset.pattern.permute.xlu0 0
  %6672 = vperm.xlu0 %6671, %v6491
  %v6673 = vpop.permute.xlu0 %6672
  %6674 = vset.pattern.permute.xlu0 0
  %6675 = vperm.xlu0 %6674, %v6492
  %v6676 = vpop.permute.xlu0 %6675
  %6677 = vset.pattern.permute.xlu0 0
  %6678 = vperm.xlu0 %6677, %v6493
  %v6679 = vpop.permute.xlu0 %6678
  %6680 = vset.pattern.permute.xlu0 0
  %6681 = vperm.xlu0 %6680, %v6494
  %v6682 = vpop.permute.xlu0 %6681
  %6683 = vset.pattern.permute.xlu0 0
  %6684 = vperm.xlu0 %6683, %v6495
  %v6685 = vpop.permute.xlu0 %6684
  %6686 = vset.pattern.permute.xlu0 0
  %6687 = vperm.xlu0 %6686, %v6496
  %v6688 = vpop.permute.xlu0 %6687
  %6689 = vset.pattern.permute.xlu0 0
  %6690 = vperm.xlu0 %6689, %v6497
  %v6691 = vpop.permute.xlu0 %6690
  %6692 = vset.pattern.permute.xlu0 0
  %6693 = vperm.xlu0 %6692, %v6498
  %v6694 = vpop.permute.xlu0 %6693
  %6695 = vset.pattern.permute.xlu0 0
  %6696 = vperm.xlu0 %6695, %v6499
  %v6697 = vpop.permute.xlu0 %6696
  %6698 = vset.pattern.permute.xlu0 0
  %6699 = vperm.xlu0 %6698, %v6500
  %v6700 = vpop.permute.xlu0 %6699
  %6701 = vset.pattern.permute.xlu0 0
  %6702 = vperm.xlu0 %6701, %v6501
  %v6703 = vpop.permute.xlu0 %6702
  %6704 = vset.pattern.permute.xlu0 0
  %6705 = vperm.xlu0 %6704, %v6502
  %v6706 = vpop.permute.xlu0 %6705
  %6707 = vset.pattern.permute.xlu0 0
  %6708 = vperm.xlu0 %6707, %v6503
  %v6709 = vpop.permute.xlu0 %6708
  %6710 = vset.pattern.permute.xlu0 0
  %6711 = vperm.xlu0 %6710, %v6504
  %v6712 = vpop.permute.xlu0 %6711
  %6713 = vset.pattern.permute.xlu0 0
  %6714 = vperm.xlu0 %6713, %v6505
  %v6715 = vpop.permute.xlu0 %6714
  %6716 = vset.pattern.permute.xlu0 0
  %6717 = vperm.xlu0 %6716, %v6506
  %v6718 = vpop.permute.xlu0 %6717
  %6719 = vset.pattern.permute.xlu0 0
  %6720 = vperm.xlu0 %6719, %v6507
  %v6721 = vpop.permute.xlu0 %6720
  %6722 = vset.pattern.permute.xlu0 0
  %6723 = vperm.xlu0 %6722, %v6508
  %v6724 = vpop.permute.xlu0 %6723
  %6725 = vset.pattern.permute.xlu0 0
  %6726 = vperm.xlu0 %6725, %v6509
  %v6727 = vpop.permute.xlu0 %6726
  %6728 = vset.pattern.permute.xlu0 0
  %6729 = vperm.xlu0 %6728, %v6510
  %v6730 = vpop.permute.xlu0 %6729
  %6731 = vset.pattern.permute.xlu0 0
  %6732 = vperm.xlu0 %6731, %v6511
  %v6733 = vpop.permute.xlu0 %6732
  %6734 = vset.pattern.permute.xlu0 0
  %6735 = vperm.xlu0 %6734, %v6512
  %v6736 = vpop.permute.xlu0 %6735
  %6737 = vset.pattern.permute.xlu0 0
  %6738 = vperm.xlu0 %6737, %v6513
  %v6739 = vpop.permute.xlu0 %6738
  %6740 = vset.pattern.permute.xlu0 0
  %6741 = vperm.xlu0 %6740, %v6514
  %v6742 = vpop.permute.xlu0 %6741
  %6743 = vset.pattern.permute.xlu0 0
  %6744 = vperm.xlu0 %6743, %v6515
  %v6745 = vpop.permute.xlu0 %6744
  %6746 = vset.pattern.permute.xlu0 0
  %6747 = vperm.xlu0 %6746, %v6516
  %v6748 = vpop.permute.xlu0 %6747
  %6749 = vset.pattern.permute.xlu0 0
  %6750 = vperm.xlu0 %6749, %v6517
  %v6751 = vpop.permute.xlu0 %6750
  %6752 = vset.pattern.permute.xlu0 0
  %6753 = vperm.xlu0 %6752, %v6518
  %v6754 = vpop.permute.xlu0 %6753
  %6755 = vset.pattern.permute.xlu0 0
  %6756 = vperm.xlu0 %6755, %v6519
  %v6757 = vpop.permute.xlu0 %6756
  %6758 = vset.pattern.permute.xlu0 0
  %6759 = vperm.xlu0 %6758, %v6520
  %v6760 = vpop.permute.xlu0 %6759
  %6761 = vset.pattern.permute.xlu0 0
  %6762 = vperm.xlu0 %6761, %v6521
  %v6763 = vpop.permute.xlu0 %6762
  %6764 = vset.pattern.permute.xlu0 0
  %6765 = vperm.xlu0 %6764, %v6522
  %v6766 = vpop.permute.xlu0 %6765
  %6767 = vset.pattern.permute.xlu0 0
  %6768 = vperm.xlu0 %6767, %v6523
  %v6769 = vpop.permute.xlu0 %6768
  %6770 = vset.pattern.permute.xlu0 0
  %6771 = vperm.xlu0 %6770, %v6524
  %v6772 = vpop.permute.xlu0 %6771
  %6773 = vset.pattern.permute.xlu0 0
  %6774 = vperm.xlu0 %6773, %v6525
  %v6775 = vpop.permute.xlu0 %6774
  %6776 = vset.pattern.permute.xlu0 0
  %6777 = vperm.xlu0 %6776, %v6526
  %v6778 = vpop.permute.xlu0 %6777
  %6779 = vset.pattern.permute.xlu0 0
  %6780 = vperm.xlu0 %6779, %v6527
  %v6781 = vpop.permute.xlu0 %6780
  %6782 = vset.pattern.permute.xlu0 0
  %6783 = vperm.xlu0 %6782, %v6528
  %v6784 = vpop.permute.xlu0 %6783
  %6785 = vset.pattern.permute.xlu0 0
  %6786 = vperm.xlu0 %6785, %v6529
  %v6787 = vpop.permute.xlu0 %6786
  %6788 = vset.pattern.permute.xlu0 0
  %6789 = vperm.xlu0 %6788, %v6530
  %v6790 = vpop.permute.xlu0 %6789
  %6791 = vset.pattern.permute.xlu0 0
  %6792 = vperm.xlu0 %6791, %v6531
  %v6793 = vpop.permute.xlu0 %6792
  %6794 = vset.pattern.permute.xlu0 0
  %6795 = vperm.xlu0 %6794, %v6532
  %v6796 = vpop.permute.xlu0 %6795
  %6797 = vset.pattern.permute.xlu0 0
  %6798 = vperm.xlu0 %6797, %v6533
  %v6799 = vpop.permute.xlu0 %6798
  %6800 = vset.pattern.permute.xlu0 0
  %6801 = vperm.xlu0 %6800, %v6534
  %v6802 = vpop.permute.xlu0 %6801
  %6803 = vset.pattern.permute.xlu0 0
  %6804 = vperm.xlu0 %6803, %v6535
  %v6805 = vpop.permute.xlu0 %6804
  %6806 = vset.pattern.permute.xlu0 0
  %6807 = vperm.xlu0 %6806, %v6536
  %v6808 = vpop.permute.xlu0 %6807
  %6809 = vset.pattern.permute.xlu0 0
  %6810 = vperm.xlu0 %6809, %v6537
  %v6811 = vpop.permute.xlu0 %6810
  %6812 = vset.pattern.permute.xlu0 0
  %6813 = vperm.xlu0 %6812, %v6538
  %v6814 = vpop.permute.xlu0 %6813
  %6815 = vset.pattern.permute.xlu0 0
  %6816 = vperm.xlu0 %6815, %v6539
  %v6817 = vpop.permute.xlu0 %6816
  %6818 = vset.pattern.permute.xlu0 0
  %6819 = vperm.xlu0 %6818, %v6540
  %v6820 = vpop.permute.xlu0 %6819
  %6821 = vset.pattern.permute.xlu0 0
  %6822 = vperm.xlu0 %6821, %v6541
  %v6823 = vpop.permute.xlu0 %6822
  %6824 = vset.pattern.permute.xlu0 0
  %6825 = vperm.xlu0 %6824, %v6542
  %v6826 = vpop.permute.xlu0 %6825
  %6827 = vset.pattern.permute.xlu0 0
  %6828 = vperm.xlu0 %6827, %v6543
  %v6829 = vpop.permute.xlu0 %6828
  %6830 = vset.pattern.permute.xlu0 0
  %6831 = vperm.xlu0 %6830, %v6544
  %v6832 = vpop.permute.xlu0 %6831
  %6833 = vset.pattern.permute.xlu0 0
  %6834 = vperm.xlu0 %6833, %v6545
  %v6835 = vpop.permute.xlu0 %6834
  %6836 = vset.pattern.permute.xlu0 0
  %6837 = vperm.xlu0 %6836, %v6546
  %v6838 = vpop.permute.xlu0 %6837
  %6839 = vset.pattern.permute.xlu0 0
  %6840 = vperm.xlu0 %6839, %v6547
  %v6841 = vpop.permute.xlu0 %6840
  %6842 = vset.pattern.permute.xlu0 0
  %6843 = vperm.xlu0 %6842, %v6548
  %v6844 = vpop.permute.xlu0 %6843
  %6845 = vset.pattern.permute.xlu0 0
  %6846 = vperm.xlu0 %6845, %v6549
  %v6847 = vpop.permute.xlu0 %6846
  %6848 = vset.pattern.permute.xlu0 0
  %6849 = vperm.xlu0 %6848, %v6550
  %v6850 = vpop.permute.xlu0 %6849
  %6851 = vset.pattern.permute.xlu0 0
  %6852 = vperm.xlu0 %6851, %v6551
  %v6853 = vpop.permute.xlu0 %6852
  %6854 = vset.pattern.permute.xlu0 0
  %6855 = vperm.xlu0 %6854, %v6552
  %v6856 = vpop.permute.xlu0 %6855
  %6857 = vset.pattern.permute.xlu0 0
  %6858 = vperm.xlu0 %6857, %v6553
  %v6859 = vpop.permute.xlu0 %6858
  %6860 = vset.pattern.permute.xlu0 0
  %6861 = vperm.xlu0 %6860, %v6554
  %v6862 = vpop.permute.xlu0 %6861
  %6863 = vset.pattern.permute.xlu0 0
  %6864 = vperm.xlu0 %6863, %v6555
  %v6865 = vpop.permute.xlu0 %6864
  %6866 = vset.pattern.permute.xlu0 0
  %6867 = vperm.xlu0 %6866, %v6556
  %v6868 = vpop.permute.xlu0 %6867
  %6869 = vset.pattern.permute.xlu0 0
  %6870 = vperm.xlu0 %6869, %v6557
  %v6871 = vpop.permute.xlu0 %6870
  %6872 = vset.pattern.permute.xlu0 0
  %6873 = vperm.xlu0 %6872, %v6558
  %v6874 = vpop.permute.xlu0 %6873
  %6875 = vset.pattern.permute.xlu0 0
  %6876 = vperm.xlu0 %6875, %v6559
  %v6877 = vpop.permute.xlu0 %6876
  %6878 = vset.pattern.permute.xlu0 0
  %6879 = vperm.xlu0 %6878, %v6560
  %v6880 = vpop.permute.xlu0 %6879
  %6881 = vset.pattern.permute.xlu0 0
  %6882 = vperm.xlu0 %6881, %v6561
  %v6883 = vpop.permute.xlu0 %6882
  %6884 = vset.pattern.permute.xlu0 0
  %6885 = vperm.xlu0 %6884, %v6562
  %v6886 = vpop.permute.xlu0 %6885
  %6887 = vset.pattern.permute.xlu0 0
  %6888 = vperm.xlu0 %6887, %v6563
  %v6889 = vpop.permute.xlu0 %6888
  %6890 = vset.pattern.permute.xlu0 0
  %6891 = vperm.xlu0 %6890, %v6564
  %v6892 = vpop.permute.xlu0 %6891
  %6893 = vset.pattern.permute.xlu0 0
  %6894 = vperm.xlu0 %6893, %v6565
  %v6895 = vpop.permute.xlu0 %6894
  %6896 = vset.pattern.permute.xlu0 0
  %6897 = vperm.xlu0 %6896, %v6566
  %v6898 = vpop.permute.xlu0 %6897
  %6899 = vset.pattern.permute.xlu0 0
  %6900 = vperm.xlu0 %6899, %v6567
  %v6901 = vpop.permute.xlu0 %6900
  %6902 = vset.pattern.permute.xlu0 0
  %6903 = vperm.xlu0 %6902, %v6568
  %v6904 = vpop.permute.xlu0 %6903
  %6905 = vset.pattern.permute.xlu0 0
  %6906 = vperm.xlu0 %6905, %v6569
  %v6907 = vpop.permute.xlu0 %6906
  %6908 = vset.pattern.permute.xlu0 0
  %6909 = vperm.xlu0 %6908, %v6570
  %v6910 = vpop.permute.xlu0 %6909
  %6911 = vset.pattern.permute.xlu0 0
  %6912 = vperm.xlu0 %6911, %v6571
  %v6913 = vpop.permute.xlu0 %6912
  %6914 = vset.pattern.permute.xlu0 0
  %6915 = vperm.xlu0 %6914, %v6572
  %v6916 = vpop.permute.xlu0 %6915
  %6917 = vset.pattern.permute.xlu0 0
  %6918 = vperm.xlu0 %6917, %v6573
  %v6919 = vpop.permute.xlu0 %6918
  %6920 = vset.pattern.permute.xlu0 0
  %6921 = vperm.xlu0 %6920, %v6574
  %v6922 = vpop.permute.xlu0 %6921
  %6923 = vset.pattern.permute.xlu0 0
  %6924 = vperm.xlu0 %6923, %v6575
  %v6925 = vpop.permute.xlu0 %6924
  %6926 = vset.pattern.permute.xlu0 0
  %6927 = vperm.xlu0 %6926, %v6576
  %v6928 = vpop.permute.xlu0 %6927
  %6929 = vset.pattern.permute.xlu0 0
  %6930 = vperm.xlu0 %6929, %v6577
  %v6931 = vpop.permute.xlu0 %6930
  %6932 = vset.pattern.permute.xlu0 0
  %6933 = vperm.xlu0 %6932, %v6578
  %v6934 = vpop.permute.xlu0 %6933
  %6935 = vset.pattern.permute.xlu0 0
  %6936 = vperm.xlu0 %6935, %v6579
  %v6937 = vpop.permute.xlu0 %6936
  %6938 = vset.pattern.permute.xlu0 0
  %6939 = vperm.xlu0 %6938, %v6580
  %v6940 = vpop.permute.xlu0 %6939
  %6941 = vset.pattern.permute.xlu0 0
  %6942 = vperm.xlu0 %6941, %v6581
  %v6943 = vpop.permute.xlu0 %6942
  %6944 = vset.pattern.permute.xlu0 0
  %6945 = vperm.xlu0 %6944, %v6582
  %v6946 = vpop.permute.xlu0 %6945
  %6947 = vset.pattern.permute.xlu0 0
  %6948 = vperm.xlu0 %6947, %v6583
  %v6949 = vpop.permute.xlu0 %6948
  %6950 = vset.pattern.permute.xlu0 0
  %6951 = vperm.xlu0 %6950, %v6584
  %v6952 = vpop.permute.xlu0 %6951
  %6953 = vset.pattern.permute.xlu0 0
  %6954 = vperm.xlu0 %6953, %v6585
  %v6955 = vpop.permute.xlu0 %6954
  %6956 = vset.pattern.permute.xlu0 0
  %6957 = vperm.xlu0 %6956, %v6586
  %v6958 = vpop.permute.xlu0 %6957
  %6959 = vset.pattern.permute.xlu0 0
  %6960 = vperm.xlu0 %6959, %v6587
  %v6961 = vpop.permute.xlu0 %6960
  %6962 = vset.pattern.permute.xlu0 0
  %6963 = vperm.xlu0 %6962, %v6588
  %v6964 = vpop.permute.xlu0 %6963
  %6965 = vset.pattern.permute.xlu0 0
  %6966 = vperm.xlu0 %6965, %v6589
  %v6967 = vpop.permute.xlu0 %6966
  %6968 = vset.pattern.permute.xlu0 0
  %6969 = vperm.xlu0 %6968, %v6590
  %v6970 = vpop.permute.xlu0 %6969
  %6971 = vset.pattern.permute.xlu0 0
  %6972 = vperm.xlu0 %6971, %v6591
  %v6973 = vpop.permute.xlu0 %6972
  %6974 = vset.pattern.permute.xlu0 0
  %6975 = vperm.xlu0 %6974, %v6592
  %v6976 = vpop.permute.xlu0 %6975
  %v6977 = vlaneseq
  %v6978 = vshrl.u32 %v6977, 7
  %v6979 = vsub.s32 %v47, %v6978
  %v6980 = vrot.slane %v6595, %v6979
  %v6981 = vlaneseq
  %v6982 = vshrl.u32 %v6981, 7
  %v6983 = vsub.s32 %v2188, %v6982
  %v6984 = vrot.slane %v6598, %v6983
  %v6985 = vsel %vm2193, %v6984, %v6980
  %v6986 = vlaneseq
  %v6987 = vshrl.u32 %v6986, 7
  %v6988 = vsub.s32 %v2195, %v6987
  %v6989 = vrot.slane %v6601, %v6988
  %v6990 = vsel %vm2200, %v6989, %v6985
  %v6991 = vlaneseq
  %v6992 = vshrl.u32 %v6991, 7
  %v6993 = vsub.s32 %v2202, %v6992
  %v6994 = vrot.slane %v6604, %v6993
  %v6995 = vsel %vm2207, %v6994, %v6990
  %v6996 = vlaneseq
  %v6997 = vshrl.u32 %v6996, 7
  %v6998 = vsub.s32 %v47, %v6997
  %v6999 = vrot.slane %v6607, %v6998
  %v7000 = vlaneseq
  %v7001 = vshrl.u32 %v7000, 7
  %v7002 = vsub.s32 %v2188, %v7001
  %v7003 = vrot.slane %v6610, %v7002
  %v7004 = vsel %vm2193, %v7003, %v6999
  %v7005 = vlaneseq
  %v7006 = vshrl.u32 %v7005, 7
  %v7007 = vsub.s32 %v2195, %v7006
  %v7008 = vrot.slane %v6613, %v7007
  %v7009 = vsel %vm2200, %v7008, %v7004
  %v7010 = vlaneseq
  %v7011 = vshrl.u32 %v7010, 7
  %v7012 = vsub.s32 %v2202, %v7011
  %v7013 = vrot.slane %v6616, %v7012
  %v7014 = vsel %vm2207, %v7013, %v7009
  %v7015 = vlaneseq
  %v7016 = vshrl.u32 %v7015, 7
  %v7017 = vsub.s32 %v47, %v7016
  %v7018 = vrot.slane %v6619, %v7017
  %v7019 = vlaneseq
  %v7020 = vshrl.u32 %v7019, 7
  %v7021 = vsub.s32 %v2188, %v7020
  %v7022 = vrot.slane %v6622, %v7021
  %v7023 = vsel %vm2193, %v7022, %v7018
  %v7024 = vlaneseq
  %v7025 = vshrl.u32 %v7024, 7
  %v7026 = vsub.s32 %v2195, %v7025
  %v7027 = vrot.slane %v6625, %v7026
  %v7028 = vsel %vm2200, %v7027, %v7023
  %v7029 = vlaneseq
  %v7030 = vshrl.u32 %v7029, 7
  %v7031 = vsub.s32 %v2202, %v7030
  %v7032 = vrot.slane %v6628, %v7031
  %v7033 = vsel %vm2207, %v7032, %v7028
  %v7034 = vlaneseq
  %v7035 = vshrl.u32 %v7034, 7
  %v7036 = vsub.s32 %v47, %v7035
  %v7037 = vrot.slane %v6631, %v7036
  %v7038 = vlaneseq
  %v7039 = vshrl.u32 %v7038, 7
  %v7040 = vsub.s32 %v2188, %v7039
  %v7041 = vrot.slane %v6634, %v7040
  %v7042 = vsel %vm2193, %v7041, %v7037
  %v7043 = vlaneseq
  %v7044 = vshrl.u32 %v7043, 7
  %v7045 = vsub.s32 %v2195, %v7044
  %v7046 = vrot.slane %v6637, %v7045
  %v7047 = vsel %vm2200, %v7046, %v7042
  %v7048 = vlaneseq
  %v7049 = vshrl.u32 %v7048, 7
  %v7050 = vsub.s32 %v2202, %v7049
  %v7051 = vrot.slane %v6640, %v7050
  %v7052 = vsel %vm2207, %v7051, %v7047
  %v7053 = vlaneseq
  %v7054 = vshrl.u32 %v7053, 7
  %v7055 = vsub.s32 %v47, %v7054
  %v7056 = vrot.slane %v6643, %v7055
  %v7057 = vlaneseq
  %v7058 = vshrl.u32 %v7057, 7
  %v7059 = vsub.s32 %v2188, %v7058
  %v7060 = vrot.slane %v6646, %v7059
  %v7061 = vsel %vm2193, %v7060, %v7056
  %v7062 = vlaneseq
  %v7063 = vshrl.u32 %v7062, 7
  %v7064 = vsub.s32 %v2195, %v7063
  %v7065 = vrot.slane %v6649, %v7064
  %v7066 = vsel %vm2200, %v7065, %v7061
  %v7067 = vlaneseq
  %v7068 = vshrl.u32 %v7067, 7
  %v7069 = vsub.s32 %v2202, %v7068
  %v7070 = vrot.slane %v6652, %v7069
  %v7071 = vsel %vm2207, %v7070, %v7066
  %v7072 = vlaneseq
  %v7073 = vshrl.u32 %v7072, 7
  %v7074 = vsub.s32 %v47, %v7073
  %v7075 = vrot.slane %v6655, %v7074
  %v7076 = vlaneseq
  %v7077 = vshrl.u32 %v7076, 7
  %v7078 = vsub.s32 %v2188, %v7077
  %v7079 = vrot.slane %v6658, %v7078
  %v7080 = vsel %vm2193, %v7079, %v7075
  %v7081 = vlaneseq
  %v7082 = vshrl.u32 %v7081, 7
  %v7083 = vsub.s32 %v2195, %v7082
  %v7084 = vrot.slane %v6661, %v7083
  %v7085 = vsel %vm2200, %v7084, %v7080
  %v7086 = vlaneseq
  %v7087 = vshrl.u32 %v7086, 7
  %v7088 = vsub.s32 %v2202, %v7087
  %v7089 = vrot.slane %v6664, %v7088
  %v7090 = vsel %vm2207, %v7089, %v7085
  %v7091 = vlaneseq
  %v7092 = vshrl.u32 %v7091, 7
  %v7093 = vsub.s32 %v47, %v7092
  %v7094 = vrot.slane %v6667, %v7093
  %v7095 = vlaneseq
  %v7096 = vshrl.u32 %v7095, 7
  %v7097 = vsub.s32 %v2188, %v7096
  %v7098 = vrot.slane %v6670, %v7097
  %v7099 = vsel %vm2193, %v7098, %v7094
  %v7100 = vlaneseq
  %v7101 = vshrl.u32 %v7100, 7
  %v7102 = vsub.s32 %v2195, %v7101
  %v7103 = vrot.slane %v6673, %v7102
  %v7104 = vsel %vm2200, %v7103, %v7099
  %v7105 = vlaneseq
  %v7106 = vshrl.u32 %v7105, 7
  %v7107 = vsub.s32 %v2202, %v7106
  %v7108 = vrot.slane %v6676, %v7107
  %v7109 = vsel %vm2207, %v7108, %v7104
  %v7110 = vlaneseq
  %v7111 = vshrl.u32 %v7110, 7
  %v7112 = vsub.s32 %v47, %v7111
  %v7113 = vrot.slane %v6679, %v7112
  %v7114 = vlaneseq
  %v7115 = vshrl.u32 %v7114, 7
  %v7116 = vsub.s32 %v2188, %v7115
  %v7117 = vrot.slane %v6682, %v7116
  %v7118 = vsel %vm2193, %v7117, %v7113
  %v7119 = vlaneseq
  %v7120 = vshrl.u32 %v7119, 7
  %v7121 = vsub.s32 %v2195, %v7120
  %v7122 = vrot.slane %v6685, %v7121
  %v7123 = vsel %vm2200, %v7122, %v7118
  %v7124 = vlaneseq
  %v7125 = vshrl.u32 %v7124, 7
  %v7126 = vsub.s32 %v2202, %v7125
  %v7127 = vrot.slane %v6688, %v7126
  %v7128 = vsel %vm2207, %v7127, %v7123
  %v7129 = vlaneseq
  %v7130 = vshrl.u32 %v7129, 7
  %v7131 = vsub.s32 %v47, %v7130
  %v7132 = vrot.slane %v6691, %v7131
  %v7133 = vlaneseq
  %v7134 = vshrl.u32 %v7133, 7
  %v7135 = vsub.s32 %v2188, %v7134
  %v7136 = vrot.slane %v6694, %v7135
  %v7137 = vsel %vm2193, %v7136, %v7132
  %v7138 = vlaneseq
  %v7139 = vshrl.u32 %v7138, 7
  %v7140 = vsub.s32 %v2195, %v7139
  %v7141 = vrot.slane %v6697, %v7140
  %v7142 = vsel %vm2200, %v7141, %v7137
  %v7143 = vlaneseq
  %v7144 = vshrl.u32 %v7143, 7
  %v7145 = vsub.s32 %v2202, %v7144
  %v7146 = vrot.slane %v6700, %v7145
  %v7147 = vsel %vm2207, %v7146, %v7142
  %v7148 = vlaneseq
  %v7149 = vshrl.u32 %v7148, 7
  %v7150 = vsub.s32 %v47, %v7149
  %v7151 = vrot.slane %v6703, %v7150
  %v7152 = vlaneseq
  %v7153 = vshrl.u32 %v7152, 7
  %v7154 = vsub.s32 %v2188, %v7153
  %v7155 = vrot.slane %v6706, %v7154
  %v7156 = vsel %vm2193, %v7155, %v7151
  %v7157 = vlaneseq
  %v7158 = vshrl.u32 %v7157, 7
  %v7159 = vsub.s32 %v2195, %v7158
  %v7160 = vrot.slane %v6709, %v7159
  %v7161 = vsel %vm2200, %v7160, %v7156
  %v7162 = vlaneseq
  %v7163 = vshrl.u32 %v7162, 7
  %v7164 = vsub.s32 %v2202, %v7163
  %v7165 = vrot.slane %v6712, %v7164
  %v7166 = vsel %vm2207, %v7165, %v7161
  %v7167 = vlaneseq
  %v7168 = vshrl.u32 %v7167, 7
  %v7169 = vsub.s32 %v47, %v7168
  %v7170 = vrot.slane %v6715, %v7169
  %v7171 = vlaneseq
  %v7172 = vshrl.u32 %v7171, 7
  %v7173 = vsub.s32 %v2188, %v7172
  %v7174 = vrot.slane %v6718, %v7173
  %v7175 = vsel %vm2193, %v7174, %v7170
  %v7176 = vlaneseq
  %v7177 = vshrl.u32 %v7176, 7
  %v7178 = vsub.s32 %v2195, %v7177
  %v7179 = vrot.slane %v6721, %v7178
  %v7180 = vsel %vm2200, %v7179, %v7175
  %v7181 = vlaneseq
  %v7182 = vshrl.u32 %v7181, 7
  %v7183 = vsub.s32 %v2202, %v7182
  %v7184 = vrot.slane %v6724, %v7183
  %v7185 = vsel %vm2207, %v7184, %v7180
  %v7186 = vlaneseq
  %v7187 = vshrl.u32 %v7186, 7
  %v7188 = vsub.s32 %v47, %v7187
  %v7189 = vrot.slane %v6727, %v7188
  %v7190 = vlaneseq
  %v7191 = vshrl.u32 %v7190, 7
  %v7192 = vsub.s32 %v2188, %v7191
  %v7193 = vrot.slane %v6730, %v7192
  %v7194 = vsel %vm2193, %v7193, %v7189
  %v7195 = vlaneseq
  %v7196 = vshrl.u32 %v7195, 7
  %v7197 = vsub.s32 %v2195, %v7196
  %v7198 = vrot.slane %v6733, %v7197
  %v7199 = vsel %vm2200, %v7198, %v7194
  %v7200 = vlaneseq
  %v7201 = vshrl.u32 %v7200, 7
  %v7202 = vsub.s32 %v2202, %v7201
  %v7203 = vrot.slane %v6736, %v7202
  %v7204 = vsel %vm2207, %v7203, %v7199
  %v7205 = vlaneseq
  %v7206 = vshrl.u32 %v7205, 7
  %v7207 = vsub.s32 %v47, %v7206
  %v7208 = vrot.slane %v6739, %v7207
  %v7209 = vlaneseq
  %v7210 = vshrl.u32 %v7209, 7
  %v7211 = vsub.s32 %v2188, %v7210
  %v7212 = vrot.slane %v6742, %v7211
  %v7213 = vsel %vm2193, %v7212, %v7208
  %v7214 = vlaneseq
  %v7215 = vshrl.u32 %v7214, 7
  %v7216 = vsub.s32 %v2195, %v7215
  %v7217 = vrot.slane %v6745, %v7216
  %v7218 = vsel %vm2200, %v7217, %v7213
  %v7219 = vlaneseq
  %v7220 = vshrl.u32 %v7219, 7
  %v7221 = vsub.s32 %v2202, %v7220
  %v7222 = vrot.slane %v6748, %v7221
  %v7223 = vsel %vm2207, %v7222, %v7218
  %v7224 = vlaneseq
  %v7225 = vshrl.u32 %v7224, 7
  %v7226 = vsub.s32 %v47, %v7225
  %v7227 = vrot.slane %v6751, %v7226
  %v7228 = vlaneseq
  %v7229 = vshrl.u32 %v7228, 7
  %v7230 = vsub.s32 %v2188, %v7229
  %v7231 = vrot.slane %v6754, %v7230
  %v7232 = vsel %vm2193, %v7231, %v7227
  %v7233 = vlaneseq
  %v7234 = vshrl.u32 %v7233, 7
  %v7235 = vsub.s32 %v2195, %v7234
  %v7236 = vrot.slane %v6757, %v7235
  %v7237 = vsel %vm2200, %v7236, %v7232
  %v7238 = vlaneseq
  %v7239 = vshrl.u32 %v7238, 7
  %v7240 = vsub.s32 %v2202, %v7239
  %v7241 = vrot.slane %v6760, %v7240
  %v7242 = vsel %vm2207, %v7241, %v7237
  %v7243 = vlaneseq
  %v7244 = vshrl.u32 %v7243, 7
  %v7245 = vsub.s32 %v47, %v7244
  %v7246 = vrot.slane %v6763, %v7245
  %v7247 = vlaneseq
  %v7248 = vshrl.u32 %v7247, 7
  %v7249 = vsub.s32 %v2188, %v7248
  %v7250 = vrot.slane %v6766, %v7249
  %v7251 = vsel %vm2193, %v7250, %v7246
  %v7252 = vlaneseq
  %v7253 = vshrl.u32 %v7252, 7
  %v7254 = vsub.s32 %v2195, %v7253
  %v7255 = vrot.slane %v6769, %v7254
  %v7256 = vsel %vm2200, %v7255, %v7251
  %v7257 = vlaneseq
  %v7258 = vshrl.u32 %v7257, 7
  %v7259 = vsub.s32 %v2202, %v7258
  %v7260 = vrot.slane %v6772, %v7259
  %v7261 = vsel %vm2207, %v7260, %v7256
  %v7262 = vlaneseq
  %v7263 = vshrl.u32 %v7262, 7
  %v7264 = vsub.s32 %v47, %v7263
  %v7265 = vrot.slane %v6775, %v7264
  %v7266 = vlaneseq
  %v7267 = vshrl.u32 %v7266, 7
  %v7268 = vsub.s32 %v2188, %v7267
  %v7269 = vrot.slane %v6778, %v7268
  %v7270 = vsel %vm2193, %v7269, %v7265
  %v7271 = vlaneseq
  %v7272 = vshrl.u32 %v7271, 7
  %v7273 = vsub.s32 %v2195, %v7272
  %v7274 = vrot.slane %v6781, %v7273
  %v7275 = vsel %vm2200, %v7274, %v7270
  %v7276 = vlaneseq
  %v7277 = vshrl.u32 %v7276, 7
  %v7278 = vsub.s32 %v2202, %v7277
  %v7279 = vrot.slane %v6784, %v7278
  %v7280 = vsel %vm2207, %v7279, %v7275
  %v7281 = vlaneseq
  %v7282 = vshrl.u32 %v7281, 7
  %v7283 = vsub.s32 %v47, %v7282
  %v7284 = vrot.slane %v6787, %v7283
  %v7285 = vlaneseq
  %v7286 = vshrl.u32 %v7285, 7
  %v7287 = vsub.s32 %v2188, %v7286
  %v7288 = vrot.slane %v6790, %v7287
  %v7289 = vsel %vm2193, %v7288, %v7284
  %v7290 = vlaneseq
  %v7291 = vshrl.u32 %v7290, 7
  %v7292 = vsub.s32 %v2195, %v7291
  %v7293 = vrot.slane %v6793, %v7292
  %v7294 = vsel %vm2200, %v7293, %v7289
  %v7295 = vlaneseq
  %v7296 = vshrl.u32 %v7295, 7
  %v7297 = vsub.s32 %v2202, %v7296
  %v7298 = vrot.slane %v6796, %v7297
  %v7299 = vsel %vm2207, %v7298, %v7294
  %v7300 = vlaneseq
  %v7301 = vshrl.u32 %v7300, 7
  %v7302 = vsub.s32 %v47, %v7301
  %v7303 = vrot.slane %v6799, %v7302
  %v7304 = vlaneseq
  %v7305 = vshrl.u32 %v7304, 7
  %v7306 = vsub.s32 %v2188, %v7305
  %v7307 = vrot.slane %v6802, %v7306
  %v7308 = vsel %vm2193, %v7307, %v7303
  %v7309 = vlaneseq
  %v7310 = vshrl.u32 %v7309, 7
  %v7311 = vsub.s32 %v2195, %v7310
  %v7312 = vrot.slane %v6805, %v7311
  %v7313 = vsel %vm2200, %v7312, %v7308
  %v7314 = vlaneseq
  %v7315 = vshrl.u32 %v7314, 7
  %v7316 = vsub.s32 %v2202, %v7315
  %v7317 = vrot.slane %v6808, %v7316
  %v7318 = vsel %vm2207, %v7317, %v7313
  %v7319 = vlaneseq
  %v7320 = vshrl.u32 %v7319, 7
  %v7321 = vsub.s32 %v47, %v7320
  %v7322 = vrot.slane %v6811, %v7321
  %v7323 = vlaneseq
  %v7324 = vshrl.u32 %v7323, 7
  %v7325 = vsub.s32 %v2188, %v7324
  %v7326 = vrot.slane %v6814, %v7325
  %v7327 = vsel %vm2193, %v7326, %v7322
  %v7328 = vlaneseq
  %v7329 = vshrl.u32 %v7328, 7
  %v7330 = vsub.s32 %v2195, %v7329
  %v7331 = vrot.slane %v6817, %v7330
  %v7332 = vsel %vm2200, %v7331, %v7327
  %v7333 = vlaneseq
  %v7334 = vshrl.u32 %v7333, 7
  %v7335 = vsub.s32 %v2202, %v7334
  %v7336 = vrot.slane %v6820, %v7335
  %v7337 = vsel %vm2207, %v7336, %v7332
  %v7338 = vlaneseq
  %v7339 = vshrl.u32 %v7338, 7
  %v7340 = vsub.s32 %v47, %v7339
  %v7341 = vrot.slane %v6823, %v7340
  %v7342 = vlaneseq
  %v7343 = vshrl.u32 %v7342, 7
  %v7344 = vsub.s32 %v2188, %v7343
  %v7345 = vrot.slane %v6826, %v7344
  %v7346 = vsel %vm2193, %v7345, %v7341
  %v7347 = vlaneseq
  %v7348 = vshrl.u32 %v7347, 7
  %v7349 = vsub.s32 %v2195, %v7348
  %v7350 = vrot.slane %v6829, %v7349
  %v7351 = vsel %vm2200, %v7350, %v7346
  %v7352 = vlaneseq
  %v7353 = vshrl.u32 %v7352, 7
  %v7354 = vsub.s32 %v2202, %v7353
  %v7355 = vrot.slane %v6832, %v7354
  %v7356 = vsel %vm2207, %v7355, %v7351
  %v7357 = vlaneseq
  %v7358 = vshrl.u32 %v7357, 7
  %v7359 = vsub.s32 %v47, %v7358
  %v7360 = vrot.slane %v6835, %v7359
  %v7361 = vlaneseq
  %v7362 = vshrl.u32 %v7361, 7
  %v7363 = vsub.s32 %v2188, %v7362
  %v7364 = vrot.slane %v6838, %v7363
  %v7365 = vsel %vm2193, %v7364, %v7360
  %v7366 = vlaneseq
  %v7367 = vshrl.u32 %v7366, 7
  %v7368 = vsub.s32 %v2195, %v7367
  %v7369 = vrot.slane %v6841, %v7368
  %v7370 = vsel %vm2200, %v7369, %v7365
  %v7371 = vlaneseq
  %v7372 = vshrl.u32 %v7371, 7
  %v7373 = vsub.s32 %v2202, %v7372
  %v7374 = vrot.slane %v6844, %v7373
  %v7375 = vsel %vm2207, %v7374, %v7370
  %v7376 = vlaneseq
  %v7377 = vshrl.u32 %v7376, 7
  %v7378 = vsub.s32 %v47, %v7377
  %v7379 = vrot.slane %v6847, %v7378
  %v7380 = vlaneseq
  %v7381 = vshrl.u32 %v7380, 7
  %v7382 = vsub.s32 %v2188, %v7381
  %v7383 = vrot.slane %v6850, %v7382
  %v7384 = vsel %vm2193, %v7383, %v7379
  %v7385 = vlaneseq
  %v7386 = vshrl.u32 %v7385, 7
  %v7387 = vsub.s32 %v2195, %v7386
  %v7388 = vrot.slane %v6853, %v7387
  %v7389 = vsel %vm2200, %v7388, %v7384
  %v7390 = vlaneseq
  %v7391 = vshrl.u32 %v7390, 7
  %v7392 = vsub.s32 %v2202, %v7391
  %v7393 = vrot.slane %v6856, %v7392
  %v7394 = vsel %vm2207, %v7393, %v7389
  %v7395 = vlaneseq
  %v7396 = vshrl.u32 %v7395, 7
  %v7397 = vsub.s32 %v47, %v7396
  %v7398 = vrot.slane %v6859, %v7397
  %v7399 = vlaneseq
  %v7400 = vshrl.u32 %v7399, 7
  %v7401 = vsub.s32 %v2188, %v7400
  %v7402 = vrot.slane %v6862, %v7401
  %v7403 = vsel %vm2193, %v7402, %v7398
  %v7404 = vlaneseq
  %v7405 = vshrl.u32 %v7404, 7
  %v7406 = vsub.s32 %v2195, %v7405
  %v7407 = vrot.slane %v6865, %v7406
  %v7408 = vsel %vm2200, %v7407, %v7403
  %v7409 = vlaneseq
  %v7410 = vshrl.u32 %v7409, 7
  %v7411 = vsub.s32 %v2202, %v7410
  %v7412 = vrot.slane %v6868, %v7411
  %v7413 = vsel %vm2207, %v7412, %v7408
  %v7414 = vlaneseq
  %v7415 = vshrl.u32 %v7414, 7
  %v7416 = vsub.s32 %v47, %v7415
  %v7417 = vrot.slane %v6871, %v7416
  %v7418 = vlaneseq
  %v7419 = vshrl.u32 %v7418, 7
  %v7420 = vsub.s32 %v2188, %v7419
  %v7421 = vrot.slane %v6874, %v7420
  %v7422 = vsel %vm2193, %v7421, %v7417
  %v7423 = vlaneseq
  %v7424 = vshrl.u32 %v7423, 7
  %v7425 = vsub.s32 %v2195, %v7424
  %v7426 = vrot.slane %v6877, %v7425
  %v7427 = vsel %vm2200, %v7426, %v7422
  %v7428 = vlaneseq
  %v7429 = vshrl.u32 %v7428, 7
  %v7430 = vsub.s32 %v2202, %v7429
  %v7431 = vrot.slane %v6880, %v7430
  %v7432 = vsel %vm2207, %v7431, %v7427
  %v7433 = vlaneseq
  %v7434 = vshrl.u32 %v7433, 7
  %v7435 = vsub.s32 %v47, %v7434
  %v7436 = vrot.slane %v6883, %v7435
  %v7437 = vlaneseq
  %v7438 = vshrl.u32 %v7437, 7
  %v7439 = vsub.s32 %v2188, %v7438
  %v7440 = vrot.slane %v6886, %v7439
  %v7441 = vsel %vm2193, %v7440, %v7436
  %v7442 = vlaneseq
  %v7443 = vshrl.u32 %v7442, 7
  %v7444 = vsub.s32 %v2195, %v7443
  %v7445 = vrot.slane %v6889, %v7444
  %v7446 = vsel %vm2200, %v7445, %v7441
  %v7447 = vlaneseq
  %v7448 = vshrl.u32 %v7447, 7
  %v7449 = vsub.s32 %v2202, %v7448
  %v7450 = vrot.slane %v6892, %v7449
  %v7451 = vsel %vm2207, %v7450, %v7446
  %v7452 = vlaneseq
  %v7453 = vshrl.u32 %v7452, 7
  %v7454 = vsub.s32 %v47, %v7453
  %v7455 = vrot.slane %v6895, %v7454
  %v7456 = vlaneseq
  %v7457 = vshrl.u32 %v7456, 7
  %v7458 = vsub.s32 %v2188, %v7457
  %v7459 = vrot.slane %v6898, %v7458
  %v7460 = vsel %vm2193, %v7459, %v7455
  %v7461 = vlaneseq
  %v7462 = vshrl.u32 %v7461, 7
  %v7463 = vsub.s32 %v2195, %v7462
  %v7464 = vrot.slane %v6901, %v7463
  %v7465 = vsel %vm2200, %v7464, %v7460
  %v7466 = vlaneseq
  %v7467 = vshrl.u32 %v7466, 7
  %v7468 = vsub.s32 %v2202, %v7467
  %v7469 = vrot.slane %v6904, %v7468
  %v7470 = vsel %vm2207, %v7469, %v7465
  %v7471 = vlaneseq
  %v7472 = vshrl.u32 %v7471, 7
  %v7473 = vsub.s32 %v47, %v7472
  %v7474 = vrot.slane %v6907, %v7473
  %v7475 = vlaneseq
  %v7476 = vshrl.u32 %v7475, 7
  %v7477 = vsub.s32 %v2188, %v7476
  %v7478 = vrot.slane %v6910, %v7477
  %v7479 = vsel %vm2193, %v7478, %v7474
  %v7480 = vlaneseq
  %v7481 = vshrl.u32 %v7480, 7
  %v7482 = vsub.s32 %v2195, %v7481
  %v7483 = vrot.slane %v6913, %v7482
  %v7484 = vsel %vm2200, %v7483, %v7479
  %v7485 = vlaneseq
  %v7486 = vshrl.u32 %v7485, 7
  %v7487 = vsub.s32 %v2202, %v7486
  %v7488 = vrot.slane %v6916, %v7487
  %v7489 = vsel %vm2207, %v7488, %v7484
  %v7490 = vlaneseq
  %v7491 = vshrl.u32 %v7490, 7
  %v7492 = vsub.s32 %v47, %v7491
  %v7493 = vrot.slane %v6919, %v7492
  %v7494 = vlaneseq
  %v7495 = vshrl.u32 %v7494, 7
  %v7496 = vsub.s32 %v2188, %v7495
  %v7497 = vrot.slane %v6922, %v7496
  %v7498 = vsel %vm2193, %v7497, %v7493
  %v7499 = vlaneseq
  %v7500 = vshrl.u32 %v7499, 7
  %v7501 = vsub.s32 %v2195, %v7500
  %v7502 = vrot.slane %v6925, %v7501
  %v7503 = vsel %vm2200, %v7502, %v7498
  %v7504 = vlaneseq
  %v7505 = vshrl.u32 %v7504, 7
  %v7506 = vsub.s32 %v2202, %v7505
  %v7507 = vrot.slane %v6928, %v7506
  %v7508 = vsel %vm2207, %v7507, %v7503
  %v7509 = vlaneseq
  %v7510 = vshrl.u32 %v7509, 7
  %v7511 = vsub.s32 %v47, %v7510
  %v7512 = vrot.slane %v6931, %v7511
  %v7513 = vlaneseq
  %v7514 = vshrl.u32 %v7513, 7
  %v7515 = vsub.s32 %v2188, %v7514
  %v7516 = vrot.slane %v6934, %v7515
  %v7517 = vsel %vm2193, %v7516, %v7512
  %v7518 = vlaneseq
  %v7519 = vshrl.u32 %v7518, 7
  %v7520 = vsub.s32 %v2195, %v7519
  %v7521 = vrot.slane %v6937, %v7520
  %v7522 = vsel %vm2200, %v7521, %v7517
  %v7523 = vlaneseq
  %v7524 = vshrl.u32 %v7523, 7
  %v7525 = vsub.s32 %v2202, %v7524
  %v7526 = vrot.slane %v6940, %v7525
  %v7527 = vsel %vm2207, %v7526, %v7522
  %v7528 = vlaneseq
  %v7529 = vshrl.u32 %v7528, 7
  %v7530 = vsub.s32 %v47, %v7529
  %v7531 = vrot.slane %v6943, %v7530
  %v7532 = vlaneseq
  %v7533 = vshrl.u32 %v7532, 7
  %v7534 = vsub.s32 %v2188, %v7533
  %v7535 = vrot.slane %v6946, %v7534
  %v7536 = vsel %vm2193, %v7535, %v7531
  %v7537 = vlaneseq
  %v7538 = vshrl.u32 %v7537, 7
  %v7539 = vsub.s32 %v2195, %v7538
  %v7540 = vrot.slane %v6949, %v7539
  %v7541 = vsel %vm2200, %v7540, %v7536
  %v7542 = vlaneseq
  %v7543 = vshrl.u32 %v7542, 7
  %v7544 = vsub.s32 %v2202, %v7543
  %v7545 = vrot.slane %v6952, %v7544
  %v7546 = vsel %vm2207, %v7545, %v7541
  %v7547 = vlaneseq
  %v7548 = vshrl.u32 %v7547, 7
  %v7549 = vsub.s32 %v47, %v7548
  %v7550 = vrot.slane %v6955, %v7549
  %v7551 = vlaneseq
  %v7552 = vshrl.u32 %v7551, 7
  %v7553 = vsub.s32 %v2188, %v7552
  %v7554 = vrot.slane %v6958, %v7553
  %v7555 = vsel %vm2193, %v7554, %v7550
  %v7556 = vlaneseq
  %v7557 = vshrl.u32 %v7556, 7
  %v7558 = vsub.s32 %v2195, %v7557
  %v7559 = vrot.slane %v6961, %v7558
  %v7560 = vsel %vm2200, %v7559, %v7555
  %v7561 = vlaneseq
  %v7562 = vshrl.u32 %v7561, 7
  %v7563 = vsub.s32 %v2202, %v7562
  %v7564 = vrot.slane %v6964, %v7563
  %v7565 = vsel %vm2207, %v7564, %v7560
  %v7566 = vlaneseq
  %v7567 = vshrl.u32 %v7566, 7
  %v7568 = vsub.s32 %v47, %v7567
  %v7569 = vrot.slane %v6967, %v7568
  %v7570 = vlaneseq
  %v7571 = vshrl.u32 %v7570, 7
  %v7572 = vsub.s32 %v2188, %v7571
  %v7573 = vrot.slane %v6970, %v7572
  %v7574 = vsel %vm2193, %v7573, %v7569
  %v7575 = vlaneseq
  %v7576 = vshrl.u32 %v7575, 7
  %v7577 = vsub.s32 %v2195, %v7576
  %v7578 = vrot.slane %v6973, %v7577
  %v7579 = vsel %vm2200, %v7578, %v7574
  %v7580 = vlaneseq
  %v7581 = vshrl.u32 %v7580, 7
  %v7582 = vsub.s32 %v2202, %v7581
  %v7583 = vrot.slane %v6976, %v7582
  %v7584 = vsel %vm2207, %v7583, %v7579
  %v7585 = vsel %vm2798, %v7014, %v6995
  %v7586 = vsel %vm2800, %v7033, %v7585
  %v7587 = vsel %vm2802, %v7052, %v7586
  %v7588 = vsel %vm2804, %v7071, %v7587
  %v7589 = vsel %vm2806, %v7090, %v7588
  %v7590 = vsel %vm2808, %v7109, %v7589
  %v7591 = vsel %vm2810, %v7128, %v7590
  %v7592 = vsel %vm2798, %v7166, %v7147
  %v7593 = vsel %vm2800, %v7185, %v7592
  %v7594 = vsel %vm2802, %v7204, %v7593
  %v7595 = vsel %vm2804, %v7223, %v7594
  %v7596 = vsel %vm2806, %v7242, %v7595
  %v7597 = vsel %vm2808, %v7261, %v7596
  %v7598 = vsel %vm2810, %v7280, %v7597
  %v7599 = vsel %vm2798, %v7318, %v7299
  %v7600 = vsel %vm2800, %v7337, %v7599
  %v7601 = vsel %vm2802, %v7356, %v7600
  %v7602 = vsel %vm2804, %v7375, %v7601
  %v7603 = vsel %vm2806, %v7394, %v7602
  %v7604 = vsel %vm2808, %v7413, %v7603
  %v7605 = vsel %vm2810, %v7432, %v7604
  %v7606 = vsel %vm2798, %v7470, %v7451
  %v7607 = vsel %vm2800, %v7489, %v7606
  %v7608 = vsel %vm2802, %v7508, %v7607
  %v7609 = vsel %vm2804, %v7527, %v7608
  %v7610 = vsel %vm2806, %v7546, %v7609
  %v7611 = vsel %vm2808, %v7565, %v7610
  %v7612 = vsel %vm2810, %v7584, %v7611
  %vm7613 = vcmp.ne.s32.totalorder %v7591, 0
  %vm7614 = vcmp.ne.s32.totalorder %v7598, 0
  %vm7615 = vcmp.ne.s32.totalorder %v7605, 0
  %vm7616 = vcmp.ne.s32.totalorder %v7612, 0
  %vm7617 = vmand %vm37, %vm7613
  %vm7618 = vmand %vm38, %vm7614
  %vm7619 = vmand %vm39, %vm7615
  %vm7620 = vmand %vm40, %vm7616
  %v7621 = vsel %vm7617, 1.0, 0.0
  %v7622 = vsel %vm7618, 1.0, 0.0
  %v7623 = vsel %vm7619, 1.0, 0.0
  %v7624 = vsel %vm7620, 1.0, 0.0
  %v7625 = vsel %vm76, %v7621, 0.0
  %7626 = vadd.xlane.f32.xlu0 %v7625
  %v7627 = vpop.xlane.xlu0 %7626
  %v7628 = vsel %vm76, %v7622, 0.0
  %7629 = vadd.xlane.f32.xlu0 %v7628
  %v7630 = vpop.xlane.xlu0 %7629
  %v7631 = vsel %vm76, %v7623, 0.0
  %7632 = vadd.xlane.f32.xlu0 %v7631
  %v7633 = vpop.xlane.xlu0 %7632
  %v7634 = vsel %vm76, %v7624, 0.0
  %7635 = vadd.xlane.f32.xlu0 %v7634
  %v7636 = vpop.xlane.xlu0 %7635
  %v7637 = vlaneseq
  %v7638 = vshrl.u32 %v7637, 7
  %v7639 = vsub.s32 %v47, %v7638
  %v7640 = vrot.slane %v5333, %v7639
  %v7641 = vlaneseq
  %v7642 = vshrl.u32 %v7641, 7
  %v7643 = vsub.s32 %v2188, %v7642
  %v7644 = vrot.slane %v5338, %v7643
  %v7645 = vsel %vm2193, %v7644, %v7640
  %v7646 = vlaneseq
  %v7647 = vshrl.u32 %v7646, 7
  %v7648 = vsub.s32 %v2195, %v7647
  %v7649 = vrot.slane %v5343, %v7648
  %v7650 = vsel %vm2200, %v7649, %v7645
  %v7651 = vlaneseq
  %v7652 = vshrl.u32 %v7651, 7
  %v7653 = vsub.s32 %v2202, %v7652
  %v7654 = vrot.slane %v5348, %v7653
  %v7655 = vsel %vm2207, %v7654, %v7650
  %v7656 = vsel %vm2800, %v7655, %v7655
  %v7657 = vsel %vm2802, %v7655, %v7656
  %v7658 = vsel %vm2804, %v7655, %v7657
  %v7659 = vsel %vm2806, %v7655, %v7658
  %v7660 = vsel %vm2808, %v7655, %v7659
  %v7661 = vsel %vm2810, %v7655, %v7660
  %v7663 = vmul.f32 %v33, %v7661
  %v7664 = vmul.f32 %v34, %v7661
  %v7665 = vmul.f32 %v35, %v7661
  %v7666 = vmul.f32 %v36, %v7661
  %v7667 = vsel %vm76, %v7663, 0.0
  %7668 = vadd.xlane.f32.xlu0 %v7667
  %v7669 = vpop.xlane.xlu0 %7668
  %v7670 = vsel %vm76, %v7664, 0.0
  %7671 = vadd.xlane.f32.xlu0 %v7670
  %v7672 = vpop.xlane.xlu0 %7671
  %v7673 = vsel %vm76, %v7665, 0.0
  %7674 = vadd.xlane.f32.xlu0 %v7673
  %v7675 = vpop.xlane.xlu0 %7674
  %v7676 = vsel %vm76, %v7666, 0.0
  %7677 = vadd.xlane.f32.xlu0 %v7676
  %v7678 = vpop.xlane.xlu0 %7677
  %v7679 = vmul.f32 %v7669, 4.0
  %v7680 = vmul.f32 %v7672, 4.0
  %v7681 = vmul.f32 %v7675, 4.0
  %v7682 = vmul.f32 %v7678, 4.0
  %v7683 = vadd.f32 %v7679, 4.0
  %v7684 = vadd.f32 %v7680, 4.0
  %v7685 = vadd.f32 %v7681, 4.0
  %v7686 = vadd.f32 %v7682, 4.0
  %v7687 = vmul.f32 %v7683, %v2923
  %v7688 = vmul.f32 %v7684, %v2923
  %v7689 = vmul.f32 %v7685, %v2923
  %v7690 = vmul.f32 %v7686, %v2923
  %v7691 = vfloor.f32 %v7687
  %v7692 = vfloor.f32 %v7688
  %v7693 = vfloor.f32 %v7689
  %v7694 = vfloor.f32 %v7690
  %vm7695 = vcmp.lt.f32.partialorder %v7627, %v7691
  %vm7696 = vcmp.lt.f32.partialorder %v7630, %v7692
  %vm7697 = vcmp.lt.f32.partialorder %v7633, %v7693
  %vm7698 = vcmp.lt.f32.partialorder %v7636, %v7694
  %vm7699 = vmand %vm7695, %vm5459
  %vm7700 = vmand %vm7696, %vm5460
  %vm7701 = vmand %vm7697, %vm5461
  %vm7702 = vmand %vm7698, %vm5462
  %v7703 = vsel %vm7699, 1.0, 0.0
  %v7704 = vsel %vm7700, 1.0, 0.0
  %v7705 = vsel %vm7701, 1.0, 0.0
  %v7706 = vsel %vm7702, 1.0, 0.0
  %v7707 = vmul.f32 %v5744, %v5769
  %v7708 = vmul.f32 %v5745, %v5770
  %v7709 = vmul.f32 %v5746, %v5771
  %v7710 = vmul.f32 %v5747, %v5772
  %7712 = vset.pattern.permute.xlu0 0
  %7713 = vperm.xlu0 %7712, %v7703
  %v7714 = vpop.permute.xlu0 %7713
  %7717 = vset.pattern.permute.xlu0 0
  %7718 = vperm.xlu0 %7717, %v7704
  %v7719 = vpop.permute.xlu0 %7718
  %7722 = vset.pattern.permute.xlu0 0
  %7723 = vperm.xlu0 %7722, %v7705
  %v7724 = vpop.permute.xlu0 %7723
  %7727 = vset.pattern.permute.xlu0 0
  %7728 = vperm.xlu0 %7727, %v7706
  %v7729 = vpop.permute.xlu0 %7728
  %v7731 = vmul.f32 %v7707, %v7714
  %v7732 = vmul.f32 %v7708, %v7719
  %v7733 = vmul.f32 %v7709, %v7724
  %v7734 = vmul.f32 %v7710, %v7729
  %vm7735 = vcmp.gt.f32.partialorder %v7703, 0.0
  %vm7736 = vcmp.gt.f32.partialorder %v7704, 0.0
  %vm7737 = vcmp.gt.f32.partialorder %v7705, 0.0
  %vm7738 = vcmp.gt.f32.partialorder %v7706, 0.0
  %v7739 = vsel %vm7735, 1, 0
  %v7740 = vsel %vm7736, 1, 0
  %v7741 = vsel %vm7737, 1, 0
  %v7742 = vsel %vm7738, 1, 0
  %7743 = vset.pattern.permute.xlu0 0
  %7744 = vperm.xlu0 %7743, %v7739
  %v7745 = vpop.permute.xlu0 %7744
  %7746 = vset.pattern.permute.xlu0 0
  %7747 = vperm.xlu0 %7746, %v7740
  %v7748 = vpop.permute.xlu0 %7747
  %7749 = vset.pattern.permute.xlu0 0
  %7750 = vperm.xlu0 %7749, %v7741
  %v7751 = vpop.permute.xlu0 %7750
  %7752 = vset.pattern.permute.xlu0 0
  %7753 = vperm.xlu0 %7752, %v7742
  %v7754 = vpop.permute.xlu0 %7753
  %vm7755 = vcmp.eq.s32.totalorder %v7745, 1
  %vm7756 = vcmp.eq.s32.totalorder %v7748, 1
  %vm7757 = vcmp.eq.s32.totalorder %v7751, 1
  %vm7758 = vcmp.eq.s32.totalorder %v7754, 1
  %v7759 = vsel %vm7755, %v7731, -1e+30
  %v7760 = vsel %vm7756, %v7732, -1e+30
  %v7761 = vsel %vm7757, %v7733, -1e+30
  %v7762 = vsel %vm7758, %v7734, -1e+30
  %v7763 = vsel %vm76, %v7759, -inf
  %v7764 = vsel %vm76, %v7760, -inf
  %v7765 = vmax.f32 %v7763, %v7764
  %v7766 = vrot.slane %v7765, 4
  %v7767 = vmax.f32 %v7765, %v7766
  %v7768 = vrot.slane %v7767, 2
  %v7769 = vmax.f32 %v7767, %v7768
  %v7770 = vrot.slane %v7769, 1
  %v7771 = vmax.f32 %v7769, %v7770
  %v7772 = vsel %vm76, %v7761, -inf
  %v7773 = vsel %vm76, %v7762, -inf
  %v7774 = vmax.f32 %v7772, %v7773
  %v7775 = vrot.slane %v7774, 4
  %v7776 = vmax.f32 %v7774, %v7775
  %v7777 = vrot.slane %v7776, 2
  %v7778 = vmax.f32 %v7776, %v7777
  %v7779 = vrot.slane %v7778, 1
  %v7780 = vmax.f32 %v7778, %v7779
  %v7781 = vsel %vm3123, %v7703, 0.0
  %v7782 = vsel %vm3123, %v7704, 0.0
  %v7783 = vadd.f32 %v7781, %v7782
  %v7784 = vrot.slane %v7783, 4
  %v7785 = vadd.f32 %v7783, %v7784
  %v7786 = vrot.slane %v7785, 2
  %v7787 = vadd.f32 %v7785, %v7786
  %v7788 = vrot.slane %v7787, 1
  %v7789 = vadd.f32 %v7787, %v7788
  %v7790 = vsel %vm3123, %v7705, 0.0
  %v7791 = vsel %vm3123, %v7706, 0.0
  %v7792 = vadd.f32 %v7790, %v7791
  %v7793 = vrot.slane %v7792, 4
  %v7794 = vadd.f32 %v7792, %v7793
  %v7795 = vrot.slane %v7794, 2
  %v7796 = vadd.f32 %v7794, %v7795
  %v7797 = vrot.slane %v7796, 1
  %v7798 = vadd.f32 %v7796, %v7797
  %v7799 = vmax.f32 %v7789, 1.0
  %v7800 = vmax.f32 %v7798, 1.0
  %v7801 = vmul.f32 %v7731, %v7714
  %v7802 = vmul.f32 %v7732, %v7719
  %v7803 = vmul.f32 %v7733, %v7724
  %v7804 = vmul.f32 %v7734, %v7729
  %v7805 = vsel %vm76, %v7801, 0.0
  %v7806 = vsel %vm76, %v7802, 0.0
  %v7807 = vadd.f32 %v7805, %v7806
  %v7808 = vrot.slane %v7807, 4
  %v7809 = vadd.f32 %v7807, %v7808
  %v7810 = vrot.slane %v7809, 2
  %v7811 = vadd.f32 %v7809, %v7810
  %v7812 = vrot.slane %v7811, 1
  %v7813 = vadd.f32 %v7811, %v7812
  %v7814 = vsel %vm76, %v7803, 0.0
  %v7815 = vsel %vm76, %v7804, 0.0
  %v7816 = vadd.f32 %v7814, %v7815
  %v7817 = vrot.slane %v7816, 4
  %v7818 = vadd.f32 %v7816, %v7817
  %v7819 = vrot.slane %v7818, 2
  %v7820 = vadd.f32 %v7818, %v7819
  %v7821 = vrot.slane %v7820, 1
  %v7822 = vadd.f32 %v7820, %v7821
  %7824 = vset.pattern.permute.xlu0 0
  %7825 = vperm.xlu0 %7824, %v7799
  %v7826 = vpop.permute.xlu0 %7825
  %7829 = vset.pattern.permute.xlu0 0
  %7830 = vperm.xlu0 %7829, %v7800
  %v7831 = vpop.permute.xlu0 %7830
  %v7833 = vrcp.pop %v7826
  %v7834 = vmul.f32 %v7813, %v7833
  %v7835 = vrcp.pop %v7831
  %v7836 = vmul.f32 %v7822, %v7835
  %v7839 = vsel %vm2798, %v7780, %v7771
  %v7843 = vsel %vm2798, %v7836, %v7834
  %7844 = vrot.lane.b32.xlu0 %v7843, 32
  %v7845 = vpop.permute.xlu0 %7844
  %v7847 = vsel %vm76, %v7839, %v7845
  %v7848 = vadd.f32 %v5572, %v7847
  %vm7849 = vcmask 1041408
  %v7850 = vsel %vm7849, %v7848, 0.0
  %v7851 = vld [vmem:[%s3 + $0x48] sm:$0xf]
  %v7852 = vld [vmem:[%s3 + $0x4c] sm:$0xf]
  %v7853 = vld [vmem:[%s3 + $0x50] sm:$0xf]
  %v7854 = vld [vmem:[%s3 + $0x54] sm:$0xf]
  %v7855 = vld [vmem:[%s3 + $0x58] sm:$0xf]
  %v7856 = vld [vmem:[%s3 + $0x5c] sm:$0xf]
  %v7857 = vld [vmem:[%s3 + $0x60] sm:$0xf]
  %v7858 = vld [vmem:[%s3 + $0x64] sm:$0xf]
  %v7859 = vpack.c.bf16 %v7850, %v7850
  %v7860 = vld [vmem:[%s4 + $0x30] sm:$0x1]
  %v7861 = vlaneseq
  %v7862 = vshrl.u32 %v7861, 7
  %v7863 = vsub.s32 0, %v7862
  %v7864 = vrot.slane %v7860, %v7863
  %v7873 = vunpack.c.l.b16 %v7851
  %v7874 = vunpack.c.l.b16 %v7852
  %v7875 = vunpack.c.l.b16 %v7853
  %v7876 = vunpack.c.l.b16 %v7854
  %v7877 = vunpack.c.l.b16 %v7855
  %v7878 = vunpack.c.l.b16 %v7856
  %v7879 = vunpack.c.l.b16 %v7857
  %v7880 = vunpack.c.l.b16 %v7858
  %v7881 = vpack.c.b16 %v7874, %v7873
  %v7882 = vpack.c.b16 %v7876, %v7875
  %v7883 = vpack.c.b16 %v7878, %v7877
  %v7884 = vpack.c.b16 %v7880, %v7879
  %v7890 = vsel %vm3309, %v7859, 0
  %7892 = vmatprep.subr.bf16.mxu0 0
  %7893 = vmatpush1.bf16.msra.mxu0 %v7881
  %7894 = vmatprep.subr.bf16.mxu0 0
  %7895 = vmatpush1.bf16.msra.mxu0 %v7882
  %7896 = vmatprep.subr.bf16.mxu0 0
  %7897 = vmatpush1.bf16.msra.mxu0 %v7883
  %7898 = vmatprep.subr.bf16.mxu0 0
  %7899 = vmatpush1.bf16.msra.mxu0 %v7884
  %7900 = vmatprep.subr.bf16.mxu0 0
  %7901 = vmatpush1.bf16.msra.mxu0 0
  %7902 = vmatprep.subr.bf16.mxu0 0
  %7903 = vmatpush1.bf16.msra.mxu0 0
  %7904 = vmatprep.subr.bf16.mxu0 0
  %7905 = vmatpush1.bf16.msra.mxu0 0
  %7906 = vmatprep.subr.bf16.mxu0 0
  %7907 = vmatpush1.bf16.msra.mxu0 0
  %7908 = vmatprep.subr.bf16.mxu0 0
  %7909 = vmatpush1.bf16.msra.mxu0 0
  %7910 = vmatprep.subr.bf16.mxu0 0
  %7911 = vmatpush1.bf16.msra.mxu0 0
  %7912 = vmatprep.subr.bf16.mxu0 0
  %7913 = vmatpush1.bf16.msra.mxu0 0
  %7914 = vmatprep.subr.bf16.mxu0 0
  %7915 = vmatpush1.bf16.msra.mxu0 0
  %7916 = vmatprep.subr.bf16.mxu0 0
  %7917 = vmatpush1.bf16.msra.mxu0 0
  %7918 = vmatprep.subr.bf16.mxu0 0
  %7919 = vmatpush1.bf16.msra.mxu0 0
  %7920 = vmatprep.subr.bf16.mxu0 0
  %7921 = vmatpush1.bf16.msra.mxu0 0
  %7922 = vmatprep.subr.bf16.mxu0 0
  %7923 = vmatpush1.bf16.msra.mxu0 0
  %7924 = vmatprep.mubr.bf16.mxu0 0
  %7925 = vmatmul.mubr.bf16.gmra.mrb[0].mxu0 %v7890
  %v7926 = vpop.f32.mrb[0].mxu0
  %v7927 = vadd.f32 %v7864, %v7926
  %v7928 = vpop.f32.mrb[0].mxu0
  %v7929 = vpop.f32.mrb[0].mxu0
  %v7930 = vpop.f32.mrb[0].mxu0
  %7931 = vdwg.mxu0
  %v7932 = vmax.f32 %v7927, 0.0
  %v7933 = vld [vmem:[%s3 + $0x68] sm:$0xf]
  %v7934 = vld [vmem:[%s3 + $0x6c] sm:$0xf]
  %v7935 = vld [vmem:[%s3 + $0x70] sm:$0xf]
  %v7936 = vld [vmem:[%s3 + $0x74] sm:$0xf]
  %v7937 = vpack.c.bf16 %v7932, %v7932
  %v7938 = vld [vmem:[%s4 + $0x38] sm:$0x1]
  %v7939 = vlaneseq
  %v7940 = vshrl.u32 %v7939, 7
  %v7941 = vsub.s32 0, %v7940
  %v7942 = vrot.slane %v7938, %v7941
  %v7947 = vunpack.c.l.b16 %v7933
  %v7948 = vunpack.c.l.b16 %v7934
  %v7949 = vunpack.c.l.b16 %v7935
  %v7950 = vunpack.c.l.b16 %v7936
  %v7951 = vpack.c.b16 %v7948, %v7947
  %v7952 = vpack.c.b16 %v7950, %v7949
  %v7956 = vsel %vm76, %v7937, 0
  %7958 = vmatprep.subr.bf16.mxu0 0
  %7959 = vmatpush1.bf16.msra.mxu0 %v7951
  %7960 = vmatprep.subr.bf16.mxu0 0
  %7961 = vmatpush1.bf16.msra.mxu0 %v7952
  %7962 = vmatprep.subr.bf16.mxu0 0
  %7963 = vmatpush1.bf16.msra.mxu0 0
  %7964 = vmatprep.subr.bf16.mxu0 0
  %7965 = vmatpush1.bf16.msra.mxu0 0
  %7966 = vmatprep.subr.bf16.mxu0 0
  %7967 = vmatpush1.bf16.msra.mxu0 0
  %7968 = vmatprep.subr.bf16.mxu0 0
  %7969 = vmatpush1.bf16.msra.mxu0 0
  %7970 = vmatprep.subr.bf16.mxu0 0
  %7971 = vmatpush1.bf16.msra.mxu0 0
  %7972 = vmatprep.subr.bf16.mxu0 0
  %7973 = vmatpush1.bf16.msra.mxu0 0
  %7974 = vmatprep.subr.bf16.mxu0 0
  %7975 = vmatpush1.bf16.msra.mxu0 0
  %7976 = vmatprep.subr.bf16.mxu0 0
  %7977 = vmatpush1.bf16.msra.mxu0 0
  %7978 = vmatprep.subr.bf16.mxu0 0
  %7979 = vmatpush1.bf16.msra.mxu0 0
  %7980 = vmatprep.subr.bf16.mxu0 0
  %7981 = vmatpush1.bf16.msra.mxu0 0
  %7982 = vmatprep.subr.bf16.mxu0 0
  %7983 = vmatpush1.bf16.msra.mxu0 0
  %7984 = vmatprep.subr.bf16.mxu0 0
  %7985 = vmatpush1.bf16.msra.mxu0 0
  %7986 = vmatprep.subr.bf16.mxu0 0
  %7987 = vmatpush1.bf16.msra.mxu0 0
  %7988 = vmatprep.subr.bf16.mxu0 0
  %7989 = vmatpush1.bf16.msra.mxu0 0
  %7990 = vmatprep.mubr.bf16.mxu0 0
  %7991 = vmatmul.mubr.bf16.gmra.mrb[0].mxu0 %v7956
  %v7992 = vpop.f32.mrb[0].mxu0
  %v7993 = vadd.f32 %v7942, %v7992
  %v7994 = vpop.f32.mrb[0].mxu0
  %v7995 = vpop.f32.mrb[0].mxu0
  %v7996 = vpop.f32.mrb[0].mxu0
  %7997 = vdwg.mxu0
  %v7998 = vmax.f32 %v7993, 0.0
  %v7999 = vld [vmem:[%s3 + $0x78] sm:$0xf]
  %v8000 = vld [vmem:[%s3 + $0x7c] sm:$0xf]
  %v8001 = vpack.c.bf16 %v7998, %v7998
  %v8002 = vld [vmem:[%s4 + $0x40] sm:$0x1]
  %v8003 = vlaneseq
  %v8004 = vshrl.u32 %v8003, 7
  %v8005 = vsub.s32 0, %v8004
  %v8006 = vrot.slane %v8002, %v8005
  %v8009 = vunpack.c.l.b16 %v7999
  %v8010 = vunpack.c.l.b16 %v8000
  %v8011 = vpack.c.b16 %v8010, %v8009
  %vm8013 = vcmask 130048
  %v8015 = vsel %vm8013, %v8001, 0
  %8017 = vmatprep.subr.bf16.mxu0 0
  %8018 = vmatpush1.bf16.msra.mxu0 %v8011
  %8019 = vmatprep.subr.bf16.mxu0 0
  %8020 = vmatpush1.bf16.msra.mxu0 0
  %8021 = vmatprep.subr.bf16.mxu0 0
  %8022 = vmatpush1.bf16.msra.mxu0 0
  %8023 = vmatprep.subr.bf16.mxu0 0
  %8024 = vmatpush1.bf16.msra.mxu0 0
  %8025 = vmatprep.subr.bf16.mxu0 0
  %8026 = vmatpush1.bf16.msra.mxu0 0
  %8027 = vmatprep.subr.bf16.mxu0 0
  %8028 = vmatpush1.bf16.msra.mxu0 0
  %8029 = vmatprep.subr.bf16.mxu0 0
  %8030 = vmatpush1.bf16.msra.mxu0 0
  %8031 = vmatprep.subr.bf16.mxu0 0
  %8032 = vmatpush1.bf16.msra.mxu0 0
  %8033 = vmatprep.subr.bf16.mxu0 0
  %8034 = vmatpush1.bf16.msra.mxu0 0
  %8035 = vmatprep.subr.bf16.mxu0 0
  %8036 = vmatpush1.bf16.msra.mxu0 0
  %8037 = vmatprep.subr.bf16.mxu0 0
  %8038 = vmatpush1.bf16.msra.mxu0 0
  %8039 = vmatprep.subr.bf16.mxu0 0
  %8040 = vmatpush1.bf16.msra.mxu0 0
  %8041 = vmatprep.subr.bf16.mxu0 0
  %8042 = vmatpush1.bf16.msra.mxu0 0
  %8043 = vmatprep.subr.bf16.mxu0 0
  %8044 = vmatpush1.bf16.msra.mxu0 0
  %8045 = vmatprep.subr.bf16.mxu0 0
  %8046 = vmatpush1.bf16.msra.mxu0 0
  %8047 = vmatprep.subr.bf16.mxu0 0
  %8048 = vmatpush1.bf16.msra.mxu0 0
  %8049 = vmatprep.mubr.bf16.mxu0 0
  %8050 = vmatmul.mubr.bf16.gmra.mrb[0].mxu0 %v8015
  %v8051 = vpop.f32.mrb[0].mxu0
  %v8052 = vadd.f32 %v8006, %v8051
  %v8053 = vpop.f32.mrb[0].mxu0
  %v8054 = vpop.f32.mrb[0].mxu0
  %v8055 = vpop.f32.mrb[0].mxu0
  %8056 = vdwg.mxu0
  %8057 = vmax.xlane.f32.xlu0 %v8052
  %v8058 = vpop.xlane.xlu0 %8057
  %v8059 = vsub.f32 %v8052, %v8058
  %v8060 = vmul.f32 %v8059, 1.442695
  %v8061 = vpow.pop %v8060
  %8062 = vadd.xlane.f32.xlu0 %v8061
  %v8063 = vpop.xlane.xlu0 %8062
  %v8064 = vlog2.pop %v8063
  %v8065 = vmul.f32 %v8064, 0.6931472
  %v8066 = vadd.f32 %v8058, %v8065
  %v8067 = vsub.f32 %v8052, %v8066
  %8068 = vst [vmem:[%s5] sm:$0xff] %v8067
  // Predicated region
  $region22: #{topknet_forward.1} parent=0 // pred_check
    _
  $region23: #{topknet_forward.1} parent=0 // pred_check_branch
    %8070 = sbr.rel (0) target = $region25
  $region24: #{topknet_forward.1} parent=0 // pred_region
    _
  $region25: #{topknet_forward.1} parent=0 // pred_fallthru
    _
  // Predicated region
  $region26: #{topknet_forward.1} parent=0 // pred_check
    _
  $region27: #{topknet_forward.1} parent=0 // pred_check_branch
    %8072 = sbr.rel (0) target = $region29
  $region28: #{topknet_forward.1} parent=0 // pred_region
    _
  $region29: #{topknet_forward.1} parent=0 // pred_fallthru
    _

</llo_original>
